<compile_context>
chip_gen: v7x
topology: tpu7x:2x2x1
jax: 0.10.0
libtpu: 0.0.40
codegen_flags: <defaults>
</compile_context>

<pallas_src>
import jax
import jax.numpy as jnp
from jax.experimental import pallas as pl
from jax.experimental.pallas import tpu as pltpu

# ----- hyper-parameters implied by the PyTorch module -----
IN_CHANNELS = 1
H_IN, W_IN = 64, 5          # NCHW input is (B, 1, 64, 5); H=64 implied by Linear(256, 10)
EMBED = 16
NUM_HEADS = 4
HEAD_DIM = EMBED // NUM_HEADS
MLP_HIDDEN = int(EMBED * 4.0)
NUM_CLASSES = 10
SEQ = H_IN // 4             # two MaxPool2d((2,1)) -> 16 tokens
OUT_PAD = 128               # lane-dense padded logits width
LN_EPS = 1e-5
BN_EPS = 1e-5


# --------------------------------------------------------------------------
# helpers usable inside kernels
# --------------------------------------------------------------------------
def _fast_recip(x):
    # EUP approximate reciprocal + one Newton step (keeps ~f32 accuracy).
    r = pl.reciprocal(x, approx=True)
    return r * (2.0 - x * r)


def _erf(x):
    # Abramowitz & Stegun 7.1.26 polynomial (|err| < 1.5e-7): exact-GELU (erf)
    # semantics with only VPU/EUP ops.
    a1, a2, a3, a4, a5 = 0.254829592, -0.284496736, 1.421413741, -1.453152027, 1.061405429
    p = 0.3275911
    ax = jnp.abs(x)
    t = _fast_recip(1.0 + p * ax)
    poly = ((((a5 * t + a4) * t + a3) * t + a2) * t + a1) * t
    y = 1.0 - poly * jnp.exp(-ax * ax)
    return jnp.where(x >= 0, y, -y)


def _gelu_exact(x):
    return 0.5 * x * (1.0 + _erf(x * 0.7071067811865476))


def _layernorm(v, g, b):
    mu = jnp.mean(v, axis=-1, keepdims=True)
    var = jnp.mean(jnp.square(v - mu), axis=-1, keepdims=True)
    return (v - mu) * jax.lax.rsqrt(var + LN_EPS) * g + b


# --------------------------------------------------------------------------
# Fused full-network kernel (one batch block of TB elements per grid step)
# --------------------------------------------------------------------------
def lhvit_kernel(x_ref, m_ref, sc_ref, vec_ref, wmat_ref, wc_ref,
                 o_ref, buf_ref, tok_ref):
    L = x_ref.shape[1]            # TB * 5  (batch folded into the lane axis)
    TB = L // W_IN
    T = TB * SEQ                  # flat token rows for the ViT stage

    def resse(x, t0, k0, c2w, c2b):
        """ResSEBlock on a lane-packed (rows=H, lanes=TB*W) slab."""
        n = x.shape[0]
        zrow = jnp.zeros((1, L), jnp.float32)
        # zero-padded staging so the +-1 row taps of the 3x3 depthwise conv are
        # plain sublane-offset loads; no batch masks needed (batch is in lanes,
        # and the kron block-diagonal column mix never crosses batch groups).
        buf_ref[pl.ds(0, 1), :] = zrow
        buf_ref[pl.ds(1, n), :] = x
        buf_ref[pl.ds(n + 1, 1), :] = zrow
        x_up = buf_ref[pl.ds(0, n), :]
        x_dn = buf_ref[pl.ds(2, n), :]
        conv = (jnp.dot(x_up, m_ref[t0], preferred_element_type=jnp.float32) +
                jnp.dot(x,    m_ref[t0 + 1], preferred_element_type=jnp.float32) +
                jnp.dot(x_dn, m_ref[t0 + 2], preferred_element_type=jnp.float32))
        # TODO(synk): BatchNorm2d reproduced in eval mode (running stats folded on host).
        h = conv + k0
        h = h * jnp.clip(h + 3.0, 0.0, 6.0) * (1.0 / 6.0)           # Hardswish
        # 1x1 conv scaled by the degenerate SE gate (sigmoid(fc2.bias)) + residual.
        return c2w * h + c2b + x

    def pool2(y):
        """MaxPool2d((2,1)) over rows: strided even/odd sublane loads + max."""
        n = y.shape[0]
        buf_ref[pl.ds(0, n), :] = y
        return jnp.maximum(buf_ref[pl.ds(0, n // 2, stride=2), :],
                           buf_ref[pl.ds(1, n // 2, stride=2), :])

    # ---- feature extractor: (ResSEBlock + MaxPool2d((2,1))) x 2 ----
    y = resse(x_ref[...], 0, sc_ref[0], sc_ref[1], sc_ref[2])        # (64, TB*5)
    y = pool2(y)                                                     # (32, TB*5)
    y = resse(y, 3, sc_ref[3], sc_ref[4], sc_ref[5])                 # (32, TB*5)
    y = pool2(y)                                                     # (16, TB*5)

    # ---- handoff: lane-packed (SEQ, TB*W) -> batch-major flat tokens (TB*SEQ, W)
    buf_ref[pl.ds(0, SEQ), :] = y
    tok0 = jnp.concatenate(
        [buf_ref[pl.ds(0, SEQ), pl.ds(b * W_IN, W_IN)] for b in range(TB)], axis=0)

    # ---- RadarViT on flat (TB*SEQ, E) tokens ----
    wp = wmat_ref[112:117, 0:EMBED]
    xe = jnp.dot(tok0, wp, preferred_element_type=jnp.float32) + vec_ref[0:1, 0:EMBED]
    xn = _layernorm(xe, vec_ref[1:2, 0:EMBED], vec_ref[2:3, 0:EMBED])
    qkv = (jnp.dot(xn, wmat_ref[0:16, 0:3 * EMBED], preferred_element_type=jnp.float32)
           + vec_ref[3:4, 0:3 * EMBED])
    qkv = qkv.reshape(TB, SEQ, 3 * EMBED)        # batched attention: no (S,S) mask/waste

    attn = jnp.zeros((T, EMBED), jnp.float32)
    for h in range(NUM_HEADS):                   # static unroll over 4 heads
        q = qkv[:, :, h * HEAD_DIM:(h + 1) * HEAD_DIM]               # q-scale pre-folded
        k = qkv[:, :, EMBED + h * HEAD_DIM:EMBED + (h + 1) * HEAD_DIM]
        v = qkv[:, :, 2 * EMBED + h * HEAD_DIM:2 * EMBED + (h + 1) * HEAD_DIM]
        s = jnp.einsum('bqd,bkd->bqk', q, k, preferred_element_type=jnp.float32)
        s = s - jnp.max(s, axis=-1, keepdims=True)
        p = jnp.exp(s)
        p = p * _fast_recip(jnp.sum(p, axis=-1, keepdims=True))
        ctx = jnp.einsum('bqk,bkd->bqd', p, v,
                         preferred_element_type=jnp.float32).reshape(T, HEAD_DIM)
        # head concat folded into the out-projection (per-head weight slab)
        attn = attn + jnp.dot(
            ctx, wmat_ref[16 + h * HEAD_DIM:16 + (h + 1) * HEAD_DIM, 0:EMBED],
            preferred_element_type=jnp.float32)

    x1 = xe + attn + vec_ref[4:5, 0:EMBED]
    x2 = _layernorm(x1, vec_ref[5:6, 0:EMBED], vec_ref[6:7, 0:EMBED])
    hm = (jnp.dot(x2, wmat_ref[32:48, 0:MLP_HIDDEN], preferred_element_type=jnp.float32)
          + vec_ref[7:8, 0:MLP_HIDDEN])
    hm = _gelu_exact(hm)
    mlp = (jnp.dot(hm, wmat_ref[48:112, 0:EMBED], preferred_element_type=jnp.float32)
           + vec_ref[8:9, 0:EMBED])
    tok = x1 + mlp                                                   # (T, 16)

    # ---- classifier: flatten folded into per-token partial-matmul accumulation ----
    # TODO(synk): Dropout(p=0.3) is identity at inference; not implemented.
    tok_ref[...] = tok
    acc = jnp.zeros((TB, OUT_PAD), jnp.float32)
    for n in range(SEQ):
        acc = acc + jnp.dot(tok_ref[pl.ds(n, TB, stride=SEQ), :],
                            wc_ref[pl.ds(n * EMBED, EMBED), :],
                            preferred_element_type=jnp.float32)
    o_ref[...] = acc + vec_ref[9:10, :]


# --------------------------------------------------------------------------
# Wrapper: batch blocking, weight packing, BlockSpecs
# --------------------------------------------------------------------------
def _round8(v):
    return ((int(v) + 7) // 8) * 8


def _choose_tb(B, block_b):
    block_b = max(8, min(int(block_b), 64))
    if B <= 8:
        return 8
    tb = min(_round8(B), _round8(block_b))
    if _round8(B) <= tb:
        # keep >= 2 grid steps so v7x can shard batch blocks across its 2 TCs
        tb = max(8, _round8((B + 1) // 2))
    return tb


def lhvit_forward(x_nchw, params, block_b=32):
    B = x_nchw.shape[0]
    TB = _choose_tb(B, block_b)
    Bp = ((B + TB - 1) // TB) * TB
    G = Bp // TB
    L = TB * W_IN
    T = TB * SEQ

    x = x_nchw[:, 0, :, :].astype(jnp.float32)                       # C == 1 -> (B, 64, 5)
    if Bp != B:
        x = jnp.concatenate([x, jnp.zeros((Bp - B, H_IN, W_IN), jnp.float32)], axis=0)
    # lane-dense packing: row = (block, h), lane = (batch-in-block, w)
    x_flat = x.reshape(G, TB, H_IN, W_IN).transpose(0, 2, 1, 3).reshape(G * H_IN, L)

    # block-diagonal (per-batch lane group) conv column-mix matrices, BN folded
    eye_tb = jnp.eye(TB, dtype=jnp.float32)
    mtaps = jnp.stack(
        [jnp.kron(eye_tb, params["m1"][t]) for t in range(3)] +
        [jnp.kron(eye_tb, params["m2"][t]) for t in range(3)], axis=0)       # (6, L, L)

    # pack the small bias / LayerNorm vectors into one lane-padded slab
    vecs = jnp.zeros((16, OUT_PAD), jnp.float32)
    vecs = vecs.at[0, :EMBED].set(params["bp"])
    vecs = vecs.at[1, :EMBED].set(params["g1"])
    vecs = vecs.at[2, :EMBED].set(params["b1"])
    vecs = vecs.at[3, :3 * EMBED].set(params["bqkv"])
    vecs = vecs.at[4, :EMBED].set(params["bo"])
    vecs = vecs.at[5, :EMBED].set(params["g2"])
    vecs = vecs.at[6, :EMBED].set(params["b2"])
    vecs = vecs.at[7, :MLP_HIDDEN].set(params["bm1"])
    vecs = vecs.at[8, :EMBED].set(params["bm2"])
    vecs = vecs.at[9, :NUM_CLASSES].set(params["bc"])

    # pack the small matrices into one block
    wmat = jnp.zeros((120, 64), jnp.float32)
    wmat = wmat.at[0:16, 0:3 * EMBED].set(params["wqkv"])
    wmat = wmat.at[16:32, 0:EMBED].set(params["wo"])
    wmat = wmat.at[32:48, 0:MLP_HIDDEN].set(params["wm1"])
    wmat = wmat.at[48:112, 0:EMBED].set(params["wm2"])
    wmat = wmat.at[112:117, 0:EMBED].set(params["wp"])

    wc_pad = jnp.zeros((SEQ * EMBED, OUT_PAD), jnp.float32).at[:, :NUM_CLASSES].set(params["wc"])

    flops = G * int(
        2 * 3 * (H_IN + H_IN // 2) * L * L
        + 2 * T * (W_IN * EMBED + EMBED * 3 * EMBED + EMBED * EMBED
                   + 2 * EMBED * MLP_HIDDEN + EMBED * OUT_PAD)
        + NUM_HEADS * 4 * TB * SEQ * SEQ * HEAD_DIM)
    transc = G * int(NUM_HEADS * TB * SEQ * SEQ + 2 * T * MLP_HIDDEN)
    byts = int(x_flat.size * 4 + Bp * OUT_PAD * 4
               + (mtaps.size + vecs.size + wmat.size + wc_pad.size) * 4)

    logits = pl.pallas_call(
        lhvit_kernel,
        out_shape=jax.ShapeDtypeStruct((Bp, OUT_PAD), jnp.float32),
        grid=(G,),
        in_specs=[
            pl.BlockSpec((H_IN, L), lambda g: (g, 0)),
            pl.BlockSpec((6, L, L), lambda g: (0, 0, 0)),
            pl.BlockSpec(memory_space=pltpu.MemorySpace.SMEM),
            pl.BlockSpec((16, OUT_PAD), lambda g: (0, 0)),
            pl.BlockSpec((120, 64), lambda g: (0, 0)),
            pl.BlockSpec((SEQ * EMBED, OUT_PAD), lambda g: (0, 0)),
        ],
        out_specs=pl.BlockSpec((TB, OUT_PAD), lambda g: (g, 0)),
        scratch_shapes=[pltpu.VMEM((H_IN + 8, L), jnp.float32),      # conv/pool/token staging
                        pltpu.VMEM((T, EMBED), jnp.float32)],        # classifier token staging
        compiler_params=pltpu.CompilerParams(
            dimension_semantics=("parallel",),
            vmem_limit_bytes=32 * 1024 * 1024),
        cost_estimate=pl.CostEstimate(flops=flops, transcendentals=transc,
                                      bytes_accessed=byts),
    )(x_flat, mtaps, params["sc"], vecs, wmat, wc_pad)
    return logits[:B, :NUM_CLASSES]


# --------------------------------------------------------------------------
# Parameter setup: synthetic PyTorch-layout params, folded for the kernel
# --------------------------------------------------------------------------
def init_raw_params(key):
    ks = iter(jax.random.split(key, 40))

    def nrm(shape, s=0.1):
        return (s * jax.random.normal(next(ks), shape)).astype(jnp.float32)

    def resse_raw():
        return dict(
            w3=nrm((3, 3), 0.3),                       # Conv2d(1,1,3,padding=1,groups=1).weight
            cb=nrm(()),                                # conv1 bias
            gamma=1.0 + nrm(()), beta=nrm(()),         # BatchNorm2d affine
            mean=nrm(()), var=1.0 + jnp.abs(nrm(())),  # BN running stats (eval mode)
            w2=1.0 + nrm(()), b2=nrm(()),              # Conv2d(1,1,1) weight / bias
            se_b=nrm((), 0.5),                         # SqueezeExcitation fc2 bias
        )

    return dict(
        res1=resse_raw(), res2=resse_raw(),
        proj_w=nrm((EMBED, W_IN)), proj_b=nrm((EMBED,)),
        ln1_g=1.0 + nrm((EMBED,)), ln1_b=nrm((EMBED,)),
        in_proj_w=nrm((3 * EMBED, EMBED)), in_proj_b=nrm((3 * EMBED,)),
        out_proj_w=nrm((EMBED, EMBED)), out_proj_b=nrm((EMBED,)),
        ln2_g=1.0 + nrm((EMBED,)), ln2_b=nrm((EMBED,)),
        mlp_w1=nrm((MLP_HIDDEN, EMBED)), mlp_b1=nrm((MLP_HIDDEN,)),
        mlp_w2=nrm((EMBED, MLP_HIDDEN)), mlp_b2=nrm((EMBED,)),
        cls_w=nrm((NUM_CLASSES, SEQ * EMBED)), cls_b=nrm((NUM_CLASSES,)),
    )


def fold_params(raw):
    # column-shift basis: (x @ cshift[j])[i, k] = x[i, k + (j - 1)] with zero pad
    cshift = jnp.stack([jnp.eye(W_IN, k=-d, dtype=jnp.float32) for d in (-1, 0, 1)])

    def fold_resse(p):
        a = p["gamma"] * jax.lax.rsqrt(p["var"] + BN_EPS)         # BN eval-mode scale
        m = a * jnp.einsum("tj,jab->tab", p["w3"], cshift)        # (3,5,5) per row tap
        k0 = a * p["cb"] + (p["beta"] - p["mean"] * a)            # BN-folded conv1 bias
        # SqueezeExcitation(channels=1, reduction=4): fc1 = Linear(1, 0), so the
        # gate degenerates to sigmoid(fc2.bias); fold it into the 1x1 conv.
        gate = jax.nn.sigmoid(p["se_b"])
        return m, jnp.stack([k0, p["w2"] * gate, p["b2"] * gate])

    m1, s1 = fold_resse(raw["res1"])
    m2, s2 = fold_resse(raw["res2"])

    scale = 1.0 / (HEAD_DIM ** 0.5)                               # folded into Wq / bq
    wq, wk, wv = jnp.split(raw["in_proj_w"], 3, axis=0)
    bq, bk, bv = jnp.split(raw["in_proj_b"], 3)
    kp = dict(
        m1=m1, m2=m2, sc=jnp.concatenate([s1, s2]),
        wp=raw["proj_w"].T, bp=raw["proj_b"],
        g1=raw["ln1_g"], b1=raw["ln1_b"],
        wqkv=jnp.concatenate([scale * wq.T, wk.T, wv.T], axis=1),     # (E, 3E)
        bqkv=jnp.concatenate([scale * bq, bk, bv]),                   # (3E,)
        wo=raw["out_proj_w"].T, bo=raw["out_proj_b"],
        g2=raw["ln2_g"], b2=raw["ln2_b"],
        wm1=raw["mlp_w1"].T, bm1=raw["mlp_b1"],
        wm2=raw["mlp_w2"].T, bm2=raw["mlp_b2"],
        wc=raw["cls_w"].T, bc=raw["cls_b"],
    )
    return {k: jnp.asarray(v, jnp.float32) for k, v in kp.items()}


if __name__ == "__main__":
    key = jax.random.PRNGKey(0)
    kx, kparam = jax.random.split(key)
    B = 2
    x = jax.random.normal(kx, (B, IN_CHANNELS, H_IN, W_IN), jnp.float32)
    params = fold_params(init_raw_params(kparam))

    out = jax.jit(lhvit_forward)(x, params)
    out = jax.block_until_ready(out)
    assert out.shape == (B, NUM_CLASSES)
    assert out.dtype == jnp.float32
    assert bool(jnp.all(jnp.isfinite(out)))
    print("KERNEL_OK")
</pallas_src>

<mosaic_0001>
module attributes {stable_mosaic.version = 11 : i64} {
  func.func @lhvit_kernel(%arg0: i32, %arg1: memref<64x40xf32, #tpu.memory_space<vmem>>, %arg2: memref<6x40x40xf32, #tpu.memory_space<vmem>>, %arg3: memref<6xf32, #tpu.memory_space<smem>>, %arg4: memref<16x128xf32, #tpu.memory_space<vmem>>, %arg5: memref<120x64xf32, #tpu.memory_space<vmem>>, %arg6: memref<256x128xf32, #tpu.memory_space<vmem>>, %arg7: memref<8x128xf32, #tpu.memory_space<vmem>>, %arg8: memref<72x40xf32, #tpu.memory_space<vmem>>, %arg9: memref<128x16xf32, #tpu.memory_space<vmem>>) attributes {dimension_semantics = [#tpu.dimension_semantics<parallel>], iteration_bounds = array<i64: 1>, scalar_prefetch = 0 : i64, scratch_operands = 2 : i64, tpu.core_type = #tpu.core_type<tc>, window_params = [{transform_indices = @transform_0, window_bounds = array<i64: 64, 40>}, {pipeline_mode = #tpu.pipeline_mode<synchronous>, transform_indices = @transform_1, window_bounds = array<i64: 6, 40, 40>}, {transform_indices = @transform_2, window_bounds = array<i64: 6>}, {pipeline_mode = #tpu.pipeline_mode<synchronous>, transform_indices = @transform_3, window_bounds = array<i64: 16, 128>}, {pipeline_mode = #tpu.pipeline_mode<synchronous>, transform_indices = @transform_4, window_bounds = array<i64: 120, 64>}, {pipeline_mode = #tpu.pipeline_mode<synchronous>, transform_indices = @transform_5, window_bounds = array<i64: 256, 128>}, {transform_indices = @transform_6, window_bounds = array<i64: 8, 128>}]} {
    %c0 = arith.constant 0 : index
    %c0_0 = arith.constant 0 : index
    %0 = vector.load %arg1[%c0, %c0_0] : memref<64x40xf32, #tpu.memory_space<vmem>>, vector<64x40xf32>
    %c0_1 = arith.constant 0 : index
    %1 = memref.load %arg3[%c0_1] : memref<6xf32, #tpu.memory_space<smem>>
    %c1 = arith.constant 1 : index
    %2 = memref.load %arg3[%c1] : memref<6xf32, #tpu.memory_space<smem>>
    %c2 = arith.constant 2 : index
    %3 = memref.load %arg3[%c2] : memref<6xf32, #tpu.memory_space<smem>>
    %cst = arith.constant 0.000000e+00 : f32
    %4 = vector.broadcast %cst : f32 to vector<1x40xf32>
    %c0_2 = arith.constant 0 : index
    %c0_3 = arith.constant 0 : index
    %5 = vector.load %arg8[%c0_2, %c0_3] : memref<72x40xf32, #tpu.memory_space<vmem>>, vector<1x40xf32>
    tpu.vector_store %arg8[%c0_2, %c0_3], %4 {strides = array<i32>} : memref<72x40xf32, #tpu.memory_space<vmem>>, vector<1x40xf32>,
    %c1_4 = arith.constant 1 : index
    %c0_5 = arith.constant 0 : index
    %6 = vector.load %arg8[%c1_4, %c0_5] : memref<72x40xf32, #tpu.memory_space<vmem>>, vector<64x40xf32>
    tpu.vector_store %arg8[%c1_4, %c0_5], %0 {strides = array<i32>} : memref<72x40xf32, #tpu.memory_space<vmem>>, vector<64x40xf32>,
    %c65 = arith.constant 65 : index
    %c0_6 = arith.constant 0 : index
    %7 = vector.load %arg8[%c65, %c0_6] : memref<72x40xf32, #tpu.memory_space<vmem>>, vector<1x40xf32>
    tpu.vector_store %arg8[%c65, %c0_6], %4 {strides = array<i32>} : memref<72x40xf32, #tpu.memory_space<vmem>>, vector<1x40xf32>,
    %c0_7 = arith.constant 0 : index
    %c0_8 = arith.constant 0 : index
    %8 = vector.load %arg8[%c0_7, %c0_8] : memref<72x40xf32, #tpu.memory_space<vmem>>, vector<64x40xf32>
    %c2_9 = arith.constant 2 : index
    %c0_10 = arith.constant 0 : index
    %9 = vector.load %arg8[%c2_9, %c0_10] : memref<72x40xf32, #tpu.memory_space<vmem>>, vector<64x40xf32>
    %c0_11 = arith.constant 0 : index
    %c0_12 = arith.constant 0 : index
    %c0_13 = arith.constant 0 : index
    %10 = vector.load %arg2[%c0_11, %c0_12, %c0_13] : memref<6x40x40xf32, #tpu.memory_space<vmem>>, vector<1x40x40xf32>
    %11 = vector.shape_cast %10 : vector<1x40x40xf32> to vector<40x40xf32>
    %cst_14 = arith.constant dense<0.000000e+00> : vector<64x40xf32>
    %12 = tpu.matmul %8, %11, %cst_14 {dimension_numbers = #tpu.dot_dimension_numbers<[1], [0], [0], [1], [0, 0, 1, 1], [], []>} : vector<64x40xf32>, vector<40x40xf32>, vector<64x40xf32> -> vector<64x40xf32>
    %c1_15 = arith.constant 1 : index
    %c0_16 = arith.constant 0 : index
    %c0_17 = arith.constant 0 : index
    %13 = vector.load %arg2[%c1_15, %c0_16, %c0_17] : memref<6x40x40xf32, #tpu.memory_space<vmem>>, vector<1x40x40xf32>
    %14 = vector.shape_cast %13 : vector<1x40x40xf32> to vector<40x40xf32>
    %cst_18 = arith.constant dense<0.000000e+00> : vector<64x40xf32>
    %15 = tpu.matmul %0, %14, %cst_18 {dimension_numbers = #tpu.dot_dimension_numbers<[1], [0], [0], [1], [0, 0, 1, 1], [], []>} : vector<64x40xf32>, vector<40x40xf32>, vector<64x40xf32> -> vector<64x40xf32>
    %16 = arith.addf %12, %15 : vector<64x40xf32>
    %c2_19 = arith.constant 2 : index
    %c0_20 = arith.constant 0 : index
    %c0_21 = arith.constant 0 : index
    %17 = vector.load %arg2[%c2_19, %c0_20, %c0_21] : memref<6x40x40xf32, #tpu.memory_space<vmem>>, vector<1x40x40xf32>
    %18 = vector.shape_cast %17 : vector<1x40x40xf32> to vector<40x40xf32>
    %cst_22 = arith.constant dense<0.000000e+00> : vector<64x40xf32>
    %19 = tpu.matmul %9, %18, %cst_22 {dimension_numbers = #tpu.dot_dimension_numbers<[1], [0], [0], [1], [0, 0, 1, 1], [], []>} : vector<64x40xf32>, vector<40x40xf32>, vector<64x40xf32> -> vector<64x40xf32>
    %20 = arith.addf %16, %19 : vector<64x40xf32>
    %21 = vector.broadcast %1 : f32 to vector<64x40xf32>
    %22 = arith.addf %20, %21 : vector<64x40xf32>
    %cst_23 = arith.constant 3.000000e+00 : f32
    %23 = vector.broadcast %cst_23 : f32 to vector<64x40xf32>
    %24 = arith.addf %22, %23 : vector<64x40xf32>
    %cst_24 = arith.constant 0.000000e+00 : f32
    %cst_25 = arith.constant 6.000000e+00 : f32
    %25 = vector.broadcast %cst_24 : f32 to vector<64x40xf32>
    %26 = arith.maximumf %25, %24 : vector<64x40xf32>
    %27 = vector.broadcast %cst_25 : f32 to vector<64x40xf32>
    %28 = arith.minimumf %27, %26 : vector<64x40xf32>
    %29 = arith.mulf %22, %28 : vector<64x40xf32>
    %cst_26 = arith.constant 0.166666672 : f32
    %30 = vector.broadcast %cst_26 : f32 to vector<64x40xf32>
    %31 = arith.mulf %29, %30 : vector<64x40xf32>
    %32 = vector.broadcast %2 : f32 to vector<64x40xf32>
    %33 = arith.mulf %32, %31 : vector<64x40xf32>
    %34 = vector.broadcast %3 : f32 to vector<64x40xf32>
    %35 = arith.addf %33, %34 : vector<64x40xf32>
    %36 = arith.addf %35, %0 : vector<64x40xf32>
    %c0_27 = arith.constant 0 : index
    %c0_28 = arith.constant 0 : index
    %37 = vector.load %arg8[%c0_27, %c0_28] : memref<72x40xf32, #tpu.memory_space<vmem>>, vector<64x40xf32>
    tpu.vector_store %arg8[%c0_27, %c0_28], %36 {strides = array<i32>} : memref<72x40xf32, #tpu.memory_space<vmem>>, vector<64x40xf32>,
    %c0_29 = arith.constant 0 : index
    %c0_30 = arith.constant 0 : index
    %38 = tpu.strided_load %arg8[%c0_29, %c0_30] {strides = array<i32: 2, 1>} : memref<72x40xf32, #tpu.memory_space<vmem>>, vector<32x40xf32>
    %c1_31 = arith.constant 1 : index
    %c0_32 = arith.constant 0 : index
    %39 = tpu.strided_load %arg8[%c1_31, %c0_32] {strides = array<i32: 2, 1>} : memref<72x40xf32, #tpu.memory_space<vmem>>, vector<32x40xf32>
    %40 = arith.maximumf %38, %39 : vector<32x40xf32>
    %c3 = arith.constant 3 : index
    %41 = memref.load %arg3[%c3] : memref<6xf32, #tpu.memory_space<smem>>
    %c4 = arith.constant 4 : index
    %42 = memref.load %arg3[%c4] : memref<6xf32, #tpu.memory_space<smem>>
    %c5 = arith.constant 5 : index
    %43 = memref.load %arg3[%c5] : memref<6xf32, #tpu.memory_space<smem>>
    %cst_33 = arith.constant 0.000000e+00 : f32
    %44 = vector.broadcast %cst_33 : f32 to vector<1x40xf32>
    %c0_34 = arith.constant 0 : index
    %c0_35 = arith.constant 0 : index
    %45 = vector.load %arg8[%c0_34, %c0_35] : memref<72x40xf32, #tpu.memory_space<vmem>>, vector<1x40xf32>
    tpu.vector_store %arg8[%c0_34, %c0_35], %44 {strides = array<i32>} : memref<72x40xf32, #tpu.memory_space<vmem>>, vector<1x40xf32>,
    %c1_36 = arith.constant 1 : index
    %c0_37 = arith.constant 0 : index
    %46 = vector.load %arg8[%c1_36, %c0_37] : memref<72x40xf32, #tpu.memory_space<vmem>>, vector<32x40xf32>
    tpu.vector_store %arg8[%c1_36, %c0_37], %40 {strides = array<i32>} : memref<72x40xf32, #tpu.memory_space<vmem>>, vector<32x40xf32>,
    %c33 = arith.constant 33 : index
    %c0_38 = arith.constant 0 : index
    %47 = vector.load %arg8[%c33, %c0_38] : memref<72x40xf32, #tpu.memory_space<vmem>>, vector<1x40xf32>
    tpu.vector_store %arg8[%c33, %c0_38], %44 {strides = array<i32>} : memref<72x40xf32, #tpu.memory_space<vmem>>, vector<1x40xf32>,
    %c0_39 = arith.constant 0 : index
    %c0_40 = arith.constant 0 : index
    %48 = vector.load %arg8[%c0_39, %c0_40] : memref<72x40xf32, #tpu.memory_space<vmem>>, vector<32x40xf32>
    %c2_41 = arith.constant 2 : index
    %c0_42 = arith.constant 0 : index
    %49 = vector.load %arg8[%c2_41, %c0_42] : memref<72x40xf32, #tpu.memory_space<vmem>>, vector<32x40xf32>
    %c3_43 = arith.constant 3 : index
    %c0_44 = arith.constant 0 : index
    %c0_45 = arith.constant 0 : index
    %50 = vector.load %arg2[%c3_43, %c0_44, %c0_45] : memref<6x40x40xf32, #tpu.memory_space<vmem>>, vector<1x40x40xf32>
    %51 = vector.shape_cast %50 : vector<1x40x40xf32> to vector<40x40xf32>
    %cst_46 = arith.constant dense<0.000000e+00> : vector<32x40xf32>
    %52 = tpu.matmul %48, %51, %cst_46 {dimension_numbers = #tpu.dot_dimension_numbers<[1], [0], [0], [1], [0, 0, 1, 1], [], []>} : vector<32x40xf32>, vector<40x40xf32>, vector<32x40xf32> -> vector<32x40xf32>
    %c4_47 = arith.constant 4 : index
    %c0_48 = arith.constant 0 : index
    %c0_49 = arith.constant 0 : index
    %53 = vector.load %arg2[%c4_47, %c0_48, %c0_49] : memref<6x40x40xf32, #tpu.memory_space<vmem>>, vector<1x40x40xf32>
    %54 = vector.shape_cast %53 : vector<1x40x40xf32> to vector<40x40xf32>
    %cst_50 = arith.constant dense<0.000000e+00> : vector<32x40xf32>
    %55 = tpu.matmul %40, %54, %cst_50 {dimension_numbers = #tpu.dot_dimension_numbers<[1], [0], [0], [1], [0, 0, 1, 1], [], []>} : vector<32x40xf32>, vector<40x40xf32>, vector<32x40xf32> -> vector<32x40xf32>
    %56 = arith.addf %52, %55 : vector<32x40xf32>
    %c5_51 = arith.constant 5 : index
    %c0_52 = arith.constant 0 : index
    %c0_53 = arith.constant 0 : index
    %57 = vector.load %arg2[%c5_51, %c0_52, %c0_53] : memref<6x40x40xf32, #tpu.memory_space<vmem>>, vector<1x40x40xf32>
    %58 = vector.shape_cast %57 : vector<1x40x40xf32> to vector<40x40xf32>
    %cst_54 = arith.constant dense<0.000000e+00> : vector<32x40xf32>
    %59 = tpu.matmul %49, %58, %cst_54 {dimension_numbers = #tpu.dot_dimension_numbers<[1], [0], [0], [1], [0, 0, 1, 1], [], []>} : vector<32x40xf32>, vector<40x40xf32>, vector<32x40xf32> -> vector<32x40xf32>
    %60 = arith.addf %56, %59 : vector<32x40xf32>
    %61 = vector.broadcast %41 : f32 to vector<32x40xf32>
    %62 = arith.addf %60, %61 : vector<32x40xf32>
    %cst_55 = arith.constant 3.000000e+00 : f32
    %63 = vector.broadcast %cst_55 : f32 to vector<32x40xf32>
    %64 = arith.addf %62, %63 : vector<32x40xf32>
    %cst_56 = arith.constant 0.000000e+00 : f32
    %cst_57 = arith.constant 6.000000e+00 : f32
    %65 = vector.broadcast %cst_56 : f32 to vector<32x40xf32>
    %66 = arith.maximumf %65, %64 : vector<32x40xf32>
    %67 = vector.broadcast %cst_57 : f32 to vector<32x40xf32>
    %68 = arith.minimumf %67, %66 : vector<32x40xf32>
    %69 = arith.mulf %62, %68 : vector<32x40xf32>
    %cst_58 = arith.constant 0.166666672 : f32
    %70 = vector.broadcast %cst_58 : f32 to vector<32x40xf32>
    %71 = arith.mulf %69, %70 : vector<32x40xf32>
    %72 = vector.broadcast %42 : f32 to vector<32x40xf32>
    %73 = arith.mulf %72, %71 : vector<32x40xf32>
    %74 = vector.broadcast %43 : f32 to vector<32x40xf32>
    %75 = arith.addf %73, %74 : vector<32x40xf32>
    %76 = arith.addf %75, %40 : vector<32x40xf32>
    %c0_59 = arith.constant 0 : index
    %c0_60 = arith.constant 0 : index
    %77 = vector.load %arg8[%c0_59, %c0_60] : memref<72x40xf32, #tpu.memory_space<vmem>>, vector<32x40xf32>
    tpu.vector_store %arg8[%c0_59, %c0_60], %76 {strides = array<i32>} : memref<72x40xf32, #tpu.memory_space<vmem>>, vector<32x40xf32>,
    %c0_61 = arith.constant 0 : index
    %c0_62 = arith.constant 0 : index
    %78 = tpu.strided_load %arg8[%c0_61, %c0_62] {strides = array<i32: 2, 1>} : memref<72x40xf32, #tpu.memory_space<vmem>>, vector<16x40xf32>
    %c1_63 = arith.constant 1 : index
    %c0_64 = arith.constant 0 : index
    %79 = tpu.strided_load %arg8[%c1_63, %c0_64] {strides = array<i32: 2, 1>} : memref<72x40xf32, #tpu.memory_space<vmem>>, vector<16x40xf32>
    %80 = arith.maximumf %78, %79 : vector<16x40xf32>
    %c0_65 = arith.constant 0 : index
    %c0_66 = arith.constant 0 : index
    %81 = vector.load %arg8[%c0_65, %c0_66] : memref<72x40xf32, #tpu.memory_space<vmem>>, vector<16x40xf32>
    tpu.vector_store %arg8[%c0_65, %c0_66], %80 {strides = array<i32>} : memref<72x40xf32, #tpu.memory_space<vmem>>, vector<16x40xf32>,
    %c0_67 = arith.constant 0 : index
    %c0_68 = arith.constant 0 : index
    %82 = vector.load %arg8[%c0_67, %c0_68] : memref<72x40xf32, #tpu.memory_space<vmem>>, vector<16x5xf32>
    %c0_69 = arith.constant 0 : index
    %c5_70 = arith.constant 5 : index
    %83 = vector.load %arg8[%c0_69, %c5_70] : memref<72x40xf32, #tpu.memory_space<vmem>>, vector<16x5xf32>
    %c0_71 = arith.constant 0 : index
    %c10 = arith.constant 10 : index
    %84 = vector.load %arg8[%c0_71, %c10] : memref<72x40xf32, #tpu.memory_space<vmem>>, vector<16x5xf32>
    %c0_72 = arith.constant 0 : index
    %c15 = arith.constant 15 : index
    %85 = vector.load %arg8[%c0_72, %c15] : memref<72x40xf32, #tpu.memory_space<vmem>>, vector<16x5xf32>
    %c0_73 = arith.constant 0 : index
    %c20 = arith.constant 20 : index
    %86 = vector.load %arg8[%c0_73, %c20] : memref<72x40xf32, #tpu.memory_space<vmem>>, vector<16x5xf32>
    %c0_74 = arith.constant 0 : index
    %c25 = arith.constant 25 : index
    %87 = vector.load %arg8[%c0_74, %c25] : memref<72x40xf32, #tpu.memory_space<vmem>>, vector<16x5xf32>
    %c0_75 = arith.constant 0 : index
    %c30 = arith.constant 30 : index
    %88 = vector.load %arg8[%c0_75, %c30] : memref<72x40xf32, #tpu.memory_space<vmem>>, vector<16x5xf32>
    %c0_76 = arith.constant 0 : index
    %c35 = arith.constant 35 : index
    %89 = vector.load %arg8[%c0_76, %c35] : memref<72x40xf32, #tpu.memory_space<vmem>>, vector<16x5xf32>
    %90 = tpu.concatenate %82, %83, %84, %85, %86, %87, %88, %89 in 0 : vector<16x5xf32>, vector<16x5xf32>, vector<16x5xf32>, vector<16x5xf32>, vector<16x5xf32>, vector<16x5xf32>, vector<16x5xf32>, vector<16x5xf32> -> vector<128x5xf32>
    %c112 = arith.constant 112 : index
    %c0_77 = arith.constant 0 : index
    %91 = vector.load %arg5[%c112, %c0_77] : memref<120x64xf32, #tpu.memory_space<vmem>>, vector<5x16xf32>
    %cst_78 = arith.constant dense<0.000000e+00> : vector<128x16xf32>
    %92 = tpu.matmul %90, %91, %cst_78 {dimension_numbers = #tpu.dot_dimension_numbers<[1], [0], [0], [1], [0, 0, 1, 1], [], []>} : vector<128x5xf32>, vector<5x16xf32>, vector<128x16xf32> -> vector<128x16xf32>
    %c0_79 = arith.constant 0 : index
    %c0_80 = arith.constant 0 : index
    %93 = vector.load %arg4[%c0_79, %c0_80] : memref<16x128xf32, #tpu.memory_space<vmem>>, vector<1x16xf32>
    %94 = vector.broadcast %93 : vector<1x16xf32> to vector<128x16xf32>
    %95 = arith.addf %92, %94 : vector<128x16xf32>
    %c1_81 = arith.constant 1 : index
    %c0_82 = arith.constant 0 : index
    %96 = vector.load %arg4[%c1_81, %c0_82] : memref<16x128xf32, #tpu.memory_space<vmem>>, vector<1x16xf32>
    %c2_83 = arith.constant 2 : index
    %c0_84 = arith.constant 0 : index
    %97 = vector.load %arg4[%c2_83, %c0_84] : memref<16x128xf32, #tpu.memory_space<vmem>>, vector<1x16xf32>
    %cst_85 = arith.constant dense<0.000000e+00> : vector<128xf32>
    %98 = vector.multi_reduction <add>, %95, %cst_85 [1] : vector<128x16xf32> to vector<128xf32>
    %99 = vector.shape_cast %98 : vector<128xf32> to vector<128x1xf32>
    %cst_86 = arith.constant 1.600000e+01 : f32
    %100 = vector.broadcast %cst_86 : f32 to vector<128x1xf32>
    %101 = arith.divf %99, %100 : vector<128x1xf32>
    %102 = vector.broadcast %101 : vector<128x1xf32> to vector<128x16xf32>
    %103 = arith.subf %95, %102 : vector<128x16xf32>
    %104 = arith.mulf %103, %103 : vector<128x16xf32>
    %cst_87 = arith.constant dense<0.000000e+00> : vector<128xf32>
    %105 = vector.multi_reduction <add>, %104, %cst_87 [1] : vector<128x16xf32> to vector<128xf32>
    %106 = vector.shape_cast %105 : vector<128xf32> to vector<128x1xf32>
    %cst_88 = arith.constant 1.600000e+01 : f32
    %107 = vector.broadcast %cst_88 : f32 to vector<128x1xf32>
    %108 = arith.divf %106, %107 : vector<128x1xf32>
    %109 = vector.broadcast %101 : vector<128x1xf32> to vector<128x16xf32>
    %110 = arith.subf %95, %109 : vector<128x16xf32>
    %cst_89 = arith.constant 9.99999974E-6 : f32
    %111 = vector.broadcast %cst_89 : f32 to vector<128x1xf32>
    %112 = arith.addf %108, %111 : vector<128x1xf32>
    %113 = math.rsqrt %112 : vector<128x1xf32>
    %114 = vector.broadcast %113 : vector<128x1xf32> to vector<128x16xf32>
    %115 = arith.mulf %110, %114 : vector<128x16xf32>
    %116 = vector.broadcast %96 : vector<1x16xf32> to vector<128x16xf32>
    %117 = arith.mulf %115, %116 : vector<128x16xf32>
    %118 = vector.broadcast %97 : vector<1x16xf32> to vector<128x16xf32>
    %119 = arith.addf %117, %118 : vector<128x16xf32>
    %c0_90 = arith.constant 0 : index
    %c0_91 = arith.constant 0 : index
    %120 = vector.load %arg5[%c0_90, %c0_91] : memref<120x64xf32, #tpu.memory_space<vmem>>, vector<16x48xf32>
    %cst_92 = arith.constant dense<0.000000e+00> : vector<128x48xf32>
    %121 = tpu.matmul %119, %120, %cst_92 {dimension_numbers = #tpu.dot_dimension_numbers<[1], [0], [0], [1], [0, 0, 1, 1], [], []>} : vector<128x16xf32>, vector<16x48xf32>, vector<128x48xf32> -> vector<128x48xf32>
    %c3_93 = arith.constant 3 : index
    %c0_94 = arith.constant 0 : index
    %122 = vector.load %arg4[%c3_93, %c0_94] : memref<16x128xf32, #tpu.memory_space<vmem>>, vector<1x48xf32>
    %123 = vector.broadcast %122 : vector<1x48xf32> to vector<128x48xf32>
    %124 = arith.addf %121, %123 : vector<128x48xf32>
    %125 = vector.shape_cast %124 : vector<128x48xf32> to vector<8x16x48xf32>
    %cst_95 = arith.constant 0.000000e+00 : f32
    %126 = vector.broadcast %cst_95 : f32 to vector<128x16xf32>
    %127 = vector.extract_strided_slice %125 {offsets = [0, 0, 0], sizes = [8, 16, 4], strides = [1, 1, 1]} : vector<8x16x48xf32> to vector<8x16x4xf32>
    %128 = vector.extract_strided_slice %125 {offsets = [0, 0, 16], sizes = [8, 16, 4], strides = [1, 1, 1]} : vector<8x16x48xf32> to vector<8x16x4xf32>
    %129 = vector.extract_strided_slice %125 {offsets = [0, 0, 32], sizes = [8, 16, 4], strides = [1, 1, 1]} : vector<8x16x48xf32> to vector<8x16x4xf32>
    "tpu.trace_start"() <{level = 10 : i32, message = "bqd,bkd->bqk"}> : () -> ()
    %cst_96 = arith.constant dense<0.000000e+00> : vector<8x16x16xf32>
    %130 = tpu.matmul %127, %128, %cst_96 {dimension_numbers = #tpu.dot_dimension_numbers<[2], [2], [1], [1], [0, 0, 0, 1, 1, 1], [0], [0]>} : vector<8x16x4xf32>, vector<8x16x4xf32>, vector<8x16x16xf32> -> vector<8x16x16xf32>
    "tpu.trace_stop"() : () -> ()
    %cst_97 = arith.constant dense<0xFF800000> : vector<8x16xf32>
    %131 = vector.multi_reduction <maximumf>, %130, %cst_97 [2] : vector<8x16x16xf32> to vector<8x16xf32>
    %132 = vector.shape_cast %131 : vector<8x16xf32> to vector<8x16x1xf32>
    %133 = vector.broadcast %132 : vector<8x16x1xf32> to vector<8x16x16xf32>
    %134 = arith.subf %130, %133 : vector<8x16x16xf32>
    %135 = math.exp %134 : vector<8x16x16xf32>
    %cst_98 = arith.constant dense<0.000000e+00> : vector<8x16xf32>
    %136 = vector.multi_reduction <add>, %135, %cst_98 [2] : vector<8x16x16xf32> to vector<8x16xf32>
    %137 = vector.shape_cast %136 : vector<8x16xf32> to vector<8x16x1xf32>
    %138 = tpu.reciprocal %137 {approx = true} : vector<8x16x1xf32> -> vector<8x16x1xf32>
    %139 = arith.mulf %137, %138 : vector<8x16x1xf32>
    %cst_99 = arith.constant 2.000000e+00 : f32
    %140 = vector.broadcast %cst_99 : f32 to vector<8x16x1xf32>
    %141 = arith.subf %140, %139 : vector<8x16x1xf32>
    %142 = arith.mulf %138, %141 : vector<8x16x1xf32>
    %143 = vector.broadcast %142 : vector<8x16x1xf32> to vector<8x16x16xf32>
    %144 = arith.mulf %135, %143 : vector<8x16x16xf32>
    "tpu.trace_start"() <{level = 10 : i32, message = "bqk,bkd->bqd"}> : () -> ()
    %cst_100 = arith.constant dense<0.000000e+00> : vector<8x16x4xf32>
    %145 = tpu.matmul %144, %129, %cst_100 {dimension_numbers = #tpu.dot_dimension_numbers<[2], [1], [1], [2], [0, 0, 0, 1, 1, 2], [0], [0]>} : vector<8x16x16xf32>, vector<8x16x4xf32>, vector<8x16x4xf32> -> vector<8x16x4xf32>
    "tpu.trace_stop"() : () -> ()
    %146 = vector.shape_cast %145 : vector<8x16x4xf32> to vector<128x4xf32>
    %c16 = arith.constant 16 : index
    %c0_101 = arith.constant 0 : index
    %147 = vector.load %arg5[%c16, %c0_101] : memref<120x64xf32, #tpu.memory_space<vmem>>, vector<4x16xf32>
    %cst_102 = arith.constant dense<0.000000e+00> : vector<128x16xf32>
    %148 = tpu.matmul %146, %147, %cst_102 {dimension_numbers = #tpu.dot_dimension_numbers<[1], [0], [0], [1], [0, 0, 1, 1], [], []>} : vector<128x4xf32>, vector<4x16xf32>, vector<128x16xf32> -> vector<128x16xf32>
    %149 = arith.addf %126, %148 : vector<128x16xf32>
    %150 = vector.extract_strided_slice %125 {offsets = [0, 0, 4], sizes = [8, 16, 4], strides = [1, 1, 1]} : vector<8x16x48xf32> to vector<8x16x4xf32>
    %151 = vector.extract_strided_slice %125 {offsets = [0, 0, 20], sizes = [8, 16, 4], strides = [1, 1, 1]} : vector<8x16x48xf32> to vector<8x16x4xf32>
    %152 = vector.extract_strided_slice %125 {offsets = [0, 0, 36], sizes = [8, 16, 4], strides = [1, 1, 1]} : vector<8x16x48xf32> to vector<8x16x4xf32>
    "tpu.trace_start"() <{level = 10 : i32, message = "bqd,bkd->bqk"}> : () -> ()
    %cst_103 = arith.constant dense<0.000000e+00> : vector<8x16x16xf32>
    %153 = tpu.matmul %150, %151, %cst_103 {dimension_numbers = #tpu.dot_dimension_numbers<[2], [2], [1], [1], [0, 0, 0, 1, 1, 1], [0], [0]>} : vector<8x16x4xf32>, vector<8x16x4xf32>, vector<8x16x16xf32> -> vector<8x16x16xf32>
    "tpu.trace_stop"() : () -> ()
    %cst_104 = arith.constant dense<0xFF800000> : vector<8x16xf32>
    %154 = vector.multi_reduction <maximumf>, %153, %cst_104 [2] : vector<8x16x16xf32> to vector<8x16xf32>
    %155 = vector.shape_cast %154 : vector<8x16xf32> to vector<8x16x1xf32>
    %156 = vector.broadcast %155 : vector<8x16x1xf32> to vector<8x16x16xf32>
    %157 = arith.subf %153, %156 : vector<8x16x16xf32>
    %158 = math.exp %157 : vector<8x16x16xf32>
    %cst_105 = arith.constant dense<0.000000e+00> : vector<8x16xf32>
    %159 = vector.multi_reduction <add>, %158, %cst_105 [2] : vector<8x16x16xf32> to vector<8x16xf32>
    %160 = vector.shape_cast %159 : vector<8x16xf32> to vector<8x16x1xf32>
    %161 = tpu.reciprocal %160 {approx = true} : vector<8x16x1xf32> -> vector<8x16x1xf32>
    %162 = arith.mulf %160, %161 : vector<8x16x1xf32>
    %cst_106 = arith.constant 2.000000e+00 : f32
    %163 = vector.broadcast %cst_106 : f32 to vector<8x16x1xf32>
    %164 = arith.subf %163, %162 : vector<8x16x1xf32>
    %165 = arith.mulf %161, %164 : vector<8x16x1xf32>
    %166 = vector.broadcast %165 : vector<8x16x1xf32> to vector<8x16x16xf32>
    %167 = arith.mulf %158, %166 : vector<8x16x16xf32>
    "tpu.trace_start"() <{level = 10 : i32, message = "bqk,bkd->bqd"}> : () -> ()
    %cst_107 = arith.constant dense<0.000000e+00> : vector<8x16x4xf32>
    %168 = tpu.matmul %167, %152, %cst_107 {dimension_numbers = #tpu.dot_dimension_numbers<[2], [1], [1], [2], [0, 0, 0, 1, 1, 2], [0], [0]>} : vector<8x16x16xf32>, vector<8x16x4xf32>, vector<8x16x4xf32> -> vector<8x16x4xf32>
    "tpu.trace_stop"() : () -> ()
    %169 = vector.shape_cast %168 : vector<8x16x4xf32> to vector<128x4xf32>
    %c20_108 = arith.constant 20 : index
    %c0_109 = arith.constant 0 : index
    %170 = vector.load %arg5[%c20_108, %c0_109] : memref<120x64xf32, #tpu.memory_space<vmem>>, vector<4x16xf32>
    %cst_110 = arith.constant dense<0.000000e+00> : vector<128x16xf32>
    %171 = tpu.matmul %169, %170, %cst_110 {dimension_numbers = #tpu.dot_dimension_numbers<[1], [0], [0], [1], [0, 0, 1, 1], [], []>} : vector<128x4xf32>, vector<4x16xf32>, vector<128x16xf32> -> vector<128x16xf32>
    %172 = arith.addf %149, %171 : vector<128x16xf32>
    %173 = vector.extract_strided_slice %125 {offsets = [0, 0, 8], sizes = [8, 16, 4], strides = [1, 1, 1]} : vector<8x16x48xf32> to vector<8x16x4xf32>
    %174 = vector.extract_strided_slice %125 {offsets = [0, 0, 24], sizes = [8, 16, 4], strides = [1, 1, 1]} : vector<8x16x48xf32> to vector<8x16x4xf32>
    %175 = vector.extract_strided_slice %125 {offsets = [0, 0, 40], sizes = [8, 16, 4], strides = [1, 1, 1]} : vector<8x16x48xf32> to vector<8x16x4xf32>
    "tpu.trace_start"() <{level = 10 : i32, message = "bqd,bkd->bqk"}> : () -> ()
    %cst_111 = arith.constant dense<0.000000e+00> : vector<8x16x16xf32>
    %176 = tpu.matmul %173, %174, %cst_111 {dimension_numbers = #tpu.dot_dimension_numbers<[2], [2], [1], [1], [0, 0, 0, 1, 1, 1], [0], [0]>} : vector<8x16x4xf32>, vector<8x16x4xf32>, vector<8x16x16xf32> -> vector<8x16x16xf32>
    "tpu.trace_stop"() : () -> ()
    %cst_112 = arith.constant dense<0xFF800000> : vector<8x16xf32>
    %177 = vector.multi_reduction <maximumf>, %176, %cst_112 [2] : vector<8x16x16xf32> to vector<8x16xf32>
    %178 = vector.shape_cast %177 : vector<8x16xf32> to vector<8x16x1xf32>
    %179 = vector.broadcast %178 : vector<8x16x1xf32> to vector<8x16x16xf32>
    %180 = arith.subf %176, %179 : vector<8x16x16xf32>
    %181 = math.exp %180 : vector<8x16x16xf32>
    %cst_113 = arith.constant dense<0.000000e+00> : vector<8x16xf32>
    %182 = vector.multi_reduction <add>, %181, %cst_113 [2] : vector<8x16x16xf32> to vector<8x16xf32>
    %183 = vector.shape_cast %182 : vector<8x16xf32> to vector<8x16x1xf32>
    %184 = tpu.reciprocal %183 {approx = true} : vector<8x16x1xf32> -> vector<8x16x1xf32>
    %185 = arith.mulf %183, %184 : vector<8x16x1xf32>
    %cst_114 = arith.constant 2.000000e+00 : f32
    %186 = vector.broadcast %cst_114 : f32 to vector<8x16x1xf32>
    %187 = arith.subf %186, %185 : vector<8x16x1xf32>
    %188 = arith.mulf %184, %187 : vector<8x16x1xf32>
    %189 = vector.broadcast %188 : vector<8x16x1xf32> to vector<8x16x16xf32>
    %190 = arith.mulf %181, %189 : vector<8x16x16xf32>
    "tpu.trace_start"() <{level = 10 : i32, message = "bqk,bkd->bqd"}> : () -> ()
    %cst_115 = arith.constant dense<0.000000e+00> : vector<8x16x4xf32>
    %191 = tpu.matmul %190, %175, %cst_115 {dimension_numbers = #tpu.dot_dimension_numbers<[2], [1], [1], [2], [0, 0, 0, 1, 1, 2], [0], [0]>} : vector<8x16x16xf32>, vector<8x16x4xf32>, vector<8x16x4xf32> -> vector<8x16x4xf32>
    "tpu.trace_stop"() : () -> ()
    %192 = vector.shape_cast %191 : vector<8x16x4xf32> to vector<128x4xf32>
    %c24 = arith.constant 24 : index
    %c0_116 = arith.constant 0 : index
    %193 = vector.load %arg5[%c24, %c0_116] : memref<120x64xf32, #tpu.memory_space<vmem>>, vector<4x16xf32>
    %cst_117 = arith.constant dense<0.000000e+00> : vector<128x16xf32>
    %194 = tpu.matmul %192, %193, %cst_117 {dimension_numbers = #tpu.dot_dimension_numbers<[1], [0], [0], [1], [0, 0, 1, 1], [], []>} : vector<128x4xf32>, vector<4x16xf32>, vector<128x16xf32> -> vector<128x16xf32>
    %195 = arith.addf %172, %194 : vector<128x16xf32>
    %196 = vector.extract_strided_slice %125 {offsets = [0, 0, 12], sizes = [8, 16, 4], strides = [1, 1, 1]} : vector<8x16x48xf32> to vector<8x16x4xf32>
    %197 = vector.extract_strided_slice %125 {offsets = [0, 0, 28], sizes = [8, 16, 4], strides = [1, 1, 1]} : vector<8x16x48xf32> to vector<8x16x4xf32>
    %198 = vector.extract_strided_slice %125 {offsets = [0, 0, 44], sizes = [8, 16, 4], strides = [1, 1, 1]} : vector<8x16x48xf32> to vector<8x16x4xf32>
    "tpu.trace_start"() <{level = 10 : i32, message = "bqd,bkd->bqk"}> : () -> ()
    %cst_118 = arith.constant dense<0.000000e+00> : vector<8x16x16xf32>
    %199 = tpu.matmul %196, %197, %cst_118 {dimension_numbers = #tpu.dot_dimension_numbers<[2], [2], [1], [1], [0, 0, 0, 1, 1, 1], [0], [0]>} : vector<8x16x4xf32>, vector<8x16x4xf32>, vector<8x16x16xf32> -> vector<8x16x16xf32>
    "tpu.trace_stop"() : () -> ()
    %cst_119 = arith.constant dense<0xFF800000> : vector<8x16xf32>
    %200 = vector.multi_reduction <maximumf>, %199, %cst_119 [2] : vector<8x16x16xf32> to vector<8x16xf32>
    %201 = vector.shape_cast %200 : vector<8x16xf32> to vector<8x16x1xf32>
    %202 = vector.broadcast %201 : vector<8x16x1xf32> to vector<8x16x16xf32>
    %203 = arith.subf %199, %202 : vector<8x16x16xf32>
    %204 = math.exp %203 : vector<8x16x16xf32>
    %cst_120 = arith.constant dense<0.000000e+00> : vector<8x16xf32>
    %205 = vector.multi_reduction <add>, %204, %cst_120 [2] : vector<8x16x16xf32> to vector<8x16xf32>
    %206 = vector.shape_cast %205 : vector<8x16xf32> to vector<8x16x1xf32>
    %207 = tpu.reciprocal %206 {approx = true} : vector<8x16x1xf32> -> vector<8x16x1xf32>
    %208 = arith.mulf %206, %207 : vector<8x16x1xf32>
    %cst_121 = arith.constant 2.000000e+00 : f32
    %209 = vector.broadcast %cst_121 : f32 to vector<8x16x1xf32>
    %210 = arith.subf %209, %208 : vector<8x16x1xf32>
    %211 = arith.mulf %207, %210 : vector<8x16x1xf32>
    %212 = vector.broadcast %211 : vector<8x16x1xf32> to vector<8x16x16xf32>
    %213 = arith.mulf %204, %212 : vector<8x16x16xf32>
    "tpu.trace_start"() <{level = 10 : i32, message = "bqk,bkd->bqd"}> : () -> ()
    %cst_122 = arith.constant dense<0.000000e+00> : vector<8x16x4xf32>
    %214 = tpu.matmul %213, %198, %cst_122 {dimension_numbers = #tpu.dot_dimension_numbers<[2], [1], [1], [2], [0, 0, 0, 1, 1, 2], [0], [0]>} : vector<8x16x16xf32>, vector<8x16x4xf32>, vector<8x16x4xf32> -> vector<8x16x4xf32>
    "tpu.trace_stop"() : () -> ()
    %215 = vector.shape_cast %214 : vector<8x16x4xf32> to vector<128x4xf32>
    %c28 = arith.constant 28 : index
    %c0_123 = arith.constant 0 : index
    %216 = vector.load %arg5[%c28, %c0_123] : memref<120x64xf32, #tpu.memory_space<vmem>>, vector<4x16xf32>
    %cst_124 = arith.constant dense<0.000000e+00> : vector<128x16xf32>
    %217 = tpu.matmul %215, %216, %cst_124 {dimension_numbers = #tpu.dot_dimension_numbers<[1], [0], [0], [1], [0, 0, 1, 1], [], []>} : vector<128x4xf32>, vector<4x16xf32>, vector<128x16xf32> -> vector<128x16xf32>
    %218 = arith.addf %195, %217 : vector<128x16xf32>
    %219 = arith.addf %95, %218 : vector<128x16xf32>
    %c4_125 = arith.constant 4 : index
    %c0_126 = arith.constant 0 : index
    %220 = vector.load %arg4[%c4_125, %c0_126] : memref<16x128xf32, #tpu.memory_space<vmem>>, vector<1x16xf32>
    %221 = vector.broadcast %220 : vector<1x16xf32> to vector<128x16xf32>
    %222 = arith.addf %219, %221 : vector<128x16xf32>
    %c5_127 = arith.constant 5 : index
    %c0_128 = arith.constant 0 : index
    %223 = vector.load %arg4[%c5_127, %c0_128] : memref<16x128xf32, #tpu.memory_space<vmem>>, vector<1x16xf32>
    %c6 = arith.constant 6 : index
    %c0_129 = arith.constant 0 : index
    %224 = vector.load %arg4[%c6, %c0_129] : memref<16x128xf32, #tpu.memory_space<vmem>>, vector<1x16xf32>
    %cst_130 = arith.constant dense<0.000000e+00> : vector<128xf32>
    %225 = vector.multi_reduction <add>, %222, %cst_130 [1] : vector<128x16xf32> to vector<128xf32>
    %226 = vector.shape_cast %225 : vector<128xf32> to vector<128x1xf32>
    %cst_131 = arith.constant 1.600000e+01 : f32
    %227 = vector.broadcast %cst_131 : f32 to vector<128x1xf32>
    %228 = arith.divf %226, %227 : vector<128x1xf32>
    %229 = vector.broadcast %228 : vector<128x1xf32> to vector<128x16xf32>
    %230 = arith.subf %222, %229 : vector<128x16xf32>
    %231 = arith.mulf %230, %230 : vector<128x16xf32>
    %cst_132 = arith.constant dense<0.000000e+00> : vector<128xf32>
    %232 = vector.multi_reduction <add>, %231, %cst_132 [1] : vector<128x16xf32> to vector<128xf32>
    %233 = vector.shape_cast %232 : vector<128xf32> to vector<128x1xf32>
    %cst_133 = arith.constant 1.600000e+01 : f32
    %234 = vector.broadcast %cst_133 : f32 to vector<128x1xf32>
    %235 = arith.divf %233, %234 : vector<128x1xf32>
    %236 = vector.broadcast %228 : vector<128x1xf32> to vector<128x16xf32>
    %237 = arith.subf %222, %236 : vector<128x16xf32>
    %cst_134 = arith.constant 9.99999974E-6 : f32
    %238 = vector.broadcast %cst_134 : f32 to vector<128x1xf32>
    %239 = arith.addf %235, %238 : vector<128x1xf32>
    %240 = math.rsqrt %239 : vector<128x1xf32>
    %241 = vector.broadcast %240 : vector<128x1xf32> to vector<128x16xf32>
    %242 = arith.mulf %237, %241 : vector<128x16xf32>
    %243 = vector.broadcast %223 : vector<1x16xf32> to vector<128x16xf32>
    %244 = arith.mulf %242, %243 : vector<128x16xf32>
    %245 = vector.broadcast %224 : vector<1x16xf32> to vector<128x16xf32>
    %246 = arith.addf %244, %245 : vector<128x16xf32>
    %c32 = arith.constant 32 : index
    %c0_135 = arith.constant 0 : index
    %247 = vector.load %arg5[%c32, %c0_135] : memref<120x64xf32, #tpu.memory_space<vmem>>, vector<16x64xf32>
    %cst_136 = arith.constant dense<0.000000e+00> : vector<128x64xf32>
    %248 = tpu.matmul %246, %247, %cst_136 {dimension_numbers = #tpu.dot_dimension_numbers<[1], [0], [0], [1], [0, 0, 1, 1], [], []>} : vector<128x16xf32>, vector<16x64xf32>, vector<128x64xf32> -> vector<128x64xf32>
    %c7 = arith.constant 7 : index
    %c0_137 = arith.constant 0 : index
    %249 = vector.load %arg4[%c7, %c0_137] : memref<16x128xf32, #tpu.memory_space<vmem>>, vector<1x64xf32>
    %250 = vector.broadcast %249 : vector<1x64xf32> to vector<128x64xf32>
    %251 = arith.addf %248, %250 : vector<128x64xf32>
    %cst_138 = arith.constant 5.000000e-01 : f32
    %252 = vector.broadcast %cst_138 : f32 to vector<128x64xf32>
    %253 = arith.mulf %252, %251 : vector<128x64xf32>
    %cst_139 = arith.constant 0.707106769 : f32
    %254 = vector.broadcast %cst_139 : f32 to vector<128x64xf32>
    %255 = arith.mulf %251, %254 : vector<128x64xf32>
    %256 = math.absf %255 : vector<128x64xf32>
    %cst_140 = arith.constant 0.327591091 : f32
    %257 = vector.broadcast %cst_140 : f32 to vector<128x64xf32>
    %258 = arith.mulf %257, %256 : vector<128x64xf32>
    %cst_141 = arith.constant 1.000000e+00 : f32
    %259 = vector.broadcast %cst_141 : f32 to vector<128x64xf32>
    %260 = arith.addf %259, %258 : vector<128x64xf32>
    %261 = tpu.reciprocal %260 {approx = true} : vector<128x64xf32> -> vector<128x64xf32>
    %262 = arith.mulf %260, %261 : vector<128x64xf32>
    %cst_142 = arith.constant 2.000000e+00 : f32
    %263 = vector.broadcast %cst_142 : f32 to vector<128x64xf32>
    %264 = arith.subf %263, %262 : vector<128x64xf32>
    %265 = arith.mulf %261, %264 : vector<128x64xf32>
    %cst_143 = arith.constant 1.06140542 : f32
    %266 = vector.broadcast %cst_143 : f32 to vector<128x64xf32>
    %267 = arith.mulf %266, %265 : vector<128x64xf32>
    %cst_144 = arith.constant -1.45315206 : f32
    %268 = vector.broadcast %cst_144 : f32 to vector<128x64xf32>
    %269 = arith.addf %267, %268 : vector<128x64xf32>
    %270 = arith.mulf %269, %265 : vector<128x64xf32>
    %cst_145 = arith.constant 1.42141378 : f32
    %271 = vector.broadcast %cst_145 : f32 to vector<128x64xf32>
    %272 = arith.addf %270, %271 : vector<128x64xf32>
    %273 = arith.mulf %272, %265 : vector<128x64xf32>
    %cst_146 = arith.constant -0.284496725 : f32
    %274 = vector.broadcast %cst_146 : f32 to vector<128x64xf32>
    %275 = arith.addf %273, %274 : vector<128x64xf32>
    %276 = arith.mulf %275, %265 : vector<128x64xf32>
    %cst_147 = arith.constant 0.254829586 : f32
    %277 = vector.broadcast %cst_147 : f32 to vector<128x64xf32>
    %278 = arith.addf %276, %277 : vector<128x64xf32>
    %279 = arith.mulf %278, %265 : vector<128x64xf32>
    %cst_148 = arith.constant 0.000000e+00 : f32
    %280 = vector.broadcast %cst_148 : f32 to vector<128x64xf32>
    %281 = arith.subf %280, %256 : vector<128x64xf32>
    %282 = arith.mulf %281, %256 : vector<128x64xf32>
    %283 = math.exp %282 : vector<128x64xf32>
    %284 = arith.mulf %279, %283 : vector<128x64xf32>
    %cst_149 = arith.constant 1.000000e+00 : f32
    %285 = vector.broadcast %cst_149 : f32 to vector<128x64xf32>
    %286 = arith.subf %285, %284 : vector<128x64xf32>
    %cst_150 = arith.constant 0.000000e+00 : f32
    %287 = vector.broadcast %cst_150 : f32 to vector<128x64xf32>
    %288 = arith.cmpf oge, %255, %287 : vector<128x64xf32>
    %cst_151 = arith.constant 0.000000e+00 : f32
    %289 = vector.broadcast %cst_151 : f32 to vector<128x64xf32>
    %290 = arith.subf %289, %286 : vector<128x64xf32>
    %291 = arith.select %288, %286, %290 : vector<128x64xi1>, vector<128x64xf32>
    %cst_152 = arith.constant 1.000000e+00 : f32
    %292 = vector.broadcast %cst_152 : f32 to vector<128x64xf32>
    %293 = arith.addf %292, %291 : vector<128x64xf32>
    %294 = arith.mulf %253, %293 : vector<128x64xf32>
    %c48 = arith.constant 48 : index
    %c0_153 = arith.constant 0 : index
    %295 = vector.load %arg5[%c48, %c0_153] : memref<120x64xf32, #tpu.memory_space<vmem>>, vector<64x16xf32>
    %cst_154 = arith.constant dense<0.000000e+00> : vector<128x16xf32>
    %296 = tpu.matmul %294, %295, %cst_154 {dimension_numbers = #tpu.dot_dimension_numbers<[1], [0], [0], [1], [0, 0, 1, 1], [], []>} : vector<128x64xf32>, vector<64x16xf32>, vector<128x16xf32> -> vector<128x16xf32>
    %c8 = arith.constant 8 : index
    %c0_155 = arith.constant 0 : index
    %297 = vector.load %arg4[%c8, %c0_155] : memref<16x128xf32, #tpu.memory_space<vmem>>, vector<1x16xf32>
    %298 = vector.broadcast %297 : vector<1x16xf32> to vector<128x16xf32>
    %299 = arith.addf %296, %298 : vector<128x16xf32>
    %300 = arith.addf %222, %299 : vector<128x16xf32>
    %c0_156 = arith.constant 0 : index
    %c0_157 = arith.constant 0 : index
    %301 = vector.load %arg9[%c0_156, %c0_157] : memref<128x16xf32, #tpu.memory_space<vmem>>, vector<128x16xf32>
    tpu.vector_store %arg9[%c0_156, %c0_157], %300 {strides = array<i32>} : memref<128x16xf32, #tpu.memory_space<vmem>>, vector<128x16xf32>,
    %cst_158 = arith.constant 0.000000e+00 : f32
    %302 = vector.broadcast %cst_158 : f32 to vector<8x128xf32>
    %c0_159 = arith.constant 0 : index
    %c0_160 = arith.constant 0 : index
    %303 = tpu.strided_load %arg9[%c0_159, %c0_160] {strides = array<i32: 16, 1>} : memref<128x16xf32, #tpu.memory_space<vmem>>, vector<8x16xf32>
    %c0_161 = arith.constant 0 : index
    %c0_162 = arith.constant 0 : index
    %304 = vector.load %arg6[%c0_161, %c0_162] : memref<256x128xf32, #tpu.memory_space<vmem>>, vector<16x128xf32>
    %cst_163 = arith.constant dense<0.000000e+00> : vector<8x128xf32>
    %305 = tpu.matmul %303, %304, %cst_163 {dimension_numbers = #tpu.dot_dimension_numbers<[1], [0], [0], [1], [0, 0, 1, 1], [], []>} : vector<8x16xf32>, vector<16x128xf32>, vector<8x128xf32> -> vector<8x128xf32>
    %306 = arith.addf %302, %305 : vector<8x128xf32>
    %c1_164 = arith.constant 1 : index
    %c0_165 = arith.constant 0 : index
    %307 = tpu.strided_load %arg9[%c1_164, %c0_165] {strides = array<i32: 16, 1>} : memref<128x16xf32, #tpu.memory_space<vmem>>, vector<8x16xf32>
    %c16_166 = arith.constant 16 : index
    %c0_167 = arith.constant 0 : index
    %308 = vector.load %arg6[%c16_166, %c0_167] : memref<256x128xf32, #tpu.memory_space<vmem>>, vector<16x128xf32>
    %cst_168 = arith.constant dense<0.000000e+00> : vector<8x128xf32>
    %309 = tpu.matmul %307, %308, %cst_168 {dimension_numbers = #tpu.dot_dimension_numbers<[1], [0], [0], [1], [0, 0, 1, 1], [], []>} : vector<8x16xf32>, vector<16x128xf32>, vector<8x128xf32> -> vector<8x128xf32>
    %310 = arith.addf %306, %309 : vector<8x128xf32>
    %c2_169 = arith.constant 2 : index
    %c0_170 = arith.constant 0 : index
    %311 = tpu.strided_load %arg9[%c2_169, %c0_170] {strides = array<i32: 16, 1>} : memref<128x16xf32, #tpu.memory_space<vmem>>, vector<8x16xf32>
    %c32_171 = arith.constant 32 : index
    %c0_172 = arith.constant 0 : index
    %312 = vector.load %arg6[%c32_171, %c0_172] : memref<256x128xf32, #tpu.memory_space<vmem>>, vector<16x128xf32>
    %cst_173 = arith.constant dense<0.000000e+00> : vector<8x128xf32>
    %313 = tpu.matmul %311, %312, %cst_173 {dimension_numbers = #tpu.dot_dimension_numbers<[1], [0], [0], [1], [0, 0, 1, 1], [], []>} : vector<8x16xf32>, vector<16x128xf32>, vector<8x128xf32> -> vector<8x128xf32>
    %314 = arith.addf %310, %313 : vector<8x128xf32>
    %c3_174 = arith.constant 3 : index
    %c0_175 = arith.constant 0 : index
    %315 = tpu.strided_load %arg9[%c3_174, %c0_175] {strides = array<i32: 16, 1>} : memref<128x16xf32, #tpu.memory_space<vmem>>, vector<8x16xf32>
    %c48_176 = arith.constant 48 : index
    %c0_177 = arith.constant 0 : index
    %316 = vector.load %arg6[%c48_176, %c0_177] : memref<256x128xf32, #tpu.memory_space<vmem>>, vector<16x128xf32>
    %cst_178 = arith.constant dense<0.000000e+00> : vector<8x128xf32>
    %317 = tpu.matmul %315, %316, %cst_178 {dimension_numbers = #tpu.dot_dimension_numbers<[1], [0], [0], [1], [0, 0, 1, 1], [], []>} : vector<8x16xf32>, vector<16x128xf32>, vector<8x128xf32> -> vector<8x128xf32>
    %318 = arith.addf %314, %317 : vector<8x128xf32>
    %c4_179 = arith.constant 4 : index
    %c0_180 = arith.constant 0 : index
    %319 = tpu.strided_load %arg9[%c4_179, %c0_180] {strides = array<i32: 16, 1>} : memref<128x16xf32, #tpu.memory_space<vmem>>, vector<8x16xf32>
    %c64 = arith.constant 64 : index
    %c0_181 = arith.constant 0 : index
    %320 = vector.load %arg6[%c64, %c0_181] : memref<256x128xf32, #tpu.memory_space<vmem>>, vector<16x128xf32>
    %cst_182 = arith.constant dense<0.000000e+00> : vector<8x128xf32>
    %321 = tpu.matmul %319, %320, %cst_182 {dimension_numbers = #tpu.dot_dimension_numbers<[1], [0], [0], [1], [0, 0, 1, 1], [], []>} : vector<8x16xf32>, vector<16x128xf32>, vector<8x128xf32> -> vector<8x128xf32>
    %322 = arith.addf %318, %321 : vector<8x128xf32>
    %c5_183 = arith.constant 5 : index
    %c0_184 = arith.constant 0 : index
    %323 = tpu.strided_load %arg9[%c5_183, %c0_184] {strides = array<i32: 16, 1>} : memref<128x16xf32, #tpu.memory_space<vmem>>, vector<8x16xf32>
    %c80 = arith.constant 80 : index
    %c0_185 = arith.constant 0 : index
    %324 = vector.load %arg6[%c80, %c0_185] : memref<256x128xf32, #tpu.memory_space<vmem>>, vector<16x128xf32>
    %cst_186 = arith.constant dense<0.000000e+00> : vector<8x128xf32>
    %325 = tpu.matmul %323, %324, %cst_186 {dimension_numbers = #tpu.dot_dimension_numbers<[1], [0], [0], [1], [0, 0, 1, 1], [], []>} : vector<8x16xf32>, vector<16x128xf32>, vector<8x128xf32> -> vector<8x128xf32>
    %326 = arith.addf %322, %325 : vector<8x128xf32>
    %c6_187 = arith.constant 6 : index
    %c0_188 = arith.constant 0 : index
    %327 = tpu.strided_load %arg9[%c6_187, %c0_188] {strides = array<i32: 16, 1>} : memref<128x16xf32, #tpu.memory_space<vmem>>, vector<8x16xf32>
    %c96 = arith.constant 96 : index
    %c0_189 = arith.constant 0 : index
    %328 = vector.load %arg6[%c96, %c0_189] : memref<256x128xf32, #tpu.memory_space<vmem>>, vector<16x128xf32>
    %cst_190 = arith.constant dense<0.000000e+00> : vector<8x128xf32>
    %329 = tpu.matmul %327, %328, %cst_190 {dimension_numbers = #tpu.dot_dimension_numbers<[1], [0], [0], [1], [0, 0, 1, 1], [], []>} : vector<8x16xf32>, vector<16x128xf32>, vector<8x128xf32> -> vector<8x128xf32>
    %330 = arith.addf %326, %329 : vector<8x128xf32>
    %c7_191 = arith.constant 7 : index
    %c0_192 = arith.constant 0 : index
    %331 = tpu.strided_load %arg9[%c7_191, %c0_192] {strides = array<i32: 16, 1>} : memref<128x16xf32, #tpu.memory_space<vmem>>, vector<8x16xf32>
    %c112_193 = arith.constant 112 : index
    %c0_194 = arith.constant 0 : index
    %332 = vector.load %arg6[%c112_193, %c0_194] : memref<256x128xf32, #tpu.memory_space<vmem>>, vector<16x128xf32>
    %cst_195 = arith.constant dense<0.000000e+00> : vector<8x128xf32>
    %333 = tpu.matmul %331, %332, %cst_195 {dimension_numbers = #tpu.dot_dimension_numbers<[1], [0], [0], [1], [0, 0, 1, 1], [], []>} : vector<8x16xf32>, vector<16x128xf32>, vector<8x128xf32> -> vector<8x128xf32>
    %334 = arith.addf %330, %333 : vector<8x128xf32>
    %c8_196 = arith.constant 8 : index
    %c0_197 = arith.constant 0 : index
    %335 = tpu.strided_load %arg9[%c8_196, %c0_197] {strides = array<i32: 16, 1>} : memref<128x16xf32, #tpu.memory_space<vmem>>, vector<8x16xf32>
    %c128 = arith.constant 128 : index
    %c0_198 = arith.constant 0 : index
    %336 = vector.load %arg6[%c128, %c0_198] : memref<256x128xf32, #tpu.memory_space<vmem>>, vector<16x128xf32>
    %cst_199 = arith.constant dense<0.000000e+00> : vector<8x128xf32>
    %337 = tpu.matmul %335, %336, %cst_199 {dimension_numbers = #tpu.dot_dimension_numbers<[1], [0], [0], [1], [0, 0, 1, 1], [], []>} : vector<8x16xf32>, vector<16x128xf32>, vector<8x128xf32> -> vector<8x128xf32>
    %338 = arith.addf %334, %337 : vector<8x128xf32>
    %c9 = arith.constant 9 : index
    %c0_200 = arith.constant 0 : index
    %339 = tpu.strided_load %arg9[%c9, %c0_200] {strides = array<i32: 16, 1>} : memref<128x16xf32, #tpu.memory_space<vmem>>, vector<8x16xf32>
    %c144 = arith.constant 144 : index
    %c0_201 = arith.constant 0 : index
    %340 = vector.load %arg6[%c144, %c0_201] : memref<256x128xf32, #tpu.memory_space<vmem>>, vector<16x128xf32>
    %cst_202 = arith.constant dense<0.000000e+00> : vector<8x128xf32>
    %341 = tpu.matmul %339, %340, %cst_202 {dimension_numbers = #tpu.dot_dimension_numbers<[1], [0], [0], [1], [0, 0, 1, 1], [], []>} : vector<8x16xf32>, vector<16x128xf32>, vector<8x128xf32> -> vector<8x128xf32>
    %342 = arith.addf %338, %341 : vector<8x128xf32>
    %c10_203 = arith.constant 10 : index
    %c0_204 = arith.constant 0 : index
    %343 = tpu.strided_load %arg9[%c10_203, %c0_204] {strides = array<i32: 16, 1>} : memref<128x16xf32, #tpu.memory_space<vmem>>, vector<8x16xf32>
    %c160 = arith.constant 160 : index
    %c0_205 = arith.constant 0 : index
    %344 = vector.load %arg6[%c160, %c0_205] : memref<256x128xf32, #tpu.memory_space<vmem>>, vector<16x128xf32>
    %cst_206 = arith.constant dense<0.000000e+00> : vector<8x128xf32>
    %345 = tpu.matmul %343, %344, %cst_206 {dimension_numbers = #tpu.dot_dimension_numbers<[1], [0], [0], [1], [0, 0, 1, 1], [], []>} : vector<8x16xf32>, vector<16x128xf32>, vector<8x128xf32> -> vector<8x128xf32>
    %346 = arith.addf %342, %345 : vector<8x128xf32>
    %c11 = arith.constant 11 : index
    %c0_207 = arith.constant 0 : index
    %347 = tpu.strided_load %arg9[%c11, %c0_207] {strides = array<i32: 16, 1>} : memref<128x16xf32, #tpu.memory_space<vmem>>, vector<8x16xf32>
    %c176 = arith.constant 176 : index
    %c0_208 = arith.constant 0 : index
    %348 = vector.load %arg6[%c176, %c0_208] : memref<256x128xf32, #tpu.memory_space<vmem>>, vector<16x128xf32>
    %cst_209 = arith.constant dense<0.000000e+00> : vector<8x128xf32>
    %349 = tpu.matmul %347, %348, %cst_209 {dimension_numbers = #tpu.dot_dimension_numbers<[1], [0], [0], [1], [0, 0, 1, 1], [], []>} : vector<8x16xf32>, vector<16x128xf32>, vector<8x128xf32> -> vector<8x128xf32>
    %350 = arith.addf %346, %349 : vector<8x128xf32>
    %c12 = arith.constant 12 : index
    %c0_210 = arith.constant 0 : index
    %351 = tpu.strided_load %arg9[%c12, %c0_210] {strides = array<i32: 16, 1>} : memref<128x16xf32, #tpu.memory_space<vmem>>, vector<8x16xf32>
    %c192 = arith.constant 192 : index
    %c0_211 = arith.constant 0 : index
    %352 = vector.load %arg6[%c192, %c0_211] : memref<256x128xf32, #tpu.memory_space<vmem>>, vector<16x128xf32>
    %cst_212 = arith.constant dense<0.000000e+00> : vector<8x128xf32>
    %353 = tpu.matmul %351, %352, %cst_212 {dimension_numbers = #tpu.dot_dimension_numbers<[1], [0], [0], [1], [0, 0, 1, 1], [], []>} : vector<8x16xf32>, vector<16x128xf32>, vector<8x128xf32> -> vector<8x128xf32>
    %354 = arith.addf %350, %353 : vector<8x128xf32>
    %c13 = arith.constant 13 : index
    %c0_213 = arith.constant 0 : index
    %355 = tpu.strided_load %arg9[%c13, %c0_213] {strides = array<i32: 16, 1>} : memref<128x16xf32, #tpu.memory_space<vmem>>, vector<8x16xf32>
    %c208 = arith.constant 208 : index
    %c0_214 = arith.constant 0 : index
    %356 = vector.load %arg6[%c208, %c0_214] : memref<256x128xf32, #tpu.memory_space<vmem>>, vector<16x128xf32>
    %cst_215 = arith.constant dense<0.000000e+00> : vector<8x128xf32>
    %357 = tpu.matmul %355, %356, %cst_215 {dimension_numbers = #tpu.dot_dimension_numbers<[1], [0], [0], [1], [0, 0, 1, 1], [], []>} : vector<8x16xf32>, vector<16x128xf32>, vector<8x128xf32> -> vector<8x128xf32>
    %358 = arith.addf %354, %357 : vector<8x128xf32>
    %c14 = arith.constant 14 : index
    %c0_216 = arith.constant 0 : index
    %359 = tpu.strided_load %arg9[%c14, %c0_216] {strides = array<i32: 16, 1>} : memref<128x16xf32, #tpu.memory_space<vmem>>, vector<8x16xf32>
    %c224 = arith.constant 224 : index
    %c0_217 = arith.constant 0 : index
    %360 = vector.load %arg6[%c224, %c0_217] : memref<256x128xf32, #tpu.memory_space<vmem>>, vector<16x128xf32>
    %cst_218 = arith.constant dense<0.000000e+00> : vector<8x128xf32>
    %361 = tpu.matmul %359, %360, %cst_218 {dimension_numbers = #tpu.dot_dimension_numbers<[1], [0], [0], [1], [0, 0, 1, 1], [], []>} : vector<8x16xf32>, vector<16x128xf32>, vector<8x128xf32> -> vector<8x128xf32>
    %362 = arith.addf %358, %361 : vector<8x128xf32>
    %c15_219 = arith.constant 15 : index
    %c0_220 = arith.constant 0 : index
    %363 = tpu.strided_load %arg9[%c15_219, %c0_220] {strides = array<i32: 16, 1>} : memref<128x16xf32, #tpu.memory_space<vmem>>, vector<8x16xf32>
    %c240 = arith.constant 240 : index
    %c0_221 = arith.constant 0 : index
    %364 = vector.load %arg6[%c240, %c0_221] : memref<256x128xf32, #tpu.memory_space<vmem>>, vector<16x128xf32>
    %cst_222 = arith.constant dense<0.000000e+00> : vector<8x128xf32>
    %365 = tpu.matmul %363, %364, %cst_222 {dimension_numbers = #tpu.dot_dimension_numbers<[1], [0], [0], [1], [0, 0, 1, 1], [], []>} : vector<8x16xf32>, vector<16x128xf32>, vector<8x128xf32> -> vector<8x128xf32>
    %366 = arith.addf %362, %365 : vector<8x128xf32>
    %c9_223 = arith.constant 9 : index
    %c0_224 = arith.constant 0 : index
    %367 = vector.load %arg4[%c9_223, %c0_224] : memref<16x128xf32, #tpu.memory_space<vmem>>, vector<1x128xf32>
    %368 = vector.broadcast %367 : vector<1x128xf32> to vector<8x128xf32>
    %369 = arith.addf %366, %368 : vector<8x128xf32>
    %c0_225 = arith.constant 0 : index
    %c0_226 = arith.constant 0 : index
    %370 = vector.load %arg7[%c0_225, %c0_226] : memref<8x128xf32, #tpu.memory_space<vmem>>, vector<8x128xf32>
    tpu.vector_store %arg7[%c0_225, %c0_226], %369 {strides = array<i32>} : memref<8x128xf32, #tpu.memory_space<vmem>>, vector<8x128xf32>,
    return
  }
  func.func @transform_0(%arg0: i32) -> (i32, i32) {
    %c0_i32 = arith.constant 0 : i32
    %c0_i32_0 = arith.constant 0 : i32
    return %arg0, %c0_i32 : i32, i32
  }
  func.func @transform_1(%arg0: i32) -> (i32, i32, i32) {
    %c0_i32 = arith.constant 0 : i32
    %c0_i32_0 = arith.constant 0 : i32
    %c0_i32_1 = arith.constant 0 : i32
    %c0_i32_2 = arith.constant 0 : i32
    return %c0_i32, %c0_i32_0, %c0_i32_1 : i32, i32, i32
  }
  func.func @transform_2(%arg0: i32) -> i32 {
    %c0_i32 = arith.constant 0 : i32
    %c0_i32_0 = arith.constant 0 : i32
    return %c0_i32 : i32
  }
  func.func @transform_3(%arg0: i32) -> (i32, i32) {
    %c0_i32 = arith.constant 0 : i32
    %c0_i32_0 = arith.constant 0 : i32
    %c0_i32_1 = arith.constant 0 : i32
    return %c0_i32, %c0_i32_0 : i32, i32
  }
  func.func @transform_4(%arg0: i32) -> (i32, i32) {
    %c0_i32 = arith.constant 0 : i32
    %c0_i32_0 = arith.constant 0 : i32
    %c0_i32_1 = arith.constant 0 : i32
    return %c0_i32, %c0_i32_0 : i32, i32
  }
  func.func @transform_5(%arg0: i32) -> (i32, i32) {
    %c0_i32 = arith.constant 0 : i32
    %c0_i32_0 = arith.constant 0 : i32
    %c0_i32_1 = arith.constant 0 : i32
    return %c0_i32, %c0_i32_0 : i32, i32
  }
  func.func @transform_6(%arg0: i32) -> (i32, i32) {
    %c0_i32 = arith.constant 0 : i32
    %c0_i32_0 = arith.constant 0 : i32
    return %arg0, %c0_i32 : i32, i32
  }
}

</mosaic_0001>

<llo_original>
// kernel: lhvit_forward.1
$region0: #{lhvit_forward.1}
  #allocation0 [shape = 'u32[]', space=smem, size = 0x4, offset = 0x4, fixed_abs, tag = 'smem constant byte address 0x4 - core index']
  #allocation1 [shape = 'u32[144,128]{1,0:T(1,128)}', space=vmem, size = 0x12000, scoped, tag = 'internal scratch']
  #allocation2 [shape = 'f32[72,40]{1,0:T(8,128)}', space=vmem, size = 0x9000, scoped, tag = 'scratch operand']
  #allocation3 [shape = 'f32[128,16]{1,0:T(8,128)}', space=vmem, size = 0x10000, scoped, tag = 'scratch operand']
  %s0 = inlined_call_operand.vmem [shape: f32[64,40], index: 0, kind: input, shape index: {}]
  %s1 = inlined_call_operand.vmem [shape: f32[6,40,40], index: 1, kind: input, shape index: {}]
  %s2 = inlined_call_operand.vmem [shape: f32[6], index: 2, kind: input, shape index: {}]
  %s3 = inlined_call_operand.vmem [shape: f32[16,128], index: 3, kind: input, shape index: {}]
  %s4 = inlined_call_operand.vmem [shape: f32[120,64], index: 4, kind: input, shape index: {}]
  %s5 = inlined_call_operand.vmem [shape: f32[256,128], index: 5, kind: input, shape index: {}]
  %s6 = inlined_call_operand.vmem [shape: f32[8,128], index: 6, kind: output, shape index: {}]
  %s7 = sld [smem:[#allocation0]]
  $region38: #{lhvit_forward.1} parent=0
    _
  %s9 = ssub.s32 1, %s7
  %s10 = scalar_select 0, %s9, %s7
  $region1: #{lhvit_forward.1} parent=0
    #allocation4 [shape = 'u8[512]{0}', space=smem, size = 0x200, scoped, tag = 'input window, operand 2, single buffered']
    #allocation5 [shape = 's32[1]{0}', space=sflag, size = 0x4, scoped, tag = 'scoped memory for lhvit_forward.1']
    %11 = vsyncpa [#allocation5], 0
    // Predicated region
    $region2: #{lhvit_forward.1} parent=1 // pred_check
      _
    $region3: #{lhvit_forward.1} parent=1 // pred_check_branch
      %13 = sbr.rel (0) target = $region5
    $region4: #{lhvit_forward.1} parent=1 // pred_region
      _
    $region5: #{lhvit_forward.1} parent=1 // pred_fallthru
      _
    // Predicated region
    $region6: #{lhvit_forward.1} parent=1 // pred_check
      _
    $region7: #{lhvit_forward.1} parent=1 // pred_check_branch
      %15 = sbr.rel (0) target = $region9
    $region8: #{lhvit_forward.1} parent=1 // pred_region
      _
    $region9: #{lhvit_forward.1} parent=1 // pred_fallthru
      _
    // Predicated region
    $region10: #{lhvit_forward.1} parent=1 // pred_check
      _
    $region11: #{lhvit_forward.1} parent=1 // pred_check_branch
      %17 = sbr.rel (0) target = $region13
    $region12: #{lhvit_forward.1} parent=1 // pred_region
      %s19 = ssub.s32 16, 16
      %20 = vsyncadd [#allocation5], %s19
      %s22 = sshll.u32 %s2, 4
      %s23 = int_to_ptr.vmem [resolvable:$true] %s22
      %25 = dma.vmem_to_smem %s23, 16, [#allocation4], [#allocation5]
    $region13: #{lhvit_forward.1} parent=1 // pred_fallthru
      _
    // Predicated region
    $region14: #{lhvit_forward.1} parent=1 // pred_check
      _
    $region15: #{lhvit_forward.1} parent=1 // pred_check_branch
      %27 = sbr.rel (0) target = $region17
    $region16: #{lhvit_forward.1} parent=1 // pred_region
      _
    $region17: #{lhvit_forward.1} parent=1 // pred_fallthru
      _
    // Predicated region
    $region18: #{lhvit_forward.1} parent=1 // pred_check
      _
    $region19: #{lhvit_forward.1} parent=1 // pred_check_branch
      %29 = sbr.rel (0) target = $region21
    $region20: #{lhvit_forward.1} parent=1 // pred_region
      _
    $region21: #{lhvit_forward.1} parent=1 // pred_fallthru
      _
    // Predicated region
    $region22: #{lhvit_forward.1} parent=1 // pred_check
      _
    $region23: #{lhvit_forward.1} parent=1 // pred_check_branch
      %31 = sbr.rel (0) target = $region25
    $region24: #{lhvit_forward.1} parent=1 // pred_region
      _
    $region25: #{lhvit_forward.1} parent=1 // pred_fallthru
      _
    // Predicated region
    $region26: #{lhvit_forward.1} parent=1 // pred_check
      _
    $region27: #{lhvit_forward.1} parent=1 // pred_check_branch
      %33 = sbr.rel (0) target = $region29
    $region28: #{lhvit_forward.1} parent=1 // pred_region
      %34 = dma.done [#allocation5], 16
    $region29: #{lhvit_forward.1} parent=1 // pred_fallthru
      _
    %35 = sfence
    %v36 = vld [vmem:[%s0] sm:$0xff]
    %v37 = vld [vmem:[%s0 + $0x8] sm:$0xff]
    %v38 = vld [vmem:[%s0 + $0x10] sm:$0xff]
    %v39 = vld [vmem:[%s0 + $0x18] sm:$0xff]
    %v40 = vld [vmem:[%s0 + $0x20] sm:$0xff]
    %v41 = vld [vmem:[%s0 + $0x28] sm:$0xff]
    %v42 = vld [vmem:[%s0 + $0x30] sm:$0xff]
    %v43 = vld [vmem:[%s0 + $0x38] sm:$0xff]
    %s44 = sld [smem:[#allocation4]]
    %s45 = sld [smem:[#allocation4 + $0x1]]
    %s46 = sld [smem:[#allocation4 + $0x2]]
    %vm47 = vcmask 319488
    %48 = vst.msk [vmem:[#allocation2] sm:$0x1] %vm47, 0.0
    %vm49 = vcmask 326656
    %50 = vst.msk [vmem:[#allocation2 + $0x1] sm:$0xff] %vm49, %v36
    %51 = vst.msk [vmem:[#allocation2 + $0x9] sm:$0xff] %vm49, %v37
    %52 = vst.msk [vmem:[#allocation2 + $0x11] sm:$0xff] %vm49, %v38
    %53 = vst.msk [vmem:[#allocation2 + $0x19] sm:$0xff] %vm49, %v39
    %54 = vst.msk [vmem:[#allocation2 + $0x21] sm:$0xff] %vm49, %v40
    %55 = vst.msk [vmem:[#allocation2 + $0x29] sm:$0xff] %vm49, %v41
    %56 = vst.msk [vmem:[#allocation2 + $0x31] sm:$0xff] %vm49, %v42
    %57 = vst.msk [vmem:[#allocation2 + $0x39] sm:$0xff] %vm49, %v43
    %58 = vst.msk [vmem:[#allocation2 + $0x41] sm:$0x1] %vm47, 0.0
    %v59 = vld [vmem:[#allocation2] sm:$0xff]
    %v60 = vld [vmem:[#allocation2 + $0x8] sm:$0xff]
    %v61 = vld [vmem:[#allocation2 + $0x10] sm:$0xff]
    %v62 = vld [vmem:[#allocation2 + $0x18] sm:$0xff]
    %v63 = vld [vmem:[#allocation2 + $0x20] sm:$0xff]
    %v64 = vld [vmem:[#allocation2 + $0x28] sm:$0xff]
    %v65 = vld [vmem:[#allocation2 + $0x30] sm:$0xff]
    %v66 = vld [vmem:[#allocation2 + $0x38] sm:$0xff]
    %v67 = vld [vmem:[#allocation2 + $0x2] sm:$0xff]
    %v68 = vld [vmem:[#allocation2 + $0xa] sm:$0xff]
    %v69 = vld [vmem:[#allocation2 + $0x12] sm:$0xff]
    %v70 = vld [vmem:[#allocation2 + $0x1a] sm:$0xff]
    %v71 = vld [vmem:[#allocation2 + $0x22] sm:$0xff]
    %v72 = vld [vmem:[#allocation2 + $0x2a] sm:$0xff]
    %v73 = vld [vmem:[#allocation2 + $0x32] sm:$0xff]
    %v74 = vld [vmem:[#allocation2 + $0x3a] sm:$0xff]
    %v75 = vld [vmem:[%s1] sm:$0xff]
    %v76 = vld [vmem:[%s1 + $0x8] sm:$0xff]
    %v77 = vld [vmem:[%s1 + $0x10] sm:$0xff]
    %v78 = vld [vmem:[%s1 + $0x18] sm:$0xff]
    %v79 = vld [vmem:[%s1 + $0x20] sm:$0xff]
    %s80 = scalar_lea.vmem %s1, 40
    %v81 = vld [vmem:[%s80] sm:$0xff]
    %v82 = vld [vmem:[%s80 + $0x8] sm:$0xff]
    %v83 = vld [vmem:[%s80 + $0x10] sm:$0xff]
    %v84 = vld [vmem:[%s80 + $0x18] sm:$0xff]
    %v85 = vld [vmem:[%s80 + $0x20] sm:$0xff]
    %v87 = vsel %vm49, %v36, 0
    %v90 = vsel %vm49, %v37, 0
    %v93 = vsel %vm49, %v38, 0
    %v96 = vsel %vm49, %v39, 0
    %v99 = vsel %vm49, %v40, 0
    %v102 = vsel %vm49, %v41, 0
    %v105 = vsel %vm49, %v42, 0
    %v108 = vsel %vm49, %v43, 0
    %110 = vmatprep.subr.mxu0 0.0
    %111 = vmatpush1.msra.mxu0 %v81
    %112 = vmatprep.subr.mxu0 0.0
    %113 = vmatpush1.msra.mxu0 %v82
    %114 = vmatprep.subr.mxu0 0.0
    %115 = vmatpush1.msra.mxu0 %v83
    %116 = vmatprep.subr.mxu0 0.0
    %117 = vmatpush1.msra.mxu0 %v84
    %118 = vmatprep.subr.mxu0 0.0
    %119 = vmatpush1.msra.mxu0 %v85
    %120 = vmatprep.subr.mxu0 0.0
    %121 = vmatpush1.msra.mxu0 0.0
    %122 = vmatprep.subr.mxu0 0.0
    %123 = vmatpush1.msra.mxu0 0.0
    %124 = vmatprep.subr.mxu0 0.0
    %125 = vmatpush1.msra.mxu0 0.0
    %126 = vmatprep.subr.mxu0 0.0
    %127 = vmatpush1.msra.mxu0 0.0
    %128 = vmatprep.subr.mxu0 0.0
    %129 = vmatpush1.msra.mxu0 0.0
    %130 = vmatprep.subr.mxu0 0.0
    %131 = vmatpush1.msra.mxu0 0.0
    %132 = vmatprep.subr.mxu0 0.0
    %133 = vmatpush1.msra.mxu0 0.0
    %134 = vmatprep.subr.mxu0 0.0
    %135 = vmatpush1.msra.mxu0 0.0
    %136 = vmatprep.subr.mxu0 0.0
    %137 = vmatpush1.msra.mxu0 0.0
    %138 = vmatprep.subr.mxu0 0.0
    %139 = vmatpush1.msra.mxu0 0.0
    %140 = vmatprep.subr.mxu0 0.0
    %141 = vmatpush1.msra.mxu0 0.0
    %142 = vmatprep.subr.mxu0 0.0
    %143 = vmatpush1.msra.mxu0 0.0
    %144 = vmatprep.subr.mxu0 0.0
    %145 = vmatpush1.msra.mxu0 0.0
    %146 = vmatprep.subr.mxu0 0.0
    %147 = vmatpush1.msra.mxu0 0.0
    %148 = vmatprep.subr.mxu0 0.0
    %149 = vmatpush1.msra.mxu0 0.0
    %150 = vmatprep.subr.mxu0 0.0
    %151 = vmatpush1.msra.mxu0 0.0
    %152 = vmatprep.subr.mxu0 0.0
    %153 = vmatpush1.msra.mxu0 0.0
    %154 = vmatprep.subr.mxu0 0.0
    %155 = vmatpush1.msra.mxu0 0.0
    %156 = vmatprep.subr.mxu0 0.0
    %157 = vmatpush1.msra.mxu0 0.0
    %158 = vmatprep.subr.mxu0 0.0
    %159 = vmatpush1.msra.mxu0 0.0
    %160 = vmatprep.subr.mxu0 0.0
    %161 = vmatpush1.msra.mxu0 0.0
    %162 = vmatprep.subr.mxu0 0.0
    %163 = vmatpush1.msra.mxu0 0.0
    %164 = vmatprep.subr.mxu0 0.0
    %165 = vmatpush1.msra.mxu0 0.0
    %166 = vmatprep.subr.mxu0 0.0
    %167 = vmatpush1.msra.mxu0 0.0
    %168 = vmatprep.subr.mxu0 0.0
    %169 = vmatpush1.msra.mxu0 0.0
    %170 = vmatprep.subr.mxu0 0.0
    %171 = vmatpush1.msra.mxu0 0.0
    %172 = vmatprep.subr.mxu0 0.0
    %173 = vmatpush1.msra.mxu0 0.0
    %174 = vmatprep.mubr.f32.mxu0 0.0
    %175 = vmatmul.mubr.f32.gmra.mrb[0].mxu0 %v87
    %v176 = vpop.f32.mrb[0].mxu0
    %v177 = vadd.f32 0.0, %v176
    %v178 = vpop.f32.mrb[0].mxu0
    %179 = vmatprep.mubr.f32.mxu0 0.0
    %180 = vmatmul.mubr.f32.gmra.mrb[0].mxu0 %v90
    %v181 = vpop.f32.mrb[0].mxu0
    %v182 = vadd.f32 0.0, %v181
    %v183 = vpop.f32.mrb[0].mxu0
    %184 = vmatprep.mubr.f32.mxu0 0.0
    %185 = vmatmul.mubr.f32.gmra.mrb[0].mxu0 %v93
    %v186 = vpop.f32.mrb[0].mxu0
    %v187 = vadd.f32 0.0, %v186
    %v188 = vpop.f32.mrb[0].mxu0
    %189 = vmatprep.mubr.f32.mxu0 0.0
    %190 = vmatmul.mubr.f32.gmra.mrb[0].mxu0 %v96
    %v191 = vpop.f32.mrb[0].mxu0
    %v192 = vadd.f32 0.0, %v191
    %v193 = vpop.f32.mrb[0].mxu0
    %194 = vmatprep.mubr.f32.mxu0 0.0
    %195 = vmatmul.mubr.f32.gmra.mrb[0].mxu0 %v99
    %v196 = vpop.f32.mrb[0].mxu0
    %v197 = vadd.f32 0.0, %v196
    %v198 = vpop.f32.mrb[0].mxu0
    %199 = vmatprep.mubr.f32.mxu0 0.0
    %200 = vmatmul.mubr.f32.gmra.mrb[0].mxu0 %v102
    %v201 = vpop.f32.mrb[0].mxu0
    %v202 = vadd.f32 0.0, %v201
    %v203 = vpop.f32.mrb[0].mxu0
    %204 = vmatprep.mubr.f32.mxu0 0.0
    %205 = vmatmul.mubr.f32.gmra.mrb[0].mxu0 %v105
    %v206 = vpop.f32.mrb[0].mxu0
    %v207 = vadd.f32 0.0, %v206
    %v208 = vpop.f32.mrb[0].mxu0
    %209 = vmatprep.mubr.f32.mxu0 0.0
    %210 = vmatmul.mubr.f32.gmra.mrb[0].mxu0 %v108
    %v211 = vpop.f32.mrb[0].mxu0
    %v212 = vadd.f32 0.0, %v211
    %v213 = vpop.f32.mrb[0].mxu0
    %214 = vdwg.mxu0
    %v216 = vsel %vm49, %v59, 0
    %v219 = vsel %vm49, %v60, 0
    %v222 = vsel %vm49, %v61, 0
    %v225 = vsel %vm49, %v62, 0
    %v228 = vsel %vm49, %v63, 0
    %v231 = vsel %vm49, %v64, 0
    %v234 = vsel %vm49, %v65, 0
    %v237 = vsel %vm49, %v66, 0
    %239 = vmatprep.subr.mxu0 0.0
    %240 = vmatpush1.msra.mxu0 %v75
    %241 = vmatprep.subr.mxu0 0.0
    %242 = vmatpush1.msra.mxu0 %v76
    %243 = vmatprep.subr.mxu0 0.0
    %244 = vmatpush1.msra.mxu0 %v77
    %245 = vmatprep.subr.mxu0 0.0
    %246 = vmatpush1.msra.mxu0 %v78
    %247 = vmatprep.subr.mxu0 0.0
    %248 = vmatpush1.msra.mxu0 %v79
    %249 = vmatprep.subr.mxu0 0.0
    %250 = vmatpush1.msra.mxu0 0.0
    %251 = vmatprep.subr.mxu0 0.0
    %252 = vmatpush1.msra.mxu0 0.0
    %253 = vmatprep.subr.mxu0 0.0
    %254 = vmatpush1.msra.mxu0 0.0
    %255 = vmatprep.subr.mxu0 0.0
    %256 = vmatpush1.msra.mxu0 0.0
    %257 = vmatprep.subr.mxu0 0.0
    %258 = vmatpush1.msra.mxu0 0.0
    %259 = vmatprep.subr.mxu0 0.0
    %260 = vmatpush1.msra.mxu0 0.0
    %261 = vmatprep.subr.mxu0 0.0
    %262 = vmatpush1.msra.mxu0 0.0
    %263 = vmatprep.subr.mxu0 0.0
    %264 = vmatpush1.msra.mxu0 0.0
    %265 = vmatprep.subr.mxu0 0.0
    %266 = vmatpush1.msra.mxu0 0.0
    %267 = vmatprep.subr.mxu0 0.0
    %268 = vmatpush1.msra.mxu0 0.0
    %269 = vmatprep.subr.mxu0 0.0
    %270 = vmatpush1.msra.mxu0 0.0
    %271 = vmatprep.subr.mxu0 0.0
    %272 = vmatpush1.msra.mxu0 0.0
    %273 = vmatprep.subr.mxu0 0.0
    %274 = vmatpush1.msra.mxu0 0.0
    %275 = vmatprep.subr.mxu0 0.0
    %276 = vmatpush1.msra.mxu0 0.0
    %277 = vmatprep.subr.mxu0 0.0
    %278 = vmatpush1.msra.mxu0 0.0
    %279 = vmatprep.subr.mxu0 0.0
    %280 = vmatpush1.msra.mxu0 0.0
    %281 = vmatprep.subr.mxu0 0.0
    %282 = vmatpush1.msra.mxu0 0.0
    %283 = vmatprep.subr.mxu0 0.0
    %284 = vmatpush1.msra.mxu0 0.0
    %285 = vmatprep.subr.mxu0 0.0
    %286 = vmatpush1.msra.mxu0 0.0
    %287 = vmatprep.subr.mxu0 0.0
    %288 = vmatpush1.msra.mxu0 0.0
    %289 = vmatprep.subr.mxu0 0.0
    %290 = vmatpush1.msra.mxu0 0.0
    %291 = vmatprep.subr.mxu0 0.0
    %292 = vmatpush1.msra.mxu0 0.0
    %293 = vmatprep.subr.mxu0 0.0
    %294 = vmatpush1.msra.mxu0 0.0
    %295 = vmatprep.subr.mxu0 0.0
    %296 = vmatpush1.msra.mxu0 0.0
    %297 = vmatprep.subr.mxu0 0.0
    %298 = vmatpush1.msra.mxu0 0.0
    %299 = vmatprep.subr.mxu0 0.0
    %300 = vmatpush1.msra.mxu0 0.0
    %301 = vmatprep.subr.mxu0 0.0
    %302 = vmatpush1.msra.mxu0 0.0
    %303 = vmatprep.mubr.f32.mxu0 0.0
    %304 = vmatmul.mubr.f32.gmra.mrb[0].mxu0 %v216
    %v305 = vpop.f32.mrb[0].mxu0
    %v306 = vadd.f32 %v177, %v305
    %v307 = vpop.f32.mrb[0].mxu0
    %308 = vmatprep.mubr.f32.mxu0 0.0
    %309 = vmatmul.mubr.f32.gmra.mrb[0].mxu0 %v219
    %v310 = vpop.f32.mrb[0].mxu0
    %v311 = vadd.f32 %v182, %v310
    %v312 = vpop.f32.mrb[0].mxu0
    %313 = vmatprep.mubr.f32.mxu0 0.0
    %314 = vmatmul.mubr.f32.gmra.mrb[0].mxu0 %v222
    %v315 = vpop.f32.mrb[0].mxu0
    %v316 = vadd.f32 %v187, %v315
    %v317 = vpop.f32.mrb[0].mxu0
    %318 = vmatprep.mubr.f32.mxu0 0.0
    %319 = vmatmul.mubr.f32.gmra.mrb[0].mxu0 %v225
    %v320 = vpop.f32.mrb[0].mxu0
    %v321 = vadd.f32 %v192, %v320
    %v322 = vpop.f32.mrb[0].mxu0
    %323 = vmatprep.mubr.f32.mxu0 0.0
    %324 = vmatmul.mubr.f32.gmra.mrb[0].mxu0 %v228
    %v325 = vpop.f32.mrb[0].mxu0
    %v326 = vadd.f32 %v197, %v325
    %v327 = vpop.f32.mrb[0].mxu0
    %328 = vmatprep.mubr.f32.mxu0 0.0
    %329 = vmatmul.mubr.f32.gmra.mrb[0].mxu0 %v231
    %v330 = vpop.f32.mrb[0].mxu0
    %v331 = vadd.f32 %v202, %v330
    %v332 = vpop.f32.mrb[0].mxu0
    %333 = vmatprep.mubr.f32.mxu0 0.0
    %334 = vmatmul.mubr.f32.gmra.mrb[0].mxu0 %v234
    %v335 = vpop.f32.mrb[0].mxu0
    %v336 = vadd.f32 %v207, %v335
    %v337 = vpop.f32.mrb[0].mxu0
    %338 = vmatprep.mubr.f32.mxu0 0.0
    %339 = vmatmul.mubr.f32.gmra.mrb[0].mxu0 %v237
    %v340 = vpop.f32.mrb[0].mxu0
    %v341 = vadd.f32 %v212, %v340
    %v342 = vpop.f32.mrb[0].mxu0
    %343 = vdwg.mxu0
    %s344 = scalar_lea.vmem %s1, 80
    %v345 = vld [vmem:[%s344] sm:$0xff]
    %v346 = vld [vmem:[%s344 + $0x8] sm:$0xff]
    %v347 = vld [vmem:[%s344 + $0x10] sm:$0xff]
    %v348 = vld [vmem:[%s344 + $0x18] sm:$0xff]
    %v349 = vld [vmem:[%s344 + $0x20] sm:$0xff]
    %v351 = vsel %vm49, %v67, 0
    %v354 = vsel %vm49, %v68, 0
    %v357 = vsel %vm49, %v69, 0
    %v360 = vsel %vm49, %v70, 0
    %v363 = vsel %vm49, %v71, 0
    %v366 = vsel %vm49, %v72, 0
    %v369 = vsel %vm49, %v73, 0
    %v372 = vsel %vm49, %v74, 0
    %374 = vmatprep.subr.mxu0 0.0
    %375 = vmatpush1.msra.mxu0 %v345
    %376 = vmatprep.subr.mxu0 0.0
    %377 = vmatpush1.msra.mxu0 %v346
    %378 = vmatprep.subr.mxu0 0.0
    %379 = vmatpush1.msra.mxu0 %v347
    %380 = vmatprep.subr.mxu0 0.0
    %381 = vmatpush1.msra.mxu0 %v348
    %382 = vmatprep.subr.mxu0 0.0
    %383 = vmatpush1.msra.mxu0 %v349
    %384 = vmatprep.subr.mxu0 0.0
    %385 = vmatpush1.msra.mxu0 0.0
    %386 = vmatprep.subr.mxu0 0.0
    %387 = vmatpush1.msra.mxu0 0.0
    %388 = vmatprep.subr.mxu0 0.0
    %389 = vmatpush1.msra.mxu0 0.0
    %390 = vmatprep.subr.mxu0 0.0
    %391 = vmatpush1.msra.mxu0 0.0
    %392 = vmatprep.subr.mxu0 0.0
    %393 = vmatpush1.msra.mxu0 0.0
    %394 = vmatprep.subr.mxu0 0.0
    %395 = vmatpush1.msra.mxu0 0.0
    %396 = vmatprep.subr.mxu0 0.0
    %397 = vmatpush1.msra.mxu0 0.0
    %398 = vmatprep.subr.mxu0 0.0
    %399 = vmatpush1.msra.mxu0 0.0
    %400 = vmatprep.subr.mxu0 0.0
    %401 = vmatpush1.msra.mxu0 0.0
    %402 = vmatprep.subr.mxu0 0.0
    %403 = vmatpush1.msra.mxu0 0.0
    %404 = vmatprep.subr.mxu0 0.0
    %405 = vmatpush1.msra.mxu0 0.0
    %406 = vmatprep.subr.mxu0 0.0
    %407 = vmatpush1.msra.mxu0 0.0
    %408 = vmatprep.subr.mxu0 0.0
    %409 = vmatpush1.msra.mxu0 0.0
    %410 = vmatprep.subr.mxu0 0.0
    %411 = vmatpush1.msra.mxu0 0.0
    %412 = vmatprep.subr.mxu0 0.0
    %413 = vmatpush1.msra.mxu0 0.0
    %414 = vmatprep.subr.mxu0 0.0
    %415 = vmatpush1.msra.mxu0 0.0
    %416 = vmatprep.subr.mxu0 0.0
    %417 = vmatpush1.msra.mxu0 0.0
    %418 = vmatprep.subr.mxu0 0.0
    %419 = vmatpush1.msra.mxu0 0.0
    %420 = vmatprep.subr.mxu0 0.0
    %421 = vmatpush1.msra.mxu0 0.0
    %422 = vmatprep.subr.mxu0 0.0
    %423 = vmatpush1.msra.mxu0 0.0
    %424 = vmatprep.subr.mxu0 0.0
    %425 = vmatpush1.msra.mxu0 0.0
    %426 = vmatprep.subr.mxu0 0.0
    %427 = vmatpush1.msra.mxu0 0.0
    %428 = vmatprep.subr.mxu0 0.0
    %429 = vmatpush1.msra.mxu0 0.0
    %430 = vmatprep.subr.mxu0 0.0
    %431 = vmatpush1.msra.mxu0 0.0
    %432 = vmatprep.subr.mxu0 0.0
    %433 = vmatpush1.msra.mxu0 0.0
    %434 = vmatprep.subr.mxu0 0.0
    %435 = vmatpush1.msra.mxu0 0.0
    %436 = vmatprep.subr.mxu0 0.0
    %437 = vmatpush1.msra.mxu0 0.0
    %438 = vmatprep.mubr.f32.mxu0 0.0
    %439 = vmatmul.mubr.f32.gmra.mrb[0].mxu0 %v351
    %v440 = vpop.f32.mrb[0].mxu0
    %v441 = vadd.f32 0.0, %v440
    %v442 = vpop.f32.mrb[0].mxu0
    %443 = vmatprep.mubr.f32.mxu0 0.0
    %444 = vmatmul.mubr.f32.gmra.mrb[0].mxu0 %v354
    %v445 = vpop.f32.mrb[0].mxu0
    %v446 = vadd.f32 0.0, %v445
    %v447 = vpop.f32.mrb[0].mxu0
    %448 = vmatprep.mubr.f32.mxu0 0.0
    %449 = vmatmul.mubr.f32.gmra.mrb[0].mxu0 %v357
    %v450 = vpop.f32.mrb[0].mxu0
    %v451 = vadd.f32 0.0, %v450
    %v452 = vpop.f32.mrb[0].mxu0
    %453 = vmatprep.mubr.f32.mxu0 0.0
    %454 = vmatmul.mubr.f32.gmra.mrb[0].mxu0 %v360
    %v455 = vpop.f32.mrb[0].mxu0
    %v456 = vadd.f32 0.0, %v455
    %v457 = vpop.f32.mrb[0].mxu0
    %458 = vmatprep.mubr.f32.mxu0 0.0
    %459 = vmatmul.mubr.f32.gmra.mrb[0].mxu0 %v363
    %v460 = vpop.f32.mrb[0].mxu0
    %v461 = vadd.f32 0.0, %v460
    %v462 = vpop.f32.mrb[0].mxu0
    %463 = vmatprep.mubr.f32.mxu0 0.0
    %464 = vmatmul.mubr.f32.gmra.mrb[0].mxu0 %v366
    %v465 = vpop.f32.mrb[0].mxu0
    %v466 = vadd.f32 0.0, %v465
    %v467 = vpop.f32.mrb[0].mxu0
    %468 = vmatprep.mubr.f32.mxu0 0.0
    %469 = vmatmul.mubr.f32.gmra.mrb[0].mxu0 %v369
    %v470 = vpop.f32.mrb[0].mxu0
    %v471 = vadd.f32 0.0, %v470
    %v472 = vpop.f32.mrb[0].mxu0
    %473 = vmatprep.mubr.f32.mxu0 0.0
    %474 = vmatmul.mubr.f32.gmra.mrb[0].mxu0 %v372
    %v475 = vpop.f32.mrb[0].mxu0
    %v476 = vadd.f32 0.0, %v475
    %v477 = vpop.f32.mrb[0].mxu0
    %478 = vdwg.mxu0
    %v479 = vadd.f32 %v306, %v441
    %v480 = vadd.f32 %v311, %v446
    %v481 = vadd.f32 %v316, %v451
    %v482 = vadd.f32 %v321, %v456
    %v483 = vadd.f32 %v326, %v461
    %v484 = vadd.f32 %v331, %v466
    %v485 = vadd.f32 %v336, %v471
    %v486 = vadd.f32 %v341, %v476
    %v487 = vstv %s44
    %v488 = vadd.f32 %v479, %v487
    %v489 = vadd.f32 %v480, %v487
    %v490 = vadd.f32 %v481, %v487
    %v491 = vadd.f32 %v482, %v487
    %v492 = vadd.f32 %v483, %v487
    %v493 = vadd.f32 %v484, %v487
    %v494 = vadd.f32 %v485, %v487
    %v495 = vadd.f32 %v486, %v487
    %v496 = vadd.f32 %v488, 3.0
    %v497 = vadd.f32 %v489, 3.0
    %v498 = vadd.f32 %v490, 3.0
    %v499 = vadd.f32 %v491, 3.0
    %v500 = vadd.f32 %v492, 3.0
    %v501 = vadd.f32 %v493, 3.0
    %v502 = vadd.f32 %v494, 3.0
    %v503 = vadd.f32 %v495, 3.0
    %v504 = vmax.f32 %v496, 0.0
    %v505 = vmax.f32 %v497, 0.0
    %v506 = vmax.f32 %v498, 0.0
    %v507 = vmax.f32 %v499, 0.0
    %v508 = vmax.f32 %v500, 0.0
    %v509 = vmax.f32 %v501, 0.0
    %v510 = vmax.f32 %v502, 0.0
    %v511 = vmax.f32 %v503, 0.0
    %v512 = vmin.f32 %v504, 6.0
    %v513 = vmin.f32 %v505, 6.0
    %v514 = vmin.f32 %v506, 6.0
    %v515 = vmin.f32 %v507, 6.0
    %v516 = vmin.f32 %v508, 6.0
    %v517 = vmin.f32 %v509, 6.0
    %v518 = vmin.f32 %v510, 6.0
    %v519 = vmin.f32 %v511, 6.0
    %v520 = vmul.f32 %v488, %v512
    %v521 = vmul.f32 %v489, %v513
    %v522 = vmul.f32 %v490, %v514
    %v523 = vmul.f32 %v491, %v515
    %v524 = vmul.f32 %v492, %v516
    %v525 = vmul.f32 %v493, %v517
    %v526 = vmul.f32 %v494, %v518
    %v527 = vmul.f32 %v495, %v519
    %v528 = vmul.f32 %v520, 0.16666667
    %v529 = vmul.f32 %v521, 0.16666667
    %v530 = vmul.f32 %v522, 0.16666667
    %v531 = vmul.f32 %v523, 0.16666667
    %v532 = vmul.f32 %v524, 0.16666667
    %v533 = vmul.f32 %v525, 0.16666667
    %v534 = vmul.f32 %v526, 0.16666667
    %v535 = vmul.f32 %v527, 0.16666667
    %v536 = vstv %s45
    %v537 = vmul.f32 %v536, %v528
    %v538 = vmul.f32 %v536, %v529
    %v539 = vmul.f32 %v536, %v530
    %v540 = vmul.f32 %v536, %v531
    %v541 = vmul.f32 %v536, %v532
    %v542 = vmul.f32 %v536, %v533
    %v543 = vmul.f32 %v536, %v534
    %v544 = vmul.f32 %v536, %v535
    %v545 = vstv %s46
    %v546 = vadd.f32 %v537, %v545
    %v547 = vadd.f32 %v538, %v545
    %v548 = vadd.f32 %v539, %v545
    %v549 = vadd.f32 %v540, %v545
    %v550 = vadd.f32 %v541, %v545
    %v551 = vadd.f32 %v542, %v545
    %v552 = vadd.f32 %v543, %v545
    %v553 = vadd.f32 %v544, %v545
    %v554 = vadd.f32 %v546, %v36
    %v555 = vadd.f32 %v547, %v37
    %v556 = vadd.f32 %v548, %v38
    %v557 = vadd.f32 %v549, %v39
    %v558 = vadd.f32 %v550, %v40
    %v559 = vadd.f32 %v551, %v41
    %v560 = vadd.f32 %v552, %v42
    %v561 = vadd.f32 %v553, %v43
    %562 = vst.msk [vmem:[#allocation2] sm:$0xff] %vm49, %v554
    %563 = vst.msk [vmem:[#allocation2 + $0x8] sm:$0xff] %vm49, %v555
    %564 = vst.msk [vmem:[#allocation2 + $0x10] sm:$0xff] %vm49, %v556
    %565 = vst.msk [vmem:[#allocation2 + $0x18] sm:$0xff] %vm49, %v557
    %566 = vst.msk [vmem:[#allocation2 + $0x20] sm:$0xff] %vm49, %v558
    %567 = vst.msk [vmem:[#allocation2 + $0x28] sm:$0xff] %vm49, %v559
    %568 = vst.msk [vmem:[#allocation2 + $0x30] sm:$0xff] %vm49, %v560
    %569 = vst.msk [vmem:[#allocation2 + $0x38] sm:$0xff] %vm49, %v561
    %v570 = vld [vmem:[#allocation2] ss:$2 sm:$0xff]
    %s571 = scalar_lea.vmem [#allocation2], 16
    %v572 = vld [vmem:[%s571] ss:$2 sm:$0xff]
    %s573 = scalar_lea.vmem [#allocation2], 32
    %v574 = vld [vmem:[%s573] ss:$2 sm:$0xff]
    %s575 = scalar_lea.vmem [#allocation2], 48
    %v576 = vld [vmem:[%s575] ss:$2 sm:$0xff]
    %s577 = scalar_lea.vmem [#allocation2], 1
    %v578 = vld [vmem:[%s577] ss:$2 sm:$0xff]
    %s579 = scalar_lea.vmem [#allocation2], 17
    %v580 = vld [vmem:[%s579] ss:$2 sm:$0xff]
    %s581 = scalar_lea.vmem [#allocation2], 33
    %v582 = vld [vmem:[%s581] ss:$2 sm:$0xff]
    %s583 = scalar_lea.vmem [#allocation2], 49
    %v584 = vld [vmem:[%s583] ss:$2 sm:$0xff]
    %v585 = vmax.f32 %v570, %v578
    %v586 = vmax.f32 %v572, %v580
    %v587 = vmax.f32 %v574, %v582
    %v588 = vmax.f32 %v576, %v584
    %s589 = sld [smem:[#allocation4 + $0x3]]
    %s590 = sld [smem:[#allocation4 + $0x4]]
    %s591 = sld [smem:[#allocation4 + $0x5]]
    %592 = vst.msk [vmem:[#allocation2] sm:$0x1] %vm47, 0.0
    %593 = vst.msk [vmem:[#allocation2 + $0x1] sm:$0xff] %vm49, %v585
    %594 = vst.msk [vmem:[#allocation2 + $0x9] sm:$0xff] %vm49, %v586
    %595 = vst.msk [vmem:[#allocation2 + $0x11] sm:$0xff] %vm49, %v587
    %596 = vst.msk [vmem:[#allocation2 + $0x19] sm:$0xff] %vm49, %v588
    %597 = vst.msk [vmem:[#allocation2 + $0x21] sm:$0x1] %vm47, 0.0
    %v598 = vld [vmem:[#allocation2] sm:$0xff]
    %v599 = vld [vmem:[#allocation2 + $0x8] sm:$0xff]
    %v600 = vld [vmem:[#allocation2 + $0x10] sm:$0xff]
    %v601 = vld [vmem:[#allocation2 + $0x18] sm:$0xff]
    %v602 = vld [vmem:[#allocation2 + $0x2] sm:$0xff]
    %v603 = vld [vmem:[#allocation2 + $0xa] sm:$0xff]
    %v604 = vld [vmem:[#allocation2 + $0x12] sm:$0xff]
    %v605 = vld [vmem:[#allocation2 + $0x1a] sm:$0xff]
    %s606 = scalar_lea.vmem %s1, 120
    %v607 = vld [vmem:[%s606] sm:$0xff]
    %v608 = vld [vmem:[%s606 + $0x8] sm:$0xff]
    %v609 = vld [vmem:[%s606 + $0x10] sm:$0xff]
    %v610 = vld [vmem:[%s606 + $0x18] sm:$0xff]
    %v611 = vld [vmem:[%s606 + $0x20] sm:$0xff]
    %s612 = scalar_lea.vmem %s1, 160
    %v613 = vld [vmem:[%s612] sm:$0xff]
    %v614 = vld [vmem:[%s612 + $0x8] sm:$0xff]
    %v615 = vld [vmem:[%s612 + $0x10] sm:$0xff]
    %v616 = vld [vmem:[%s612 + $0x18] sm:$0xff]
    %v617 = vld [vmem:[%s612 + $0x20] sm:$0xff]
    %v619 = vsel %vm49, %v585, 0
    %v622 = vsel %vm49, %v586, 0
    %v625 = vsel %vm49, %v587, 0
    %v628 = vsel %vm49, %v588, 0
    %630 = vmatprep.subr.mxu0 0.0
    %631 = vmatpush1.msra.mxu0 %v613
    %632 = vmatprep.subr.mxu0 0.0
    %633 = vmatpush1.msra.mxu0 %v614
    %634 = vmatprep.subr.mxu0 0.0
    %635 = vmatpush1.msra.mxu0 %v615
    %636 = vmatprep.subr.mxu0 0.0
    %637 = vmatpush1.msra.mxu0 %v616
    %638 = vmatprep.subr.mxu0 0.0
    %639 = vmatpush1.msra.mxu0 %v617
    %640 = vmatprep.subr.mxu0 0.0
    %641 = vmatpush1.msra.mxu0 0.0
    %642 = vmatprep.subr.mxu0 0.0
    %643 = vmatpush1.msra.mxu0 0.0
    %644 = vmatprep.subr.mxu0 0.0
    %645 = vmatpush1.msra.mxu0 0.0
    %646 = vmatprep.subr.mxu0 0.0
    %647 = vmatpush1.msra.mxu0 0.0
    %648 = vmatprep.subr.mxu0 0.0
    %649 = vmatpush1.msra.mxu0 0.0
    %650 = vmatprep.subr.mxu0 0.0
    %651 = vmatpush1.msra.mxu0 0.0
    %652 = vmatprep.subr.mxu0 0.0
    %653 = vmatpush1.msra.mxu0 0.0
    %654 = vmatprep.subr.mxu0 0.0
    %655 = vmatpush1.msra.mxu0 0.0
    %656 = vmatprep.subr.mxu0 0.0
    %657 = vmatpush1.msra.mxu0 0.0
    %658 = vmatprep.subr.mxu0 0.0
    %659 = vmatpush1.msra.mxu0 0.0
    %660 = vmatprep.subr.mxu0 0.0
    %661 = vmatpush1.msra.mxu0 0.0
    %662 = vmatprep.subr.mxu0 0.0
    %663 = vmatpush1.msra.mxu0 0.0
    %664 = vmatprep.subr.mxu0 0.0
    %665 = vmatpush1.msra.mxu0 0.0
    %666 = vmatprep.subr.mxu0 0.0
    %667 = vmatpush1.msra.mxu0 0.0
    %668 = vmatprep.subr.mxu0 0.0
    %669 = vmatpush1.msra.mxu0 0.0
    %670 = vmatprep.subr.mxu0 0.0
    %671 = vmatpush1.msra.mxu0 0.0
    %672 = vmatprep.subr.mxu0 0.0
    %673 = vmatpush1.msra.mxu0 0.0
    %674 = vmatprep.subr.mxu0 0.0
    %675 = vmatpush1.msra.mxu0 0.0
    %676 = vmatprep.subr.mxu0 0.0
    %677 = vmatpush1.msra.mxu0 0.0
    %678 = vmatprep.subr.mxu0 0.0
    %679 = vmatpush1.msra.mxu0 0.0
    %680 = vmatprep.subr.mxu0 0.0
    %681 = vmatpush1.msra.mxu0 0.0
    %682 = vmatprep.subr.mxu0 0.0
    %683 = vmatpush1.msra.mxu0 0.0
    %684 = vmatprep.subr.mxu0 0.0
    %685 = vmatpush1.msra.mxu0 0.0
    %686 = vmatprep.subr.mxu0 0.0
    %687 = vmatpush1.msra.mxu0 0.0
    %688 = vmatprep.subr.mxu0 0.0
    %689 = vmatpush1.msra.mxu0 0.0
    %690 = vmatprep.subr.mxu0 0.0
    %691 = vmatpush1.msra.mxu0 0.0
    %692 = vmatprep.subr.mxu0 0.0
    %693 = vmatpush1.msra.mxu0 0.0
    %694 = vmatprep.mubr.f32.mxu0 0.0
    %695 = vmatmul.mubr.f32.gmra.mrb[0].mxu0 %v619
    %v696 = vpop.f32.mrb[0].mxu0
    %v697 = vadd.f32 0.0, %v696
    %v698 = vpop.f32.mrb[0].mxu0
    %699 = vmatprep.mubr.f32.mxu0 0.0
    %700 = vmatmul.mubr.f32.gmra.mrb[0].mxu0 %v622
    %v701 = vpop.f32.mrb[0].mxu0
    %v702 = vadd.f32 0.0, %v701
    %v703 = vpop.f32.mrb[0].mxu0
    %704 = vmatprep.mubr.f32.mxu0 0.0
    %705 = vmatmul.mubr.f32.gmra.mrb[0].mxu0 %v625
    %v706 = vpop.f32.mrb[0].mxu0
    %v707 = vadd.f32 0.0, %v706
    %v708 = vpop.f32.mrb[0].mxu0
    %709 = vmatprep.mubr.f32.mxu0 0.0
    %710 = vmatmul.mubr.f32.gmra.mrb[0].mxu0 %v628
    %v711 = vpop.f32.mrb[0].mxu0
    %v712 = vadd.f32 0.0, %v711
    %v713 = vpop.f32.mrb[0].mxu0
    %714 = vdwg.mxu0
    %v716 = vsel %vm49, %v598, 0
    %v719 = vsel %vm49, %v599, 0
    %v722 = vsel %vm49, %v600, 0
    %v725 = vsel %vm49, %v601, 0
    %727 = vmatprep.subr.mxu0 0.0
    %728 = vmatpush1.msra.mxu0 %v607
    %729 = vmatprep.subr.mxu0 0.0
    %730 = vmatpush1.msra.mxu0 %v608
    %731 = vmatprep.subr.mxu0 0.0
    %732 = vmatpush1.msra.mxu0 %v609
    %733 = vmatprep.subr.mxu0 0.0
    %734 = vmatpush1.msra.mxu0 %v610
    %735 = vmatprep.subr.mxu0 0.0
    %736 = vmatpush1.msra.mxu0 %v611
    %737 = vmatprep.subr.mxu0 0.0
    %738 = vmatpush1.msra.mxu0 0.0
    %739 = vmatprep.subr.mxu0 0.0
    %740 = vmatpush1.msra.mxu0 0.0
    %741 = vmatprep.subr.mxu0 0.0
    %742 = vmatpush1.msra.mxu0 0.0
    %743 = vmatprep.subr.mxu0 0.0
    %744 = vmatpush1.msra.mxu0 0.0
    %745 = vmatprep.subr.mxu0 0.0
    %746 = vmatpush1.msra.mxu0 0.0
    %747 = vmatprep.subr.mxu0 0.0
    %748 = vmatpush1.msra.mxu0 0.0
    %749 = vmatprep.subr.mxu0 0.0
    %750 = vmatpush1.msra.mxu0 0.0
    %751 = vmatprep.subr.mxu0 0.0
    %752 = vmatpush1.msra.mxu0 0.0
    %753 = vmatprep.subr.mxu0 0.0
    %754 = vmatpush1.msra.mxu0 0.0
    %755 = vmatprep.subr.mxu0 0.0
    %756 = vmatpush1.msra.mxu0 0.0
    %757 = vmatprep.subr.mxu0 0.0
    %758 = vmatpush1.msra.mxu0 0.0
    %759 = vmatprep.subr.mxu0 0.0
    %760 = vmatpush1.msra.mxu0 0.0
    %761 = vmatprep.subr.mxu0 0.0
    %762 = vmatpush1.msra.mxu0 0.0
    %763 = vmatprep.subr.mxu0 0.0
    %764 = vmatpush1.msra.mxu0 0.0
    %765 = vmatprep.subr.mxu0 0.0
    %766 = vmatpush1.msra.mxu0 0.0
    %767 = vmatprep.subr.mxu0 0.0
    %768 = vmatpush1.msra.mxu0 0.0
    %769 = vmatprep.subr.mxu0 0.0
    %770 = vmatpush1.msra.mxu0 0.0
    %771 = vmatprep.subr.mxu0 0.0
    %772 = vmatpush1.msra.mxu0 0.0
    %773 = vmatprep.subr.mxu0 0.0
    %774 = vmatpush1.msra.mxu0 0.0
    %775 = vmatprep.subr.mxu0 0.0
    %776 = vmatpush1.msra.mxu0 0.0
    %777 = vmatprep.subr.mxu0 0.0
    %778 = vmatpush1.msra.mxu0 0.0
    %779 = vmatprep.subr.mxu0 0.0
    %780 = vmatpush1.msra.mxu0 0.0
    %781 = vmatprep.subr.mxu0 0.0
    %782 = vmatpush1.msra.mxu0 0.0
    %783 = vmatprep.subr.mxu0 0.0
    %784 = vmatpush1.msra.mxu0 0.0
    %785 = vmatprep.subr.mxu0 0.0
    %786 = vmatpush1.msra.mxu0 0.0
    %787 = vmatprep.subr.mxu0 0.0
    %788 = vmatpush1.msra.mxu0 0.0
    %789 = vmatprep.subr.mxu0 0.0
    %790 = vmatpush1.msra.mxu0 0.0
    %791 = vmatprep.mubr.f32.mxu0 0.0
    %792 = vmatmul.mubr.f32.gmra.mrb[0].mxu0 %v716
    %v793 = vpop.f32.mrb[0].mxu0
    %v794 = vadd.f32 %v697, %v793
    %v795 = vpop.f32.mrb[0].mxu0
    %796 = vmatprep.mubr.f32.mxu0 0.0
    %797 = vmatmul.mubr.f32.gmra.mrb[0].mxu0 %v719
    %v798 = vpop.f32.mrb[0].mxu0
    %v799 = vadd.f32 %v702, %v798
    %v800 = vpop.f32.mrb[0].mxu0
    %801 = vmatprep.mubr.f32.mxu0 0.0
    %802 = vmatmul.mubr.f32.gmra.mrb[0].mxu0 %v722
    %v803 = vpop.f32.mrb[0].mxu0
    %v804 = vadd.f32 %v707, %v803
    %v805 = vpop.f32.mrb[0].mxu0
    %806 = vmatprep.mubr.f32.mxu0 0.0
    %807 = vmatmul.mubr.f32.gmra.mrb[0].mxu0 %v725
    %v808 = vpop.f32.mrb[0].mxu0
    %v809 = vadd.f32 %v712, %v808
    %v810 = vpop.f32.mrb[0].mxu0
    %811 = vdwg.mxu0
    %s812 = scalar_lea.vmem %s1, 200
    %v813 = vld [vmem:[%s812] sm:$0xff]
    %v814 = vld [vmem:[%s812 + $0x8] sm:$0xff]
    %v815 = vld [vmem:[%s812 + $0x10] sm:$0xff]
    %v816 = vld [vmem:[%s812 + $0x18] sm:$0xff]
    %v817 = vld [vmem:[%s812 + $0x20] sm:$0xff]
    %v819 = vsel %vm49, %v602, 0
    %v822 = vsel %vm49, %v603, 0
    %v825 = vsel %vm49, %v604, 0
    %v828 = vsel %vm49, %v605, 0
    %830 = vmatprep.subr.mxu0 0.0
    %831 = vmatpush1.msra.mxu0 %v813
    %832 = vmatprep.subr.mxu0 0.0
    %833 = vmatpush1.msra.mxu0 %v814
    %834 = vmatprep.subr.mxu0 0.0
    %835 = vmatpush1.msra.mxu0 %v815
    %836 = vmatprep.subr.mxu0 0.0
    %837 = vmatpush1.msra.mxu0 %v816
    %838 = vmatprep.subr.mxu0 0.0
    %839 = vmatpush1.msra.mxu0 %v817
    %840 = vmatprep.subr.mxu0 0.0
    %841 = vmatpush1.msra.mxu0 0.0
    %842 = vmatprep.subr.mxu0 0.0
    %843 = vmatpush1.msra.mxu0 0.0
    %844 = vmatprep.subr.mxu0 0.0
    %845 = vmatpush1.msra.mxu0 0.0
    %846 = vmatprep.subr.mxu0 0.0
    %847 = vmatpush1.msra.mxu0 0.0
    %848 = vmatprep.subr.mxu0 0.0
    %849 = vmatpush1.msra.mxu0 0.0
    %850 = vmatprep.subr.mxu0 0.0
    %851 = vmatpush1.msra.mxu0 0.0
    %852 = vmatprep.subr.mxu0 0.0
    %853 = vmatpush1.msra.mxu0 0.0
    %854 = vmatprep.subr.mxu0 0.0
    %855 = vmatpush1.msra.mxu0 0.0
    %856 = vmatprep.subr.mxu0 0.0
    %857 = vmatpush1.msra.mxu0 0.0
    %858 = vmatprep.subr.mxu0 0.0
    %859 = vmatpush1.msra.mxu0 0.0
    %860 = vmatprep.subr.mxu0 0.0
    %861 = vmatpush1.msra.mxu0 0.0
    %862 = vmatprep.subr.mxu0 0.0
    %863 = vmatpush1.msra.mxu0 0.0
    %864 = vmatprep.subr.mxu0 0.0
    %865 = vmatpush1.msra.mxu0 0.0
    %866 = vmatprep.subr.mxu0 0.0
    %867 = vmatpush1.msra.mxu0 0.0
    %868 = vmatprep.subr.mxu0 0.0
    %869 = vmatpush1.msra.mxu0 0.0
    %870 = vmatprep.subr.mxu0 0.0
    %871 = vmatpush1.msra.mxu0 0.0
    %872 = vmatprep.subr.mxu0 0.0
    %873 = vmatpush1.msra.mxu0 0.0
    %874 = vmatprep.subr.mxu0 0.0
    %875 = vmatpush1.msra.mxu0 0.0
    %876 = vmatprep.subr.mxu0 0.0
    %877 = vmatpush1.msra.mxu0 0.0
    %878 = vmatprep.subr.mxu0 0.0
    %879 = vmatpush1.msra.mxu0 0.0
    %880 = vmatprep.subr.mxu0 0.0
    %881 = vmatpush1.msra.mxu0 0.0
    %882 = vmatprep.subr.mxu0 0.0
    %883 = vmatpush1.msra.mxu0 0.0
    %884 = vmatprep.subr.mxu0 0.0
    %885 = vmatpush1.msra.mxu0 0.0
    %886 = vmatprep.subr.mxu0 0.0
    %887 = vmatpush1.msra.mxu0 0.0
    %888 = vmatprep.subr.mxu0 0.0
    %889 = vmatpush1.msra.mxu0 0.0
    %890 = vmatprep.subr.mxu0 0.0
    %891 = vmatpush1.msra.mxu0 0.0
    %892 = vmatprep.subr.mxu0 0.0
    %893 = vmatpush1.msra.mxu0 0.0
    %894 = vmatprep.mubr.f32.mxu0 0.0
    %895 = vmatmul.mubr.f32.gmra.mrb[0].mxu0 %v819
    %v896 = vpop.f32.mrb[0].mxu0
    %v897 = vadd.f32 0.0, %v896
    %v898 = vpop.f32.mrb[0].mxu0
    %899 = vmatprep.mubr.f32.mxu0 0.0
    %900 = vmatmul.mubr.f32.gmra.mrb[0].mxu0 %v822
    %v901 = vpop.f32.mrb[0].mxu0
    %v902 = vadd.f32 0.0, %v901
    %v903 = vpop.f32.mrb[0].mxu0
    %904 = vmatprep.mubr.f32.mxu0 0.0
    %905 = vmatmul.mubr.f32.gmra.mrb[0].mxu0 %v825
    %v906 = vpop.f32.mrb[0].mxu0
    %v907 = vadd.f32 0.0, %v906
    %v908 = vpop.f32.mrb[0].mxu0
    %909 = vmatprep.mubr.f32.mxu0 0.0
    %910 = vmatmul.mubr.f32.gmra.mrb[0].mxu0 %v828
    %v911 = vpop.f32.mrb[0].mxu0
    %v912 = vadd.f32 0.0, %v911
    %v913 = vpop.f32.mrb[0].mxu0
    %914 = vdwg.mxu0
    %v915 = vadd.f32 %v794, %v897
    %v916 = vadd.f32 %v799, %v902
    %v917 = vadd.f32 %v804, %v907
    %v918 = vadd.f32 %v809, %v912
    %v919 = vstv %s589
    %v920 = vadd.f32 %v915, %v919
    %v921 = vadd.f32 %v916, %v919
    %v922 = vadd.f32 %v917, %v919
    %v923 = vadd.f32 %v918, %v919
    %v924 = vadd.f32 %v920, 3.0
    %v925 = vadd.f32 %v921, 3.0
    %v926 = vadd.f32 %v922, 3.0
    %v927 = vadd.f32 %v923, 3.0
    %v928 = vmax.f32 %v924, 0.0
    %v929 = vmax.f32 %v925, 0.0
    %v930 = vmax.f32 %v926, 0.0
    %v931 = vmax.f32 %v927, 0.0
    %v932 = vmin.f32 %v928, 6.0
    %v933 = vmin.f32 %v929, 6.0
    %v934 = vmin.f32 %v930, 6.0
    %v935 = vmin.f32 %v931, 6.0
    %v936 = vmul.f32 %v920, %v932
    %v937 = vmul.f32 %v921, %v933
    %v938 = vmul.f32 %v922, %v934
    %v939 = vmul.f32 %v923, %v935
    %v940 = vmul.f32 %v936, 0.16666667
    %v941 = vmul.f32 %v937, 0.16666667
    %v942 = vmul.f32 %v938, 0.16666667
    %v943 = vmul.f32 %v939, 0.16666667
    %v944 = vstv %s590
    %v945 = vmul.f32 %v944, %v940
    %v946 = vmul.f32 %v944, %v941
    %v947 = vmul.f32 %v944, %v942
    %v948 = vmul.f32 %v944, %v943
    %v949 = vstv %s591
    %v950 = vadd.f32 %v945, %v949
    %v951 = vadd.f32 %v946, %v949
    %v952 = vadd.f32 %v947, %v949
    %v953 = vadd.f32 %v948, %v949
    %v954 = vadd.f32 %v950, %v585
    %v955 = vadd.f32 %v951, %v586
    %v956 = vadd.f32 %v952, %v587
    %v957 = vadd.f32 %v953, %v588
    %958 = vst.msk [vmem:[#allocation2] sm:$0xff] %vm49, %v954
    %959 = vst.msk [vmem:[#allocation2 + $0x8] sm:$0xff] %vm49, %v955
    %960 = vst.msk [vmem:[#allocation2 + $0x10] sm:$0xff] %vm49, %v956
    %961 = vst.msk [vmem:[#allocation2 + $0x18] sm:$0xff] %vm49, %v957
    %v962 = vld [vmem:[#allocation2] ss:$2 sm:$0xff]
    %v963 = vld [vmem:[%s571] ss:$2 sm:$0xff]
    %v964 = vld [vmem:[%s577] ss:$2 sm:$0xff]
    %v965 = vld [vmem:[%s579] ss:$2 sm:$0xff]
    %v966 = vmax.f32 %v962, %v964
    %v967 = vmax.f32 %v963, %v965
    %968 = vst.msk [vmem:[#allocation2] sm:$0xff] %vm49, %v966
    %969 = vst.msk [vmem:[#allocation2 + $0x8] sm:$0xff] %vm49, %v967
    %v970 = vld [vmem:[#allocation2] sm:$0xff]
    %v971 = vld [vmem:[#allocation2 + $0x8] sm:$0xff]
    %974 = vrot.lane.b32.xlu0 %v970, 123
    %v975 = vpop.permute.xlu0 %974
    %976 = vrot.lane.b32.xlu0 %v971, 123
    %v977 = vpop.permute.xlu0 %976
    %978 = vrot.lane.b32.xlu0 %v970, 118
    %v979 = vpop.permute.xlu0 %978
    %980 = vrot.lane.b32.xlu0 %v971, 118
    %v981 = vpop.permute.xlu0 %980
    %982 = vrot.lane.b32.xlu0 %v970, 113
    %v983 = vpop.permute.xlu0 %982
    %984 = vrot.lane.b32.xlu0 %v971, 113
    %v985 = vpop.permute.xlu0 %984
    %986 = vrot.lane.b32.xlu0 %v970, 108
    %v987 = vpop.permute.xlu0 %986
    %988 = vrot.lane.b32.xlu0 %v971, 108
    %v989 = vpop.permute.xlu0 %988
    %990 = vrot.lane.b32.xlu0 %v970, 103
    %v991 = vpop.permute.xlu0 %990
    %992 = vrot.lane.b32.xlu0 %v971, 103
    %v993 = vpop.permute.xlu0 %992
    %994 = vrot.lane.b32.xlu0 %v970, 98
    %v995 = vpop.permute.xlu0 %994
    %996 = vrot.lane.b32.xlu0 %v971, 98
    %v997 = vpop.permute.xlu0 %996
    %998 = vrot.lane.b32.xlu0 %v970, 93
    %v999 = vpop.permute.xlu0 %998
    %1000 = vrot.lane.b32.xlu0 %v971, 93
    %v1001 = vpop.permute.xlu0 %1000
    %v1002 = vld [vmem:[%s4 + $0x70] sm:$0x1f]
    %v1003 = vld [vmem:[%s3] sm:$0x1]
    %v1004 = vlaneseq
    %v1005 = vshrl.u32 %v1004, 7
    %v1006 = vsub.s32 0, %v1005
    %v1007 = vrot.slane %v1003, %v1006
    %vm1008 = vcmask 39936
    %v1009 = vsel %vm1008, %v970, 0
    %v1011 = vsel %vm1008, %v971, 0
    %v1013 = vsel %vm1008, %v975, 0
    %v1015 = vsel %vm1008, %v977, 0
    %v1017 = vsel %vm1008, %v979, 0
    %v1019 = vsel %vm1008, %v981, 0
    %v1021 = vsel %vm1008, %v983, 0
    %v1023 = vsel %vm1008, %v985, 0
    %v1025 = vsel %vm1008, %v987, 0
    %v1027 = vsel %vm1008, %v989, 0
    %v1029 = vsel %vm1008, %v991, 0
    %v1031 = vsel %vm1008, %v993, 0
    %v1033 = vsel %vm1008, %v995, 0
    %v1035 = vsel %vm1008, %v997, 0
    %v1037 = vsel %vm1008, %v999, 0
    %v1039 = vsel %vm1008, %v1001, 0
    %vm1041 = vcmask 1044480
    %v1043 = vsel %vm1041, %v1002, 0
    %1045 = vmatprep.subr.mxu0 0.0
    %1046 = vmatpush1.msra.mxu0 %v1043
    %1047 = vmatprep.subr.mxu0 0.0
    %1048 = vmatpush1.msra.mxu0 0.0
    %1049 = vmatprep.subr.mxu0 0.0
    %1050 = vmatpush1.msra.mxu0 0.0
    %1051 = vmatprep.subr.mxu0 0.0
    %1052 = vmatpush1.msra.mxu0 0.0
    %1053 = vmatprep.subr.mxu0 0.0
    %1054 = vmatpush1.msra.mxu0 0.0
    %1055 = vmatprep.subr.mxu0 0.0
    %1056 = vmatpush1.msra.mxu0 0.0
    %1057 = vmatprep.subr.mxu0 0.0
    %1058 = vmatpush1.msra.mxu0 0.0
    %1059 = vmatprep.subr.mxu0 0.0
    %1060 = vmatpush1.msra.mxu0 0.0
    %1061 = vmatprep.subr.mxu0 0.0
    %1062 = vmatpush1.msra.mxu0 0.0
    %1063 = vmatprep.subr.mxu0 0.0
    %1064 = vmatpush1.msra.mxu0 0.0
    %1065 = vmatprep.subr.mxu0 0.0
    %1066 = vmatpush1.msra.mxu0 0.0
    %1067 = vmatprep.subr.mxu0 0.0
    %1068 = vmatpush1.msra.mxu0 0.0
    %1069 = vmatprep.subr.mxu0 0.0
    %1070 = vmatpush1.msra.mxu0 0.0
    %1071 = vmatprep.subr.mxu0 0.0
    %1072 = vmatpush1.msra.mxu0 0.0
    %1073 = vmatprep.subr.mxu0 0.0
    %1074 = vmatpush1.msra.mxu0 0.0
    %1075 = vmatprep.subr.mxu0 0.0
    %1076 = vmatpush1.msra.mxu0 0.0
    %1077 = vmatprep.subr.mxu0 0.0
    %1078 = vmatpush1.msra.mxu0 0.0
    %1079 = vmatprep.subr.mxu0 0.0
    %1080 = vmatpush1.msra.mxu0 0.0
    %1081 = vmatprep.subr.mxu0 0.0
    %1082 = vmatpush1.msra.mxu0 0.0
    %1083 = vmatprep.subr.mxu0 0.0
    %1084 = vmatpush1.msra.mxu0 0.0
    %1085 = vmatprep.subr.mxu0 0.0
    %1086 = vmatpush1.msra.mxu0 0.0
    %1087 = vmatprep.subr.mxu0 0.0
    %1088 = vmatpush1.msra.mxu0 0.0
    %1089 = vmatprep.subr.mxu0 0.0
    %1090 = vmatpush1.msra.mxu0 0.0
    %1091 = vmatprep.subr.mxu0 0.0
    %1092 = vmatpush1.msra.mxu0 0.0
    %1093 = vmatprep.subr.mxu0 0.0
    %1094 = vmatpush1.msra.mxu0 0.0
    %1095 = vmatprep.subr.mxu0 0.0
    %1096 = vmatpush1.msra.mxu0 0.0
    %1097 = vmatprep.subr.mxu0 0.0
    %1098 = vmatpush1.msra.mxu0 0.0
    %1099 = vmatprep.subr.mxu0 0.0
    %1100 = vmatpush1.msra.mxu0 0.0
    %1101 = vmatprep.subr.mxu0 0.0
    %1102 = vmatpush1.msra.mxu0 0.0
    %1103 = vmatprep.subr.mxu0 0.0
    %1104 = vmatpush1.msra.mxu0 0.0
    %1105 = vmatprep.subr.mxu0 0.0
    %1106 = vmatpush1.msra.mxu0 0.0
    %1107 = vmatprep.subr.mxu0 0.0
    %1108 = vmatpush1.msra.mxu0 0.0
    %1109 = vmatprep.mubr.f32.mxu0 0.0
    %1110 = vmatmul.mubr.f32.gmra.mrb[0].mxu0 %v1009
    %v1111 = vpop.f32.mrb[0].mxu0
    %v1112 = vadd.f32 %v1007, %v1111
    %v1113 = vpop.f32.mrb[0].mxu0
    %1114 = vmatprep.mubr.f32.mxu0 0.0
    %1115 = vmatmul.mubr.f32.gmra.mrb[0].mxu0 %v1011
    %v1116 = vpop.f32.mrb[0].mxu0
    %v1117 = vadd.f32 %v1007, %v1116
    %v1118 = vpop.f32.mrb[0].mxu0
    %1119 = vmatprep.mubr.f32.mxu0 0.0
    %1120 = vmatmul.mubr.f32.gmra.mrb[0].mxu0 %v1013
    %v1121 = vpop.f32.mrb[0].mxu0
    %v1122 = vadd.f32 %v1007, %v1121
    %v1123 = vpop.f32.mrb[0].mxu0
    %1124 = vmatprep.mubr.f32.mxu0 0.0
    %1125 = vmatmul.mubr.f32.gmra.mrb[0].mxu0 %v1015
    %v1126 = vpop.f32.mrb[0].mxu0
    %v1127 = vadd.f32 %v1007, %v1126
    %v1128 = vpop.f32.mrb[0].mxu0
    %1129 = vmatprep.mubr.f32.mxu0 0.0
    %1130 = vmatmul.mubr.f32.gmra.mrb[0].mxu0 %v1017
    %v1131 = vpop.f32.mrb[0].mxu0
    %v1132 = vadd.f32 %v1007, %v1131
    %v1133 = vpop.f32.mrb[0].mxu0
    %1134 = vmatprep.mubr.f32.mxu0 0.0
    %1135 = vmatmul.mubr.f32.gmra.mrb[0].mxu0 %v1019
    %v1136 = vpop.f32.mrb[0].mxu0
    %v1137 = vadd.f32 %v1007, %v1136
    %v1138 = vpop.f32.mrb[0].mxu0
    %1139 = vmatprep.mubr.f32.mxu0 0.0
    %1140 = vmatmul.mubr.f32.gmra.mrb[0].mxu0 %v1021
    %v1141 = vpop.f32.mrb[0].mxu0
    %v1142 = vadd.f32 %v1007, %v1141
    %v1143 = vpop.f32.mrb[0].mxu0
    %1144 = vmatprep.mubr.f32.mxu0 0.0
    %1145 = vmatmul.mubr.f32.gmra.mrb[0].mxu0 %v1023
    %v1146 = vpop.f32.mrb[0].mxu0
    %v1147 = vadd.f32 %v1007, %v1146
    %v1148 = vpop.f32.mrb[0].mxu0
    %1149 = vmatprep.mubr.f32.mxu0 0.0
    %1150 = vmatmul.mubr.f32.gmra.mrb[0].mxu0 %v1025
    %v1151 = vpop.f32.mrb[0].mxu0
    %v1152 = vadd.f32 %v1007, %v1151
    %v1153 = vpop.f32.mrb[0].mxu0
    %1154 = vmatprep.mubr.f32.mxu0 0.0
    %1155 = vmatmul.mubr.f32.gmra.mrb[0].mxu0 %v1027
    %v1156 = vpop.f32.mrb[0].mxu0
    %v1157 = vadd.f32 %v1007, %v1156
    %v1158 = vpop.f32.mrb[0].mxu0
    %1159 = vmatprep.mubr.f32.mxu0 0.0
    %1160 = vmatmul.mubr.f32.gmra.mrb[0].mxu0 %v1029
    %v1161 = vpop.f32.mrb[0].mxu0
    %v1162 = vadd.f32 %v1007, %v1161
    %v1163 = vpop.f32.mrb[0].mxu0
    %1164 = vmatprep.mubr.f32.mxu0 0.0
    %1165 = vmatmul.mubr.f32.gmra.mrb[0].mxu0 %v1031
    %v1166 = vpop.f32.mrb[0].mxu0
    %v1167 = vadd.f32 %v1007, %v1166
    %v1168 = vpop.f32.mrb[0].mxu0
    %1169 = vmatprep.mubr.f32.mxu0 0.0
    %1170 = vmatmul.mubr.f32.gmra.mrb[0].mxu0 %v1033
    %v1171 = vpop.f32.mrb[0].mxu0
    %v1172 = vadd.f32 %v1007, %v1171
    %v1173 = vpop.f32.mrb[0].mxu0
    %1174 = vmatprep.mubr.f32.mxu0 0.0
    %1175 = vmatmul.mubr.f32.gmra.mrb[0].mxu0 %v1035
    %v1176 = vpop.f32.mrb[0].mxu0
    %v1177 = vadd.f32 %v1007, %v1176
    %v1178 = vpop.f32.mrb[0].mxu0
    %1179 = vmatprep.mubr.f32.mxu0 0.0
    %1180 = vmatmul.mubr.f32.gmra.mrb[0].mxu0 %v1037
    %v1181 = vpop.f32.mrb[0].mxu0
    %v1182 = vadd.f32 %v1007, %v1181
    %v1183 = vpop.f32.mrb[0].mxu0
    %1184 = vmatprep.mubr.f32.mxu0 0.0
    %1185 = vmatmul.mubr.f32.gmra.mrb[0].mxu0 %v1039
    %v1186 = vpop.f32.mrb[0].mxu0
    %v1187 = vadd.f32 %v1007, %v1186
    %v1188 = vpop.f32.mrb[0].mxu0
    %1189 = vdwg.mxu0
    %v1190 = vld [vmem:[%s3 + $0x1] sm:$0x1]
    %v1191 = vld [vmem:[%s3 + $0x2] sm:$0x1]
    %vm1192 = vcmask 130048
    %v1193 = vsel %vm1192, %v1112, 0.0
    %1194 = vadd.xlane.f32.xlu0 %v1193
    %v1195 = vpop.xlane.xlu0 %1194
    %v1196 = vsel %vm1192, %v1117, 0.0
    %1197 = vadd.xlane.f32.xlu0 %v1196
    %v1198 = vpop.xlane.xlu0 %1197
    %v1199 = vsel %vm1192, %v1122, 0.0
    %1200 = vadd.xlane.f32.xlu0 %v1199
    %v1201 = vpop.xlane.xlu0 %1200
    %v1202 = vsel %vm1192, %v1127, 0.0
    %1203 = vadd.xlane.f32.xlu0 %v1202
    %v1204 = vpop.xlane.xlu0 %1203
    %v1205 = vsel %vm1192, %v1132, 0.0
    %1206 = vadd.xlane.f32.xlu0 %v1205
    %v1207 = vpop.xlane.xlu0 %1206
    %v1208 = vsel %vm1192, %v1137, 0.0
    %1209 = vadd.xlane.f32.xlu0 %v1208
    %v1210 = vpop.xlane.xlu0 %1209
    %v1211 = vsel %vm1192, %v1142, 0.0
    %1212 = vadd.xlane.f32.xlu0 %v1211
    %v1213 = vpop.xlane.xlu0 %1212
    %v1214 = vsel %vm1192, %v1147, 0.0
    %1215 = vadd.xlane.f32.xlu0 %v1214
    %v1216 = vpop.xlane.xlu0 %1215
    %v1217 = vsel %vm1192, %v1152, 0.0
    %1218 = vadd.xlane.f32.xlu0 %v1217
    %v1219 = vpop.xlane.xlu0 %1218
    %v1220 = vsel %vm1192, %v1157, 0.0
    %1221 = vadd.xlane.f32.xlu0 %v1220
    %v1222 = vpop.xlane.xlu0 %1221
    %v1223 = vsel %vm1192, %v1162, 0.0
    %1224 = vadd.xlane.f32.xlu0 %v1223
    %v1225 = vpop.xlane.xlu0 %1224
    %v1226 = vsel %vm1192, %v1167, 0.0
    %1227 = vadd.xlane.f32.xlu0 %v1226
    %v1228 = vpop.xlane.xlu0 %1227
    %v1229 = vsel %vm1192, %v1172, 0.0
    %1230 = vadd.xlane.f32.xlu0 %v1229
    %v1231 = vpop.xlane.xlu0 %1230
    %v1232 = vsel %vm1192, %v1177, 0.0
    %1233 = vadd.xlane.f32.xlu0 %v1232
    %v1234 = vpop.xlane.xlu0 %1233
    %v1235 = vsel %vm1192, %v1182, 0.0
    %1236 = vadd.xlane.f32.xlu0 %v1235
    %v1237 = vpop.xlane.xlu0 %1236
    %v1238 = vsel %vm1192, %v1187, 0.0
    %1239 = vadd.xlane.f32.xlu0 %v1238
    %v1240 = vpop.xlane.xlu0 %1239
    %v1241 = vrcp.pop 16.0
    %v1242 = vmul.f32 %v1195, %v1241
    %v1243 = vmul.f32 %v1198, %v1241
    %v1244 = vmul.f32 %v1201, %v1241
    %v1245 = vmul.f32 %v1204, %v1241
    %v1246 = vmul.f32 %v1207, %v1241
    %v1247 = vmul.f32 %v1210, %v1241
    %v1248 = vmul.f32 %v1213, %v1241
    %v1249 = vmul.f32 %v1216, %v1241
    %v1250 = vmul.f32 %v1219, %v1241
    %v1251 = vmul.f32 %v1222, %v1241
    %v1252 = vmul.f32 %v1225, %v1241
    %v1253 = vmul.f32 %v1228, %v1241
    %v1254 = vmul.f32 %v1231, %v1241
    %v1255 = vmul.f32 %v1234, %v1241
    %v1256 = vmul.f32 %v1237, %v1241
    %v1257 = vmul.f32 %v1240, %v1241
    %v1258 = vsub.f32 %v1112, %v1242
    %v1259 = vsub.f32 %v1117, %v1243
    %v1260 = vsub.f32 %v1122, %v1244
    %v1261 = vsub.f32 %v1127, %v1245
    %v1262 = vsub.f32 %v1132, %v1246
    %v1263 = vsub.f32 %v1137, %v1247
    %v1264 = vsub.f32 %v1142, %v1248
    %v1265 = vsub.f32 %v1147, %v1249
    %v1266 = vsub.f32 %v1152, %v1250
    %v1267 = vsub.f32 %v1157, %v1251
    %v1268 = vsub.f32 %v1162, %v1252
    %v1269 = vsub.f32 %v1167, %v1253
    %v1270 = vsub.f32 %v1172, %v1254
    %v1271 = vsub.f32 %v1177, %v1255
    %v1272 = vsub.f32 %v1182, %v1256
    %v1273 = vsub.f32 %v1187, %v1257
    %v1274 = vmul.f32 %v1258, %v1258
    %v1275 = vmul.f32 %v1259, %v1259
    %v1276 = vmul.f32 %v1260, %v1260
    %v1277 = vmul.f32 %v1261, %v1261
    %v1278 = vmul.f32 %v1262, %v1262
    %v1279 = vmul.f32 %v1263, %v1263
    %v1280 = vmul.f32 %v1264, %v1264
    %v1281 = vmul.f32 %v1265, %v1265
    %v1282 = vmul.f32 %v1266, %v1266
    %v1283 = vmul.f32 %v1267, %v1267
    %v1284 = vmul.f32 %v1268, %v1268
    %v1285 = vmul.f32 %v1269, %v1269
    %v1286 = vmul.f32 %v1270, %v1270
    %v1287 = vmul.f32 %v1271, %v1271
    %v1288 = vmul.f32 %v1272, %v1272
    %v1289 = vmul.f32 %v1273, %v1273
    %v1290 = vsel %vm1192, %v1274, 0.0
    %1291 = vadd.xlane.f32.xlu0 %v1290
    %v1292 = vpop.xlane.xlu0 %1291
    %v1293 = vsel %vm1192, %v1275, 0.0
    %1294 = vadd.xlane.f32.xlu0 %v1293
    %v1295 = vpop.xlane.xlu0 %1294
    %v1296 = vsel %vm1192, %v1276, 0.0
    %1297 = vadd.xlane.f32.xlu0 %v1296
    %v1298 = vpop.xlane.xlu0 %1297
    %v1299 = vsel %vm1192, %v1277, 0.0
    %1300 = vadd.xlane.f32.xlu0 %v1299
    %v1301 = vpop.xlane.xlu0 %1300
    %v1302 = vsel %vm1192, %v1278, 0.0
    %1303 = vadd.xlane.f32.xlu0 %v1302
    %v1304 = vpop.xlane.xlu0 %1303
    %v1305 = vsel %vm1192, %v1279, 0.0
    %1306 = vadd.xlane.f32.xlu0 %v1305
    %v1307 = vpop.xlane.xlu0 %1306
    %v1308 = vsel %vm1192, %v1280, 0.0
    %1309 = vadd.xlane.f32.xlu0 %v1308
    %v1310 = vpop.xlane.xlu0 %1309
    %v1311 = vsel %vm1192, %v1281, 0.0
    %1312 = vadd.xlane.f32.xlu0 %v1311
    %v1313 = vpop.xlane.xlu0 %1312
    %v1314 = vsel %vm1192, %v1282, 0.0
    %1315 = vadd.xlane.f32.xlu0 %v1314
    %v1316 = vpop.xlane.xlu0 %1315
    %v1317 = vsel %vm1192, %v1283, 0.0
    %1318 = vadd.xlane.f32.xlu0 %v1317
    %v1319 = vpop.xlane.xlu0 %1318
    %v1320 = vsel %vm1192, %v1284, 0.0
    %1321 = vadd.xlane.f32.xlu0 %v1320
    %v1322 = vpop.xlane.xlu0 %1321
    %v1323 = vsel %vm1192, %v1285, 0.0
    %1324 = vadd.xlane.f32.xlu0 %v1323
    %v1325 = vpop.xlane.xlu0 %1324
    %v1326 = vsel %vm1192, %v1286, 0.0
    %1327 = vadd.xlane.f32.xlu0 %v1326
    %v1328 = vpop.xlane.xlu0 %1327
    %v1329 = vsel %vm1192, %v1287, 0.0
    %1330 = vadd.xlane.f32.xlu0 %v1329
    %v1331 = vpop.xlane.xlu0 %1330
    %v1332 = vsel %vm1192, %v1288, 0.0
    %1333 = vadd.xlane.f32.xlu0 %v1332
    %v1334 = vpop.xlane.xlu0 %1333
    %v1335 = vsel %vm1192, %v1289, 0.0
    %1336 = vadd.xlane.f32.xlu0 %v1335
    %v1337 = vpop.xlane.xlu0 %1336
    %v1338 = vmul.f32 %v1292, %v1241
    %v1339 = vmul.f32 %v1295, %v1241
    %v1340 = vmul.f32 %v1298, %v1241
    %v1341 = vmul.f32 %v1301, %v1241
    %v1342 = vmul.f32 %v1304, %v1241
    %v1343 = vmul.f32 %v1307, %v1241
    %v1344 = vmul.f32 %v1310, %v1241
    %v1345 = vmul.f32 %v1313, %v1241
    %v1346 = vmul.f32 %v1316, %v1241
    %v1347 = vmul.f32 %v1319, %v1241
    %v1348 = vmul.f32 %v1322, %v1241
    %v1349 = vmul.f32 %v1325, %v1241
    %v1350 = vmul.f32 %v1328, %v1241
    %v1351 = vmul.f32 %v1331, %v1241
    %v1352 = vmul.f32 %v1334, %v1241
    %v1353 = vmul.f32 %v1337, %v1241
    %v1354 = vadd.f32 %v1338, 1e-05
    %v1355 = vadd.f32 %v1339, 1e-05
    %v1356 = vadd.f32 %v1340, 1e-05
    %v1357 = vadd.f32 %v1341, 1e-05
    %v1358 = vadd.f32 %v1342, 1e-05
    %v1359 = vadd.f32 %v1343, 1e-05
    %v1360 = vadd.f32 %v1344, 1e-05
    %v1361 = vadd.f32 %v1345, 1e-05
    %v1362 = vadd.f32 %v1346, 1e-05
    %v1363 = vadd.f32 %v1347, 1e-05
    %v1364 = vadd.f32 %v1348, 1e-05
    %v1365 = vadd.f32 %v1349, 1e-05
    %v1366 = vadd.f32 %v1350, 1e-05
    %v1367 = vadd.f32 %v1351, 1e-05
    %v1368 = vadd.f32 %v1352, 1e-05
    %v1369 = vadd.f32 %v1353, 1e-05
    %v1370 = vrsqrt.pop %v1354
    %v1371 = vrsqrt.pop %v1355
    %v1372 = vrsqrt.pop %v1356
    %v1373 = vrsqrt.pop %v1357
    %v1374 = vrsqrt.pop %v1358
    %v1375 = vrsqrt.pop %v1359
    %v1376 = vrsqrt.pop %v1360
    %v1377 = vrsqrt.pop %v1361
    %v1378 = vrsqrt.pop %v1362
    %v1379 = vrsqrt.pop %v1363
    %v1380 = vrsqrt.pop %v1364
    %v1381 = vrsqrt.pop %v1365
    %v1382 = vrsqrt.pop %v1366
    %v1383 = vrsqrt.pop %v1367
    %v1384 = vrsqrt.pop %v1368
    %v1385 = vrsqrt.pop %v1369
    %v1386 = vmul.f32 %v1258, %v1370
    %v1387 = vmul.f32 %v1259, %v1371
    %v1388 = vmul.f32 %v1260, %v1372
    %v1389 = vmul.f32 %v1261, %v1373
    %v1390 = vmul.f32 %v1262, %v1374
    %v1391 = vmul.f32 %v1263, %v1375
    %v1392 = vmul.f32 %v1264, %v1376
    %v1393 = vmul.f32 %v1265, %v1377
    %v1394 = vmul.f32 %v1266, %v1378
    %v1395 = vmul.f32 %v1267, %v1379
    %v1396 = vmul.f32 %v1268, %v1380
    %v1397 = vmul.f32 %v1269, %v1381
    %v1398 = vmul.f32 %v1270, %v1382
    %v1399 = vmul.f32 %v1271, %v1383
    %v1400 = vmul.f32 %v1272, %v1384
    %v1401 = vmul.f32 %v1273, %v1385
    %v1402 = vlaneseq
    %v1403 = vshrl.u32 %v1402, 7
    %v1404 = vsub.s32 0, %v1403
    %v1405 = vrot.slane %v1190, %v1404
    %v1406 = vmul.f32 %v1386, %v1405
    %v1407 = vmul.f32 %v1387, %v1405
    %v1408 = vmul.f32 %v1388, %v1405
    %v1409 = vmul.f32 %v1389, %v1405
    %v1410 = vmul.f32 %v1390, %v1405
    %v1411 = vmul.f32 %v1391, %v1405
    %v1412 = vmul.f32 %v1392, %v1405
    %v1413 = vmul.f32 %v1393, %v1405
    %v1414 = vmul.f32 %v1394, %v1405
    %v1415 = vmul.f32 %v1395, %v1405
    %v1416 = vmul.f32 %v1396, %v1405
    %v1417 = vmul.f32 %v1397, %v1405
    %v1418 = vmul.f32 %v1398, %v1405
    %v1419 = vmul.f32 %v1399, %v1405
    %v1420 = vmul.f32 %v1400, %v1405
    %v1421 = vmul.f32 %v1401, %v1405
    %v1422 = vlaneseq
    %v1423 = vshrl.u32 %v1422, 7
    %v1424 = vsub.s32 0, %v1423
    %v1425 = vrot.slane %v1191, %v1424
    %v1426 = vadd.f32 %v1406, %v1425
    %v1427 = vadd.f32 %v1407, %v1425
    %v1428 = vadd.f32 %v1408, %v1425
    %v1429 = vadd.f32 %v1409, %v1425
    %v1430 = vadd.f32 %v1410, %v1425
    %v1431 = vadd.f32 %v1411, %v1425
    %v1432 = vadd.f32 %v1412, %v1425
    %v1433 = vadd.f32 %v1413, %v1425
    %v1434 = vadd.f32 %v1414, %v1425
    %v1435 = vadd.f32 %v1415, %v1425
    %v1436 = vadd.f32 %v1416, %v1425
    %v1437 = vadd.f32 %v1417, %v1425
    %v1438 = vadd.f32 %v1418, %v1425
    %v1439 = vadd.f32 %v1419, %v1425
    %v1440 = vadd.f32 %v1420, %v1425
    %v1441 = vadd.f32 %v1421, %v1425
    %v1442 = vld [vmem:[%s4] sm:$0xff]
    %v1443 = vld [vmem:[%s4 + $0x8] sm:$0xff]
    %v1444 = vld [vmem:[%s3 + $0x3] sm:$0x1]
    %v1445 = vlaneseq
    %v1446 = vshrl.u32 %v1445, 7
    %v1447 = vsub.s32 0, %v1446
    %v1448 = vrot.slane %v1444, %v1447
    %v1450 = vsel %vm1192, %v1426, 0
    %v1453 = vsel %vm1192, %v1427, 0
    %v1456 = vsel %vm1192, %v1428, 0
    %v1459 = vsel %vm1192, %v1429, 0
    %v1462 = vsel %vm1192, %v1430, 0
    %v1465 = vsel %vm1192, %v1431, 0
    %v1468 = vsel %vm1192, %v1432, 0
    %v1471 = vsel %vm1192, %v1433, 0
    %v1474 = vsel %vm1192, %v1434, 0
    %v1477 = vsel %vm1192, %v1435, 0
    %v1480 = vsel %vm1192, %v1436, 0
    %v1483 = vsel %vm1192, %v1437, 0
    %v1486 = vsel %vm1192, %v1438, 0
    %v1489 = vsel %vm1192, %v1439, 0
    %v1492 = vsel %vm1192, %v1440, 0
    %v1495 = vsel %vm1192, %v1441, 0
    %1497 = vmatprep.subr.mxu0 0.0
    %1498 = vmatpush1.msra.mxu0 %v1442
    %1499 = vmatprep.subr.mxu0 0.0
    %1500 = vmatpush1.msra.mxu0 %v1443
    %1501 = vmatprep.subr.mxu0 0.0
    %1502 = vmatpush1.msra.mxu0 0.0
    %1503 = vmatprep.subr.mxu0 0.0
    %1504 = vmatpush1.msra.mxu0 0.0
    %1505 = vmatprep.subr.mxu0 0.0
    %1506 = vmatpush1.msra.mxu0 0.0
    %1507 = vmatprep.subr.mxu0 0.0
    %1508 = vmatpush1.msra.mxu0 0.0
    %1509 = vmatprep.subr.mxu0 0.0
    %1510 = vmatpush1.msra.mxu0 0.0
    %1511 = vmatprep.subr.mxu0 0.0
    %1512 = vmatpush1.msra.mxu0 0.0
    %1513 = vmatprep.subr.mxu0 0.0
    %1514 = vmatpush1.msra.mxu0 0.0
    %1515 = vmatprep.subr.mxu0 0.0
    %1516 = vmatpush1.msra.mxu0 0.0
    %1517 = vmatprep.subr.mxu0 0.0
    %1518 = vmatpush1.msra.mxu0 0.0
    %1519 = vmatprep.subr.mxu0 0.0
    %1520 = vmatpush1.msra.mxu0 0.0
    %1521 = vmatprep.subr.mxu0 0.0
    %1522 = vmatpush1.msra.mxu0 0.0
    %1523 = vmatprep.subr.mxu0 0.0
    %1524 = vmatpush1.msra.mxu0 0.0
    %1525 = vmatprep.subr.mxu0 0.0
    %1526 = vmatpush1.msra.mxu0 0.0
    %1527 = vmatprep.subr.mxu0 0.0
    %1528 = vmatpush1.msra.mxu0 0.0
    %1529 = vmatprep.subr.mxu0 0.0
    %1530 = vmatpush1.msra.mxu0 0.0
    %1531 = vmatprep.subr.mxu0 0.0
    %1532 = vmatpush1.msra.mxu0 0.0
    %1533 = vmatprep.subr.mxu0 0.0
    %1534 = vmatpush1.msra.mxu0 0.0
    %1535 = vmatprep.subr.mxu0 0.0
    %1536 = vmatpush1.msra.mxu0 0.0
    %1537 = vmatprep.subr.mxu0 0.0
    %1538 = vmatpush1.msra.mxu0 0.0
    %1539 = vmatprep.subr.mxu0 0.0
    %1540 = vmatpush1.msra.mxu0 0.0
    %1541 = vmatprep.subr.mxu0 0.0
    %1542 = vmatpush1.msra.mxu0 0.0
    %1543 = vmatprep.subr.mxu0 0.0
    %1544 = vmatpush1.msra.mxu0 0.0
    %1545 = vmatprep.subr.mxu0 0.0
    %1546 = vmatpush1.msra.mxu0 0.0
    %1547 = vmatprep.subr.mxu0 0.0
    %1548 = vmatpush1.msra.mxu0 0.0
    %1549 = vmatprep.subr.mxu0 0.0
    %1550 = vmatpush1.msra.mxu0 0.0
    %1551 = vmatprep.subr.mxu0 0.0
    %1552 = vmatpush1.msra.mxu0 0.0
    %1553 = vmatprep.subr.mxu0 0.0
    %1554 = vmatpush1.msra.mxu0 0.0
    %1555 = vmatprep.subr.mxu0 0.0
    %1556 = vmatpush1.msra.mxu0 0.0
    %1557 = vmatprep.subr.mxu0 0.0
    %1558 = vmatpush1.msra.mxu0 0.0
    %1559 = vmatprep.subr.mxu0 0.0
    %1560 = vmatpush1.msra.mxu0 0.0
    %1561 = vmatprep.mubr.f32.mxu0 0.0
    %1562 = vmatmul.mubr.f32.gmra.mrb[0].mxu0 %v1450
    %v1563 = vpop.f32.mrb[0].mxu0
    %v1564 = vadd.f32 %v1448, %v1563
    %v1565 = vpop.f32.mrb[0].mxu0
    %1566 = vmatprep.mubr.f32.mxu0 0.0
    %1567 = vmatmul.mubr.f32.gmra.mrb[0].mxu0 %v1453
    %v1568 = vpop.f32.mrb[0].mxu0
    %v1569 = vadd.f32 %v1448, %v1568
    %v1570 = vpop.f32.mrb[0].mxu0
    %1571 = vmatprep.mubr.f32.mxu0 0.0
    %1572 = vmatmul.mubr.f32.gmra.mrb[0].mxu0 %v1456
    %v1573 = vpop.f32.mrb[0].mxu0
    %v1574 = vadd.f32 %v1448, %v1573
    %v1575 = vpop.f32.mrb[0].mxu0
    %1576 = vmatprep.mubr.f32.mxu0 0.0
    %1577 = vmatmul.mubr.f32.gmra.mrb[0].mxu0 %v1459
    %v1578 = vpop.f32.mrb[0].mxu0
    %v1579 = vadd.f32 %v1448, %v1578
    %v1580 = vpop.f32.mrb[0].mxu0
    %1581 = vmatprep.mubr.f32.mxu0 0.0
    %1582 = vmatmul.mubr.f32.gmra.mrb[0].mxu0 %v1462
    %v1583 = vpop.f32.mrb[0].mxu0
    %v1584 = vadd.f32 %v1448, %v1583
    %v1585 = vpop.f32.mrb[0].mxu0
    %1586 = vmatprep.mubr.f32.mxu0 0.0
    %1587 = vmatmul.mubr.f32.gmra.mrb[0].mxu0 %v1465
    %v1588 = vpop.f32.mrb[0].mxu0
    %v1589 = vadd.f32 %v1448, %v1588
    %v1590 = vpop.f32.mrb[0].mxu0
    %1591 = vmatprep.mubr.f32.mxu0 0.0
    %1592 = vmatmul.mubr.f32.gmra.mrb[0].mxu0 %v1468
    %v1593 = vpop.f32.mrb[0].mxu0
    %v1594 = vadd.f32 %v1448, %v1593
    %v1595 = vpop.f32.mrb[0].mxu0
    %1596 = vmatprep.mubr.f32.mxu0 0.0
    %1597 = vmatmul.mubr.f32.gmra.mrb[0].mxu0 %v1471
    %v1598 = vpop.f32.mrb[0].mxu0
    %v1599 = vadd.f32 %v1448, %v1598
    %v1600 = vpop.f32.mrb[0].mxu0
    %1601 = vmatprep.mubr.f32.mxu0 0.0
    %1602 = vmatmul.mubr.f32.gmra.mrb[0].mxu0 %v1474
    %v1603 = vpop.f32.mrb[0].mxu0
    %v1604 = vadd.f32 %v1448, %v1603
    %v1605 = vpop.f32.mrb[0].mxu0
    %1606 = vmatprep.mubr.f32.mxu0 0.0
    %1607 = vmatmul.mubr.f32.gmra.mrb[0].mxu0 %v1477
    %v1608 = vpop.f32.mrb[0].mxu0
    %v1609 = vadd.f32 %v1448, %v1608
    %v1610 = vpop.f32.mrb[0].mxu0
    %1611 = vmatprep.mubr.f32.mxu0 0.0
    %1612 = vmatmul.mubr.f32.gmra.mrb[0].mxu0 %v1480
    %v1613 = vpop.f32.mrb[0].mxu0
    %v1614 = vadd.f32 %v1448, %v1613
    %v1615 = vpop.f32.mrb[0].mxu0
    %1616 = vmatprep.mubr.f32.mxu0 0.0
    %1617 = vmatmul.mubr.f32.gmra.mrb[0].mxu0 %v1483
    %v1618 = vpop.f32.mrb[0].mxu0
    %v1619 = vadd.f32 %v1448, %v1618
    %v1620 = vpop.f32.mrb[0].mxu0
    %1621 = vmatprep.mubr.f32.mxu0 0.0
    %1622 = vmatmul.mubr.f32.gmra.mrb[0].mxu0 %v1486
    %v1623 = vpop.f32.mrb[0].mxu0
    %v1624 = vadd.f32 %v1448, %v1623
    %v1625 = vpop.f32.mrb[0].mxu0
    %1626 = vmatprep.mubr.f32.mxu0 0.0
    %1627 = vmatmul.mubr.f32.gmra.mrb[0].mxu0 %v1489
    %v1628 = vpop.f32.mrb[0].mxu0
    %v1629 = vadd.f32 %v1448, %v1628
    %v1630 = vpop.f32.mrb[0].mxu0
    %1631 = vmatprep.mubr.f32.mxu0 0.0
    %1632 = vmatmul.mubr.f32.gmra.mrb[0].mxu0 %v1492
    %v1633 = vpop.f32.mrb[0].mxu0
    %v1634 = vadd.f32 %v1448, %v1633
    %v1635 = vpop.f32.mrb[0].mxu0
    %1636 = vmatprep.mubr.f32.mxu0 0.0
    %1637 = vmatmul.mubr.f32.gmra.mrb[0].mxu0 %v1495
    %v1638 = vpop.f32.mrb[0].mxu0
    %v1639 = vadd.f32 %v1448, %v1638
    %v1640 = vpop.f32.mrb[0].mxu0
    %1641 = vdwg.mxu0
    %1644 = vrot.lane.b32.xlu0 %v1564, 112
    %v1645 = vpop.permute.xlu0 %1644
    %1646 = vrot.lane.b32.xlu0 %v1569, 112
    %v1647 = vpop.permute.xlu0 %1646
    %vm1648 = vcmask 31744
    %v1649 = vsel %vm1648, %v1564, 0
    %v1651 = vsel %vm1648, %v1569, 0
    %v1653 = vsel %vm1648, %v1645, 0
    %v1655 = vsel %vm1648, %v1647, 0
    %1657 = vmatprep.subr.mxu0 0.0
    %1658 = vmatpush1.xpose.msra.mxu0 %v1653
    %1659 = vmatprep.subr.mxu0 0.0
    %1660 = vmatpush1.xpose.msra.mxu0 %v1655
    %1661 = vmatprep.subr.mxu0 0.0
    %1662 = vmatpush1.xpose.msra.mxu0 0.0
    %1663 = vmatprep.subr.mxu0 0.0
    %1664 = vmatpush1.xpose.msra.mxu0 0.0
    %1665 = vmatprep.subr.mxu0 0.0
    %1666 = vmatpush1.xpose.msra.mxu0 0.0
    %1667 = vmatprep.subr.mxu0 0.0
    %1668 = vmatpush1.xpose.msra.mxu0 0.0
    %1669 = vmatprep.subr.mxu0 0.0
    %1670 = vmatpush1.xpose.msra.mxu0 0.0
    %1671 = vmatprep.subr.mxu0 0.0
    %1672 = vmatpush1.xpose.msra.mxu0 0.0
    %1673 = vmatprep.subr.mxu0 0.0
    %1674 = vmatpush1.xpose.msra.mxu0 0.0
    %1675 = vmatprep.subr.mxu0 0.0
    %1676 = vmatpush1.xpose.msra.mxu0 0.0
    %1677 = vmatprep.subr.mxu0 0.0
    %1678 = vmatpush1.xpose.msra.mxu0 0.0
    %1679 = vmatprep.subr.mxu0 0.0
    %1680 = vmatpush1.xpose.msra.mxu0 0.0
    %1681 = vmatprep.subr.mxu0 0.0
    %1682 = vmatpush1.xpose.msra.mxu0 0.0
    %1683 = vmatprep.subr.mxu0 0.0
    %1684 = vmatpush1.xpose.msra.mxu0 0.0
    %1685 = vmatprep.subr.mxu0 0.0
    %1686 = vmatpush1.xpose.msra.mxu0 0.0
    %1687 = vmatprep.subr.mxu0 0.0
    %1688 = vmatpush1.xpose.msra.mxu0 0.0
    %1689 = vmatprep.subr.mxu0 0.0
    %1690 = vmatpush1.xpose.msra.mxu0 0.0
    %1691 = vmatprep.subr.mxu0 0.0
    %1692 = vmatpush1.xpose.msra.mxu0 0.0
    %1693 = vmatprep.subr.mxu0 0.0
    %1694 = vmatpush1.xpose.msra.mxu0 0.0
    %1695 = vmatprep.subr.mxu0 0.0
    %1696 = vmatpush1.xpose.msra.mxu0 0.0
    %1697 = vmatprep.subr.mxu0 0.0
    %1698 = vmatpush1.xpose.msra.mxu0 0.0
    %1699 = vmatprep.subr.mxu0 0.0
    %1700 = vmatpush1.xpose.msra.mxu0 0.0
    %1701 = vmatprep.subr.mxu0 0.0
    %1702 = vmatpush1.xpose.msra.mxu0 0.0
    %1703 = vmatprep.subr.mxu0 0.0
    %1704 = vmatpush1.xpose.msra.mxu0 0.0
    %1705 = vmatprep.subr.mxu0 0.0
    %1706 = vmatpush1.xpose.msra.mxu0 0.0
    %1707 = vmatprep.subr.mxu0 0.0
    %1708 = vmatpush1.xpose.msra.mxu0 0.0
    %1709 = vmatprep.subr.mxu0 0.0
    %1710 = vmatpush1.xpose.msra.mxu0 0.0
    %1711 = vmatprep.subr.mxu0 0.0
    %1712 = vmatpush1.xpose.msra.mxu0 0.0
    %1713 = vmatprep.subr.mxu0 0.0
    %1714 = vmatpush1.xpose.msra.mxu0 0.0
    %1715 = vmatprep.subr.mxu0 0.0
    %1716 = vmatpush1.xpose.msra.mxu0 0.0
    %1717 = vmatprep.subr.mxu0 0.0
    %1718 = vmatpush1.xpose.msra.mxu0 0.0
    %1719 = vmatprep.subr.mxu0 0.0
    %1720 = vmatpush1.xpose.msra.mxu0 0.0
    %1721 = vmatprep.mubr.f32.mxu0 0.0
    %1722 = vmatmul.mubr.f32.gmra.mrb[0].mxu0 %v1649
    %v1723 = vpop.f32.mrb[0].mxu0
    %v1724 = vadd.f32 0.0, %v1723
    %v1725 = vpop.f32.mrb[0].mxu0
    %1726 = vmatprep.mubr.f32.mxu0 0.0
    %1727 = vmatmul.mubr.f32.gmra.mrb[0].mxu0 %v1651
    %v1728 = vpop.f32.mrb[0].mxu0
    %v1729 = vadd.f32 0.0, %v1728
    %v1730 = vpop.f32.mrb[0].mxu0
    %1731 = vdwg.mxu0
    %1734 = vrot.lane.b32.xlu0 %v1574, 112
    %v1735 = vpop.permute.xlu0 %1734
    %1736 = vrot.lane.b32.xlu0 %v1579, 112
    %v1737 = vpop.permute.xlu0 %1736
    %v1738 = vsel %vm1648, %v1574, 0
    %v1740 = vsel %vm1648, %v1579, 0
    %v1742 = vsel %vm1648, %v1735, 0
    %v1744 = vsel %vm1648, %v1737, 0
    %1746 = vmatprep.subr.mxu0 0.0
    %1747 = vmatpush1.xpose.msra.mxu0 %v1742
    %1748 = vmatprep.subr.mxu0 0.0
    %1749 = vmatpush1.xpose.msra.mxu0 %v1744
    %1750 = vmatprep.subr.mxu0 0.0
    %1751 = vmatpush1.xpose.msra.mxu0 0.0
    %1752 = vmatprep.subr.mxu0 0.0
    %1753 = vmatpush1.xpose.msra.mxu0 0.0
    %1754 = vmatprep.subr.mxu0 0.0
    %1755 = vmatpush1.xpose.msra.mxu0 0.0
    %1756 = vmatprep.subr.mxu0 0.0
    %1757 = vmatpush1.xpose.msra.mxu0 0.0
    %1758 = vmatprep.subr.mxu0 0.0
    %1759 = vmatpush1.xpose.msra.mxu0 0.0
    %1760 = vmatprep.subr.mxu0 0.0
    %1761 = vmatpush1.xpose.msra.mxu0 0.0
    %1762 = vmatprep.subr.mxu0 0.0
    %1763 = vmatpush1.xpose.msra.mxu0 0.0
    %1764 = vmatprep.subr.mxu0 0.0
    %1765 = vmatpush1.xpose.msra.mxu0 0.0
    %1766 = vmatprep.subr.mxu0 0.0
    %1767 = vmatpush1.xpose.msra.mxu0 0.0
    %1768 = vmatprep.subr.mxu0 0.0
    %1769 = vmatpush1.xpose.msra.mxu0 0.0
    %1770 = vmatprep.subr.mxu0 0.0
    %1771 = vmatpush1.xpose.msra.mxu0 0.0
    %1772 = vmatprep.subr.mxu0 0.0
    %1773 = vmatpush1.xpose.msra.mxu0 0.0
    %1774 = vmatprep.subr.mxu0 0.0
    %1775 = vmatpush1.xpose.msra.mxu0 0.0
    %1776 = vmatprep.subr.mxu0 0.0
    %1777 = vmatpush1.xpose.msra.mxu0 0.0
    %1778 = vmatprep.subr.mxu0 0.0
    %1779 = vmatpush1.xpose.msra.mxu0 0.0
    %1780 = vmatprep.subr.mxu0 0.0
    %1781 = vmatpush1.xpose.msra.mxu0 0.0
    %1782 = vmatprep.subr.mxu0 0.0
    %1783 = vmatpush1.xpose.msra.mxu0 0.0
    %1784 = vmatprep.subr.mxu0 0.0
    %1785 = vmatpush1.xpose.msra.mxu0 0.0
    %1786 = vmatprep.subr.mxu0 0.0
    %1787 = vmatpush1.xpose.msra.mxu0 0.0
    %1788 = vmatprep.subr.mxu0 0.0
    %1789 = vmatpush1.xpose.msra.mxu0 0.0
    %1790 = vmatprep.subr.mxu0 0.0
    %1791 = vmatpush1.xpose.msra.mxu0 0.0
    %1792 = vmatprep.subr.mxu0 0.0
    %1793 = vmatpush1.xpose.msra.mxu0 0.0
    %1794 = vmatprep.subr.mxu0 0.0
    %1795 = vmatpush1.xpose.msra.mxu0 0.0
    %1796 = vmatprep.subr.mxu0 0.0
    %1797 = vmatpush1.xpose.msra.mxu0 0.0
    %1798 = vmatprep.subr.mxu0 0.0
    %1799 = vmatpush1.xpose.msra.mxu0 0.0
    %1800 = vmatprep.subr.mxu0 0.0
    %1801 = vmatpush1.xpose.msra.mxu0 0.0
    %1802 = vmatprep.subr.mxu0 0.0
    %1803 = vmatpush1.xpose.msra.mxu0 0.0
    %1804 = vmatprep.subr.mxu0 0.0
    %1805 = vmatpush1.xpose.msra.mxu0 0.0
    %1806 = vmatprep.subr.mxu0 0.0
    %1807 = vmatpush1.xpose.msra.mxu0 0.0
    %1808 = vmatprep.subr.mxu0 0.0
    %1809 = vmatpush1.xpose.msra.mxu0 0.0
    %1810 = vmatprep.mubr.f32.mxu0 0.0
    %1811 = vmatmul.mubr.f32.gmra.mrb[0].mxu0 %v1738
    %v1812 = vpop.f32.mrb[0].mxu0
    %v1813 = vadd.f32 0.0, %v1812
    %v1814 = vpop.f32.mrb[0].mxu0
    %1815 = vmatprep.mubr.f32.mxu0 0.0
    %1816 = vmatmul.mubr.f32.gmra.mrb[0].mxu0 %v1740
    %v1817 = vpop.f32.mrb[0].mxu0
    %v1818 = vadd.f32 0.0, %v1817
    %v1819 = vpop.f32.mrb[0].mxu0
    %1820 = vdwg.mxu0
    %1823 = vrot.lane.b32.xlu0 %v1584, 112
    %v1824 = vpop.permute.xlu0 %1823
    %1825 = vrot.lane.b32.xlu0 %v1589, 112
    %v1826 = vpop.permute.xlu0 %1825
    %v1827 = vsel %vm1648, %v1584, 0
    %v1829 = vsel %vm1648, %v1589, 0
    %v1831 = vsel %vm1648, %v1824, 0
    %v1833 = vsel %vm1648, %v1826, 0
    %1835 = vmatprep.subr.mxu0 0.0
    %1836 = vmatpush1.xpose.msra.mxu0 %v1831
    %1837 = vmatprep.subr.mxu0 0.0
    %1838 = vmatpush1.xpose.msra.mxu0 %v1833
    %1839 = vmatprep.subr.mxu0 0.0
    %1840 = vmatpush1.xpose.msra.mxu0 0.0
    %1841 = vmatprep.subr.mxu0 0.0
    %1842 = vmatpush1.xpose.msra.mxu0 0.0
    %1843 = vmatprep.subr.mxu0 0.0
    %1844 = vmatpush1.xpose.msra.mxu0 0.0
    %1845 = vmatprep.subr.mxu0 0.0
    %1846 = vmatpush1.xpose.msra.mxu0 0.0
    %1847 = vmatprep.subr.mxu0 0.0
    %1848 = vmatpush1.xpose.msra.mxu0 0.0
    %1849 = vmatprep.subr.mxu0 0.0
    %1850 = vmatpush1.xpose.msra.mxu0 0.0
    %1851 = vmatprep.subr.mxu0 0.0
    %1852 = vmatpush1.xpose.msra.mxu0 0.0
    %1853 = vmatprep.subr.mxu0 0.0
    %1854 = vmatpush1.xpose.msra.mxu0 0.0
    %1855 = vmatprep.subr.mxu0 0.0
    %1856 = vmatpush1.xpose.msra.mxu0 0.0
    %1857 = vmatprep.subr.mxu0 0.0
    %1858 = vmatpush1.xpose.msra.mxu0 0.0
    %1859 = vmatprep.subr.mxu0 0.0
    %1860 = vmatpush1.xpose.msra.mxu0 0.0
    %1861 = vmatprep.subr.mxu0 0.0
    %1862 = vmatpush1.xpose.msra.mxu0 0.0
    %1863 = vmatprep.subr.mxu0 0.0
    %1864 = vmatpush1.xpose.msra.mxu0 0.0
    %1865 = vmatprep.subr.mxu0 0.0
    %1866 = vmatpush1.xpose.msra.mxu0 0.0
    %1867 = vmatprep.subr.mxu0 0.0
    %1868 = vmatpush1.xpose.msra.mxu0 0.0
    %1869 = vmatprep.subr.mxu0 0.0
    %1870 = vmatpush1.xpose.msra.mxu0 0.0
    %1871 = vmatprep.subr.mxu0 0.0
    %1872 = vmatpush1.xpose.msra.mxu0 0.0
    %1873 = vmatprep.subr.mxu0 0.0
    %1874 = vmatpush1.xpose.msra.mxu0 0.0
    %1875 = vmatprep.subr.mxu0 0.0
    %1876 = vmatpush1.xpose.msra.mxu0 0.0
    %1877 = vmatprep.subr.mxu0 0.0
    %1878 = vmatpush1.xpose.msra.mxu0 0.0
    %1879 = vmatprep.subr.mxu0 0.0
    %1880 = vmatpush1.xpose.msra.mxu0 0.0
    %1881 = vmatprep.subr.mxu0 0.0
    %1882 = vmatpush1.xpose.msra.mxu0 0.0
    %1883 = vmatprep.subr.mxu0 0.0
    %1884 = vmatpush1.xpose.msra.mxu0 0.0
    %1885 = vmatprep.subr.mxu0 0.0
    %1886 = vmatpush1.xpose.msra.mxu0 0.0
    %1887 = vmatprep.subr.mxu0 0.0
    %1888 = vmatpush1.xpose.msra.mxu0 0.0
    %1889 = vmatprep.subr.mxu0 0.0
    %1890 = vmatpush1.xpose.msra.mxu0 0.0
    %1891 = vmatprep.subr.mxu0 0.0
    %1892 = vmatpush1.xpose.msra.mxu0 0.0
    %1893 = vmatprep.subr.mxu0 0.0
    %1894 = vmatpush1.xpose.msra.mxu0 0.0
    %1895 = vmatprep.subr.mxu0 0.0
    %1896 = vmatpush1.xpose.msra.mxu0 0.0
    %1897 = vmatprep.subr.mxu0 0.0
    %1898 = vmatpush1.xpose.msra.mxu0 0.0
    %1899 = vmatprep.mubr.f32.mxu0 0.0
    %1900 = vmatmul.mubr.f32.gmra.mrb[0].mxu0 %v1827
    %v1901 = vpop.f32.mrb[0].mxu0
    %v1902 = vadd.f32 0.0, %v1901
    %v1903 = vpop.f32.mrb[0].mxu0
    %1904 = vmatprep.mubr.f32.mxu0 0.0
    %1905 = vmatmul.mubr.f32.gmra.mrb[0].mxu0 %v1829
    %v1906 = vpop.f32.mrb[0].mxu0
    %v1907 = vadd.f32 0.0, %v1906
    %v1908 = vpop.f32.mrb[0].mxu0
    %1909 = vdwg.mxu0
    %1912 = vrot.lane.b32.xlu0 %v1594, 112
    %v1913 = vpop.permute.xlu0 %1912
    %1914 = vrot.lane.b32.xlu0 %v1599, 112
    %v1915 = vpop.permute.xlu0 %1914
    %v1916 = vsel %vm1648, %v1594, 0
    %v1918 = vsel %vm1648, %v1599, 0
    %v1920 = vsel %vm1648, %v1913, 0
    %v1922 = vsel %vm1648, %v1915, 0
    %1924 = vmatprep.subr.mxu0 0.0
    %1925 = vmatpush1.xpose.msra.mxu0 %v1920
    %1926 = vmatprep.subr.mxu0 0.0
    %1927 = vmatpush1.xpose.msra.mxu0 %v1922
    %1928 = vmatprep.subr.mxu0 0.0
    %1929 = vmatpush1.xpose.msra.mxu0 0.0
    %1930 = vmatprep.subr.mxu0 0.0
    %1931 = vmatpush1.xpose.msra.mxu0 0.0
    %1932 = vmatprep.subr.mxu0 0.0
    %1933 = vmatpush1.xpose.msra.mxu0 0.0
    %1934 = vmatprep.subr.mxu0 0.0
    %1935 = vmatpush1.xpose.msra.mxu0 0.0
    %1936 = vmatprep.subr.mxu0 0.0
    %1937 = vmatpush1.xpose.msra.mxu0 0.0
    %1938 = vmatprep.subr.mxu0 0.0
    %1939 = vmatpush1.xpose.msra.mxu0 0.0
    %1940 = vmatprep.subr.mxu0 0.0
    %1941 = vmatpush1.xpose.msra.mxu0 0.0
    %1942 = vmatprep.subr.mxu0 0.0
    %1943 = vmatpush1.xpose.msra.mxu0 0.0
    %1944 = vmatprep.subr.mxu0 0.0
    %1945 = vmatpush1.xpose.msra.mxu0 0.0
    %1946 = vmatprep.subr.mxu0 0.0
    %1947 = vmatpush1.xpose.msra.mxu0 0.0
    %1948 = vmatprep.subr.mxu0 0.0
    %1949 = vmatpush1.xpose.msra.mxu0 0.0
    %1950 = vmatprep.subr.mxu0 0.0
    %1951 = vmatpush1.xpose.msra.mxu0 0.0
    %1952 = vmatprep.subr.mxu0 0.0
    %1953 = vmatpush1.xpose.msra.mxu0 0.0
    %1954 = vmatprep.subr.mxu0 0.0
    %1955 = vmatpush1.xpose.msra.mxu0 0.0
    %1956 = vmatprep.subr.mxu0 0.0
    %1957 = vmatpush1.xpose.msra.mxu0 0.0
    %1958 = vmatprep.subr.mxu0 0.0
    %1959 = vmatpush1.xpose.msra.mxu0 0.0
    %1960 = vmatprep.subr.mxu0 0.0
    %1961 = vmatpush1.xpose.msra.mxu0 0.0
    %1962 = vmatprep.subr.mxu0 0.0
    %1963 = vmatpush1.xpose.msra.mxu0 0.0
    %1964 = vmatprep.subr.mxu0 0.0
    %1965 = vmatpush1.xpose.msra.mxu0 0.0
    %1966 = vmatprep.subr.mxu0 0.0
    %1967 = vmatpush1.xpose.msra.mxu0 0.0
    %1968 = vmatprep.subr.mxu0 0.0
    %1969 = vmatpush1.xpose.msra.mxu0 0.0
    %1970 = vmatprep.subr.mxu0 0.0
    %1971 = vmatpush1.xpose.msra.mxu0 0.0
    %1972 = vmatprep.subr.mxu0 0.0
    %1973 = vmatpush1.xpose.msra.mxu0 0.0
    %1974 = vmatprep.subr.mxu0 0.0
    %1975 = vmatpush1.xpose.msra.mxu0 0.0
    %1976 = vmatprep.subr.mxu0 0.0
    %1977 = vmatpush1.xpose.msra.mxu0 0.0
    %1978 = vmatprep.subr.mxu0 0.0
    %1979 = vmatpush1.xpose.msra.mxu0 0.0
    %1980 = vmatprep.subr.mxu0 0.0
    %1981 = vmatpush1.xpose.msra.mxu0 0.0
    %1982 = vmatprep.subr.mxu0 0.0
    %1983 = vmatpush1.xpose.msra.mxu0 0.0
    %1984 = vmatprep.subr.mxu0 0.0
    %1985 = vmatpush1.xpose.msra.mxu0 0.0
    %1986 = vmatprep.subr.mxu0 0.0
    %1987 = vmatpush1.xpose.msra.mxu0 0.0
    %1988 = vmatprep.mubr.f32.mxu0 0.0
    %1989 = vmatmul.mubr.f32.gmra.mrb[0].mxu0 %v1916
    %v1990 = vpop.f32.mrb[0].mxu0
    %v1991 = vadd.f32 0.0, %v1990
    %v1992 = vpop.f32.mrb[0].mxu0
    %1993 = vmatprep.mubr.f32.mxu0 0.0
    %1994 = vmatmul.mubr.f32.gmra.mrb[0].mxu0 %v1918
    %v1995 = vpop.f32.mrb[0].mxu0
    %v1996 = vadd.f32 0.0, %v1995
    %v1997 = vpop.f32.mrb[0].mxu0
    %1998 = vdwg.mxu0
    %2001 = vrot.lane.b32.xlu0 %v1604, 112
    %v2002 = vpop.permute.xlu0 %2001
    %2003 = vrot.lane.b32.xlu0 %v1609, 112
    %v2004 = vpop.permute.xlu0 %2003
    %v2005 = vsel %vm1648, %v1604, 0
    %v2007 = vsel %vm1648, %v1609, 0
    %v2009 = vsel %vm1648, %v2002, 0
    %v2011 = vsel %vm1648, %v2004, 0
    %2013 = vmatprep.subr.mxu0 0.0
    %2014 = vmatpush1.xpose.msra.mxu0 %v2009
    %2015 = vmatprep.subr.mxu0 0.0
    %2016 = vmatpush1.xpose.msra.mxu0 %v2011
    %2017 = vmatprep.subr.mxu0 0.0
    %2018 = vmatpush1.xpose.msra.mxu0 0.0
    %2019 = vmatprep.subr.mxu0 0.0
    %2020 = vmatpush1.xpose.msra.mxu0 0.0
    %2021 = vmatprep.subr.mxu0 0.0
    %2022 = vmatpush1.xpose.msra.mxu0 0.0
    %2023 = vmatprep.subr.mxu0 0.0
    %2024 = vmatpush1.xpose.msra.mxu0 0.0
    %2025 = vmatprep.subr.mxu0 0.0
    %2026 = vmatpush1.xpose.msra.mxu0 0.0
    %2027 = vmatprep.subr.mxu0 0.0
    %2028 = vmatpush1.xpose.msra.mxu0 0.0
    %2029 = vmatprep.subr.mxu0 0.0
    %2030 = vmatpush1.xpose.msra.mxu0 0.0
    %2031 = vmatprep.subr.mxu0 0.0
    %2032 = vmatpush1.xpose.msra.mxu0 0.0
    %2033 = vmatprep.subr.mxu0 0.0
    %2034 = vmatpush1.xpose.msra.mxu0 0.0
    %2035 = vmatprep.subr.mxu0 0.0
    %2036 = vmatpush1.xpose.msra.mxu0 0.0
    %2037 = vmatprep.subr.mxu0 0.0
    %2038 = vmatpush1.xpose.msra.mxu0 0.0
    %2039 = vmatprep.subr.mxu0 0.0
    %2040 = vmatpush1.xpose.msra.mxu0 0.0
    %2041 = vmatprep.subr.mxu0 0.0
    %2042 = vmatpush1.xpose.msra.mxu0 0.0
    %2043 = vmatprep.subr.mxu0 0.0
    %2044 = vmatpush1.xpose.msra.mxu0 0.0
    %2045 = vmatprep.subr.mxu0 0.0
    %2046 = vmatpush1.xpose.msra.mxu0 0.0
    %2047 = vmatprep.subr.mxu0 0.0
    %2048 = vmatpush1.xpose.msra.mxu0 0.0
    %2049 = vmatprep.subr.mxu0 0.0
    %2050 = vmatpush1.xpose.msra.mxu0 0.0
    %2051 = vmatprep.subr.mxu0 0.0
    %2052 = vmatpush1.xpose.msra.mxu0 0.0
    %2053 = vmatprep.subr.mxu0 0.0
    %2054 = vmatpush1.xpose.msra.mxu0 0.0
    %2055 = vmatprep.subr.mxu0 0.0
    %2056 = vmatpush1.xpose.msra.mxu0 0.0
    %2057 = vmatprep.subr.mxu0 0.0
    %2058 = vmatpush1.xpose.msra.mxu0 0.0
    %2059 = vmatprep.subr.mxu0 0.0
    %2060 = vmatpush1.xpose.msra.mxu0 0.0
    %2061 = vmatprep.subr.mxu0 0.0
    %2062 = vmatpush1.xpose.msra.mxu0 0.0
    %2063 = vmatprep.subr.mxu0 0.0
    %2064 = vmatpush1.xpose.msra.mxu0 0.0
    %2065 = vmatprep.subr.mxu0 0.0
    %2066 = vmatpush1.xpose.msra.mxu0 0.0
    %2067 = vmatprep.subr.mxu0 0.0
    %2068 = vmatpush1.xpose.msra.mxu0 0.0
    %2069 = vmatprep.subr.mxu0 0.0
    %2070 = vmatpush1.xpose.msra.mxu0 0.0
    %2071 = vmatprep.subr.mxu0 0.0
    %2072 = vmatpush1.xpose.msra.mxu0 0.0
    %2073 = vmatprep.subr.mxu0 0.0
    %2074 = vmatpush1.xpose.msra.mxu0 0.0
    %2075 = vmatprep.subr.mxu0 0.0
    %2076 = vmatpush1.xpose.msra.mxu0 0.0
    %2077 = vmatprep.mubr.f32.mxu0 0.0
    %2078 = vmatmul.mubr.f32.gmra.mrb[0].mxu0 %v2005
    %v2079 = vpop.f32.mrb[0].mxu0
    %v2080 = vadd.f32 0.0, %v2079
    %v2081 = vpop.f32.mrb[0].mxu0
    %2082 = vmatprep.mubr.f32.mxu0 0.0
    %2083 = vmatmul.mubr.f32.gmra.mrb[0].mxu0 %v2007
    %v2084 = vpop.f32.mrb[0].mxu0
    %v2085 = vadd.f32 0.0, %v2084
    %v2086 = vpop.f32.mrb[0].mxu0
    %2087 = vdwg.mxu0
    %2090 = vrot.lane.b32.xlu0 %v1614, 112
    %v2091 = vpop.permute.xlu0 %2090
    %2092 = vrot.lane.b32.xlu0 %v1619, 112
    %v2093 = vpop.permute.xlu0 %2092
    %v2094 = vsel %vm1648, %v1614, 0
    %v2096 = vsel %vm1648, %v1619, 0
    %v2098 = vsel %vm1648, %v2091, 0
    %v2100 = vsel %vm1648, %v2093, 0
    %2102 = vmatprep.subr.mxu0 0.0
    %2103 = vmatpush1.xpose.msra.mxu0 %v2098
    %2104 = vmatprep.subr.mxu0 0.0
    %2105 = vmatpush1.xpose.msra.mxu0 %v2100
    %2106 = vmatprep.subr.mxu0 0.0
    %2107 = vmatpush1.xpose.msra.mxu0 0.0
    %2108 = vmatprep.subr.mxu0 0.0
    %2109 = vmatpush1.xpose.msra.mxu0 0.0
    %2110 = vmatprep.subr.mxu0 0.0
    %2111 = vmatpush1.xpose.msra.mxu0 0.0
    %2112 = vmatprep.subr.mxu0 0.0
    %2113 = vmatpush1.xpose.msra.mxu0 0.0
    %2114 = vmatprep.subr.mxu0 0.0
    %2115 = vmatpush1.xpose.msra.mxu0 0.0
    %2116 = vmatprep.subr.mxu0 0.0
    %2117 = vmatpush1.xpose.msra.mxu0 0.0
    %2118 = vmatprep.subr.mxu0 0.0
    %2119 = vmatpush1.xpose.msra.mxu0 0.0
    %2120 = vmatprep.subr.mxu0 0.0
    %2121 = vmatpush1.xpose.msra.mxu0 0.0
    %2122 = vmatprep.subr.mxu0 0.0
    %2123 = vmatpush1.xpose.msra.mxu0 0.0
    %2124 = vmatprep.subr.mxu0 0.0
    %2125 = vmatpush1.xpose.msra.mxu0 0.0
    %2126 = vmatprep.subr.mxu0 0.0
    %2127 = vmatpush1.xpose.msra.mxu0 0.0
    %2128 = vmatprep.subr.mxu0 0.0
    %2129 = vmatpush1.xpose.msra.mxu0 0.0
    %2130 = vmatprep.subr.mxu0 0.0
    %2131 = vmatpush1.xpose.msra.mxu0 0.0
    %2132 = vmatprep.subr.mxu0 0.0
    %2133 = vmatpush1.xpose.msra.mxu0 0.0
    %2134 = vmatprep.subr.mxu0 0.0
    %2135 = vmatpush1.xpose.msra.mxu0 0.0
    %2136 = vmatprep.subr.mxu0 0.0
    %2137 = vmatpush1.xpose.msra.mxu0 0.0
    %2138 = vmatprep.subr.mxu0 0.0
    %2139 = vmatpush1.xpose.msra.mxu0 0.0
    %2140 = vmatprep.subr.mxu0 0.0
    %2141 = vmatpush1.xpose.msra.mxu0 0.0
    %2142 = vmatprep.subr.mxu0 0.0
    %2143 = vmatpush1.xpose.msra.mxu0 0.0
    %2144 = vmatprep.subr.mxu0 0.0
    %2145 = vmatpush1.xpose.msra.mxu0 0.0
    %2146 = vmatprep.subr.mxu0 0.0
    %2147 = vmatpush1.xpose.msra.mxu0 0.0
    %2148 = vmatprep.subr.mxu0 0.0
    %2149 = vmatpush1.xpose.msra.mxu0 0.0
    %2150 = vmatprep.subr.mxu0 0.0
    %2151 = vmatpush1.xpose.msra.mxu0 0.0
    %2152 = vmatprep.subr.mxu0 0.0
    %2153 = vmatpush1.xpose.msra.mxu0 0.0
    %2154 = vmatprep.subr.mxu0 0.0
    %2155 = vmatpush1.xpose.msra.mxu0 0.0
    %2156 = vmatprep.subr.mxu0 0.0
    %2157 = vmatpush1.xpose.msra.mxu0 0.0
    %2158 = vmatprep.subr.mxu0 0.0
    %2159 = vmatpush1.xpose.msra.mxu0 0.0
    %2160 = vmatprep.subr.mxu0 0.0
    %2161 = vmatpush1.xpose.msra.mxu0 0.0
    %2162 = vmatprep.subr.mxu0 0.0
    %2163 = vmatpush1.xpose.msra.mxu0 0.0
    %2164 = vmatprep.subr.mxu0 0.0
    %2165 = vmatpush1.xpose.msra.mxu0 0.0
    %2166 = vmatprep.mubr.f32.mxu0 0.0
    %2167 = vmatmul.mubr.f32.gmra.mrb[0].mxu0 %v2094
    %v2168 = vpop.f32.mrb[0].mxu0
    %v2169 = vadd.f32 0.0, %v2168
    %v2170 = vpop.f32.mrb[0].mxu0
    %2171 = vmatprep.mubr.f32.mxu0 0.0
    %2172 = vmatmul.mubr.f32.gmra.mrb[0].mxu0 %v2096
    %v2173 = vpop.f32.mrb[0].mxu0
    %v2174 = vadd.f32 0.0, %v2173
    %v2175 = vpop.f32.mrb[0].mxu0
    %2176 = vdwg.mxu0
    %2179 = vrot.lane.b32.xlu0 %v1624, 112
    %v2180 = vpop.permute.xlu0 %2179
    %2181 = vrot.lane.b32.xlu0 %v1629, 112
    %v2182 = vpop.permute.xlu0 %2181
    %v2183 = vsel %vm1648, %v1624, 0
    %v2185 = vsel %vm1648, %v1629, 0
    %v2187 = vsel %vm1648, %v2180, 0
    %v2189 = vsel %vm1648, %v2182, 0
    %2191 = vmatprep.subr.mxu0 0.0
    %2192 = vmatpush1.xpose.msra.mxu0 %v2187
    %2193 = vmatprep.subr.mxu0 0.0
    %2194 = vmatpush1.xpose.msra.mxu0 %v2189
    %2195 = vmatprep.subr.mxu0 0.0
    %2196 = vmatpush1.xpose.msra.mxu0 0.0
    %2197 = vmatprep.subr.mxu0 0.0
    %2198 = vmatpush1.xpose.msra.mxu0 0.0
    %2199 = vmatprep.subr.mxu0 0.0
    %2200 = vmatpush1.xpose.msra.mxu0 0.0
    %2201 = vmatprep.subr.mxu0 0.0
    %2202 = vmatpush1.xpose.msra.mxu0 0.0
    %2203 = vmatprep.subr.mxu0 0.0
    %2204 = vmatpush1.xpose.msra.mxu0 0.0
    %2205 = vmatprep.subr.mxu0 0.0
    %2206 = vmatpush1.xpose.msra.mxu0 0.0
    %2207 = vmatprep.subr.mxu0 0.0
    %2208 = vmatpush1.xpose.msra.mxu0 0.0
    %2209 = vmatprep.subr.mxu0 0.0
    %2210 = vmatpush1.xpose.msra.mxu0 0.0
    %2211 = vmatprep.subr.mxu0 0.0
    %2212 = vmatpush1.xpose.msra.mxu0 0.0
    %2213 = vmatprep.subr.mxu0 0.0
    %2214 = vmatpush1.xpose.msra.mxu0 0.0
    %2215 = vmatprep.subr.mxu0 0.0
    %2216 = vmatpush1.xpose.msra.mxu0 0.0
    %2217 = vmatprep.subr.mxu0 0.0
    %2218 = vmatpush1.xpose.msra.mxu0 0.0
    %2219 = vmatprep.subr.mxu0 0.0
    %2220 = vmatpush1.xpose.msra.mxu0 0.0
    %2221 = vmatprep.subr.mxu0 0.0
    %2222 = vmatpush1.xpose.msra.mxu0 0.0
    %2223 = vmatprep.subr.mxu0 0.0
    %2224 = vmatpush1.xpose.msra.mxu0 0.0
    %2225 = vmatprep.subr.mxu0 0.0
    %2226 = vmatpush1.xpose.msra.mxu0 0.0
    %2227 = vmatprep.subr.mxu0 0.0
    %2228 = vmatpush1.xpose.msra.mxu0 0.0
    %2229 = vmatprep.subr.mxu0 0.0
    %2230 = vmatpush1.xpose.msra.mxu0 0.0
    %2231 = vmatprep.subr.mxu0 0.0
    %2232 = vmatpush1.xpose.msra.mxu0 0.0
    %2233 = vmatprep.subr.mxu0 0.0
    %2234 = vmatpush1.xpose.msra.mxu0 0.0
    %2235 = vmatprep.subr.mxu0 0.0
    %2236 = vmatpush1.xpose.msra.mxu0 0.0
    %2237 = vmatprep.subr.mxu0 0.0
    %2238 = vmatpush1.xpose.msra.mxu0 0.0
    %2239 = vmatprep.subr.mxu0 0.0
    %2240 = vmatpush1.xpose.msra.mxu0 0.0
    %2241 = vmatprep.subr.mxu0 0.0
    %2242 = vmatpush1.xpose.msra.mxu0 0.0
    %2243 = vmatprep.subr.mxu0 0.0
    %2244 = vmatpush1.xpose.msra.mxu0 0.0
    %2245 = vmatprep.subr.mxu0 0.0
    %2246 = vmatpush1.xpose.msra.mxu0 0.0
    %2247 = vmatprep.subr.mxu0 0.0
    %2248 = vmatpush1.xpose.msra.mxu0 0.0
    %2249 = vmatprep.subr.mxu0 0.0
    %2250 = vmatpush1.xpose.msra.mxu0 0.0
    %2251 = vmatprep.subr.mxu0 0.0
    %2252 = vmatpush1.xpose.msra.mxu0 0.0
    %2253 = vmatprep.subr.mxu0 0.0
    %2254 = vmatpush1.xpose.msra.mxu0 0.0
    %2255 = vmatprep.mubr.f32.mxu0 0.0
    %2256 = vmatmul.mubr.f32.gmra.mrb[0].mxu0 %v2183
    %v2257 = vpop.f32.mrb[0].mxu0
    %v2258 = vadd.f32 0.0, %v2257
    %v2259 = vpop.f32.mrb[0].mxu0
    %2260 = vmatprep.mubr.f32.mxu0 0.0
    %2261 = vmatmul.mubr.f32.gmra.mrb[0].mxu0 %v2185
    %v2262 = vpop.f32.mrb[0].mxu0
    %v2263 = vadd.f32 0.0, %v2262
    %v2264 = vpop.f32.mrb[0].mxu0
    %2265 = vdwg.mxu0
    %2268 = vrot.lane.b32.xlu0 %v1634, 112
    %v2269 = vpop.permute.xlu0 %2268
    %2270 = vrot.lane.b32.xlu0 %v1639, 112
    %v2271 = vpop.permute.xlu0 %2270
    %v2272 = vsel %vm1648, %v1634, 0
    %v2274 = vsel %vm1648, %v1639, 0
    %v2276 = vsel %vm1648, %v2269, 0
    %v2278 = vsel %vm1648, %v2271, 0
    %2280 = vmatprep.subr.mxu0 0.0
    %2281 = vmatpush1.xpose.msra.mxu0 %v2276
    %2282 = vmatprep.subr.mxu0 0.0
    %2283 = vmatpush1.xpose.msra.mxu0 %v2278
    %2284 = vmatprep.subr.mxu0 0.0
    %2285 = vmatpush1.xpose.msra.mxu0 0.0
    %2286 = vmatprep.subr.mxu0 0.0
    %2287 = vmatpush1.xpose.msra.mxu0 0.0
    %2288 = vmatprep.subr.mxu0 0.0
    %2289 = vmatpush1.xpose.msra.mxu0 0.0
    %2290 = vmatprep.subr.mxu0 0.0
    %2291 = vmatpush1.xpose.msra.mxu0 0.0
    %2292 = vmatprep.subr.mxu0 0.0
    %2293 = vmatpush1.xpose.msra.mxu0 0.0
    %2294 = vmatprep.subr.mxu0 0.0
    %2295 = vmatpush1.xpose.msra.mxu0 0.0
    %2296 = vmatprep.subr.mxu0 0.0
    %2297 = vmatpush1.xpose.msra.mxu0 0.0
    %2298 = vmatprep.subr.mxu0 0.0
    %2299 = vmatpush1.xpose.msra.mxu0 0.0
    %2300 = vmatprep.subr.mxu0 0.0
    %2301 = vmatpush1.xpose.msra.mxu0 0.0
    %2302 = vmatprep.subr.mxu0 0.0
    %2303 = vmatpush1.xpose.msra.mxu0 0.0
    %2304 = vmatprep.subr.mxu0 0.0
    %2305 = vmatpush1.xpose.msra.mxu0 0.0
    %2306 = vmatprep.subr.mxu0 0.0
    %2307 = vmatpush1.xpose.msra.mxu0 0.0
    %2308 = vmatprep.subr.mxu0 0.0
    %2309 = vmatpush1.xpose.msra.mxu0 0.0
    %2310 = vmatprep.subr.mxu0 0.0
    %2311 = vmatpush1.xpose.msra.mxu0 0.0
    %2312 = vmatprep.subr.mxu0 0.0
    %2313 = vmatpush1.xpose.msra.mxu0 0.0
    %2314 = vmatprep.subr.mxu0 0.0
    %2315 = vmatpush1.xpose.msra.mxu0 0.0
    %2316 = vmatprep.subr.mxu0 0.0
    %2317 = vmatpush1.xpose.msra.mxu0 0.0
    %2318 = vmatprep.subr.mxu0 0.0
    %2319 = vmatpush1.xpose.msra.mxu0 0.0
    %2320 = vmatprep.subr.mxu0 0.0
    %2321 = vmatpush1.xpose.msra.mxu0 0.0
    %2322 = vmatprep.subr.mxu0 0.0
    %2323 = vmatpush1.xpose.msra.mxu0 0.0
    %2324 = vmatprep.subr.mxu0 0.0
    %2325 = vmatpush1.xpose.msra.mxu0 0.0
    %2326 = vmatprep.subr.mxu0 0.0
    %2327 = vmatpush1.xpose.msra.mxu0 0.0
    %2328 = vmatprep.subr.mxu0 0.0
    %2329 = vmatpush1.xpose.msra.mxu0 0.0
    %2330 = vmatprep.subr.mxu0 0.0
    %2331 = vmatpush1.xpose.msra.mxu0 0.0
    %2332 = vmatprep.subr.mxu0 0.0
    %2333 = vmatpush1.xpose.msra.mxu0 0.0
    %2334 = vmatprep.subr.mxu0 0.0
    %2335 = vmatpush1.xpose.msra.mxu0 0.0
    %2336 = vmatprep.subr.mxu0 0.0
    %2337 = vmatpush1.xpose.msra.mxu0 0.0
    %2338 = vmatprep.subr.mxu0 0.0
    %2339 = vmatpush1.xpose.msra.mxu0 0.0
    %2340 = vmatprep.subr.mxu0 0.0
    %2341 = vmatpush1.xpose.msra.mxu0 0.0
    %2342 = vmatprep.subr.mxu0 0.0
    %2343 = vmatpush1.xpose.msra.mxu0 0.0
    %2344 = vmatprep.mubr.f32.mxu0 0.0
    %2345 = vmatmul.mubr.f32.gmra.mrb[0].mxu0 %v2272
    %v2346 = vpop.f32.mrb[0].mxu0
    %v2347 = vadd.f32 0.0, %v2346
    %v2348 = vpop.f32.mrb[0].mxu0
    %2349 = vmatprep.mubr.f32.mxu0 0.0
    %2350 = vmatmul.mubr.f32.gmra.mrb[0].mxu0 %v2274
    %v2351 = vpop.f32.mrb[0].mxu0
    %v2352 = vadd.f32 0.0, %v2351
    %v2353 = vpop.f32.mrb[0].mxu0
    %2354 = vdwg.mxu0
    %v2355 = vsel %vm1192, %v1724, -inf
    %2356 = vmax.xlane.f32.xlu0 %v2355
    %v2357 = vpop.xlane.xlu0 %2356
    %v2358 = vsel %vm1192, %v1729, -inf
    %2359 = vmax.xlane.f32.xlu0 %v2358
    %v2360 = vpop.xlane.xlu0 %2359
    %v2361 = vsel %vm1192, %v1813, -inf
    %2362 = vmax.xlane.f32.xlu0 %v2361
    %v2363 = vpop.xlane.xlu0 %2362
    %v2364 = vsel %vm1192, %v1818, -inf
    %2365 = vmax.xlane.f32.xlu0 %v2364
    %v2366 = vpop.xlane.xlu0 %2365
    %v2367 = vsel %vm1192, %v1902, -inf
    %2368 = vmax.xlane.f32.xlu0 %v2367
    %v2369 = vpop.xlane.xlu0 %2368
    %v2370 = vsel %vm1192, %v1907, -inf
    %2371 = vmax.xlane.f32.xlu0 %v2370
    %v2372 = vpop.xlane.xlu0 %2371
    %v2373 = vsel %vm1192, %v1991, -inf
    %2374 = vmax.xlane.f32.xlu0 %v2373
    %v2375 = vpop.xlane.xlu0 %2374
    %v2376 = vsel %vm1192, %v1996, -inf
    %2377 = vmax.xlane.f32.xlu0 %v2376
    %v2378 = vpop.xlane.xlu0 %2377
    %v2379 = vsel %vm1192, %v2080, -inf
    %2380 = vmax.xlane.f32.xlu0 %v2379
    %v2381 = vpop.xlane.xlu0 %2380
    %v2382 = vsel %vm1192, %v2085, -inf
    %2383 = vmax.xlane.f32.xlu0 %v2382
    %v2384 = vpop.xlane.xlu0 %2383
    %v2385 = vsel %vm1192, %v2169, -inf
    %2386 = vmax.xlane.f32.xlu0 %v2385
    %v2387 = vpop.xlane.xlu0 %2386
    %v2388 = vsel %vm1192, %v2174, -inf
    %2389 = vmax.xlane.f32.xlu0 %v2388
    %v2390 = vpop.xlane.xlu0 %2389
    %v2391 = vsel %vm1192, %v2258, -inf
    %2392 = vmax.xlane.f32.xlu0 %v2391
    %v2393 = vpop.xlane.xlu0 %2392
    %v2394 = vsel %vm1192, %v2263, -inf
    %2395 = vmax.xlane.f32.xlu0 %v2394
    %v2396 = vpop.xlane.xlu0 %2395
    %v2397 = vsel %vm1192, %v2347, -inf
    %2398 = vmax.xlane.f32.xlu0 %v2397
    %v2399 = vpop.xlane.xlu0 %2398
    %v2400 = vsel %vm1192, %v2352, -inf
    %2401 = vmax.xlane.f32.xlu0 %v2400
    %v2402 = vpop.xlane.xlu0 %2401
    %v2403 = vsub.f32 %v1724, %v2357
    %v2404 = vsub.f32 %v1729, %v2360
    %v2405 = vsub.f32 %v1813, %v2363
    %v2406 = vsub.f32 %v1818, %v2366
    %v2407 = vsub.f32 %v1902, %v2369
    %v2408 = vsub.f32 %v1907, %v2372
    %v2409 = vsub.f32 %v1991, %v2375
    %v2410 = vsub.f32 %v1996, %v2378
    %v2411 = vsub.f32 %v2080, %v2381
    %v2412 = vsub.f32 %v2085, %v2384
    %v2413 = vsub.f32 %v2169, %v2387
    %v2414 = vsub.f32 %v2174, %v2390
    %v2415 = vsub.f32 %v2258, %v2393
    %v2416 = vsub.f32 %v2263, %v2396
    %v2417 = vsub.f32 %v2347, %v2399
    %v2418 = vsub.f32 %v2352, %v2402
    %v2419 = vmul.f32 %v2403, 1.442695
    %v2420 = vpow.pop %v2419
    %v2421 = vmul.f32 %v2404, 1.442695
    %v2422 = vpow.pop %v2421
    %v2423 = vmul.f32 %v2405, 1.442695
    %v2424 = vpow.pop %v2423
    %v2425 = vmul.f32 %v2406, 1.442695
    %v2426 = vpow.pop %v2425
    %v2427 = vmul.f32 %v2407, 1.442695
    %v2428 = vpow.pop %v2427
    %v2429 = vmul.f32 %v2408, 1.442695
    %v2430 = vpow.pop %v2429
    %v2431 = vmul.f32 %v2409, 1.442695
    %v2432 = vpow.pop %v2431
    %v2433 = vmul.f32 %v2410, 1.442695
    %v2434 = vpow.pop %v2433
    %v2435 = vmul.f32 %v2411, 1.442695
    %v2436 = vpow.pop %v2435
    %v2437 = vmul.f32 %v2412, 1.442695
    %v2438 = vpow.pop %v2437
    %v2439 = vmul.f32 %v2413, 1.442695
    %v2440 = vpow.pop %v2439
    %v2441 = vmul.f32 %v2414, 1.442695
    %v2442 = vpow.pop %v2441
    %v2443 = vmul.f32 %v2415, 1.442695
    %v2444 = vpow.pop %v2443
    %v2445 = vmul.f32 %v2416, 1.442695
    %v2446 = vpow.pop %v2445
    %v2447 = vmul.f32 %v2417, 1.442695
    %v2448 = vpow.pop %v2447
    %v2449 = vmul.f32 %v2418, 1.442695
    %v2450 = vpow.pop %v2449
    %v2451 = vsel %vm1192, %v2420, 0.0
    %2452 = vadd.xlane.f32.xlu0 %v2451
    %v2453 = vpop.xlane.xlu0 %2452
    %v2454 = vsel %vm1192, %v2422, 0.0
    %2455 = vadd.xlane.f32.xlu0 %v2454
    %v2456 = vpop.xlane.xlu0 %2455
    %v2457 = vsel %vm1192, %v2424, 0.0
    %2458 = vadd.xlane.f32.xlu0 %v2457
    %v2459 = vpop.xlane.xlu0 %2458
    %v2460 = vsel %vm1192, %v2426, 0.0
    %2461 = vadd.xlane.f32.xlu0 %v2460
    %v2462 = vpop.xlane.xlu0 %2461
    %v2463 = vsel %vm1192, %v2428, 0.0
    %2464 = vadd.xlane.f32.xlu0 %v2463
    %v2465 = vpop.xlane.xlu0 %2464
    %v2466 = vsel %vm1192, %v2430, 0.0
    %2467 = vadd.xlane.f32.xlu0 %v2466
    %v2468 = vpop.xlane.xlu0 %2467
    %v2469 = vsel %vm1192, %v2432, 0.0
    %2470 = vadd.xlane.f32.xlu0 %v2469
    %v2471 = vpop.xlane.xlu0 %2470
    %v2472 = vsel %vm1192, %v2434, 0.0
    %2473 = vadd.xlane.f32.xlu0 %v2472
    %v2474 = vpop.xlane.xlu0 %2473
    %v2475 = vsel %vm1192, %v2436, 0.0
    %2476 = vadd.xlane.f32.xlu0 %v2475
    %v2477 = vpop.xlane.xlu0 %2476
    %v2478 = vsel %vm1192, %v2438, 0.0
    %2479 = vadd.xlane.f32.xlu0 %v2478
    %v2480 = vpop.xlane.xlu0 %2479
    %v2481 = vsel %vm1192, %v2440, 0.0
    %2482 = vadd.xlane.f32.xlu0 %v2481
    %v2483 = vpop.xlane.xlu0 %2482
    %v2484 = vsel %vm1192, %v2442, 0.0
    %2485 = vadd.xlane.f32.xlu0 %v2484
    %v2486 = vpop.xlane.xlu0 %2485
    %v2487 = vsel %vm1192, %v2444, 0.0
    %2488 = vadd.xlane.f32.xlu0 %v2487
    %v2489 = vpop.xlane.xlu0 %2488
    %v2490 = vsel %vm1192, %v2446, 0.0
    %2491 = vadd.xlane.f32.xlu0 %v2490
    %v2492 = vpop.xlane.xlu0 %2491
    %v2493 = vsel %vm1192, %v2448, 0.0
    %2494 = vadd.xlane.f32.xlu0 %v2493
    %v2495 = vpop.xlane.xlu0 %2494
    %v2496 = vsel %vm1192, %v2450, 0.0
    %2497 = vadd.xlane.f32.xlu0 %v2496
    %v2498 = vpop.xlane.xlu0 %2497
    %v2499 = vrcp.pop %v2453
    %v2500 = vrcp.pop %v2456
    %v2501 = vrcp.pop %v2459
    %v2502 = vrcp.pop %v2462
    %v2503 = vrcp.pop %v2465
    %v2504 = vrcp.pop %v2468
    %v2505 = vrcp.pop %v2471
    %v2506 = vrcp.pop %v2474
    %v2507 = vrcp.pop %v2477
    %v2508 = vrcp.pop %v2480
    %v2509 = vrcp.pop %v2483
    %v2510 = vrcp.pop %v2486
    %v2511 = vrcp.pop %v2489
    %v2512 = vrcp.pop %v2492
    %v2513 = vrcp.pop %v2495
    %v2514 = vrcp.pop %v2498
    %v2515 = vmul.f32 %v2453, %v2499
    %v2516 = vmul.f32 %v2456, %v2500
    %v2517 = vmul.f32 %v2459, %v2501
    %v2518 = vmul.f32 %v2462, %v2502
    %v2519 = vmul.f32 %v2465, %v2503
    %v2520 = vmul.f32 %v2468, %v2504
    %v2521 = vmul.f32 %v2471, %v2505
    %v2522 = vmul.f32 %v2474, %v2506
    %v2523 = vmul.f32 %v2477, %v2507
    %v2524 = vmul.f32 %v2480, %v2508
    %v2525 = vmul.f32 %v2483, %v2509
    %v2526 = vmul.f32 %v2486, %v2510
    %v2527 = vmul.f32 %v2489, %v2511
    %v2528 = vmul.f32 %v2492, %v2512
    %v2529 = vmul.f32 %v2495, %v2513
    %v2530 = vmul.f32 %v2498, %v2514
    %v2531 = vsub.f32 2.0, %v2515
    %v2532 = vsub.f32 2.0, %v2516
    %v2533 = vsub.f32 2.0, %v2517
    %v2534 = vsub.f32 2.0, %v2518
    %v2535 = vsub.f32 2.0, %v2519
    %v2536 = vsub.f32 2.0, %v2520
    %v2537 = vsub.f32 2.0, %v2521
    %v2538 = vsub.f32 2.0, %v2522
    %v2539 = vsub.f32 2.0, %v2523
    %v2540 = vsub.f32 2.0, %v2524
    %v2541 = vsub.f32 2.0, %v2525
    %v2542 = vsub.f32 2.0, %v2526
    %v2543 = vsub.f32 2.0, %v2527
    %v2544 = vsub.f32 2.0, %v2528
    %v2545 = vsub.f32 2.0, %v2529
    %v2546 = vsub.f32 2.0, %v2530
    %v2547 = vmul.f32 %v2499, %v2531
    %v2548 = vmul.f32 %v2500, %v2532
    %v2549 = vmul.f32 %v2501, %v2533
    %v2550 = vmul.f32 %v2502, %v2534
    %v2551 = vmul.f32 %v2503, %v2535
    %v2552 = vmul.f32 %v2504, %v2536
    %v2553 = vmul.f32 %v2505, %v2537
    %v2554 = vmul.f32 %v2506, %v2538
    %v2555 = vmul.f32 %v2507, %v2539
    %v2556 = vmul.f32 %v2508, %v2540
    %v2557 = vmul.f32 %v2509, %v2541
    %v2558 = vmul.f32 %v2510, %v2542
    %v2559 = vmul.f32 %v2511, %v2543
    %v2560 = vmul.f32 %v2512, %v2544
    %v2561 = vmul.f32 %v2513, %v2545
    %v2562 = vmul.f32 %v2514, %v2546
    %v2563 = vmul.f32 %v2420, %v2547
    %v2564 = vmul.f32 %v2422, %v2548
    %v2565 = vmul.f32 %v2424, %v2549
    %v2566 = vmul.f32 %v2426, %v2550
    %v2567 = vmul.f32 %v2428, %v2551
    %v2568 = vmul.f32 %v2430, %v2552
    %v2569 = vmul.f32 %v2432, %v2553
    %v2570 = vmul.f32 %v2434, %v2554
    %v2571 = vmul.f32 %v2436, %v2555
    %v2572 = vmul.f32 %v2438, %v2556
    %v2573 = vmul.f32 %v2440, %v2557
    %v2574 = vmul.f32 %v2442, %v2558
    %v2575 = vmul.f32 %v2444, %v2559
    %v2576 = vmul.f32 %v2446, %v2560
    %v2577 = vmul.f32 %v2448, %v2561
    %v2578 = vmul.f32 %v2450, %v2562
    %2579 = vrot.lane.b32.xlu0 %v1564, 96
    %v2580 = vpop.permute.xlu0 %2579
    %2581 = vrot.lane.b32.xlu0 %v1569, 96
    %v2582 = vpop.permute.xlu0 %2581
    %v2586 = vsel %vm1192, %v2563, 0
    %v2589 = vsel %vm1192, %v2564, 0
    %2591 = vmatprep.subr.mxu0 0.0
    %2592 = vmatpush1.msra.mxu0 %v2580
    %2593 = vmatprep.subr.mxu0 0.0
    %2594 = vmatpush1.msra.mxu0 %v2582
    %2595 = vmatprep.subr.mxu0 0.0
    %2596 = vmatpush1.msra.mxu0 0.0
    %2597 = vmatprep.subr.mxu0 0.0
    %2598 = vmatpush1.msra.mxu0 0.0
    %2599 = vmatprep.subr.mxu0 0.0
    %2600 = vmatpush1.msra.mxu0 0.0
    %2601 = vmatprep.subr.mxu0 0.0
    %2602 = vmatpush1.msra.mxu0 0.0
    %2603 = vmatprep.subr.mxu0 0.0
    %2604 = vmatpush1.msra.mxu0 0.0
    %2605 = vmatprep.subr.mxu0 0.0
    %2606 = vmatpush1.msra.mxu0 0.0
    %2607 = vmatprep.subr.mxu0 0.0
    %2608 = vmatpush1.msra.mxu0 0.0
    %2609 = vmatprep.subr.mxu0 0.0
    %2610 = vmatpush1.msra.mxu0 0.0
    %2611 = vmatprep.subr.mxu0 0.0
    %2612 = vmatpush1.msra.mxu0 0.0
    %2613 = vmatprep.subr.mxu0 0.0
    %2614 = vmatpush1.msra.mxu0 0.0
    %2615 = vmatprep.subr.mxu0 0.0
    %2616 = vmatpush1.msra.mxu0 0.0
    %2617 = vmatprep.subr.mxu0 0.0
    %2618 = vmatpush1.msra.mxu0 0.0
    %2619 = vmatprep.subr.mxu0 0.0
    %2620 = vmatpush1.msra.mxu0 0.0
    %2621 = vmatprep.subr.mxu0 0.0
    %2622 = vmatpush1.msra.mxu0 0.0
    %2623 = vmatprep.subr.mxu0 0.0
    %2624 = vmatpush1.msra.mxu0 0.0
    %2625 = vmatprep.subr.mxu0 0.0
    %2626 = vmatpush1.msra.mxu0 0.0
    %2627 = vmatprep.subr.mxu0 0.0
    %2628 = vmatpush1.msra.mxu0 0.0
    %2629 = vmatprep.subr.mxu0 0.0
    %2630 = vmatpush1.msra.mxu0 0.0
    %2631 = vmatprep.subr.mxu0 0.0
    %2632 = vmatpush1.msra.mxu0 0.0
    %2633 = vmatprep.subr.mxu0 0.0
    %2634 = vmatpush1.msra.mxu0 0.0
    %2635 = vmatprep.subr.mxu0 0.0
    %2636 = vmatpush1.msra.mxu0 0.0
    %2637 = vmatprep.subr.mxu0 0.0
    %2638 = vmatpush1.msra.mxu0 0.0
    %2639 = vmatprep.subr.mxu0 0.0
    %2640 = vmatpush1.msra.mxu0 0.0
    %2641 = vmatprep.subr.mxu0 0.0
    %2642 = vmatpush1.msra.mxu0 0.0
    %2643 = vmatprep.subr.mxu0 0.0
    %2644 = vmatpush1.msra.mxu0 0.0
    %2645 = vmatprep.subr.mxu0 0.0
    %2646 = vmatpush1.msra.mxu0 0.0
    %2647 = vmatprep.subr.mxu0 0.0
    %2648 = vmatpush1.msra.mxu0 0.0
    %2649 = vmatprep.subr.mxu0 0.0
    %2650 = vmatpush1.msra.mxu0 0.0
    %2651 = vmatprep.subr.mxu0 0.0
    %2652 = vmatpush1.msra.mxu0 0.0
    %2653 = vmatprep.subr.mxu0 0.0
    %2654 = vmatpush1.msra.mxu0 0.0
    %2655 = vmatprep.mubr.f32.mxu0 0.0
    %2656 = vmatmul.mubr.f32.gmra.mrb[0].mxu0 %v2586
    %v2657 = vpop.f32.mrb[0].mxu0
    %v2658 = vadd.f32 0.0, %v2657
    %v2659 = vpop.f32.mrb[0].mxu0
    %2660 = vmatprep.mubr.f32.mxu0 0.0
    %2661 = vmatmul.mubr.f32.gmra.mrb[0].mxu0 %v2589
    %v2662 = vpop.f32.mrb[0].mxu0
    %v2663 = vadd.f32 0.0, %v2662
    %v2664 = vpop.f32.mrb[0].mxu0
    %2665 = vdwg.mxu0
    %2666 = vrot.lane.b32.xlu0 %v1574, 96
    %v2667 = vpop.permute.xlu0 %2666
    %2668 = vrot.lane.b32.xlu0 %v1579, 96
    %v2669 = vpop.permute.xlu0 %2668
    %v2673 = vsel %vm1192, %v2565, 0
    %v2676 = vsel %vm1192, %v2566, 0
    %2678 = vmatprep.subr.mxu0 0.0
    %2679 = vmatpush1.msra.mxu0 %v2667
    %2680 = vmatprep.subr.mxu0 0.0
    %2681 = vmatpush1.msra.mxu0 %v2669
    %2682 = vmatprep.subr.mxu0 0.0
    %2683 = vmatpush1.msra.mxu0 0.0
    %2684 = vmatprep.subr.mxu0 0.0
    %2685 = vmatpush1.msra.mxu0 0.0
    %2686 = vmatprep.subr.mxu0 0.0
    %2687 = vmatpush1.msra.mxu0 0.0
    %2688 = vmatprep.subr.mxu0 0.0
    %2689 = vmatpush1.msra.mxu0 0.0
    %2690 = vmatprep.subr.mxu0 0.0
    %2691 = vmatpush1.msra.mxu0 0.0
    %2692 = vmatprep.subr.mxu0 0.0
    %2693 = vmatpush1.msra.mxu0 0.0
    %2694 = vmatprep.subr.mxu0 0.0
    %2695 = vmatpush1.msra.mxu0 0.0
    %2696 = vmatprep.subr.mxu0 0.0
    %2697 = vmatpush1.msra.mxu0 0.0
    %2698 = vmatprep.subr.mxu0 0.0
    %2699 = vmatpush1.msra.mxu0 0.0
    %2700 = vmatprep.subr.mxu0 0.0
    %2701 = vmatpush1.msra.mxu0 0.0
    %2702 = vmatprep.subr.mxu0 0.0
    %2703 = vmatpush1.msra.mxu0 0.0
    %2704 = vmatprep.subr.mxu0 0.0
    %2705 = vmatpush1.msra.mxu0 0.0
    %2706 = vmatprep.subr.mxu0 0.0
    %2707 = vmatpush1.msra.mxu0 0.0
    %2708 = vmatprep.subr.mxu0 0.0
    %2709 = vmatpush1.msra.mxu0 0.0
    %2710 = vmatprep.subr.mxu0 0.0
    %2711 = vmatpush1.msra.mxu0 0.0
    %2712 = vmatprep.subr.mxu0 0.0
    %2713 = vmatpush1.msra.mxu0 0.0
    %2714 = vmatprep.subr.mxu0 0.0
    %2715 = vmatpush1.msra.mxu0 0.0
    %2716 = vmatprep.subr.mxu0 0.0
    %2717 = vmatpush1.msra.mxu0 0.0
    %2718 = vmatprep.subr.mxu0 0.0
    %2719 = vmatpush1.msra.mxu0 0.0
    %2720 = vmatprep.subr.mxu0 0.0
    %2721 = vmatpush1.msra.mxu0 0.0
    %2722 = vmatprep.subr.mxu0 0.0
    %2723 = vmatpush1.msra.mxu0 0.0
    %2724 = vmatprep.subr.mxu0 0.0
    %2725 = vmatpush1.msra.mxu0 0.0
    %2726 = vmatprep.subr.mxu0 0.0
    %2727 = vmatpush1.msra.mxu0 0.0
    %2728 = vmatprep.subr.mxu0 0.0
    %2729 = vmatpush1.msra.mxu0 0.0
    %2730 = vmatprep.subr.mxu0 0.0
    %2731 = vmatpush1.msra.mxu0 0.0
    %2732 = vmatprep.subr.mxu0 0.0
    %2733 = vmatpush1.msra.mxu0 0.0
    %2734 = vmatprep.subr.mxu0 0.0
    %2735 = vmatpush1.msra.mxu0 0.0
    %2736 = vmatprep.subr.mxu0 0.0
    %2737 = vmatpush1.msra.mxu0 0.0
    %2738 = vmatprep.subr.mxu0 0.0
    %2739 = vmatpush1.msra.mxu0 0.0
    %2740 = vmatprep.subr.mxu0 0.0
    %2741 = vmatpush1.msra.mxu0 0.0
    %2742 = vmatprep.mubr.f32.mxu0 0.0
    %2743 = vmatmul.mubr.f32.gmra.mrb[0].mxu0 %v2673
    %v2744 = vpop.f32.mrb[0].mxu0
    %v2745 = vadd.f32 0.0, %v2744
    %v2746 = vpop.f32.mrb[0].mxu0
    %2747 = vmatprep.mubr.f32.mxu0 0.0
    %2748 = vmatmul.mubr.f32.gmra.mrb[0].mxu0 %v2676
    %v2749 = vpop.f32.mrb[0].mxu0
    %v2750 = vadd.f32 0.0, %v2749
    %v2751 = vpop.f32.mrb[0].mxu0
    %2752 = vdwg.mxu0
    %2753 = vrot.lane.b32.xlu0 %v1584, 96
    %v2754 = vpop.permute.xlu0 %2753
    %2755 = vrot.lane.b32.xlu0 %v1589, 96
    %v2756 = vpop.permute.xlu0 %2755
    %v2760 = vsel %vm1192, %v2567, 0
    %v2763 = vsel %vm1192, %v2568, 0
    %2765 = vmatprep.subr.mxu0 0.0
    %2766 = vmatpush1.msra.mxu0 %v2754
    %2767 = vmatprep.subr.mxu0 0.0
    %2768 = vmatpush1.msra.mxu0 %v2756
    %2769 = vmatprep.subr.mxu0 0.0
    %2770 = vmatpush1.msra.mxu0 0.0
    %2771 = vmatprep.subr.mxu0 0.0
    %2772 = vmatpush1.msra.mxu0 0.0
    %2773 = vmatprep.subr.mxu0 0.0
    %2774 = vmatpush1.msra.mxu0 0.0
    %2775 = vmatprep.subr.mxu0 0.0
    %2776 = vmatpush1.msra.mxu0 0.0
    %2777 = vmatprep.subr.mxu0 0.0
    %2778 = vmatpush1.msra.mxu0 0.0
    %2779 = vmatprep.subr.mxu0 0.0
    %2780 = vmatpush1.msra.mxu0 0.0
    %2781 = vmatprep.subr.mxu0 0.0
    %2782 = vmatpush1.msra.mxu0 0.0
    %2783 = vmatprep.subr.mxu0 0.0
    %2784 = vmatpush1.msra.mxu0 0.0
    %2785 = vmatprep.subr.mxu0 0.0
    %2786 = vmatpush1.msra.mxu0 0.0
    %2787 = vmatprep.subr.mxu0 0.0
    %2788 = vmatpush1.msra.mxu0 0.0
    %2789 = vmatprep.subr.mxu0 0.0
    %2790 = vmatpush1.msra.mxu0 0.0
    %2791 = vmatprep.subr.mxu0 0.0
    %2792 = vmatpush1.msra.mxu0 0.0
    %2793 = vmatprep.subr.mxu0 0.0
    %2794 = vmatpush1.msra.mxu0 0.0
    %2795 = vmatprep.subr.mxu0 0.0
    %2796 = vmatpush1.msra.mxu0 0.0
    %2797 = vmatprep.subr.mxu0 0.0
    %2798 = vmatpush1.msra.mxu0 0.0
    %2799 = vmatprep.subr.mxu0 0.0
    %2800 = vmatpush1.msra.mxu0 0.0
    %2801 = vmatprep.subr.mxu0 0.0
    %2802 = vmatpush1.msra.mxu0 0.0
    %2803 = vmatprep.subr.mxu0 0.0
    %2804 = vmatpush1.msra.mxu0 0.0
    %2805 = vmatprep.subr.mxu0 0.0
    %2806 = vmatpush1.msra.mxu0 0.0
    %2807 = vmatprep.subr.mxu0 0.0
    %2808 = vmatpush1.msra.mxu0 0.0
    %2809 = vmatprep.subr.mxu0 0.0
    %2810 = vmatpush1.msra.mxu0 0.0
    %2811 = vmatprep.subr.mxu0 0.0
    %2812 = vmatpush1.msra.mxu0 0.0
    %2813 = vmatprep.subr.mxu0 0.0
    %2814 = vmatpush1.msra.mxu0 0.0
    %2815 = vmatprep.subr.mxu0 0.0
    %2816 = vmatpush1.msra.mxu0 0.0
    %2817 = vmatprep.subr.mxu0 0.0
    %2818 = vmatpush1.msra.mxu0 0.0
    %2819 = vmatprep.subr.mxu0 0.0
    %2820 = vmatpush1.msra.mxu0 0.0
    %2821 = vmatprep.subr.mxu0 0.0
    %2822 = vmatpush1.msra.mxu0 0.0
    %2823 = vmatprep.subr.mxu0 0.0
    %2824 = vmatpush1.msra.mxu0 0.0
    %2825 = vmatprep.subr.mxu0 0.0
    %2826 = vmatpush1.msra.mxu0 0.0
    %2827 = vmatprep.subr.mxu0 0.0
    %2828 = vmatpush1.msra.mxu0 0.0
    %2829 = vmatprep.mubr.f32.mxu0 0.0
    %2830 = vmatmul.mubr.f32.gmra.mrb[0].mxu0 %v2760
    %v2831 = vpop.f32.mrb[0].mxu0
    %v2832 = vadd.f32 0.0, %v2831
    %v2833 = vpop.f32.mrb[0].mxu0
    %2834 = vmatprep.mubr.f32.mxu0 0.0
    %2835 = vmatmul.mubr.f32.gmra.mrb[0].mxu0 %v2763
    %v2836 = vpop.f32.mrb[0].mxu0
    %v2837 = vadd.f32 0.0, %v2836
    %v2838 = vpop.f32.mrb[0].mxu0
    %2839 = vdwg.mxu0
    %2840 = vrot.lane.b32.xlu0 %v1594, 96
    %v2841 = vpop.permute.xlu0 %2840
    %2842 = vrot.lane.b32.xlu0 %v1599, 96
    %v2843 = vpop.permute.xlu0 %2842
    %v2847 = vsel %vm1192, %v2569, 0
    %v2850 = vsel %vm1192, %v2570, 0
    %2852 = vmatprep.subr.mxu0 0.0
    %2853 = vmatpush1.msra.mxu0 %v2841
    %2854 = vmatprep.subr.mxu0 0.0
    %2855 = vmatpush1.msra.mxu0 %v2843
    %2856 = vmatprep.subr.mxu0 0.0
    %2857 = vmatpush1.msra.mxu0 0.0
    %2858 = vmatprep.subr.mxu0 0.0
    %2859 = vmatpush1.msra.mxu0 0.0
    %2860 = vmatprep.subr.mxu0 0.0
    %2861 = vmatpush1.msra.mxu0 0.0
    %2862 = vmatprep.subr.mxu0 0.0
    %2863 = vmatpush1.msra.mxu0 0.0
    %2864 = vmatprep.subr.mxu0 0.0
    %2865 = vmatpush1.msra.mxu0 0.0
    %2866 = vmatprep.subr.mxu0 0.0
    %2867 = vmatpush1.msra.mxu0 0.0
    %2868 = vmatprep.subr.mxu0 0.0
    %2869 = vmatpush1.msra.mxu0 0.0
    %2870 = vmatprep.subr.mxu0 0.0
    %2871 = vmatpush1.msra.mxu0 0.0
    %2872 = vmatprep.subr.mxu0 0.0
    %2873 = vmatpush1.msra.mxu0 0.0
    %2874 = vmatprep.subr.mxu0 0.0
    %2875 = vmatpush1.msra.mxu0 0.0
    %2876 = vmatprep.subr.mxu0 0.0
    %2877 = vmatpush1.msra.mxu0 0.0
    %2878 = vmatprep.subr.mxu0 0.0
    %2879 = vmatpush1.msra.mxu0 0.0
    %2880 = vmatprep.subr.mxu0 0.0
    %2881 = vmatpush1.msra.mxu0 0.0
    %2882 = vmatprep.subr.mxu0 0.0
    %2883 = vmatpush1.msra.mxu0 0.0
    %2884 = vmatprep.subr.mxu0 0.0
    %2885 = vmatpush1.msra.mxu0 0.0
    %2886 = vmatprep.subr.mxu0 0.0
    %2887 = vmatpush1.msra.mxu0 0.0
    %2888 = vmatprep.subr.mxu0 0.0
    %2889 = vmatpush1.msra.mxu0 0.0
    %2890 = vmatprep.subr.mxu0 0.0
    %2891 = vmatpush1.msra.mxu0 0.0
    %2892 = vmatprep.subr.mxu0 0.0
    %2893 = vmatpush1.msra.mxu0 0.0
    %2894 = vmatprep.subr.mxu0 0.0
    %2895 = vmatpush1.msra.mxu0 0.0
    %2896 = vmatprep.subr.mxu0 0.0
    %2897 = vmatpush1.msra.mxu0 0.0
    %2898 = vmatprep.subr.mxu0 0.0
    %2899 = vmatpush1.msra.mxu0 0.0
    %2900 = vmatprep.subr.mxu0 0.0
    %2901 = vmatpush1.msra.mxu0 0.0
    %2902 = vmatprep.subr.mxu0 0.0
    %2903 = vmatpush1.msra.mxu0 0.0
    %2904 = vmatprep.subr.mxu0 0.0
    %2905 = vmatpush1.msra.mxu0 0.0
    %2906 = vmatprep.subr.mxu0 0.0
    %2907 = vmatpush1.msra.mxu0 0.0
    %2908 = vmatprep.subr.mxu0 0.0
    %2909 = vmatpush1.msra.mxu0 0.0
    %2910 = vmatprep.subr.mxu0 0.0
    %2911 = vmatpush1.msra.mxu0 0.0
    %2912 = vmatprep.subr.mxu0 0.0
    %2913 = vmatpush1.msra.mxu0 0.0
    %2914 = vmatprep.subr.mxu0 0.0
    %2915 = vmatpush1.msra.mxu0 0.0
    %2916 = vmatprep.mubr.f32.mxu0 0.0
    %2917 = vmatmul.mubr.f32.gmra.mrb[0].mxu0 %v2847
    %v2918 = vpop.f32.mrb[0].mxu0
    %v2919 = vadd.f32 0.0, %v2918
    %v2920 = vpop.f32.mrb[0].mxu0
    %2921 = vmatprep.mubr.f32.mxu0 0.0
    %2922 = vmatmul.mubr.f32.gmra.mrb[0].mxu0 %v2850
    %v2923 = vpop.f32.mrb[0].mxu0
    %v2924 = vadd.f32 0.0, %v2923
    %v2925 = vpop.f32.mrb[0].mxu0
    %2926 = vdwg.mxu0
    %2927 = vrot.lane.b32.xlu0 %v1604, 96
    %v2928 = vpop.permute.xlu0 %2927
    %2929 = vrot.lane.b32.xlu0 %v1609, 96
    %v2930 = vpop.permute.xlu0 %2929
    %v2934 = vsel %vm1192, %v2571, 0
    %v2937 = vsel %vm1192, %v2572, 0
    %2939 = vmatprep.subr.mxu0 0.0
    %2940 = vmatpush1.msra.mxu0 %v2928
    %2941 = vmatprep.subr.mxu0 0.0
    %2942 = vmatpush1.msra.mxu0 %v2930
    %2943 = vmatprep.subr.mxu0 0.0
    %2944 = vmatpush1.msra.mxu0 0.0
    %2945 = vmatprep.subr.mxu0 0.0
    %2946 = vmatpush1.msra.mxu0 0.0
    %2947 = vmatprep.subr.mxu0 0.0
    %2948 = vmatpush1.msra.mxu0 0.0
    %2949 = vmatprep.subr.mxu0 0.0
    %2950 = vmatpush1.msra.mxu0 0.0
    %2951 = vmatprep.subr.mxu0 0.0
    %2952 = vmatpush1.msra.mxu0 0.0
    %2953 = vmatprep.subr.mxu0 0.0
    %2954 = vmatpush1.msra.mxu0 0.0
    %2955 = vmatprep.subr.mxu0 0.0
    %2956 = vmatpush1.msra.mxu0 0.0
    %2957 = vmatprep.subr.mxu0 0.0
    %2958 = vmatpush1.msra.mxu0 0.0
    %2959 = vmatprep.subr.mxu0 0.0
    %2960 = vmatpush1.msra.mxu0 0.0
    %2961 = vmatprep.subr.mxu0 0.0
    %2962 = vmatpush1.msra.mxu0 0.0
    %2963 = vmatprep.subr.mxu0 0.0
    %2964 = vmatpush1.msra.mxu0 0.0
    %2965 = vmatprep.subr.mxu0 0.0
    %2966 = vmatpush1.msra.mxu0 0.0
    %2967 = vmatprep.subr.mxu0 0.0
    %2968 = vmatpush1.msra.mxu0 0.0
    %2969 = vmatprep.subr.mxu0 0.0
    %2970 = vmatpush1.msra.mxu0 0.0
    %2971 = vmatprep.subr.mxu0 0.0
    %2972 = vmatpush1.msra.mxu0 0.0
    %2973 = vmatprep.subr.mxu0 0.0
    %2974 = vmatpush1.msra.mxu0 0.0
    %2975 = vmatprep.subr.mxu0 0.0
    %2976 = vmatpush1.msra.mxu0 0.0
    %2977 = vmatprep.subr.mxu0 0.0
    %2978 = vmatpush1.msra.mxu0 0.0
    %2979 = vmatprep.subr.mxu0 0.0
    %2980 = vmatpush1.msra.mxu0 0.0
    %2981 = vmatprep.subr.mxu0 0.0
    %2982 = vmatpush1.msra.mxu0 0.0
    %2983 = vmatprep.subr.mxu0 0.0
    %2984 = vmatpush1.msra.mxu0 0.0
    %2985 = vmatprep.subr.mxu0 0.0
    %2986 = vmatpush1.msra.mxu0 0.0
    %2987 = vmatprep.subr.mxu0 0.0
    %2988 = vmatpush1.msra.mxu0 0.0
    %2989 = vmatprep.subr.mxu0 0.0
    %2990 = vmatpush1.msra.mxu0 0.0
    %2991 = vmatprep.subr.mxu0 0.0
    %2992 = vmatpush1.msra.mxu0 0.0
    %2993 = vmatprep.subr.mxu0 0.0
    %2994 = vmatpush1.msra.mxu0 0.0
    %2995 = vmatprep.subr.mxu0 0.0
    %2996 = vmatpush1.msra.mxu0 0.0
    %2997 = vmatprep.subr.mxu0 0.0
    %2998 = vmatpush1.msra.mxu0 0.0
    %2999 = vmatprep.subr.mxu0 0.0
    %3000 = vmatpush1.msra.mxu0 0.0
    %3001 = vmatprep.subr.mxu0 0.0
    %3002 = vmatpush1.msra.mxu0 0.0
    %3003 = vmatprep.mubr.f32.mxu0 0.0
    %3004 = vmatmul.mubr.f32.gmra.mrb[0].mxu0 %v2934
    %v3005 = vpop.f32.mrb[0].mxu0
    %v3006 = vadd.f32 0.0, %v3005
    %v3007 = vpop.f32.mrb[0].mxu0
    %3008 = vmatprep.mubr.f32.mxu0 0.0
    %3009 = vmatmul.mubr.f32.gmra.mrb[0].mxu0 %v2937
    %v3010 = vpop.f32.mrb[0].mxu0
    %v3011 = vadd.f32 0.0, %v3010
    %v3012 = vpop.f32.mrb[0].mxu0
    %3013 = vdwg.mxu0
    %3014 = vrot.lane.b32.xlu0 %v1614, 96
    %v3015 = vpop.permute.xlu0 %3014
    %3016 = vrot.lane.b32.xlu0 %v1619, 96
    %v3017 = vpop.permute.xlu0 %3016
    %v3021 = vsel %vm1192, %v2573, 0
    %v3024 = vsel %vm1192, %v2574, 0
    %3026 = vmatprep.subr.mxu0 0.0
    %3027 = vmatpush1.msra.mxu0 %v3015
    %3028 = vmatprep.subr.mxu0 0.0
    %3029 = vmatpush1.msra.mxu0 %v3017
    %3030 = vmatprep.subr.mxu0 0.0
    %3031 = vmatpush1.msra.mxu0 0.0
    %3032 = vmatprep.subr.mxu0 0.0
    %3033 = vmatpush1.msra.mxu0 0.0
    %3034 = vmatprep.subr.mxu0 0.0
    %3035 = vmatpush1.msra.mxu0 0.0
    %3036 = vmatprep.subr.mxu0 0.0
    %3037 = vmatpush1.msra.mxu0 0.0
    %3038 = vmatprep.subr.mxu0 0.0
    %3039 = vmatpush1.msra.mxu0 0.0
    %3040 = vmatprep.subr.mxu0 0.0
    %3041 = vmatpush1.msra.mxu0 0.0
    %3042 = vmatprep.subr.mxu0 0.0
    %3043 = vmatpush1.msra.mxu0 0.0
    %3044 = vmatprep.subr.mxu0 0.0
    %3045 = vmatpush1.msra.mxu0 0.0
    %3046 = vmatprep.subr.mxu0 0.0
    %3047 = vmatpush1.msra.mxu0 0.0
    %3048 = vmatprep.subr.mxu0 0.0
    %3049 = vmatpush1.msra.mxu0 0.0
    %3050 = vmatprep.subr.mxu0 0.0
    %3051 = vmatpush1.msra.mxu0 0.0
    %3052 = vmatprep.subr.mxu0 0.0
    %3053 = vmatpush1.msra.mxu0 0.0
    %3054 = vmatprep.subr.mxu0 0.0
    %3055 = vmatpush1.msra.mxu0 0.0
    %3056 = vmatprep.subr.mxu0 0.0
    %3057 = vmatpush1.msra.mxu0 0.0
    %3058 = vmatprep.subr.mxu0 0.0
    %3059 = vmatpush1.msra.mxu0 0.0
    %3060 = vmatprep.subr.mxu0 0.0
    %3061 = vmatpush1.msra.mxu0 0.0
    %3062 = vmatprep.subr.mxu0 0.0
    %3063 = vmatpush1.msra.mxu0 0.0
    %3064 = vmatprep.subr.mxu0 0.0
    %3065 = vmatpush1.msra.mxu0 0.0
    %3066 = vmatprep.subr.mxu0 0.0
    %3067 = vmatpush1.msra.mxu0 0.0
    %3068 = vmatprep.subr.mxu0 0.0
    %3069 = vmatpush1.msra.mxu0 0.0
    %3070 = vmatprep.subr.mxu0 0.0
    %3071 = vmatpush1.msra.mxu0 0.0
    %3072 = vmatprep.subr.mxu0 0.0
    %3073 = vmatpush1.msra.mxu0 0.0
    %3074 = vmatprep.subr.mxu0 0.0
    %3075 = vmatpush1.msra.mxu0 0.0
    %3076 = vmatprep.subr.mxu0 0.0
    %3077 = vmatpush1.msra.mxu0 0.0
    %3078 = vmatprep.subr.mxu0 0.0
    %3079 = vmatpush1.msra.mxu0 0.0
    %3080 = vmatprep.subr.mxu0 0.0
    %3081 = vmatpush1.msra.mxu0 0.0
    %3082 = vmatprep.subr.mxu0 0.0
    %3083 = vmatpush1.msra.mxu0 0.0
    %3084 = vmatprep.subr.mxu0 0.0
    %3085 = vmatpush1.msra.mxu0 0.0
    %3086 = vmatprep.subr.mxu0 0.0
    %3087 = vmatpush1.msra.mxu0 0.0
    %3088 = vmatprep.subr.mxu0 0.0
    %3089 = vmatpush1.msra.mxu0 0.0
    %3090 = vmatprep.mubr.f32.mxu0 0.0
    %3091 = vmatmul.mubr.f32.gmra.mrb[0].mxu0 %v3021
    %v3092 = vpop.f32.mrb[0].mxu0
    %v3093 = vadd.f32 0.0, %v3092
    %v3094 = vpop.f32.mrb[0].mxu0
    %3095 = vmatprep.mubr.f32.mxu0 0.0
    %3096 = vmatmul.mubr.f32.gmra.mrb[0].mxu0 %v3024
    %v3097 = vpop.f32.mrb[0].mxu0
    %v3098 = vadd.f32 0.0, %v3097
    %v3099 = vpop.f32.mrb[0].mxu0
    %3100 = vdwg.mxu0
    %3101 = vrot.lane.b32.xlu0 %v1624, 96
    %v3102 = vpop.permute.xlu0 %3101
    %3103 = vrot.lane.b32.xlu0 %v1629, 96
    %v3104 = vpop.permute.xlu0 %3103
    %v3108 = vsel %vm1192, %v2575, 0
    %v3111 = vsel %vm1192, %v2576, 0
    %3113 = vmatprep.subr.mxu0 0.0
    %3114 = vmatpush1.msra.mxu0 %v3102
    %3115 = vmatprep.subr.mxu0 0.0
    %3116 = vmatpush1.msra.mxu0 %v3104
    %3117 = vmatprep.subr.mxu0 0.0
    %3118 = vmatpush1.msra.mxu0 0.0
    %3119 = vmatprep.subr.mxu0 0.0
    %3120 = vmatpush1.msra.mxu0 0.0
    %3121 = vmatprep.subr.mxu0 0.0
    %3122 = vmatpush1.msra.mxu0 0.0
    %3123 = vmatprep.subr.mxu0 0.0
    %3124 = vmatpush1.msra.mxu0 0.0
    %3125 = vmatprep.subr.mxu0 0.0
    %3126 = vmatpush1.msra.mxu0 0.0
    %3127 = vmatprep.subr.mxu0 0.0
    %3128 = vmatpush1.msra.mxu0 0.0
    %3129 = vmatprep.subr.mxu0 0.0
    %3130 = vmatpush1.msra.mxu0 0.0
    %3131 = vmatprep.subr.mxu0 0.0
    %3132 = vmatpush1.msra.mxu0 0.0
    %3133 = vmatprep.subr.mxu0 0.0
    %3134 = vmatpush1.msra.mxu0 0.0
    %3135 = vmatprep.subr.mxu0 0.0
    %3136 = vmatpush1.msra.mxu0 0.0
    %3137 = vmatprep.subr.mxu0 0.0
    %3138 = vmatpush1.msra.mxu0 0.0
    %3139 = vmatprep.subr.mxu0 0.0
    %3140 = vmatpush1.msra.mxu0 0.0
    %3141 = vmatprep.subr.mxu0 0.0
    %3142 = vmatpush1.msra.mxu0 0.0
    %3143 = vmatprep.subr.mxu0 0.0
    %3144 = vmatpush1.msra.mxu0 0.0
    %3145 = vmatprep.subr.mxu0 0.0
    %3146 = vmatpush1.msra.mxu0 0.0
    %3147 = vmatprep.subr.mxu0 0.0
    %3148 = vmatpush1.msra.mxu0 0.0
    %3149 = vmatprep.subr.mxu0 0.0
    %3150 = vmatpush1.msra.mxu0 0.0
    %3151 = vmatprep.subr.mxu0 0.0
    %3152 = vmatpush1.msra.mxu0 0.0
    %3153 = vmatprep.subr.mxu0 0.0
    %3154 = vmatpush1.msra.mxu0 0.0
    %3155 = vmatprep.subr.mxu0 0.0
    %3156 = vmatpush1.msra.mxu0 0.0
    %3157 = vmatprep.subr.mxu0 0.0
    %3158 = vmatpush1.msra.mxu0 0.0
    %3159 = vmatprep.subr.mxu0 0.0
    %3160 = vmatpush1.msra.mxu0 0.0
    %3161 = vmatprep.subr.mxu0 0.0
    %3162 = vmatpush1.msra.mxu0 0.0
    %3163 = vmatprep.subr.mxu0 0.0
    %3164 = vmatpush1.msra.mxu0 0.0
    %3165 = vmatprep.subr.mxu0 0.0
    %3166 = vmatpush1.msra.mxu0 0.0
    %3167 = vmatprep.subr.mxu0 0.0
    %3168 = vmatpush1.msra.mxu0 0.0
    %3169 = vmatprep.subr.mxu0 0.0
    %3170 = vmatpush1.msra.mxu0 0.0
    %3171 = vmatprep.subr.mxu0 0.0
    %3172 = vmatpush1.msra.mxu0 0.0
    %3173 = vmatprep.subr.mxu0 0.0
    %3174 = vmatpush1.msra.mxu0 0.0
    %3175 = vmatprep.subr.mxu0 0.0
    %3176 = vmatpush1.msra.mxu0 0.0
    %3177 = vmatprep.mubr.f32.mxu0 0.0
    %3178 = vmatmul.mubr.f32.gmra.mrb[0].mxu0 %v3108
    %v3179 = vpop.f32.mrb[0].mxu0
    %v3180 = vadd.f32 0.0, %v3179
    %v3181 = vpop.f32.mrb[0].mxu0
    %3182 = vmatprep.mubr.f32.mxu0 0.0
    %3183 = vmatmul.mubr.f32.gmra.mrb[0].mxu0 %v3111
    %v3184 = vpop.f32.mrb[0].mxu0
    %v3185 = vadd.f32 0.0, %v3184
    %v3186 = vpop.f32.mrb[0].mxu0
    %3187 = vdwg.mxu0
    %3188 = vrot.lane.b32.xlu0 %v1634, 96
    %v3189 = vpop.permute.xlu0 %3188
    %3190 = vrot.lane.b32.xlu0 %v1639, 96
    %v3191 = vpop.permute.xlu0 %3190
    %v3195 = vsel %vm1192, %v2577, 0
    %v3198 = vsel %vm1192, %v2578, 0
    %3200 = vmatprep.subr.mxu0 0.0
    %3201 = vmatpush1.msra.mxu0 %v3189
    %3202 = vmatprep.subr.mxu0 0.0
    %3203 = vmatpush1.msra.mxu0 %v3191
    %3204 = vmatprep.subr.mxu0 0.0
    %3205 = vmatpush1.msra.mxu0 0.0
    %3206 = vmatprep.subr.mxu0 0.0
    %3207 = vmatpush1.msra.mxu0 0.0
    %3208 = vmatprep.subr.mxu0 0.0
    %3209 = vmatpush1.msra.mxu0 0.0
    %3210 = vmatprep.subr.mxu0 0.0
    %3211 = vmatpush1.msra.mxu0 0.0
    %3212 = vmatprep.subr.mxu0 0.0
    %3213 = vmatpush1.msra.mxu0 0.0
    %3214 = vmatprep.subr.mxu0 0.0
    %3215 = vmatpush1.msra.mxu0 0.0
    %3216 = vmatprep.subr.mxu0 0.0
    %3217 = vmatpush1.msra.mxu0 0.0
    %3218 = vmatprep.subr.mxu0 0.0
    %3219 = vmatpush1.msra.mxu0 0.0
    %3220 = vmatprep.subr.mxu0 0.0
    %3221 = vmatpush1.msra.mxu0 0.0
    %3222 = vmatprep.subr.mxu0 0.0
    %3223 = vmatpush1.msra.mxu0 0.0
    %3224 = vmatprep.subr.mxu0 0.0
    %3225 = vmatpush1.msra.mxu0 0.0
    %3226 = vmatprep.subr.mxu0 0.0
    %3227 = vmatpush1.msra.mxu0 0.0
    %3228 = vmatprep.subr.mxu0 0.0
    %3229 = vmatpush1.msra.mxu0 0.0
    %3230 = vmatprep.subr.mxu0 0.0
    %3231 = vmatpush1.msra.mxu0 0.0
    %3232 = vmatprep.subr.mxu0 0.0
    %3233 = vmatpush1.msra.mxu0 0.0
    %3234 = vmatprep.subr.mxu0 0.0
    %3235 = vmatpush1.msra.mxu0 0.0
    %3236 = vmatprep.subr.mxu0 0.0
    %3237 = vmatpush1.msra.mxu0 0.0
    %3238 = vmatprep.subr.mxu0 0.0
    %3239 = vmatpush1.msra.mxu0 0.0
    %3240 = vmatprep.subr.mxu0 0.0
    %3241 = vmatpush1.msra.mxu0 0.0
    %3242 = vmatprep.subr.mxu0 0.0
    %3243 = vmatpush1.msra.mxu0 0.0
    %3244 = vmatprep.subr.mxu0 0.0
    %3245 = vmatpush1.msra.mxu0 0.0
    %3246 = vmatprep.subr.mxu0 0.0
    %3247 = vmatpush1.msra.mxu0 0.0
    %3248 = vmatprep.subr.mxu0 0.0
    %3249 = vmatpush1.msra.mxu0 0.0
    %3250 = vmatprep.subr.mxu0 0.0
    %3251 = vmatpush1.msra.mxu0 0.0
    %3252 = vmatprep.subr.mxu0 0.0
    %3253 = vmatpush1.msra.mxu0 0.0
    %3254 = vmatprep.subr.mxu0 0.0
    %3255 = vmatpush1.msra.mxu0 0.0
    %3256 = vmatprep.subr.mxu0 0.0
    %3257 = vmatpush1.msra.mxu0 0.0
    %3258 = vmatprep.subr.mxu0 0.0
    %3259 = vmatpush1.msra.mxu0 0.0
    %3260 = vmatprep.subr.mxu0 0.0
    %3261 = vmatpush1.msra.mxu0 0.0
    %3262 = vmatprep.subr.mxu0 0.0
    %3263 = vmatpush1.msra.mxu0 0.0
    %3264 = vmatprep.mubr.f32.mxu0 0.0
    %3265 = vmatmul.mubr.f32.gmra.mrb[0].mxu0 %v3195
    %v3266 = vpop.f32.mrb[0].mxu0
    %v3267 = vadd.f32 0.0, %v3266
    %v3268 = vpop.f32.mrb[0].mxu0
    %3269 = vmatprep.mubr.f32.mxu0 0.0
    %3270 = vmatmul.mubr.f32.gmra.mrb[0].mxu0 %v3198
    %v3271 = vpop.f32.mrb[0].mxu0
    %v3272 = vadd.f32 0.0, %v3271
    %v3273 = vpop.f32.mrb[0].mxu0
    %3274 = vdwg.mxu0
    %v3275 = vld [vmem:[%s4 + $0x10] sm:$0xf]
    %3276 = vrot.lane.b32.xlu0 %v1564, 124
    %v3277 = vpop.permute.xlu0 %3276
    %3278 = vrot.lane.b32.xlu0 %v1569, 124
    %v3279 = vpop.permute.xlu0 %3278
    %3280 = vrot.lane.b32.xlu0 %v1564, 108
    %v3281 = vpop.permute.xlu0 %3280
    %3282 = vrot.lane.b32.xlu0 %v1569, 108
    %v3283 = vpop.permute.xlu0 %3282
    %v3284 = vsel %vm1648, %v3277, 0
    %v3286 = vsel %vm1648, %v3279, 0
    %v3288 = vsel %vm1648, %v3281, 0
    %v3290 = vsel %vm1648, %v3283, 0
    %3292 = vmatprep.subr.mxu0 0.0
    %3293 = vmatpush1.xpose.msra.mxu0 %v3288
    %3294 = vmatprep.subr.mxu0 0.0
    %3295 = vmatpush1.xpose.msra.mxu0 %v3290
    %3296 = vmatprep.subr.mxu0 0.0
    %3297 = vmatpush1.xpose.msra.mxu0 0.0
    %3298 = vmatprep.subr.mxu0 0.0
    %3299 = vmatpush1.xpose.msra.mxu0 0.0
    %3300 = vmatprep.subr.mxu0 0.0
    %3301 = vmatpush1.xpose.msra.mxu0 0.0
    %3302 = vmatprep.subr.mxu0 0.0
    %3303 = vmatpush1.xpose.msra.mxu0 0.0
    %3304 = vmatprep.subr.mxu0 0.0
    %3305 = vmatpush1.xpose.msra.mxu0 0.0
    %3306 = vmatprep.subr.mxu0 0.0
    %3307 = vmatpush1.xpose.msra.mxu0 0.0
    %3308 = vmatprep.subr.mxu0 0.0
    %3309 = vmatpush1.xpose.msra.mxu0 0.0
    %3310 = vmatprep.subr.mxu0 0.0
    %3311 = vmatpush1.xpose.msra.mxu0 0.0
    %3312 = vmatprep.subr.mxu0 0.0
    %3313 = vmatpush1.xpose.msra.mxu0 0.0
    %3314 = vmatprep.subr.mxu0 0.0
    %3315 = vmatpush1.xpose.msra.mxu0 0.0
    %3316 = vmatprep.subr.mxu0 0.0
    %3317 = vmatpush1.xpose.msra.mxu0 0.0
    %3318 = vmatprep.subr.mxu0 0.0
    %3319 = vmatpush1.xpose.msra.mxu0 0.0
    %3320 = vmatprep.subr.mxu0 0.0
    %3321 = vmatpush1.xpose.msra.mxu0 0.0
    %3322 = vmatprep.subr.mxu0 0.0
    %3323 = vmatpush1.xpose.msra.mxu0 0.0
    %3324 = vmatprep.subr.mxu0 0.0
    %3325 = vmatpush1.xpose.msra.mxu0 0.0
    %3326 = vmatprep.subr.mxu0 0.0
    %3327 = vmatpush1.xpose.msra.mxu0 0.0
    %3328 = vmatprep.subr.mxu0 0.0
    %3329 = vmatpush1.xpose.msra.mxu0 0.0
    %3330 = vmatprep.subr.mxu0 0.0
    %3331 = vmatpush1.xpose.msra.mxu0 0.0
    %3332 = vmatprep.subr.mxu0 0.0
    %3333 = vmatpush1.xpose.msra.mxu0 0.0
    %3334 = vmatprep.subr.mxu0 0.0
    %3335 = vmatpush1.xpose.msra.mxu0 0.0
    %3336 = vmatprep.subr.mxu0 0.0
    %3337 = vmatpush1.xpose.msra.mxu0 0.0
    %3338 = vmatprep.subr.mxu0 0.0
    %3339 = vmatpush1.xpose.msra.mxu0 0.0
    %3340 = vmatprep.subr.mxu0 0.0
    %3341 = vmatpush1.xpose.msra.mxu0 0.0
    %3342 = vmatprep.subr.mxu0 0.0
    %3343 = vmatpush1.xpose.msra.mxu0 0.0
    %3344 = vmatprep.subr.mxu0 0.0
    %3345 = vmatpush1.xpose.msra.mxu0 0.0
    %3346 = vmatprep.subr.mxu0 0.0
    %3347 = vmatpush1.xpose.msra.mxu0 0.0
    %3348 = vmatprep.subr.mxu0 0.0
    %3349 = vmatpush1.xpose.msra.mxu0 0.0
    %3350 = vmatprep.subr.mxu0 0.0
    %3351 = vmatpush1.xpose.msra.mxu0 0.0
    %3352 = vmatprep.subr.mxu0 0.0
    %3353 = vmatpush1.xpose.msra.mxu0 0.0
    %3354 = vmatprep.subr.mxu0 0.0
    %3355 = vmatpush1.xpose.msra.mxu0 0.0
    %3356 = vmatprep.mubr.f32.mxu0 0.0
    %3357 = vmatmul.mubr.f32.gmra.mrb[0].mxu0 %v3284
    %v3358 = vpop.f32.mrb[0].mxu0
    %v3359 = vadd.f32 0.0, %v3358
    %v3360 = vpop.f32.mrb[0].mxu0
    %3361 = vmatprep.mubr.f32.mxu0 0.0
    %3362 = vmatmul.mubr.f32.gmra.mrb[0].mxu0 %v3286
    %v3363 = vpop.f32.mrb[0].mxu0
    %v3364 = vadd.f32 0.0, %v3363
    %v3365 = vpop.f32.mrb[0].mxu0
    %3366 = vdwg.mxu0
    %3367 = vrot.lane.b32.xlu0 %v1574, 124
    %v3368 = vpop.permute.xlu0 %3367
    %3369 = vrot.lane.b32.xlu0 %v1579, 124
    %v3370 = vpop.permute.xlu0 %3369
    %3371 = vrot.lane.b32.xlu0 %v1574, 108
    %v3372 = vpop.permute.xlu0 %3371
    %3373 = vrot.lane.b32.xlu0 %v1579, 108
    %v3374 = vpop.permute.xlu0 %3373
    %v3375 = vsel %vm1648, %v3368, 0
    %v3377 = vsel %vm1648, %v3370, 0
    %v3379 = vsel %vm1648, %v3372, 0
    %v3381 = vsel %vm1648, %v3374, 0
    %3383 = vmatprep.subr.mxu0 0.0
    %3384 = vmatpush1.xpose.msra.mxu0 %v3379
    %3385 = vmatprep.subr.mxu0 0.0
    %3386 = vmatpush1.xpose.msra.mxu0 %v3381
    %3387 = vmatprep.subr.mxu0 0.0
    %3388 = vmatpush1.xpose.msra.mxu0 0.0
    %3389 = vmatprep.subr.mxu0 0.0
    %3390 = vmatpush1.xpose.msra.mxu0 0.0
    %3391 = vmatprep.subr.mxu0 0.0
    %3392 = vmatpush1.xpose.msra.mxu0 0.0
    %3393 = vmatprep.subr.mxu0 0.0
    %3394 = vmatpush1.xpose.msra.mxu0 0.0
    %3395 = vmatprep.subr.mxu0 0.0
    %3396 = vmatpush1.xpose.msra.mxu0 0.0
    %3397 = vmatprep.subr.mxu0 0.0
    %3398 = vmatpush1.xpose.msra.mxu0 0.0
    %3399 = vmatprep.subr.mxu0 0.0
    %3400 = vmatpush1.xpose.msra.mxu0 0.0
    %3401 = vmatprep.subr.mxu0 0.0
    %3402 = vmatpush1.xpose.msra.mxu0 0.0
    %3403 = vmatprep.subr.mxu0 0.0
    %3404 = vmatpush1.xpose.msra.mxu0 0.0
    %3405 = vmatprep.subr.mxu0 0.0
    %3406 = vmatpush1.xpose.msra.mxu0 0.0
    %3407 = vmatprep.subr.mxu0 0.0
    %3408 = vmatpush1.xpose.msra.mxu0 0.0
    %3409 = vmatprep.subr.mxu0 0.0
    %3410 = vmatpush1.xpose.msra.mxu0 0.0
    %3411 = vmatprep.subr.mxu0 0.0
    %3412 = vmatpush1.xpose.msra.mxu0 0.0
    %3413 = vmatprep.subr.mxu0 0.0
    %3414 = vmatpush1.xpose.msra.mxu0 0.0
    %3415 = vmatprep.subr.mxu0 0.0
    %3416 = vmatpush1.xpose.msra.mxu0 0.0
    %3417 = vmatprep.subr.mxu0 0.0
    %3418 = vmatpush1.xpose.msra.mxu0 0.0
    %3419 = vmatprep.subr.mxu0 0.0
    %3420 = vmatpush1.xpose.msra.mxu0 0.0
    %3421 = vmatprep.subr.mxu0 0.0
    %3422 = vmatpush1.xpose.msra.mxu0 0.0
    %3423 = vmatprep.subr.mxu0 0.0
    %3424 = vmatpush1.xpose.msra.mxu0 0.0
    %3425 = vmatprep.subr.mxu0 0.0
    %3426 = vmatpush1.xpose.msra.mxu0 0.0
    %3427 = vmatprep.subr.mxu0 0.0
    %3428 = vmatpush1.xpose.msra.mxu0 0.0
    %3429 = vmatprep.subr.mxu0 0.0
    %3430 = vmatpush1.xpose.msra.mxu0 0.0
    %3431 = vmatprep.subr.mxu0 0.0
    %3432 = vmatpush1.xpose.msra.mxu0 0.0
    %3433 = vmatprep.subr.mxu0 0.0
    %3434 = vmatpush1.xpose.msra.mxu0 0.0
    %3435 = vmatprep.subr.mxu0 0.0
    %3436 = vmatpush1.xpose.msra.mxu0 0.0
    %3437 = vmatprep.subr.mxu0 0.0
    %3438 = vmatpush1.xpose.msra.mxu0 0.0
    %3439 = vmatprep.subr.mxu0 0.0
    %3440 = vmatpush1.xpose.msra.mxu0 0.0
    %3441 = vmatprep.subr.mxu0 0.0
    %3442 = vmatpush1.xpose.msra.mxu0 0.0
    %3443 = vmatprep.subr.mxu0 0.0
    %3444 = vmatpush1.xpose.msra.mxu0 0.0
    %3445 = vmatprep.subr.mxu0 0.0
    %3446 = vmatpush1.xpose.msra.mxu0 0.0
    %3447 = vmatprep.mubr.f32.mxu0 0.0
    %3448 = vmatmul.mubr.f32.gmra.mrb[0].mxu0 %v3375
    %v3449 = vpop.f32.mrb[0].mxu0
    %v3450 = vadd.f32 0.0, %v3449
    %v3451 = vpop.f32.mrb[0].mxu0
    %3452 = vmatprep.mubr.f32.mxu0 0.0
    %3453 = vmatmul.mubr.f32.gmra.mrb[0].mxu0 %v3377
    %v3454 = vpop.f32.mrb[0].mxu0
    %v3455 = vadd.f32 0.0, %v3454
    %v3456 = vpop.f32.mrb[0].mxu0
    %3457 = vdwg.mxu0
    %3458 = vrot.lane.b32.xlu0 %v1584, 124
    %v3459 = vpop.permute.xlu0 %3458
    %3460 = vrot.lane.b32.xlu0 %v1589, 124
    %v3461 = vpop.permute.xlu0 %3460
    %3462 = vrot.lane.b32.xlu0 %v1584, 108
    %v3463 = vpop.permute.xlu0 %3462
    %3464 = vrot.lane.b32.xlu0 %v1589, 108
    %v3465 = vpop.permute.xlu0 %3464
    %v3466 = vsel %vm1648, %v3459, 0
    %v3468 = vsel %vm1648, %v3461, 0
    %v3470 = vsel %vm1648, %v3463, 0
    %v3472 = vsel %vm1648, %v3465, 0
    %3474 = vmatprep.subr.mxu0 0.0
    %3475 = vmatpush1.xpose.msra.mxu0 %v3470
    %3476 = vmatprep.subr.mxu0 0.0
    %3477 = vmatpush1.xpose.msra.mxu0 %v3472
    %3478 = vmatprep.subr.mxu0 0.0
    %3479 = vmatpush1.xpose.msra.mxu0 0.0
    %3480 = vmatprep.subr.mxu0 0.0
    %3481 = vmatpush1.xpose.msra.mxu0 0.0
    %3482 = vmatprep.subr.mxu0 0.0
    %3483 = vmatpush1.xpose.msra.mxu0 0.0
    %3484 = vmatprep.subr.mxu0 0.0
    %3485 = vmatpush1.xpose.msra.mxu0 0.0
    %3486 = vmatprep.subr.mxu0 0.0
    %3487 = vmatpush1.xpose.msra.mxu0 0.0
    %3488 = vmatprep.subr.mxu0 0.0
    %3489 = vmatpush1.xpose.msra.mxu0 0.0
    %3490 = vmatprep.subr.mxu0 0.0
    %3491 = vmatpush1.xpose.msra.mxu0 0.0
    %3492 = vmatprep.subr.mxu0 0.0
    %3493 = vmatpush1.xpose.msra.mxu0 0.0
    %3494 = vmatprep.subr.mxu0 0.0
    %3495 = vmatpush1.xpose.msra.mxu0 0.0
    %3496 = vmatprep.subr.mxu0 0.0
    %3497 = vmatpush1.xpose.msra.mxu0 0.0
    %3498 = vmatprep.subr.mxu0 0.0
    %3499 = vmatpush1.xpose.msra.mxu0 0.0
    %3500 = vmatprep.subr.mxu0 0.0
    %3501 = vmatpush1.xpose.msra.mxu0 0.0
    %3502 = vmatprep.subr.mxu0 0.0
    %3503 = vmatpush1.xpose.msra.mxu0 0.0
    %3504 = vmatprep.subr.mxu0 0.0
    %3505 = vmatpush1.xpose.msra.mxu0 0.0
    %3506 = vmatprep.subr.mxu0 0.0
    %3507 = vmatpush1.xpose.msra.mxu0 0.0
    %3508 = vmatprep.subr.mxu0 0.0
    %3509 = vmatpush1.xpose.msra.mxu0 0.0
    %3510 = vmatprep.subr.mxu0 0.0
    %3511 = vmatpush1.xpose.msra.mxu0 0.0
    %3512 = vmatprep.subr.mxu0 0.0
    %3513 = vmatpush1.xpose.msra.mxu0 0.0
    %3514 = vmatprep.subr.mxu0 0.0
    %3515 = vmatpush1.xpose.msra.mxu0 0.0
    %3516 = vmatprep.subr.mxu0 0.0
    %3517 = vmatpush1.xpose.msra.mxu0 0.0
    %3518 = vmatprep.subr.mxu0 0.0
    %3519 = vmatpush1.xpose.msra.mxu0 0.0
    %3520 = vmatprep.subr.mxu0 0.0
    %3521 = vmatpush1.xpose.msra.mxu0 0.0
    %3522 = vmatprep.subr.mxu0 0.0
    %3523 = vmatpush1.xpose.msra.mxu0 0.0
    %3524 = vmatprep.subr.mxu0 0.0
    %3525 = vmatpush1.xpose.msra.mxu0 0.0
    %3526 = vmatprep.subr.mxu0 0.0
    %3527 = vmatpush1.xpose.msra.mxu0 0.0
    %3528 = vmatprep.subr.mxu0 0.0
    %3529 = vmatpush1.xpose.msra.mxu0 0.0
    %3530 = vmatprep.subr.mxu0 0.0
    %3531 = vmatpush1.xpose.msra.mxu0 0.0
    %3532 = vmatprep.subr.mxu0 0.0
    %3533 = vmatpush1.xpose.msra.mxu0 0.0
    %3534 = vmatprep.subr.mxu0 0.0
    %3535 = vmatpush1.xpose.msra.mxu0 0.0
    %3536 = vmatprep.subr.mxu0 0.0
    %3537 = vmatpush1.xpose.msra.mxu0 0.0
    %3538 = vmatprep.mubr.f32.mxu0 0.0
    %3539 = vmatmul.mubr.f32.gmra.mrb[0].mxu0 %v3466
    %v3540 = vpop.f32.mrb[0].mxu0
    %v3541 = vadd.f32 0.0, %v3540
    %v3542 = vpop.f32.mrb[0].mxu0
    %3543 = vmatprep.mubr.f32.mxu0 0.0
    %3544 = vmatmul.mubr.f32.gmra.mrb[0].mxu0 %v3468
    %v3545 = vpop.f32.mrb[0].mxu0
    %v3546 = vadd.f32 0.0, %v3545
    %v3547 = vpop.f32.mrb[0].mxu0
    %3548 = vdwg.mxu0
    %3549 = vrot.lane.b32.xlu0 %v1594, 124
    %v3550 = vpop.permute.xlu0 %3549
    %3551 = vrot.lane.b32.xlu0 %v1599, 124
    %v3552 = vpop.permute.xlu0 %3551
    %3553 = vrot.lane.b32.xlu0 %v1594, 108
    %v3554 = vpop.permute.xlu0 %3553
    %3555 = vrot.lane.b32.xlu0 %v1599, 108
    %v3556 = vpop.permute.xlu0 %3555
    %v3557 = vsel %vm1648, %v3550, 0
    %v3559 = vsel %vm1648, %v3552, 0
    %v3561 = vsel %vm1648, %v3554, 0
    %v3563 = vsel %vm1648, %v3556, 0
    %3565 = vmatprep.subr.mxu0 0.0
    %3566 = vmatpush1.xpose.msra.mxu0 %v3561
    %3567 = vmatprep.subr.mxu0 0.0
    %3568 = vmatpush1.xpose.msra.mxu0 %v3563
    %3569 = vmatprep.subr.mxu0 0.0
    %3570 = vmatpush1.xpose.msra.mxu0 0.0
    %3571 = vmatprep.subr.mxu0 0.0
    %3572 = vmatpush1.xpose.msra.mxu0 0.0
    %3573 = vmatprep.subr.mxu0 0.0
    %3574 = vmatpush1.xpose.msra.mxu0 0.0
    %3575 = vmatprep.subr.mxu0 0.0
    %3576 = vmatpush1.xpose.msra.mxu0 0.0
    %3577 = vmatprep.subr.mxu0 0.0
    %3578 = vmatpush1.xpose.msra.mxu0 0.0
    %3579 = vmatprep.subr.mxu0 0.0
    %3580 = vmatpush1.xpose.msra.mxu0 0.0
    %3581 = vmatprep.subr.mxu0 0.0
    %3582 = vmatpush1.xpose.msra.mxu0 0.0
    %3583 = vmatprep.subr.mxu0 0.0
    %3584 = vmatpush1.xpose.msra.mxu0 0.0
    %3585 = vmatprep.subr.mxu0 0.0
    %3586 = vmatpush1.xpose.msra.mxu0 0.0
    %3587 = vmatprep.subr.mxu0 0.0
    %3588 = vmatpush1.xpose.msra.mxu0 0.0
    %3589 = vmatprep.subr.mxu0 0.0
    %3590 = vmatpush1.xpose.msra.mxu0 0.0
    %3591 = vmatprep.subr.mxu0 0.0
    %3592 = vmatpush1.xpose.msra.mxu0 0.0
    %3593 = vmatprep.subr.mxu0 0.0
    %3594 = vmatpush1.xpose.msra.mxu0 0.0
    %3595 = vmatprep.subr.mxu0 0.0
    %3596 = vmatpush1.xpose.msra.mxu0 0.0
    %3597 = vmatprep.subr.mxu0 0.0
    %3598 = vmatpush1.xpose.msra.mxu0 0.0
    %3599 = vmatprep.subr.mxu0 0.0
    %3600 = vmatpush1.xpose.msra.mxu0 0.0
    %3601 = vmatprep.subr.mxu0 0.0
    %3602 = vmatpush1.xpose.msra.mxu0 0.0
    %3603 = vmatprep.subr.mxu0 0.0
    %3604 = vmatpush1.xpose.msra.mxu0 0.0
    %3605 = vmatprep.subr.mxu0 0.0
    %3606 = vmatpush1.xpose.msra.mxu0 0.0
    %3607 = vmatprep.subr.mxu0 0.0
    %3608 = vmatpush1.xpose.msra.mxu0 0.0
    %3609 = vmatprep.subr.mxu0 0.0
    %3610 = vmatpush1.xpose.msra.mxu0 0.0
    %3611 = vmatprep.subr.mxu0 0.0
    %3612 = vmatpush1.xpose.msra.mxu0 0.0
    %3613 = vmatprep.subr.mxu0 0.0
    %3614 = vmatpush1.xpose.msra.mxu0 0.0
    %3615 = vmatprep.subr.mxu0 0.0
    %3616 = vmatpush1.xpose.msra.mxu0 0.0
    %3617 = vmatprep.subr.mxu0 0.0
    %3618 = vmatpush1.xpose.msra.mxu0 0.0
    %3619 = vmatprep.subr.mxu0 0.0
    %3620 = vmatpush1.xpose.msra.mxu0 0.0
    %3621 = vmatprep.subr.mxu0 0.0
    %3622 = vmatpush1.xpose.msra.mxu0 0.0
    %3623 = vmatprep.subr.mxu0 0.0
    %3624 = vmatpush1.xpose.msra.mxu0 0.0
    %3625 = vmatprep.subr.mxu0 0.0
    %3626 = vmatpush1.xpose.msra.mxu0 0.0
    %3627 = vmatprep.subr.mxu0 0.0
    %3628 = vmatpush1.xpose.msra.mxu0 0.0
    %3629 = vmatprep.mubr.f32.mxu0 0.0
    %3630 = vmatmul.mubr.f32.gmra.mrb[0].mxu0 %v3557
    %v3631 = vpop.f32.mrb[0].mxu0
    %v3632 = vadd.f32 0.0, %v3631
    %v3633 = vpop.f32.mrb[0].mxu0
    %3634 = vmatprep.mubr.f32.mxu0 0.0
    %3635 = vmatmul.mubr.f32.gmra.mrb[0].mxu0 %v3559
    %v3636 = vpop.f32.mrb[0].mxu0
    %v3637 = vadd.f32 0.0, %v3636
    %v3638 = vpop.f32.mrb[0].mxu0
    %3639 = vdwg.mxu0
    %3640 = vrot.lane.b32.xlu0 %v1604, 124
    %v3641 = vpop.permute.xlu0 %3640
    %3642 = vrot.lane.b32.xlu0 %v1609, 124
    %v3643 = vpop.permute.xlu0 %3642
    %3644 = vrot.lane.b32.xlu0 %v1604, 108
    %v3645 = vpop.permute.xlu0 %3644
    %3646 = vrot.lane.b32.xlu0 %v1609, 108
    %v3647 = vpop.permute.xlu0 %3646
    %v3648 = vsel %vm1648, %v3641, 0
    %v3650 = vsel %vm1648, %v3643, 0
    %v3652 = vsel %vm1648, %v3645, 0
    %v3654 = vsel %vm1648, %v3647, 0
    %3656 = vmatprep.subr.mxu0 0.0
    %3657 = vmatpush1.xpose.msra.mxu0 %v3652
    %3658 = vmatprep.subr.mxu0 0.0
    %3659 = vmatpush1.xpose.msra.mxu0 %v3654
    %3660 = vmatprep.subr.mxu0 0.0
    %3661 = vmatpush1.xpose.msra.mxu0 0.0
    %3662 = vmatprep.subr.mxu0 0.0
    %3663 = vmatpush1.xpose.msra.mxu0 0.0
    %3664 = vmatprep.subr.mxu0 0.0
    %3665 = vmatpush1.xpose.msra.mxu0 0.0
    %3666 = vmatprep.subr.mxu0 0.0
    %3667 = vmatpush1.xpose.msra.mxu0 0.0
    %3668 = vmatprep.subr.mxu0 0.0
    %3669 = vmatpush1.xpose.msra.mxu0 0.0
    %3670 = vmatprep.subr.mxu0 0.0
    %3671 = vmatpush1.xpose.msra.mxu0 0.0
    %3672 = vmatprep.subr.mxu0 0.0
    %3673 = vmatpush1.xpose.msra.mxu0 0.0
    %3674 = vmatprep.subr.mxu0 0.0
    %3675 = vmatpush1.xpose.msra.mxu0 0.0
    %3676 = vmatprep.subr.mxu0 0.0
    %3677 = vmatpush1.xpose.msra.mxu0 0.0
    %3678 = vmatprep.subr.mxu0 0.0
    %3679 = vmatpush1.xpose.msra.mxu0 0.0
    %3680 = vmatprep.subr.mxu0 0.0
    %3681 = vmatpush1.xpose.msra.mxu0 0.0
    %3682 = vmatprep.subr.mxu0 0.0
    %3683 = vmatpush1.xpose.msra.mxu0 0.0
    %3684 = vmatprep.subr.mxu0 0.0
    %3685 = vmatpush1.xpose.msra.mxu0 0.0
    %3686 = vmatprep.subr.mxu0 0.0
    %3687 = vmatpush1.xpose.msra.mxu0 0.0
    %3688 = vmatprep.subr.mxu0 0.0
    %3689 = vmatpush1.xpose.msra.mxu0 0.0
    %3690 = vmatprep.subr.mxu0 0.0
    %3691 = vmatpush1.xpose.msra.mxu0 0.0
    %3692 = vmatprep.subr.mxu0 0.0
    %3693 = vmatpush1.xpose.msra.mxu0 0.0
    %3694 = vmatprep.subr.mxu0 0.0
    %3695 = vmatpush1.xpose.msra.mxu0 0.0
    %3696 = vmatprep.subr.mxu0 0.0
    %3697 = vmatpush1.xpose.msra.mxu0 0.0
    %3698 = vmatprep.subr.mxu0 0.0
    %3699 = vmatpush1.xpose.msra.mxu0 0.0
    %3700 = vmatprep.subr.mxu0 0.0
    %3701 = vmatpush1.xpose.msra.mxu0 0.0
    %3702 = vmatprep.subr.mxu0 0.0
    %3703 = vmatpush1.xpose.msra.mxu0 0.0
    %3704 = vmatprep.subr.mxu0 0.0
    %3705 = vmatpush1.xpose.msra.mxu0 0.0
    %3706 = vmatprep.subr.mxu0 0.0
    %3707 = vmatpush1.xpose.msra.mxu0 0.0
    %3708 = vmatprep.subr.mxu0 0.0
    %3709 = vmatpush1.xpose.msra.mxu0 0.0
    %3710 = vmatprep.subr.mxu0 0.0
    %3711 = vmatpush1.xpose.msra.mxu0 0.0
    %3712 = vmatprep.subr.mxu0 0.0
    %3713 = vmatpush1.xpose.msra.mxu0 0.0
    %3714 = vmatprep.subr.mxu0 0.0
    %3715 = vmatpush1.xpose.msra.mxu0 0.0
    %3716 = vmatprep.subr.mxu0 0.0
    %3717 = vmatpush1.xpose.msra.mxu0 0.0
    %3718 = vmatprep.subr.mxu0 0.0
    %3719 = vmatpush1.xpose.msra.mxu0 0.0
    %3720 = vmatprep.mubr.f32.mxu0 0.0
    %3721 = vmatmul.mubr.f32.gmra.mrb[0].mxu0 %v3648
    %v3722 = vpop.f32.mrb[0].mxu0
    %v3723 = vadd.f32 0.0, %v3722
    %v3724 = vpop.f32.mrb[0].mxu0
    %3725 = vmatprep.mubr.f32.mxu0 0.0
    %3726 = vmatmul.mubr.f32.gmra.mrb[0].mxu0 %v3650
    %v3727 = vpop.f32.mrb[0].mxu0
    %v3728 = vadd.f32 0.0, %v3727
    %v3729 = vpop.f32.mrb[0].mxu0
    %3730 = vdwg.mxu0
    %3731 = vrot.lane.b32.xlu0 %v1614, 124
    %v3732 = vpop.permute.xlu0 %3731
    %3733 = vrot.lane.b32.xlu0 %v1619, 124
    %v3734 = vpop.permute.xlu0 %3733
    %3735 = vrot.lane.b32.xlu0 %v1614, 108
    %v3736 = vpop.permute.xlu0 %3735
    %3737 = vrot.lane.b32.xlu0 %v1619, 108
    %v3738 = vpop.permute.xlu0 %3737
    %v3739 = vsel %vm1648, %v3732, 0
    %v3741 = vsel %vm1648, %v3734, 0
    %v3743 = vsel %vm1648, %v3736, 0
    %v3745 = vsel %vm1648, %v3738, 0
    %3747 = vmatprep.subr.mxu0 0.0
    %3748 = vmatpush1.xpose.msra.mxu0 %v3743
    %3749 = vmatprep.subr.mxu0 0.0
    %3750 = vmatpush1.xpose.msra.mxu0 %v3745
    %3751 = vmatprep.subr.mxu0 0.0
    %3752 = vmatpush1.xpose.msra.mxu0 0.0
    %3753 = vmatprep.subr.mxu0 0.0
    %3754 = vmatpush1.xpose.msra.mxu0 0.0
    %3755 = vmatprep.subr.mxu0 0.0
    %3756 = vmatpush1.xpose.msra.mxu0 0.0
    %3757 = vmatprep.subr.mxu0 0.0
    %3758 = vmatpush1.xpose.msra.mxu0 0.0
    %3759 = vmatprep.subr.mxu0 0.0
    %3760 = vmatpush1.xpose.msra.mxu0 0.0
    %3761 = vmatprep.subr.mxu0 0.0
    %3762 = vmatpush1.xpose.msra.mxu0 0.0
    %3763 = vmatprep.subr.mxu0 0.0
    %3764 = vmatpush1.xpose.msra.mxu0 0.0
    %3765 = vmatprep.subr.mxu0 0.0
    %3766 = vmatpush1.xpose.msra.mxu0 0.0
    %3767 = vmatprep.subr.mxu0 0.0
    %3768 = vmatpush1.xpose.msra.mxu0 0.0
    %3769 = vmatprep.subr.mxu0 0.0
    %3770 = vmatpush1.xpose.msra.mxu0 0.0
    %3771 = vmatprep.subr.mxu0 0.0
    %3772 = vmatpush1.xpose.msra.mxu0 0.0
    %3773 = vmatprep.subr.mxu0 0.0
    %3774 = vmatpush1.xpose.msra.mxu0 0.0
    %3775 = vmatprep.subr.mxu0 0.0
    %3776 = vmatpush1.xpose.msra.mxu0 0.0
    %3777 = vmatprep.subr.mxu0 0.0
    %3778 = vmatpush1.xpose.msra.mxu0 0.0
    %3779 = vmatprep.subr.mxu0 0.0
    %3780 = vmatpush1.xpose.msra.mxu0 0.0
    %3781 = vmatprep.subr.mxu0 0.0
    %3782 = vmatpush1.xpose.msra.mxu0 0.0
    %3783 = vmatprep.subr.mxu0 0.0
    %3784 = vmatpush1.xpose.msra.mxu0 0.0
    %3785 = vmatprep.subr.mxu0 0.0
    %3786 = vmatpush1.xpose.msra.mxu0 0.0
    %3787 = vmatprep.subr.mxu0 0.0
    %3788 = vmatpush1.xpose.msra.mxu0 0.0
    %3789 = vmatprep.subr.mxu0 0.0
    %3790 = vmatpush1.xpose.msra.mxu0 0.0
    %3791 = vmatprep.subr.mxu0 0.0
    %3792 = vmatpush1.xpose.msra.mxu0 0.0
    %3793 = vmatprep.subr.mxu0 0.0
    %3794 = vmatpush1.xpose.msra.mxu0 0.0
    %3795 = vmatprep.subr.mxu0 0.0
    %3796 = vmatpush1.xpose.msra.mxu0 0.0
    %3797 = vmatprep.subr.mxu0 0.0
    %3798 = vmatpush1.xpose.msra.mxu0 0.0
    %3799 = vmatprep.subr.mxu0 0.0
    %3800 = vmatpush1.xpose.msra.mxu0 0.0
    %3801 = vmatprep.subr.mxu0 0.0
    %3802 = vmatpush1.xpose.msra.mxu0 0.0
    %3803 = vmatprep.subr.mxu0 0.0
    %3804 = vmatpush1.xpose.msra.mxu0 0.0
    %3805 = vmatprep.subr.mxu0 0.0
    %3806 = vmatpush1.xpose.msra.mxu0 0.0
    %3807 = vmatprep.subr.mxu0 0.0
    %3808 = vmatpush1.xpose.msra.mxu0 0.0
    %3809 = vmatprep.subr.mxu0 0.0
    %3810 = vmatpush1.xpose.msra.mxu0 0.0
    %3811 = vmatprep.mubr.f32.mxu0 0.0
    %3812 = vmatmul.mubr.f32.gmra.mrb[0].mxu0 %v3739
    %v3813 = vpop.f32.mrb[0].mxu0
    %v3814 = vadd.f32 0.0, %v3813
    %v3815 = vpop.f32.mrb[0].mxu0
    %3816 = vmatprep.mubr.f32.mxu0 0.0
    %3817 = vmatmul.mubr.f32.gmra.mrb[0].mxu0 %v3741
    %v3818 = vpop.f32.mrb[0].mxu0
    %v3819 = vadd.f32 0.0, %v3818
    %v3820 = vpop.f32.mrb[0].mxu0
    %3821 = vdwg.mxu0
    %3822 = vrot.lane.b32.xlu0 %v1624, 124
    %v3823 = vpop.permute.xlu0 %3822
    %3824 = vrot.lane.b32.xlu0 %v1629, 124
    %v3825 = vpop.permute.xlu0 %3824
    %3826 = vrot.lane.b32.xlu0 %v1624, 108
    %v3827 = vpop.permute.xlu0 %3826
    %3828 = vrot.lane.b32.xlu0 %v1629, 108
    %v3829 = vpop.permute.xlu0 %3828
    %v3830 = vsel %vm1648, %v3823, 0
    %v3832 = vsel %vm1648, %v3825, 0
    %v3834 = vsel %vm1648, %v3827, 0
    %v3836 = vsel %vm1648, %v3829, 0
    %3838 = vmatprep.subr.mxu0 0.0
    %3839 = vmatpush1.xpose.msra.mxu0 %v3834
    %3840 = vmatprep.subr.mxu0 0.0
    %3841 = vmatpush1.xpose.msra.mxu0 %v3836
    %3842 = vmatprep.subr.mxu0 0.0
    %3843 = vmatpush1.xpose.msra.mxu0 0.0
    %3844 = vmatprep.subr.mxu0 0.0
    %3845 = vmatpush1.xpose.msra.mxu0 0.0
    %3846 = vmatprep.subr.mxu0 0.0
    %3847 = vmatpush1.xpose.msra.mxu0 0.0
    %3848 = vmatprep.subr.mxu0 0.0
    %3849 = vmatpush1.xpose.msra.mxu0 0.0
    %3850 = vmatprep.subr.mxu0 0.0
    %3851 = vmatpush1.xpose.msra.mxu0 0.0
    %3852 = vmatprep.subr.mxu0 0.0
    %3853 = vmatpush1.xpose.msra.mxu0 0.0
    %3854 = vmatprep.subr.mxu0 0.0
    %3855 = vmatpush1.xpose.msra.mxu0 0.0
    %3856 = vmatprep.subr.mxu0 0.0
    %3857 = vmatpush1.xpose.msra.mxu0 0.0
    %3858 = vmatprep.subr.mxu0 0.0
    %3859 = vmatpush1.xpose.msra.mxu0 0.0
    %3860 = vmatprep.subr.mxu0 0.0
    %3861 = vmatpush1.xpose.msra.mxu0 0.0
    %3862 = vmatprep.subr.mxu0 0.0
    %3863 = vmatpush1.xpose.msra.mxu0 0.0
    %3864 = vmatprep.subr.mxu0 0.0
    %3865 = vmatpush1.xpose.msra.mxu0 0.0
    %3866 = vmatprep.subr.mxu0 0.0
    %3867 = vmatpush1.xpose.msra.mxu0 0.0
    %3868 = vmatprep.subr.mxu0 0.0
    %3869 = vmatpush1.xpose.msra.mxu0 0.0
    %3870 = vmatprep.subr.mxu0 0.0
    %3871 = vmatpush1.xpose.msra.mxu0 0.0
    %3872 = vmatprep.subr.mxu0 0.0
    %3873 = vmatpush1.xpose.msra.mxu0 0.0
    %3874 = vmatprep.subr.mxu0 0.0
    %3875 = vmatpush1.xpose.msra.mxu0 0.0
    %3876 = vmatprep.subr.mxu0 0.0
    %3877 = vmatpush1.xpose.msra.mxu0 0.0
    %3878 = vmatprep.subr.mxu0 0.0
    %3879 = vmatpush1.xpose.msra.mxu0 0.0
    %3880 = vmatprep.subr.mxu0 0.0
    %3881 = vmatpush1.xpose.msra.mxu0 0.0
    %3882 = vmatprep.subr.mxu0 0.0
    %3883 = vmatpush1.xpose.msra.mxu0 0.0
    %3884 = vmatprep.subr.mxu0 0.0
    %3885 = vmatpush1.xpose.msra.mxu0 0.0
    %3886 = vmatprep.subr.mxu0 0.0
    %3887 = vmatpush1.xpose.msra.mxu0 0.0
    %3888 = vmatprep.subr.mxu0 0.0
    %3889 = vmatpush1.xpose.msra.mxu0 0.0
    %3890 = vmatprep.subr.mxu0 0.0
    %3891 = vmatpush1.xpose.msra.mxu0 0.0
    %3892 = vmatprep.subr.mxu0 0.0
    %3893 = vmatpush1.xpose.msra.mxu0 0.0
    %3894 = vmatprep.subr.mxu0 0.0
    %3895 = vmatpush1.xpose.msra.mxu0 0.0
    %3896 = vmatprep.subr.mxu0 0.0
    %3897 = vmatpush1.xpose.msra.mxu0 0.0
    %3898 = vmatprep.subr.mxu0 0.0
    %3899 = vmatpush1.xpose.msra.mxu0 0.0
    %3900 = vmatprep.subr.mxu0 0.0
    %3901 = vmatpush1.xpose.msra.mxu0 0.0
    %3902 = vmatprep.mubr.f32.mxu0 0.0
    %3903 = vmatmul.mubr.f32.gmra.mrb[0].mxu0 %v3830
    %v3904 = vpop.f32.mrb[0].mxu0
    %v3905 = vadd.f32 0.0, %v3904
    %v3906 = vpop.f32.mrb[0].mxu0
    %3907 = vmatprep.mubr.f32.mxu0 0.0
    %3908 = vmatmul.mubr.f32.gmra.mrb[0].mxu0 %v3832
    %v3909 = vpop.f32.mrb[0].mxu0
    %v3910 = vadd.f32 0.0, %v3909
    %v3911 = vpop.f32.mrb[0].mxu0
    %3912 = vdwg.mxu0
    %3913 = vrot.lane.b32.xlu0 %v1634, 124
    %v3914 = vpop.permute.xlu0 %3913
    %3915 = vrot.lane.b32.xlu0 %v1639, 124
    %v3916 = vpop.permute.xlu0 %3915
    %3917 = vrot.lane.b32.xlu0 %v1634, 108
    %v3918 = vpop.permute.xlu0 %3917
    %3919 = vrot.lane.b32.xlu0 %v1639, 108
    %v3920 = vpop.permute.xlu0 %3919
    %v3921 = vsel %vm1648, %v3914, 0
    %v3923 = vsel %vm1648, %v3916, 0
    %v3925 = vsel %vm1648, %v3918, 0
    %v3927 = vsel %vm1648, %v3920, 0
    %3929 = vmatprep.subr.mxu0 0.0
    %3930 = vmatpush1.xpose.msra.mxu0 %v3925
    %3931 = vmatprep.subr.mxu0 0.0
    %3932 = vmatpush1.xpose.msra.mxu0 %v3927
    %3933 = vmatprep.subr.mxu0 0.0
    %3934 = vmatpush1.xpose.msra.mxu0 0.0
    %3935 = vmatprep.subr.mxu0 0.0
    %3936 = vmatpush1.xpose.msra.mxu0 0.0
    %3937 = vmatprep.subr.mxu0 0.0
    %3938 = vmatpush1.xpose.msra.mxu0 0.0
    %3939 = vmatprep.subr.mxu0 0.0
    %3940 = vmatpush1.xpose.msra.mxu0 0.0
    %3941 = vmatprep.subr.mxu0 0.0
    %3942 = vmatpush1.xpose.msra.mxu0 0.0
    %3943 = vmatprep.subr.mxu0 0.0
    %3944 = vmatpush1.xpose.msra.mxu0 0.0
    %3945 = vmatprep.subr.mxu0 0.0
    %3946 = vmatpush1.xpose.msra.mxu0 0.0
    %3947 = vmatprep.subr.mxu0 0.0
    %3948 = vmatpush1.xpose.msra.mxu0 0.0
    %3949 = vmatprep.subr.mxu0 0.0
    %3950 = vmatpush1.xpose.msra.mxu0 0.0
    %3951 = vmatprep.subr.mxu0 0.0
    %3952 = vmatpush1.xpose.msra.mxu0 0.0
    %3953 = vmatprep.subr.mxu0 0.0
    %3954 = vmatpush1.xpose.msra.mxu0 0.0
    %3955 = vmatprep.subr.mxu0 0.0
    %3956 = vmatpush1.xpose.msra.mxu0 0.0
    %3957 = vmatprep.subr.mxu0 0.0
    %3958 = vmatpush1.xpose.msra.mxu0 0.0
    %3959 = vmatprep.subr.mxu0 0.0
    %3960 = vmatpush1.xpose.msra.mxu0 0.0
    %3961 = vmatprep.subr.mxu0 0.0
    %3962 = vmatpush1.xpose.msra.mxu0 0.0
    %3963 = vmatprep.subr.mxu0 0.0
    %3964 = vmatpush1.xpose.msra.mxu0 0.0
    %3965 = vmatprep.subr.mxu0 0.0
    %3966 = vmatpush1.xpose.msra.mxu0 0.0
    %3967 = vmatprep.subr.mxu0 0.0
    %3968 = vmatpush1.xpose.msra.mxu0 0.0
    %3969 = vmatprep.subr.mxu0 0.0
    %3970 = vmatpush1.xpose.msra.mxu0 0.0
    %3971 = vmatprep.subr.mxu0 0.0
    %3972 = vmatpush1.xpose.msra.mxu0 0.0
    %3973 = vmatprep.subr.mxu0 0.0
    %3974 = vmatpush1.xpose.msra.mxu0 0.0
    %3975 = vmatprep.subr.mxu0 0.0
    %3976 = vmatpush1.xpose.msra.mxu0 0.0
    %3977 = vmatprep.subr.mxu0 0.0
    %3978 = vmatpush1.xpose.msra.mxu0 0.0
    %3979 = vmatprep.subr.mxu0 0.0
    %3980 = vmatpush1.xpose.msra.mxu0 0.0
    %3981 = vmatprep.subr.mxu0 0.0
    %3982 = vmatpush1.xpose.msra.mxu0 0.0
    %3983 = vmatprep.subr.mxu0 0.0
    %3984 = vmatpush1.xpose.msra.mxu0 0.0
    %3985 = vmatprep.subr.mxu0 0.0
    %3986 = vmatpush1.xpose.msra.mxu0 0.0
    %3987 = vmatprep.subr.mxu0 0.0
    %3988 = vmatpush1.xpose.msra.mxu0 0.0
    %3989 = vmatprep.subr.mxu0 0.0
    %3990 = vmatpush1.xpose.msra.mxu0 0.0
    %3991 = vmatprep.subr.mxu0 0.0
    %3992 = vmatpush1.xpose.msra.mxu0 0.0
    %3993 = vmatprep.mubr.f32.mxu0 0.0
    %3994 = vmatmul.mubr.f32.gmra.mrb[0].mxu0 %v3921
    %v3995 = vpop.f32.mrb[0].mxu0
    %v3996 = vadd.f32 0.0, %v3995
    %v3997 = vpop.f32.mrb[0].mxu0
    %3998 = vmatprep.mubr.f32.mxu0 0.0
    %3999 = vmatmul.mubr.f32.gmra.mrb[0].mxu0 %v3923
    %v4000 = vpop.f32.mrb[0].mxu0
    %v4001 = vadd.f32 0.0, %v4000
    %v4002 = vpop.f32.mrb[0].mxu0
    %4003 = vdwg.mxu0
    %v4004 = vsel %vm1192, %v3359, -inf
    %4005 = vmax.xlane.f32.xlu0 %v4004
    %v4006 = vpop.xlane.xlu0 %4005
    %v4007 = vsel %vm1192, %v3364, -inf
    %4008 = vmax.xlane.f32.xlu0 %v4007
    %v4009 = vpop.xlane.xlu0 %4008
    %v4010 = vsel %vm1192, %v3450, -inf
    %4011 = vmax.xlane.f32.xlu0 %v4010
    %v4012 = vpop.xlane.xlu0 %4011
    %v4013 = vsel %vm1192, %v3455, -inf
    %4014 = vmax.xlane.f32.xlu0 %v4013
    %v4015 = vpop.xlane.xlu0 %4014
    %v4016 = vsel %vm1192, %v3541, -inf
    %4017 = vmax.xlane.f32.xlu0 %v4016
    %v4018 = vpop.xlane.xlu0 %4017
    %v4019 = vsel %vm1192, %v3546, -inf
    %4020 = vmax.xlane.f32.xlu0 %v4019
    %v4021 = vpop.xlane.xlu0 %4020
    %v4022 = vsel %vm1192, %v3632, -inf
    %4023 = vmax.xlane.f32.xlu0 %v4022
    %v4024 = vpop.xlane.xlu0 %4023
    %v4025 = vsel %vm1192, %v3637, -inf
    %4026 = vmax.xlane.f32.xlu0 %v4025
    %v4027 = vpop.xlane.xlu0 %4026
    %v4028 = vsel %vm1192, %v3723, -inf
    %4029 = vmax.xlane.f32.xlu0 %v4028
    %v4030 = vpop.xlane.xlu0 %4029
    %v4031 = vsel %vm1192, %v3728, -inf
    %4032 = vmax.xlane.f32.xlu0 %v4031
    %v4033 = vpop.xlane.xlu0 %4032
    %v4034 = vsel %vm1192, %v3814, -inf
    %4035 = vmax.xlane.f32.xlu0 %v4034
    %v4036 = vpop.xlane.xlu0 %4035
    %v4037 = vsel %vm1192, %v3819, -inf
    %4038 = vmax.xlane.f32.xlu0 %v4037
    %v4039 = vpop.xlane.xlu0 %4038
    %v4040 = vsel %vm1192, %v3905, -inf
    %4041 = vmax.xlane.f32.xlu0 %v4040
    %v4042 = vpop.xlane.xlu0 %4041
    %v4043 = vsel %vm1192, %v3910, -inf
    %4044 = vmax.xlane.f32.xlu0 %v4043
    %v4045 = vpop.xlane.xlu0 %4044
    %v4046 = vsel %vm1192, %v3996, -inf
    %4047 = vmax.xlane.f32.xlu0 %v4046
    %v4048 = vpop.xlane.xlu0 %4047
    %v4049 = vsel %vm1192, %v4001, -inf
    %4050 = vmax.xlane.f32.xlu0 %v4049
    %v4051 = vpop.xlane.xlu0 %4050
    %v4052 = vsub.f32 %v3359, %v4006
    %v4053 = vsub.f32 %v3364, %v4009
    %v4054 = vsub.f32 %v3450, %v4012
    %v4055 = vsub.f32 %v3455, %v4015
    %v4056 = vsub.f32 %v3541, %v4018
    %v4057 = vsub.f32 %v3546, %v4021
    %v4058 = vsub.f32 %v3632, %v4024
    %v4059 = vsub.f32 %v3637, %v4027
    %v4060 = vsub.f32 %v3723, %v4030
    %v4061 = vsub.f32 %v3728, %v4033
    %v4062 = vsub.f32 %v3814, %v4036
    %v4063 = vsub.f32 %v3819, %v4039
    %v4064 = vsub.f32 %v3905, %v4042
    %v4065 = vsub.f32 %v3910, %v4045
    %v4066 = vsub.f32 %v3996, %v4048
    %v4067 = vsub.f32 %v4001, %v4051
    %v4068 = vmul.f32 %v4052, 1.442695
    %v4069 = vpow.pop %v4068
    %v4070 = vmul.f32 %v4053, 1.442695
    %v4071 = vpow.pop %v4070
    %v4072 = vmul.f32 %v4054, 1.442695
    %v4073 = vpow.pop %v4072
    %v4074 = vmul.f32 %v4055, 1.442695
    %v4075 = vpow.pop %v4074
    %v4076 = vmul.f32 %v4056, 1.442695
    %v4077 = vpow.pop %v4076
    %v4078 = vmul.f32 %v4057, 1.442695
    %v4079 = vpow.pop %v4078
    %v4080 = vmul.f32 %v4058, 1.442695
    %v4081 = vpow.pop %v4080
    %v4082 = vmul.f32 %v4059, 1.442695
    %v4083 = vpow.pop %v4082
    %v4084 = vmul.f32 %v4060, 1.442695
    %v4085 = vpow.pop %v4084
    %v4086 = vmul.f32 %v4061, 1.442695
    %v4087 = vpow.pop %v4086
    %v4088 = vmul.f32 %v4062, 1.442695
    %v4089 = vpow.pop %v4088
    %v4090 = vmul.f32 %v4063, 1.442695
    %v4091 = vpow.pop %v4090
    %v4092 = vmul.f32 %v4064, 1.442695
    %v4093 = vpow.pop %v4092
    %v4094 = vmul.f32 %v4065, 1.442695
    %v4095 = vpow.pop %v4094
    %v4096 = vmul.f32 %v4066, 1.442695
    %v4097 = vpow.pop %v4096
    %v4098 = vmul.f32 %v4067, 1.442695
    %v4099 = vpow.pop %v4098
    %v4100 = vsel %vm1192, %v4069, 0.0
    %4101 = vadd.xlane.f32.xlu0 %v4100
    %v4102 = vpop.xlane.xlu0 %4101
    %v4103 = vsel %vm1192, %v4071, 0.0
    %4104 = vadd.xlane.f32.xlu0 %v4103
    %v4105 = vpop.xlane.xlu0 %4104
    %v4106 = vsel %vm1192, %v4073, 0.0
    %4107 = vadd.xlane.f32.xlu0 %v4106
    %v4108 = vpop.xlane.xlu0 %4107
    %v4109 = vsel %vm1192, %v4075, 0.0
    %4110 = vadd.xlane.f32.xlu0 %v4109
    %v4111 = vpop.xlane.xlu0 %4110
    %v4112 = vsel %vm1192, %v4077, 0.0
    %4113 = vadd.xlane.f32.xlu0 %v4112
    %v4114 = vpop.xlane.xlu0 %4113
    %v4115 = vsel %vm1192, %v4079, 0.0
    %4116 = vadd.xlane.f32.xlu0 %v4115
    %v4117 = vpop.xlane.xlu0 %4116
    %v4118 = vsel %vm1192, %v4081, 0.0
    %4119 = vadd.xlane.f32.xlu0 %v4118
    %v4120 = vpop.xlane.xlu0 %4119
    %v4121 = vsel %vm1192, %v4083, 0.0
    %4122 = vadd.xlane.f32.xlu0 %v4121
    %v4123 = vpop.xlane.xlu0 %4122
    %v4124 = vsel %vm1192, %v4085, 0.0
    %4125 = vadd.xlane.f32.xlu0 %v4124
    %v4126 = vpop.xlane.xlu0 %4125
    %v4127 = vsel %vm1192, %v4087, 0.0
    %4128 = vadd.xlane.f32.xlu0 %v4127
    %v4129 = vpop.xlane.xlu0 %4128
    %v4130 = vsel %vm1192, %v4089, 0.0
    %4131 = vadd.xlane.f32.xlu0 %v4130
    %v4132 = vpop.xlane.xlu0 %4131
    %v4133 = vsel %vm1192, %v4091, 0.0
    %4134 = vadd.xlane.f32.xlu0 %v4133
    %v4135 = vpop.xlane.xlu0 %4134
    %v4136 = vsel %vm1192, %v4093, 0.0
    %4137 = vadd.xlane.f32.xlu0 %v4136
    %v4138 = vpop.xlane.xlu0 %4137
    %v4139 = vsel %vm1192, %v4095, 0.0
    %4140 = vadd.xlane.f32.xlu0 %v4139
    %v4141 = vpop.xlane.xlu0 %4140
    %v4142 = vsel %vm1192, %v4097, 0.0
    %4143 = vadd.xlane.f32.xlu0 %v4142
    %v4144 = vpop.xlane.xlu0 %4143
    %v4145 = vsel %vm1192, %v4099, 0.0
    %4146 = vadd.xlane.f32.xlu0 %v4145
    %v4147 = vpop.xlane.xlu0 %4146
    %v4148 = vrcp.pop %v4102
    %v4149 = vrcp.pop %v4105
    %v4150 = vrcp.pop %v4108
    %v4151 = vrcp.pop %v4111
    %v4152 = vrcp.pop %v4114
    %v4153 = vrcp.pop %v4117
    %v4154 = vrcp.pop %v4120
    %v4155 = vrcp.pop %v4123
    %v4156 = vrcp.pop %v4126
    %v4157 = vrcp.pop %v4129
    %v4158 = vrcp.pop %v4132
    %v4159 = vrcp.pop %v4135
    %v4160 = vrcp.pop %v4138
    %v4161 = vrcp.pop %v4141
    %v4162 = vrcp.pop %v4144
    %v4163 = vrcp.pop %v4147
    %v4164 = vmul.f32 %v4102, %v4148
    %v4165 = vmul.f32 %v4105, %v4149
    %v4166 = vmul.f32 %v4108, %v4150
    %v4167 = vmul.f32 %v4111, %v4151
    %v4168 = vmul.f32 %v4114, %v4152
    %v4169 = vmul.f32 %v4117, %v4153
    %v4170 = vmul.f32 %v4120, %v4154
    %v4171 = vmul.f32 %v4123, %v4155
    %v4172 = vmul.f32 %v4126, %v4156
    %v4173 = vmul.f32 %v4129, %v4157
    %v4174 = vmul.f32 %v4132, %v4158
    %v4175 = vmul.f32 %v4135, %v4159
    %v4176 = vmul.f32 %v4138, %v4160
    %v4177 = vmul.f32 %v4141, %v4161
    %v4178 = vmul.f32 %v4144, %v4162
    %v4179 = vmul.f32 %v4147, %v4163
    %v4180 = vsub.f32 2.0, %v4164
    %v4181 = vsub.f32 2.0, %v4165
    %v4182 = vsub.f32 2.0, %v4166
    %v4183 = vsub.f32 2.0, %v4167
    %v4184 = vsub.f32 2.0, %v4168
    %v4185 = vsub.f32 2.0, %v4169
    %v4186 = vsub.f32 2.0, %v4170
    %v4187 = vsub.f32 2.0, %v4171
    %v4188 = vsub.f32 2.0, %v4172
    %v4189 = vsub.f32 2.0, %v4173
    %v4190 = vsub.f32 2.0, %v4174
    %v4191 = vsub.f32 2.0, %v4175
    %v4192 = vsub.f32 2.0, %v4176
    %v4193 = vsub.f32 2.0, %v4177
    %v4194 = vsub.f32 2.0, %v4178
    %v4195 = vsub.f32 2.0, %v4179
    %v4196 = vmul.f32 %v4148, %v4180
    %v4197 = vmul.f32 %v4149, %v4181
    %v4198 = vmul.f32 %v4150, %v4182
    %v4199 = vmul.f32 %v4151, %v4183
    %v4200 = vmul.f32 %v4152, %v4184
    %v4201 = vmul.f32 %v4153, %v4185
    %v4202 = vmul.f32 %v4154, %v4186
    %v4203 = vmul.f32 %v4155, %v4187
    %v4204 = vmul.f32 %v4156, %v4188
    %v4205 = vmul.f32 %v4157, %v4189
    %v4206 = vmul.f32 %v4158, %v4190
    %v4207 = vmul.f32 %v4159, %v4191
    %v4208 = vmul.f32 %v4160, %v4192
    %v4209 = vmul.f32 %v4161, %v4193
    %v4210 = vmul.f32 %v4162, %v4194
    %v4211 = vmul.f32 %v4163, %v4195
    %v4212 = vmul.f32 %v4069, %v4196
    %v4213 = vmul.f32 %v4071, %v4197
    %v4214 = vmul.f32 %v4073, %v4198
    %v4215 = vmul.f32 %v4075, %v4199
    %v4216 = vmul.f32 %v4077, %v4200
    %v4217 = vmul.f32 %v4079, %v4201
    %v4218 = vmul.f32 %v4081, %v4202
    %v4219 = vmul.f32 %v4083, %v4203
    %v4220 = vmul.f32 %v4085, %v4204
    %v4221 = vmul.f32 %v4087, %v4205
    %v4222 = vmul.f32 %v4089, %v4206
    %v4223 = vmul.f32 %v4091, %v4207
    %v4224 = vmul.f32 %v4093, %v4208
    %v4225 = vmul.f32 %v4095, %v4209
    %v4226 = vmul.f32 %v4097, %v4210
    %v4227 = vmul.f32 %v4099, %v4211
    %4228 = vrot.lane.b32.xlu0 %v1564, 92
    %v4229 = vpop.permute.xlu0 %4228
    %4230 = vrot.lane.b32.xlu0 %v1569, 92
    %v4231 = vpop.permute.xlu0 %4230
    %v4235 = vsel %vm1192, %v4212, 0
    %v4238 = vsel %vm1192, %v4213, 0
    %4240 = vmatprep.subr.mxu0 0.0
    %4241 = vmatpush1.msra.mxu0 %v4229
    %4242 = vmatprep.subr.mxu0 0.0
    %4243 = vmatpush1.msra.mxu0 %v4231
    %4244 = vmatprep.subr.mxu0 0.0
    %4245 = vmatpush1.msra.mxu0 0.0
    %4246 = vmatprep.subr.mxu0 0.0
    %4247 = vmatpush1.msra.mxu0 0.0
    %4248 = vmatprep.subr.mxu0 0.0
    %4249 = vmatpush1.msra.mxu0 0.0
    %4250 = vmatprep.subr.mxu0 0.0
    %4251 = vmatpush1.msra.mxu0 0.0
    %4252 = vmatprep.subr.mxu0 0.0
    %4253 = vmatpush1.msra.mxu0 0.0
    %4254 = vmatprep.subr.mxu0 0.0
    %4255 = vmatpush1.msra.mxu0 0.0
    %4256 = vmatprep.subr.mxu0 0.0
    %4257 = vmatpush1.msra.mxu0 0.0
    %4258 = vmatprep.subr.mxu0 0.0
    %4259 = vmatpush1.msra.mxu0 0.0
    %4260 = vmatprep.subr.mxu0 0.0
    %4261 = vmatpush1.msra.mxu0 0.0
    %4262 = vmatprep.subr.mxu0 0.0
    %4263 = vmatpush1.msra.mxu0 0.0
    %4264 = vmatprep.subr.mxu0 0.0
    %4265 = vmatpush1.msra.mxu0 0.0
    %4266 = vmatprep.subr.mxu0 0.0
    %4267 = vmatpush1.msra.mxu0 0.0
    %4268 = vmatprep.subr.mxu0 0.0
    %4269 = vmatpush1.msra.mxu0 0.0
    %4270 = vmatprep.subr.mxu0 0.0
    %4271 = vmatpush1.msra.mxu0 0.0
    %4272 = vmatprep.subr.mxu0 0.0
    %4273 = vmatpush1.msra.mxu0 0.0
    %4274 = vmatprep.subr.mxu0 0.0
    %4275 = vmatpush1.msra.mxu0 0.0
    %4276 = vmatprep.subr.mxu0 0.0
    %4277 = vmatpush1.msra.mxu0 0.0
    %4278 = vmatprep.subr.mxu0 0.0
    %4279 = vmatpush1.msra.mxu0 0.0
    %4280 = vmatprep.subr.mxu0 0.0
    %4281 = vmatpush1.msra.mxu0 0.0
    %4282 = vmatprep.subr.mxu0 0.0
    %4283 = vmatpush1.msra.mxu0 0.0
    %4284 = vmatprep.subr.mxu0 0.0
    %4285 = vmatpush1.msra.mxu0 0.0
    %4286 = vmatprep.subr.mxu0 0.0
    %4287 = vmatpush1.msra.mxu0 0.0
    %4288 = vmatprep.subr.mxu0 0.0
    %4289 = vmatpush1.msra.mxu0 0.0
    %4290 = vmatprep.subr.mxu0 0.0
    %4291 = vmatpush1.msra.mxu0 0.0
    %4292 = vmatprep.subr.mxu0 0.0
    %4293 = vmatpush1.msra.mxu0 0.0
    %4294 = vmatprep.subr.mxu0 0.0
    %4295 = vmatpush1.msra.mxu0 0.0
    %4296 = vmatprep.subr.mxu0 0.0
    %4297 = vmatpush1.msra.mxu0 0.0
    %4298 = vmatprep.subr.mxu0 0.0
    %4299 = vmatpush1.msra.mxu0 0.0
    %4300 = vmatprep.subr.mxu0 0.0
    %4301 = vmatpush1.msra.mxu0 0.0
    %4302 = vmatprep.subr.mxu0 0.0
    %4303 = vmatpush1.msra.mxu0 0.0
    %4304 = vmatprep.mubr.f32.mxu0 0.0
    %4305 = vmatmul.mubr.f32.gmra.mrb[0].mxu0 %v4235
    %v4306 = vpop.f32.mrb[0].mxu0
    %v4307 = vadd.f32 0.0, %v4306
    %v4308 = vpop.f32.mrb[0].mxu0
    %4309 = vmatprep.mubr.f32.mxu0 0.0
    %4310 = vmatmul.mubr.f32.gmra.mrb[0].mxu0 %v4238
    %v4311 = vpop.f32.mrb[0].mxu0
    %v4312 = vadd.f32 0.0, %v4311
    %v4313 = vpop.f32.mrb[0].mxu0
    %4314 = vdwg.mxu0
    %4315 = vrot.lane.b32.xlu0 %v1574, 92
    %v4316 = vpop.permute.xlu0 %4315
    %4317 = vrot.lane.b32.xlu0 %v1579, 92
    %v4318 = vpop.permute.xlu0 %4317
    %v4322 = vsel %vm1192, %v4214, 0
    %v4325 = vsel %vm1192, %v4215, 0
    %4327 = vmatprep.subr.mxu0 0.0
    %4328 = vmatpush1.msra.mxu0 %v4316
    %4329 = vmatprep.subr.mxu0 0.0
    %4330 = vmatpush1.msra.mxu0 %v4318
    %4331 = vmatprep.subr.mxu0 0.0
    %4332 = vmatpush1.msra.mxu0 0.0
    %4333 = vmatprep.subr.mxu0 0.0
    %4334 = vmatpush1.msra.mxu0 0.0
    %4335 = vmatprep.subr.mxu0 0.0
    %4336 = vmatpush1.msra.mxu0 0.0
    %4337 = vmatprep.subr.mxu0 0.0
    %4338 = vmatpush1.msra.mxu0 0.0
    %4339 = vmatprep.subr.mxu0 0.0
    %4340 = vmatpush1.msra.mxu0 0.0
    %4341 = vmatprep.subr.mxu0 0.0
    %4342 = vmatpush1.msra.mxu0 0.0
    %4343 = vmatprep.subr.mxu0 0.0
    %4344 = vmatpush1.msra.mxu0 0.0
    %4345 = vmatprep.subr.mxu0 0.0
    %4346 = vmatpush1.msra.mxu0 0.0
    %4347 = vmatprep.subr.mxu0 0.0
    %4348 = vmatpush1.msra.mxu0 0.0
    %4349 = vmatprep.subr.mxu0 0.0
    %4350 = vmatpush1.msra.mxu0 0.0
    %4351 = vmatprep.subr.mxu0 0.0
    %4352 = vmatpush1.msra.mxu0 0.0
    %4353 = vmatprep.subr.mxu0 0.0
    %4354 = vmatpush1.msra.mxu0 0.0
    %4355 = vmatprep.subr.mxu0 0.0
    %4356 = vmatpush1.msra.mxu0 0.0
    %4357 = vmatprep.subr.mxu0 0.0
    %4358 = vmatpush1.msra.mxu0 0.0
    %4359 = vmatprep.subr.mxu0 0.0
    %4360 = vmatpush1.msra.mxu0 0.0
    %4361 = vmatprep.subr.mxu0 0.0
    %4362 = vmatpush1.msra.mxu0 0.0
    %4363 = vmatprep.subr.mxu0 0.0
    %4364 = vmatpush1.msra.mxu0 0.0
    %4365 = vmatprep.subr.mxu0 0.0
    %4366 = vmatpush1.msra.mxu0 0.0
    %4367 = vmatprep.subr.mxu0 0.0
    %4368 = vmatpush1.msra.mxu0 0.0
    %4369 = vmatprep.subr.mxu0 0.0
    %4370 = vmatpush1.msra.mxu0 0.0
    %4371 = vmatprep.subr.mxu0 0.0
    %4372 = vmatpush1.msra.mxu0 0.0
    %4373 = vmatprep.subr.mxu0 0.0
    %4374 = vmatpush1.msra.mxu0 0.0
    %4375 = vmatprep.subr.mxu0 0.0
    %4376 = vmatpush1.msra.mxu0 0.0
    %4377 = vmatprep.subr.mxu0 0.0
    %4378 = vmatpush1.msra.mxu0 0.0
    %4379 = vmatprep.subr.mxu0 0.0
    %4380 = vmatpush1.msra.mxu0 0.0
    %4381 = vmatprep.subr.mxu0 0.0
    %4382 = vmatpush1.msra.mxu0 0.0
    %4383 = vmatprep.subr.mxu0 0.0
    %4384 = vmatpush1.msra.mxu0 0.0
    %4385 = vmatprep.subr.mxu0 0.0
    %4386 = vmatpush1.msra.mxu0 0.0
    %4387 = vmatprep.subr.mxu0 0.0
    %4388 = vmatpush1.msra.mxu0 0.0
    %4389 = vmatprep.subr.mxu0 0.0
    %4390 = vmatpush1.msra.mxu0 0.0
    %4391 = vmatprep.mubr.f32.mxu0 0.0
    %4392 = vmatmul.mubr.f32.gmra.mrb[0].mxu0 %v4322
    %v4393 = vpop.f32.mrb[0].mxu0
    %v4394 = vadd.f32 0.0, %v4393
    %v4395 = vpop.f32.mrb[0].mxu0
    %4396 = vmatprep.mubr.f32.mxu0 0.0
    %4397 = vmatmul.mubr.f32.gmra.mrb[0].mxu0 %v4325
    %v4398 = vpop.f32.mrb[0].mxu0
    %v4399 = vadd.f32 0.0, %v4398
    %v4400 = vpop.f32.mrb[0].mxu0
    %4401 = vdwg.mxu0
    %4402 = vrot.lane.b32.xlu0 %v1584, 92
    %v4403 = vpop.permute.xlu0 %4402
    %4404 = vrot.lane.b32.xlu0 %v1589, 92
    %v4405 = vpop.permute.xlu0 %4404
    %v4409 = vsel %vm1192, %v4216, 0
    %v4412 = vsel %vm1192, %v4217, 0
    %4414 = vmatprep.subr.mxu0 0.0
    %4415 = vmatpush1.msra.mxu0 %v4403
    %4416 = vmatprep.subr.mxu0 0.0
    %4417 = vmatpush1.msra.mxu0 %v4405
    %4418 = vmatprep.subr.mxu0 0.0
    %4419 = vmatpush1.msra.mxu0 0.0
    %4420 = vmatprep.subr.mxu0 0.0
    %4421 = vmatpush1.msra.mxu0 0.0
    %4422 = vmatprep.subr.mxu0 0.0
    %4423 = vmatpush1.msra.mxu0 0.0
    %4424 = vmatprep.subr.mxu0 0.0
    %4425 = vmatpush1.msra.mxu0 0.0
    %4426 = vmatprep.subr.mxu0 0.0
    %4427 = vmatpush1.msra.mxu0 0.0
    %4428 = vmatprep.subr.mxu0 0.0
    %4429 = vmatpush1.msra.mxu0 0.0
    %4430 = vmatprep.subr.mxu0 0.0
    %4431 = vmatpush1.msra.mxu0 0.0
    %4432 = vmatprep.subr.mxu0 0.0
    %4433 = vmatpush1.msra.mxu0 0.0
    %4434 = vmatprep.subr.mxu0 0.0
    %4435 = vmatpush1.msra.mxu0 0.0
    %4436 = vmatprep.subr.mxu0 0.0
    %4437 = vmatpush1.msra.mxu0 0.0
    %4438 = vmatprep.subr.mxu0 0.0
    %4439 = vmatpush1.msra.mxu0 0.0
    %4440 = vmatprep.subr.mxu0 0.0
    %4441 = vmatpush1.msra.mxu0 0.0
    %4442 = vmatprep.subr.mxu0 0.0
    %4443 = vmatpush1.msra.mxu0 0.0
    %4444 = vmatprep.subr.mxu0 0.0
    %4445 = vmatpush1.msra.mxu0 0.0
    %4446 = vmatprep.subr.mxu0 0.0
    %4447 = vmatpush1.msra.mxu0 0.0
    %4448 = vmatprep.subr.mxu0 0.0
    %4449 = vmatpush1.msra.mxu0 0.0
    %4450 = vmatprep.subr.mxu0 0.0
    %4451 = vmatpush1.msra.mxu0 0.0
    %4452 = vmatprep.subr.mxu0 0.0
    %4453 = vmatpush1.msra.mxu0 0.0
    %4454 = vmatprep.subr.mxu0 0.0
    %4455 = vmatpush1.msra.mxu0 0.0
    %4456 = vmatprep.subr.mxu0 0.0
    %4457 = vmatpush1.msra.mxu0 0.0
    %4458 = vmatprep.subr.mxu0 0.0
    %4459 = vmatpush1.msra.mxu0 0.0
    %4460 = vmatprep.subr.mxu0 0.0
    %4461 = vmatpush1.msra.mxu0 0.0
    %4462 = vmatprep.subr.mxu0 0.0
    %4463 = vmatpush1.msra.mxu0 0.0
    %4464 = vmatprep.subr.mxu0 0.0
    %4465 = vmatpush1.msra.mxu0 0.0
    %4466 = vmatprep.subr.mxu0 0.0
    %4467 = vmatpush1.msra.mxu0 0.0
    %4468 = vmatprep.subr.mxu0 0.0
    %4469 = vmatpush1.msra.mxu0 0.0
    %4470 = vmatprep.subr.mxu0 0.0
    %4471 = vmatpush1.msra.mxu0 0.0
    %4472 = vmatprep.subr.mxu0 0.0
    %4473 = vmatpush1.msra.mxu0 0.0
    %4474 = vmatprep.subr.mxu0 0.0
    %4475 = vmatpush1.msra.mxu0 0.0
    %4476 = vmatprep.subr.mxu0 0.0
    %4477 = vmatpush1.msra.mxu0 0.0
    %4478 = vmatprep.mubr.f32.mxu0 0.0
    %4479 = vmatmul.mubr.f32.gmra.mrb[0].mxu0 %v4409
    %v4480 = vpop.f32.mrb[0].mxu0
    %v4481 = vadd.f32 0.0, %v4480
    %v4482 = vpop.f32.mrb[0].mxu0
    %4483 = vmatprep.mubr.f32.mxu0 0.0
    %4484 = vmatmul.mubr.f32.gmra.mrb[0].mxu0 %v4412
    %v4485 = vpop.f32.mrb[0].mxu0
    %v4486 = vadd.f32 0.0, %v4485
    %v4487 = vpop.f32.mrb[0].mxu0
    %4488 = vdwg.mxu0
    %4489 = vrot.lane.b32.xlu0 %v1594, 92
    %v4490 = vpop.permute.xlu0 %4489
    %4491 = vrot.lane.b32.xlu0 %v1599, 92
    %v4492 = vpop.permute.xlu0 %4491
    %v4496 = vsel %vm1192, %v4218, 0
    %v4499 = vsel %vm1192, %v4219, 0
    %4501 = vmatprep.subr.mxu0 0.0
    %4502 = vmatpush1.msra.mxu0 %v4490
    %4503 = vmatprep.subr.mxu0 0.0
    %4504 = vmatpush1.msra.mxu0 %v4492
    %4505 = vmatprep.subr.mxu0 0.0
    %4506 = vmatpush1.msra.mxu0 0.0
    %4507 = vmatprep.subr.mxu0 0.0
    %4508 = vmatpush1.msra.mxu0 0.0
    %4509 = vmatprep.subr.mxu0 0.0
    %4510 = vmatpush1.msra.mxu0 0.0
    %4511 = vmatprep.subr.mxu0 0.0
    %4512 = vmatpush1.msra.mxu0 0.0
    %4513 = vmatprep.subr.mxu0 0.0
    %4514 = vmatpush1.msra.mxu0 0.0
    %4515 = vmatprep.subr.mxu0 0.0
    %4516 = vmatpush1.msra.mxu0 0.0
    %4517 = vmatprep.subr.mxu0 0.0
    %4518 = vmatpush1.msra.mxu0 0.0
    %4519 = vmatprep.subr.mxu0 0.0
    %4520 = vmatpush1.msra.mxu0 0.0
    %4521 = vmatprep.subr.mxu0 0.0
    %4522 = vmatpush1.msra.mxu0 0.0
    %4523 = vmatprep.subr.mxu0 0.0
    %4524 = vmatpush1.msra.mxu0 0.0
    %4525 = vmatprep.subr.mxu0 0.0
    %4526 = vmatpush1.msra.mxu0 0.0
    %4527 = vmatprep.subr.mxu0 0.0
    %4528 = vmatpush1.msra.mxu0 0.0
    %4529 = vmatprep.subr.mxu0 0.0
    %4530 = vmatpush1.msra.mxu0 0.0
    %4531 = vmatprep.subr.mxu0 0.0
    %4532 = vmatpush1.msra.mxu0 0.0
    %4533 = vmatprep.subr.mxu0 0.0
    %4534 = vmatpush1.msra.mxu0 0.0
    %4535 = vmatprep.subr.mxu0 0.0
    %4536 = vmatpush1.msra.mxu0 0.0
    %4537 = vmatprep.subr.mxu0 0.0
    %4538 = vmatpush1.msra.mxu0 0.0
    %4539 = vmatprep.subr.mxu0 0.0
    %4540 = vmatpush1.msra.mxu0 0.0
    %4541 = vmatprep.subr.mxu0 0.0
    %4542 = vmatpush1.msra.mxu0 0.0
    %4543 = vmatprep.subr.mxu0 0.0
    %4544 = vmatpush1.msra.mxu0 0.0
    %4545 = vmatprep.subr.mxu0 0.0
    %4546 = vmatpush1.msra.mxu0 0.0
    %4547 = vmatprep.subr.mxu0 0.0
    %4548 = vmatpush1.msra.mxu0 0.0
    %4549 = vmatprep.subr.mxu0 0.0
    %4550 = vmatpush1.msra.mxu0 0.0
    %4551 = vmatprep.subr.mxu0 0.0
    %4552 = vmatpush1.msra.mxu0 0.0
    %4553 = vmatprep.subr.mxu0 0.0
    %4554 = vmatpush1.msra.mxu0 0.0
    %4555 = vmatprep.subr.mxu0 0.0
    %4556 = vmatpush1.msra.mxu0 0.0
    %4557 = vmatprep.subr.mxu0 0.0
    %4558 = vmatpush1.msra.mxu0 0.0
    %4559 = vmatprep.subr.mxu0 0.0
    %4560 = vmatpush1.msra.mxu0 0.0
    %4561 = vmatprep.subr.mxu0 0.0
    %4562 = vmatpush1.msra.mxu0 0.0
    %4563 = vmatprep.subr.mxu0 0.0
    %4564 = vmatpush1.msra.mxu0 0.0
    %4565 = vmatprep.mubr.f32.mxu0 0.0
    %4566 = vmatmul.mubr.f32.gmra.mrb[0].mxu0 %v4496
    %v4567 = vpop.f32.mrb[0].mxu0
    %v4568 = vadd.f32 0.0, %v4567
    %v4569 = vpop.f32.mrb[0].mxu0
    %4570 = vmatprep.mubr.f32.mxu0 0.0
    %4571 = vmatmul.mubr.f32.gmra.mrb[0].mxu0 %v4499
    %v4572 = vpop.f32.mrb[0].mxu0
    %v4573 = vadd.f32 0.0, %v4572
    %v4574 = vpop.f32.mrb[0].mxu0
    %4575 = vdwg.mxu0
    %4576 = vrot.lane.b32.xlu0 %v1604, 92
    %v4577 = vpop.permute.xlu0 %4576
    %4578 = vrot.lane.b32.xlu0 %v1609, 92
    %v4579 = vpop.permute.xlu0 %4578
    %v4583 = vsel %vm1192, %v4220, 0
    %v4586 = vsel %vm1192, %v4221, 0
    %4588 = vmatprep.subr.mxu0 0.0
    %4589 = vmatpush1.msra.mxu0 %v4577
    %4590 = vmatprep.subr.mxu0 0.0
    %4591 = vmatpush1.msra.mxu0 %v4579
    %4592 = vmatprep.subr.mxu0 0.0
    %4593 = vmatpush1.msra.mxu0 0.0
    %4594 = vmatprep.subr.mxu0 0.0
    %4595 = vmatpush1.msra.mxu0 0.0
    %4596 = vmatprep.subr.mxu0 0.0
    %4597 = vmatpush1.msra.mxu0 0.0
    %4598 = vmatprep.subr.mxu0 0.0
    %4599 = vmatpush1.msra.mxu0 0.0
    %4600 = vmatprep.subr.mxu0 0.0
    %4601 = vmatpush1.msra.mxu0 0.0
    %4602 = vmatprep.subr.mxu0 0.0
    %4603 = vmatpush1.msra.mxu0 0.0
    %4604 = vmatprep.subr.mxu0 0.0
    %4605 = vmatpush1.msra.mxu0 0.0
    %4606 = vmatprep.subr.mxu0 0.0
    %4607 = vmatpush1.msra.mxu0 0.0
    %4608 = vmatprep.subr.mxu0 0.0
    %4609 = vmatpush1.msra.mxu0 0.0
    %4610 = vmatprep.subr.mxu0 0.0
    %4611 = vmatpush1.msra.mxu0 0.0
    %4612 = vmatprep.subr.mxu0 0.0
    %4613 = vmatpush1.msra.mxu0 0.0
    %4614 = vmatprep.subr.mxu0 0.0
    %4615 = vmatpush1.msra.mxu0 0.0
    %4616 = vmatprep.subr.mxu0 0.0
    %4617 = vmatpush1.msra.mxu0 0.0
    %4618 = vmatprep.subr.mxu0 0.0
    %4619 = vmatpush1.msra.mxu0 0.0
    %4620 = vmatprep.subr.mxu0 0.0
    %4621 = vmatpush1.msra.mxu0 0.0
    %4622 = vmatprep.subr.mxu0 0.0
    %4623 = vmatpush1.msra.mxu0 0.0
    %4624 = vmatprep.subr.mxu0 0.0
    %4625 = vmatpush1.msra.mxu0 0.0
    %4626 = vmatprep.subr.mxu0 0.0
    %4627 = vmatpush1.msra.mxu0 0.0
    %4628 = vmatprep.subr.mxu0 0.0
    %4629 = vmatpush1.msra.mxu0 0.0
    %4630 = vmatprep.subr.mxu0 0.0
    %4631 = vmatpush1.msra.mxu0 0.0
    %4632 = vmatprep.subr.mxu0 0.0
    %4633 = vmatpush1.msra.mxu0 0.0
    %4634 = vmatprep.subr.mxu0 0.0
    %4635 = vmatpush1.msra.mxu0 0.0
    %4636 = vmatprep.subr.mxu0 0.0
    %4637 = vmatpush1.msra.mxu0 0.0
    %4638 = vmatprep.subr.mxu0 0.0
    %4639 = vmatpush1.msra.mxu0 0.0
    %4640 = vmatprep.subr.mxu0 0.0
    %4641 = vmatpush1.msra.mxu0 0.0
    %4642 = vmatprep.subr.mxu0 0.0
    %4643 = vmatpush1.msra.mxu0 0.0
    %4644 = vmatprep.subr.mxu0 0.0
    %4645 = vmatpush1.msra.mxu0 0.0
    %4646 = vmatprep.subr.mxu0 0.0
    %4647 = vmatpush1.msra.mxu0 0.0
    %4648 = vmatprep.subr.mxu0 0.0
    %4649 = vmatpush1.msra.mxu0 0.0
    %4650 = vmatprep.subr.mxu0 0.0
    %4651 = vmatpush1.msra.mxu0 0.0
    %4652 = vmatprep.mubr.f32.mxu0 0.0
    %4653 = vmatmul.mubr.f32.gmra.mrb[0].mxu0 %v4583
    %v4654 = vpop.f32.mrb[0].mxu0
    %v4655 = vadd.f32 0.0, %v4654
    %v4656 = vpop.f32.mrb[0].mxu0
    %4657 = vmatprep.mubr.f32.mxu0 0.0
    %4658 = vmatmul.mubr.f32.gmra.mrb[0].mxu0 %v4586
    %v4659 = vpop.f32.mrb[0].mxu0
    %v4660 = vadd.f32 0.0, %v4659
    %v4661 = vpop.f32.mrb[0].mxu0
    %4662 = vdwg.mxu0
    %4663 = vrot.lane.b32.xlu0 %v1614, 92
    %v4664 = vpop.permute.xlu0 %4663
    %4665 = vrot.lane.b32.xlu0 %v1619, 92
    %v4666 = vpop.permute.xlu0 %4665
    %v4670 = vsel %vm1192, %v4222, 0
    %v4673 = vsel %vm1192, %v4223, 0
    %4675 = vmatprep.subr.mxu0 0.0
    %4676 = vmatpush1.msra.mxu0 %v4664
    %4677 = vmatprep.subr.mxu0 0.0
    %4678 = vmatpush1.msra.mxu0 %v4666
    %4679 = vmatprep.subr.mxu0 0.0
    %4680 = vmatpush1.msra.mxu0 0.0
    %4681 = vmatprep.subr.mxu0 0.0
    %4682 = vmatpush1.msra.mxu0 0.0
    %4683 = vmatprep.subr.mxu0 0.0
    %4684 = vmatpush1.msra.mxu0 0.0
    %4685 = vmatprep.subr.mxu0 0.0
    %4686 = vmatpush1.msra.mxu0 0.0
    %4687 = vmatprep.subr.mxu0 0.0
    %4688 = vmatpush1.msra.mxu0 0.0
    %4689 = vmatprep.subr.mxu0 0.0
    %4690 = vmatpush1.msra.mxu0 0.0
    %4691 = vmatprep.subr.mxu0 0.0
    %4692 = vmatpush1.msra.mxu0 0.0
    %4693 = vmatprep.subr.mxu0 0.0
    %4694 = vmatpush1.msra.mxu0 0.0
    %4695 = vmatprep.subr.mxu0 0.0
    %4696 = vmatpush1.msra.mxu0 0.0
    %4697 = vmatprep.subr.mxu0 0.0
    %4698 = vmatpush1.msra.mxu0 0.0
    %4699 = vmatprep.subr.mxu0 0.0
    %4700 = vmatpush1.msra.mxu0 0.0
    %4701 = vmatprep.subr.mxu0 0.0
    %4702 = vmatpush1.msra.mxu0 0.0
    %4703 = vmatprep.subr.mxu0 0.0
    %4704 = vmatpush1.msra.mxu0 0.0
    %4705 = vmatprep.subr.mxu0 0.0
    %4706 = vmatpush1.msra.mxu0 0.0
    %4707 = vmatprep.subr.mxu0 0.0
    %4708 = vmatpush1.msra.mxu0 0.0
    %4709 = vmatprep.subr.mxu0 0.0
    %4710 = vmatpush1.msra.mxu0 0.0
    %4711 = vmatprep.subr.mxu0 0.0
    %4712 = vmatpush1.msra.mxu0 0.0
    %4713 = vmatprep.subr.mxu0 0.0
    %4714 = vmatpush1.msra.mxu0 0.0
    %4715 = vmatprep.subr.mxu0 0.0
    %4716 = vmatpush1.msra.mxu0 0.0
    %4717 = vmatprep.subr.mxu0 0.0
    %4718 = vmatpush1.msra.mxu0 0.0
    %4719 = vmatprep.subr.mxu0 0.0
    %4720 = vmatpush1.msra.mxu0 0.0
    %4721 = vmatprep.subr.mxu0 0.0
    %4722 = vmatpush1.msra.mxu0 0.0
    %4723 = vmatprep.subr.mxu0 0.0
    %4724 = vmatpush1.msra.mxu0 0.0
    %4725 = vmatprep.subr.mxu0 0.0
    %4726 = vmatpush1.msra.mxu0 0.0
    %4727 = vmatprep.subr.mxu0 0.0
    %4728 = vmatpush1.msra.mxu0 0.0
    %4729 = vmatprep.subr.mxu0 0.0
    %4730 = vmatpush1.msra.mxu0 0.0
    %4731 = vmatprep.subr.mxu0 0.0
    %4732 = vmatpush1.msra.mxu0 0.0
    %4733 = vmatprep.subr.mxu0 0.0
    %4734 = vmatpush1.msra.mxu0 0.0
    %4735 = vmatprep.subr.mxu0 0.0
    %4736 = vmatpush1.msra.mxu0 0.0
    %4737 = vmatprep.subr.mxu0 0.0
    %4738 = vmatpush1.msra.mxu0 0.0
    %4739 = vmatprep.mubr.f32.mxu0 0.0
    %4740 = vmatmul.mubr.f32.gmra.mrb[0].mxu0 %v4670
    %v4741 = vpop.f32.mrb[0].mxu0
    %v4742 = vadd.f32 0.0, %v4741
    %v4743 = vpop.f32.mrb[0].mxu0
    %4744 = vmatprep.mubr.f32.mxu0 0.0
    %4745 = vmatmul.mubr.f32.gmra.mrb[0].mxu0 %v4673
    %v4746 = vpop.f32.mrb[0].mxu0
    %v4747 = vadd.f32 0.0, %v4746
    %v4748 = vpop.f32.mrb[0].mxu0
    %4749 = vdwg.mxu0
    %4750 = vrot.lane.b32.xlu0 %v1624, 92
    %v4751 = vpop.permute.xlu0 %4750
    %4752 = vrot.lane.b32.xlu0 %v1629, 92
    %v4753 = vpop.permute.xlu0 %4752
    %v4757 = vsel %vm1192, %v4224, 0
    %v4760 = vsel %vm1192, %v4225, 0
    %4762 = vmatprep.subr.mxu0 0.0
    %4763 = vmatpush1.msra.mxu0 %v4751
    %4764 = vmatprep.subr.mxu0 0.0
    %4765 = vmatpush1.msra.mxu0 %v4753
    %4766 = vmatprep.subr.mxu0 0.0
    %4767 = vmatpush1.msra.mxu0 0.0
    %4768 = vmatprep.subr.mxu0 0.0
    %4769 = vmatpush1.msra.mxu0 0.0
    %4770 = vmatprep.subr.mxu0 0.0
    %4771 = vmatpush1.msra.mxu0 0.0
    %4772 = vmatprep.subr.mxu0 0.0
    %4773 = vmatpush1.msra.mxu0 0.0
    %4774 = vmatprep.subr.mxu0 0.0
    %4775 = vmatpush1.msra.mxu0 0.0
    %4776 = vmatprep.subr.mxu0 0.0
    %4777 = vmatpush1.msra.mxu0 0.0
    %4778 = vmatprep.subr.mxu0 0.0
    %4779 = vmatpush1.msra.mxu0 0.0
    %4780 = vmatprep.subr.mxu0 0.0
    %4781 = vmatpush1.msra.mxu0 0.0
    %4782 = vmatprep.subr.mxu0 0.0
    %4783 = vmatpush1.msra.mxu0 0.0
    %4784 = vmatprep.subr.mxu0 0.0
    %4785 = vmatpush1.msra.mxu0 0.0
    %4786 = vmatprep.subr.mxu0 0.0
    %4787 = vmatpush1.msra.mxu0 0.0
    %4788 = vmatprep.subr.mxu0 0.0
    %4789 = vmatpush1.msra.mxu0 0.0
    %4790 = vmatprep.subr.mxu0 0.0
    %4791 = vmatpush1.msra.mxu0 0.0
    %4792 = vmatprep.subr.mxu0 0.0
    %4793 = vmatpush1.msra.mxu0 0.0
    %4794 = vmatprep.subr.mxu0 0.0
    %4795 = vmatpush1.msra.mxu0 0.0
    %4796 = vmatprep.subr.mxu0 0.0
    %4797 = vmatpush1.msra.mxu0 0.0
    %4798 = vmatprep.subr.mxu0 0.0
    %4799 = vmatpush1.msra.mxu0 0.0
    %4800 = vmatprep.subr.mxu0 0.0
    %4801 = vmatpush1.msra.mxu0 0.0
    %4802 = vmatprep.subr.mxu0 0.0
    %4803 = vmatpush1.msra.mxu0 0.0
    %4804 = vmatprep.subr.mxu0 0.0
    %4805 = vmatpush1.msra.mxu0 0.0
    %4806 = vmatprep.subr.mxu0 0.0
    %4807 = vmatpush1.msra.mxu0 0.0
    %4808 = vmatprep.subr.mxu0 0.0
    %4809 = vmatpush1.msra.mxu0 0.0
    %4810 = vmatprep.subr.mxu0 0.0
    %4811 = vmatpush1.msra.mxu0 0.0
    %4812 = vmatprep.subr.mxu0 0.0
    %4813 = vmatpush1.msra.mxu0 0.0
    %4814 = vmatprep.subr.mxu0 0.0
    %4815 = vmatpush1.msra.mxu0 0.0
    %4816 = vmatprep.subr.mxu0 0.0
    %4817 = vmatpush1.msra.mxu0 0.0
    %4818 = vmatprep.subr.mxu0 0.0
    %4819 = vmatpush1.msra.mxu0 0.0
    %4820 = vmatprep.subr.mxu0 0.0
    %4821 = vmatpush1.msra.mxu0 0.0
    %4822 = vmatprep.subr.mxu0 0.0
    %4823 = vmatpush1.msra.mxu0 0.0
    %4824 = vmatprep.subr.mxu0 0.0
    %4825 = vmatpush1.msra.mxu0 0.0
    %4826 = vmatprep.mubr.f32.mxu0 0.0
    %4827 = vmatmul.mubr.f32.gmra.mrb[0].mxu0 %v4757
    %v4828 = vpop.f32.mrb[0].mxu0
    %v4829 = vadd.f32 0.0, %v4828
    %v4830 = vpop.f32.mrb[0].mxu0
    %4831 = vmatprep.mubr.f32.mxu0 0.0
    %4832 = vmatmul.mubr.f32.gmra.mrb[0].mxu0 %v4760
    %v4833 = vpop.f32.mrb[0].mxu0
    %v4834 = vadd.f32 0.0, %v4833
    %v4835 = vpop.f32.mrb[0].mxu0
    %4836 = vdwg.mxu0
    %4837 = vrot.lane.b32.xlu0 %v1634, 92
    %v4838 = vpop.permute.xlu0 %4837
    %4839 = vrot.lane.b32.xlu0 %v1639, 92
    %v4840 = vpop.permute.xlu0 %4839
    %v4844 = vsel %vm1192, %v4226, 0
    %v4847 = vsel %vm1192, %v4227, 0
    %4849 = vmatprep.subr.mxu0 0.0
    %4850 = vmatpush1.msra.mxu0 %v4838
    %4851 = vmatprep.subr.mxu0 0.0
    %4852 = vmatpush1.msra.mxu0 %v4840
    %4853 = vmatprep.subr.mxu0 0.0
    %4854 = vmatpush1.msra.mxu0 0.0
    %4855 = vmatprep.subr.mxu0 0.0
    %4856 = vmatpush1.msra.mxu0 0.0
    %4857 = vmatprep.subr.mxu0 0.0
    %4858 = vmatpush1.msra.mxu0 0.0
    %4859 = vmatprep.subr.mxu0 0.0
    %4860 = vmatpush1.msra.mxu0 0.0
    %4861 = vmatprep.subr.mxu0 0.0
    %4862 = vmatpush1.msra.mxu0 0.0
    %4863 = vmatprep.subr.mxu0 0.0
    %4864 = vmatpush1.msra.mxu0 0.0
    %4865 = vmatprep.subr.mxu0 0.0
    %4866 = vmatpush1.msra.mxu0 0.0
    %4867 = vmatprep.subr.mxu0 0.0
    %4868 = vmatpush1.msra.mxu0 0.0
    %4869 = vmatprep.subr.mxu0 0.0
    %4870 = vmatpush1.msra.mxu0 0.0
    %4871 = vmatprep.subr.mxu0 0.0
    %4872 = vmatpush1.msra.mxu0 0.0
    %4873 = vmatprep.subr.mxu0 0.0
    %4874 = vmatpush1.msra.mxu0 0.0
    %4875 = vmatprep.subr.mxu0 0.0
    %4876 = vmatpush1.msra.mxu0 0.0
    %4877 = vmatprep.subr.mxu0 0.0
    %4878 = vmatpush1.msra.mxu0 0.0
    %4879 = vmatprep.subr.mxu0 0.0
    %4880 = vmatpush1.msra.mxu0 0.0
    %4881 = vmatprep.subr.mxu0 0.0
    %4882 = vmatpush1.msra.mxu0 0.0
    %4883 = vmatprep.subr.mxu0 0.0
    %4884 = vmatpush1.msra.mxu0 0.0
    %4885 = vmatprep.subr.mxu0 0.0
    %4886 = vmatpush1.msra.mxu0 0.0
    %4887 = vmatprep.subr.mxu0 0.0
    %4888 = vmatpush1.msra.mxu0 0.0
    %4889 = vmatprep.subr.mxu0 0.0
    %4890 = vmatpush1.msra.mxu0 0.0
    %4891 = vmatprep.subr.mxu0 0.0
    %4892 = vmatpush1.msra.mxu0 0.0
    %4893 = vmatprep.subr.mxu0 0.0
    %4894 = vmatpush1.msra.mxu0 0.0
    %4895 = vmatprep.subr.mxu0 0.0
    %4896 = vmatpush1.msra.mxu0 0.0
    %4897 = vmatprep.subr.mxu0 0.0
    %4898 = vmatpush1.msra.mxu0 0.0
    %4899 = vmatprep.subr.mxu0 0.0
    %4900 = vmatpush1.msra.mxu0 0.0
    %4901 = vmatprep.subr.mxu0 0.0
    %4902 = vmatpush1.msra.mxu0 0.0
    %4903 = vmatprep.subr.mxu0 0.0
    %4904 = vmatpush1.msra.mxu0 0.0
    %4905 = vmatprep.subr.mxu0 0.0
    %4906 = vmatpush1.msra.mxu0 0.0
    %4907 = vmatprep.subr.mxu0 0.0
    %4908 = vmatpush1.msra.mxu0 0.0
    %4909 = vmatprep.subr.mxu0 0.0
    %4910 = vmatpush1.msra.mxu0 0.0
    %4911 = vmatprep.subr.mxu0 0.0
    %4912 = vmatpush1.msra.mxu0 0.0
    %4913 = vmatprep.mubr.f32.mxu0 0.0
    %4914 = vmatmul.mubr.f32.gmra.mrb[0].mxu0 %v4844
    %v4915 = vpop.f32.mrb[0].mxu0
    %v4916 = vadd.f32 0.0, %v4915
    %v4917 = vpop.f32.mrb[0].mxu0
    %4918 = vmatprep.mubr.f32.mxu0 0.0
    %4919 = vmatmul.mubr.f32.gmra.mrb[0].mxu0 %v4847
    %v4920 = vpop.f32.mrb[0].mxu0
    %v4921 = vadd.f32 0.0, %v4920
    %v4922 = vpop.f32.mrb[0].mxu0
    %4923 = vdwg.mxu0
    %v4924 = vld [vmem:[%s4 + $0x14] sm:$0xf]
    %v4926 = vsel %vm1648, %v4307, 0
    %v4929 = vsel %vm1648, %v4312, 0
    %v4932 = vsel %vm1648, %v4394, 0
    %v4935 = vsel %vm1648, %v4399, 0
    %v4938 = vsel %vm1648, %v4481, 0
    %v4941 = vsel %vm1648, %v4486, 0
    %v4944 = vsel %vm1648, %v4568, 0
    %v4947 = vsel %vm1648, %v4573, 0
    %v4950 = vsel %vm1648, %v4655, 0
    %v4953 = vsel %vm1648, %v4660, 0
    %v4956 = vsel %vm1648, %v4742, 0
    %v4959 = vsel %vm1648, %v4747, 0
    %v4962 = vsel %vm1648, %v4829, 0
    %v4965 = vsel %vm1648, %v4834, 0
    %v4968 = vsel %vm1648, %v4916, 0
    %v4971 = vsel %vm1648, %v4921, 0
    %vm4973 = vcmask 1043456
    %v4975 = vsel %vm4973, %v4924, 0
    %4977 = vmatprep.subr.mxu0 0.0
    %4978 = vmatpush1.msra.mxu0 %v4975
    %4979 = vmatprep.subr.mxu0 0.0
    %4980 = vmatpush1.msra.mxu0 0.0
    %4981 = vmatprep.subr.mxu0 0.0
    %4982 = vmatpush1.msra.mxu0 0.0
    %4983 = vmatprep.subr.mxu0 0.0
    %4984 = vmatpush1.msra.mxu0 0.0
    %4985 = vmatprep.subr.mxu0 0.0
    %4986 = vmatpush1.msra.mxu0 0.0
    %4987 = vmatprep.subr.mxu0 0.0
    %4988 = vmatpush1.msra.mxu0 0.0
    %4989 = vmatprep.subr.mxu0 0.0
    %4990 = vmatpush1.msra.mxu0 0.0
    %4991 = vmatprep.subr.mxu0 0.0
    %4992 = vmatpush1.msra.mxu0 0.0
    %4993 = vmatprep.subr.mxu0 0.0
    %4994 = vmatpush1.msra.mxu0 0.0
    %4995 = vmatprep.subr.mxu0 0.0
    %4996 = vmatpush1.msra.mxu0 0.0
    %4997 = vmatprep.subr.mxu0 0.0
    %4998 = vmatpush1.msra.mxu0 0.0
    %4999 = vmatprep.subr.mxu0 0.0
    %5000 = vmatpush1.msra.mxu0 0.0
    %5001 = vmatprep.subr.mxu0 0.0
    %5002 = vmatpush1.msra.mxu0 0.0
    %5003 = vmatprep.subr.mxu0 0.0
    %5004 = vmatpush1.msra.mxu0 0.0
    %5005 = vmatprep.subr.mxu0 0.0
    %5006 = vmatpush1.msra.mxu0 0.0
    %5007 = vmatprep.subr.mxu0 0.0
    %5008 = vmatpush1.msra.mxu0 0.0
    %5009 = vmatprep.subr.mxu0 0.0
    %5010 = vmatpush1.msra.mxu0 0.0
    %5011 = vmatprep.subr.mxu0 0.0
    %5012 = vmatpush1.msra.mxu0 0.0
    %5013 = vmatprep.subr.mxu0 0.0
    %5014 = vmatpush1.msra.mxu0 0.0
    %5015 = vmatprep.subr.mxu0 0.0
    %5016 = vmatpush1.msra.mxu0 0.0
    %5017 = vmatprep.subr.mxu0 0.0
    %5018 = vmatpush1.msra.mxu0 0.0
    %5019 = vmatprep.subr.mxu0 0.0
    %5020 = vmatpush1.msra.mxu0 0.0
    %5021 = vmatprep.subr.mxu0 0.0
    %5022 = vmatpush1.msra.mxu0 0.0
    %5023 = vmatprep.subr.mxu0 0.0
    %5024 = vmatpush1.msra.mxu0 0.0
    %5025 = vmatprep.subr.mxu0 0.0
    %5026 = vmatpush1.msra.mxu0 0.0
    %5027 = vmatprep.subr.mxu0 0.0
    %5028 = vmatpush1.msra.mxu0 0.0
    %5029 = vmatprep.subr.mxu0 0.0
    %5030 = vmatpush1.msra.mxu0 0.0
    %5031 = vmatprep.subr.mxu0 0.0
    %5032 = vmatpush1.msra.mxu0 0.0
    %5033 = vmatprep.subr.mxu0 0.0
    %5034 = vmatpush1.msra.mxu0 0.0
    %5035 = vmatprep.subr.mxu0 0.0
    %5036 = vmatpush1.msra.mxu0 0.0
    %5037 = vmatprep.subr.mxu0 0.0
    %5038 = vmatpush1.msra.mxu0 0.0
    %5039 = vmatprep.subr.mxu0 0.0
    %5040 = vmatpush1.msra.mxu0 0.0
    %5041 = vmatprep.mubr.f32.mxu0 0.0
    %5042 = vmatmul.mubr.f32.gmra.mrb[0].mxu0 %v4926
    %v5043 = vpop.f32.mrb[0].mxu0
    %v5044 = vadd.f32 0.0, %v5043
    %v5045 = vpop.f32.mrb[0].mxu0
    %5046 = vmatprep.mubr.f32.mxu0 0.0
    %5047 = vmatmul.mubr.f32.gmra.mrb[0].mxu0 %v4929
    %v5048 = vpop.f32.mrb[0].mxu0
    %v5049 = vadd.f32 0.0, %v5048
    %v5050 = vpop.f32.mrb[0].mxu0
    %5051 = vmatprep.mubr.f32.mxu0 0.0
    %5052 = vmatmul.mubr.f32.gmra.mrb[0].mxu0 %v4932
    %v5053 = vpop.f32.mrb[0].mxu0
    %v5054 = vadd.f32 0.0, %v5053
    %v5055 = vpop.f32.mrb[0].mxu0
    %5056 = vmatprep.mubr.f32.mxu0 0.0
    %5057 = vmatmul.mubr.f32.gmra.mrb[0].mxu0 %v4935
    %v5058 = vpop.f32.mrb[0].mxu0
    %v5059 = vadd.f32 0.0, %v5058
    %v5060 = vpop.f32.mrb[0].mxu0
    %5061 = vmatprep.mubr.f32.mxu0 0.0
    %5062 = vmatmul.mubr.f32.gmra.mrb[0].mxu0 %v4938
    %v5063 = vpop.f32.mrb[0].mxu0
    %v5064 = vadd.f32 0.0, %v5063
    %v5065 = vpop.f32.mrb[0].mxu0
    %5066 = vmatprep.mubr.f32.mxu0 0.0
    %5067 = vmatmul.mubr.f32.gmra.mrb[0].mxu0 %v4941
    %v5068 = vpop.f32.mrb[0].mxu0
    %v5069 = vadd.f32 0.0, %v5068
    %v5070 = vpop.f32.mrb[0].mxu0
    %5071 = vmatprep.mubr.f32.mxu0 0.0
    %5072 = vmatmul.mubr.f32.gmra.mrb[0].mxu0 %v4944
    %v5073 = vpop.f32.mrb[0].mxu0
    %v5074 = vadd.f32 0.0, %v5073
    %v5075 = vpop.f32.mrb[0].mxu0
    %5076 = vmatprep.mubr.f32.mxu0 0.0
    %5077 = vmatmul.mubr.f32.gmra.mrb[0].mxu0 %v4947
    %v5078 = vpop.f32.mrb[0].mxu0
    %v5079 = vadd.f32 0.0, %v5078
    %v5080 = vpop.f32.mrb[0].mxu0
    %5081 = vmatprep.mubr.f32.mxu0 0.0
    %5082 = vmatmul.mubr.f32.gmra.mrb[0].mxu0 %v4950
    %v5083 = vpop.f32.mrb[0].mxu0
    %v5084 = vadd.f32 0.0, %v5083
    %v5085 = vpop.f32.mrb[0].mxu0
    %5086 = vmatprep.mubr.f32.mxu0 0.0
    %5087 = vmatmul.mubr.f32.gmra.mrb[0].mxu0 %v4953
    %v5088 = vpop.f32.mrb[0].mxu0
    %v5089 = vadd.f32 0.0, %v5088
    %v5090 = vpop.f32.mrb[0].mxu0
    %5091 = vmatprep.mubr.f32.mxu0 0.0
    %5092 = vmatmul.mubr.f32.gmra.mrb[0].mxu0 %v4956
    %v5093 = vpop.f32.mrb[0].mxu0
    %v5094 = vadd.f32 0.0, %v5093
    %v5095 = vpop.f32.mrb[0].mxu0
    %5096 = vmatprep.mubr.f32.mxu0 0.0
    %5097 = vmatmul.mubr.f32.gmra.mrb[0].mxu0 %v4959
    %v5098 = vpop.f32.mrb[0].mxu0
    %v5099 = vadd.f32 0.0, %v5098
    %v5100 = vpop.f32.mrb[0].mxu0
    %5101 = vmatprep.mubr.f32.mxu0 0.0
    %5102 = vmatmul.mubr.f32.gmra.mrb[0].mxu0 %v4962
    %v5103 = vpop.f32.mrb[0].mxu0
    %v5104 = vadd.f32 0.0, %v5103
    %v5105 = vpop.f32.mrb[0].mxu0
    %5106 = vmatprep.mubr.f32.mxu0 0.0
    %5107 = vmatmul.mubr.f32.gmra.mrb[0].mxu0 %v4965
    %v5108 = vpop.f32.mrb[0].mxu0
    %v5109 = vadd.f32 0.0, %v5108
    %v5110 = vpop.f32.mrb[0].mxu0
    %5111 = vmatprep.mubr.f32.mxu0 0.0
    %5112 = vmatmul.mubr.f32.gmra.mrb[0].mxu0 %v4968
    %v5113 = vpop.f32.mrb[0].mxu0
    %v5114 = vadd.f32 0.0, %v5113
    %v5115 = vpop.f32.mrb[0].mxu0
    %5116 = vmatprep.mubr.f32.mxu0 0.0
    %5117 = vmatmul.mubr.f32.gmra.mrb[0].mxu0 %v4971
    %v5118 = vpop.f32.mrb[0].mxu0
    %v5119 = vadd.f32 0.0, %v5118
    %v5120 = vpop.f32.mrb[0].mxu0
    %5121 = vdwg.mxu0
    %v5123 = vsel %vm1648, %v2658, 0
    %v5126 = vsel %vm1648, %v2663, 0
    %v5129 = vsel %vm1648, %v2745, 0
    %v5132 = vsel %vm1648, %v2750, 0
    %v5135 = vsel %vm1648, %v2832, 0
    %v5138 = vsel %vm1648, %v2837, 0
    %v5141 = vsel %vm1648, %v2919, 0
    %v5144 = vsel %vm1648, %v2924, 0
    %v5147 = vsel %vm1648, %v3006, 0
    %v5150 = vsel %vm1648, %v3011, 0
    %v5153 = vsel %vm1648, %v3093, 0
    %v5156 = vsel %vm1648, %v3098, 0
    %v5159 = vsel %vm1648, %v3180, 0
    %v5162 = vsel %vm1648, %v3185, 0
    %v5165 = vsel %vm1648, %v3267, 0
    %v5168 = vsel %vm1648, %v3272, 0
    %v5171 = vsel %vm4973, %v3275, 0
    %5173 = vmatprep.subr.mxu0 0.0
    %5174 = vmatpush1.msra.mxu0 %v5171
    %5175 = vmatprep.subr.mxu0 0.0
    %5176 = vmatpush1.msra.mxu0 0.0
    %5177 = vmatprep.subr.mxu0 0.0
    %5178 = vmatpush1.msra.mxu0 0.0
    %5179 = vmatprep.subr.mxu0 0.0
    %5180 = vmatpush1.msra.mxu0 0.0
    %5181 = vmatprep.subr.mxu0 0.0
    %5182 = vmatpush1.msra.mxu0 0.0
    %5183 = vmatprep.subr.mxu0 0.0
    %5184 = vmatpush1.msra.mxu0 0.0
    %5185 = vmatprep.subr.mxu0 0.0
    %5186 = vmatpush1.msra.mxu0 0.0
    %5187 = vmatprep.subr.mxu0 0.0
    %5188 = vmatpush1.msra.mxu0 0.0
    %5189 = vmatprep.subr.mxu0 0.0
    %5190 = vmatpush1.msra.mxu0 0.0
    %5191 = vmatprep.subr.mxu0 0.0
    %5192 = vmatpush1.msra.mxu0 0.0
    %5193 = vmatprep.subr.mxu0 0.0
    %5194 = vmatpush1.msra.mxu0 0.0
    %5195 = vmatprep.subr.mxu0 0.0
    %5196 = vmatpush1.msra.mxu0 0.0
    %5197 = vmatprep.subr.mxu0 0.0
    %5198 = vmatpush1.msra.mxu0 0.0
    %5199 = vmatprep.subr.mxu0 0.0
    %5200 = vmatpush1.msra.mxu0 0.0
    %5201 = vmatprep.subr.mxu0 0.0
    %5202 = vmatpush1.msra.mxu0 0.0
    %5203 = vmatprep.subr.mxu0 0.0
    %5204 = vmatpush1.msra.mxu0 0.0
    %5205 = vmatprep.subr.mxu0 0.0
    %5206 = vmatpush1.msra.mxu0 0.0
    %5207 = vmatprep.subr.mxu0 0.0
    %5208 = vmatpush1.msra.mxu0 0.0
    %5209 = vmatprep.subr.mxu0 0.0
    %5210 = vmatpush1.msra.mxu0 0.0
    %5211 = vmatprep.subr.mxu0 0.0
    %5212 = vmatpush1.msra.mxu0 0.0
    %5213 = vmatprep.subr.mxu0 0.0
    %5214 = vmatpush1.msra.mxu0 0.0
    %5215 = vmatprep.subr.mxu0 0.0
    %5216 = vmatpush1.msra.mxu0 0.0
    %5217 = vmatprep.subr.mxu0 0.0
    %5218 = vmatpush1.msra.mxu0 0.0
    %5219 = vmatprep.subr.mxu0 0.0
    %5220 = vmatpush1.msra.mxu0 0.0
    %5221 = vmatprep.subr.mxu0 0.0
    %5222 = vmatpush1.msra.mxu0 0.0
    %5223 = vmatprep.subr.mxu0 0.0
    %5224 = vmatpush1.msra.mxu0 0.0
    %5225 = vmatprep.subr.mxu0 0.0
    %5226 = vmatpush1.msra.mxu0 0.0
    %5227 = vmatprep.subr.mxu0 0.0
    %5228 = vmatpush1.msra.mxu0 0.0
    %5229 = vmatprep.subr.mxu0 0.0
    %5230 = vmatpush1.msra.mxu0 0.0
    %5231 = vmatprep.subr.mxu0 0.0
    %5232 = vmatpush1.msra.mxu0 0.0
    %5233 = vmatprep.subr.mxu0 0.0
    %5234 = vmatpush1.msra.mxu0 0.0
    %5235 = vmatprep.subr.mxu0 0.0
    %5236 = vmatpush1.msra.mxu0 0.0
    %5237 = vmatprep.mubr.f32.mxu0 0.0
    %5238 = vmatmul.mubr.f32.gmra.mrb[0].mxu0 %v5123
    %v5239 = vpop.f32.mrb[0].mxu0
    %v5240 = vadd.f32 %v5044, %v5239
    %v5241 = vpop.f32.mrb[0].mxu0
    %5242 = vmatprep.mubr.f32.mxu0 0.0
    %5243 = vmatmul.mubr.f32.gmra.mrb[0].mxu0 %v5126
    %v5244 = vpop.f32.mrb[0].mxu0
    %v5245 = vadd.f32 %v5049, %v5244
    %v5246 = vpop.f32.mrb[0].mxu0
    %5247 = vmatprep.mubr.f32.mxu0 0.0
    %5248 = vmatmul.mubr.f32.gmra.mrb[0].mxu0 %v5129
    %v5249 = vpop.f32.mrb[0].mxu0
    %v5250 = vadd.f32 %v5054, %v5249
    %v5251 = vpop.f32.mrb[0].mxu0
    %5252 = vmatprep.mubr.f32.mxu0 0.0
    %5253 = vmatmul.mubr.f32.gmra.mrb[0].mxu0 %v5132
    %v5254 = vpop.f32.mrb[0].mxu0
    %v5255 = vadd.f32 %v5059, %v5254
    %v5256 = vpop.f32.mrb[0].mxu0
    %5257 = vmatprep.mubr.f32.mxu0 0.0
    %5258 = vmatmul.mubr.f32.gmra.mrb[0].mxu0 %v5135
    %v5259 = vpop.f32.mrb[0].mxu0
    %v5260 = vadd.f32 %v5064, %v5259
    %v5261 = vpop.f32.mrb[0].mxu0
    %5262 = vmatprep.mubr.f32.mxu0 0.0
    %5263 = vmatmul.mubr.f32.gmra.mrb[0].mxu0 %v5138
    %v5264 = vpop.f32.mrb[0].mxu0
    %v5265 = vadd.f32 %v5069, %v5264
    %v5266 = vpop.f32.mrb[0].mxu0
    %5267 = vmatprep.mubr.f32.mxu0 0.0
    %5268 = vmatmul.mubr.f32.gmra.mrb[0].mxu0 %v5141
    %v5269 = vpop.f32.mrb[0].mxu0
    %v5270 = vadd.f32 %v5074, %v5269
    %v5271 = vpop.f32.mrb[0].mxu0
    %5272 = vmatprep.mubr.f32.mxu0 0.0
    %5273 = vmatmul.mubr.f32.gmra.mrb[0].mxu0 %v5144
    %v5274 = vpop.f32.mrb[0].mxu0
    %v5275 = vadd.f32 %v5079, %v5274
    %v5276 = vpop.f32.mrb[0].mxu0
    %5277 = vmatprep.mubr.f32.mxu0 0.0
    %5278 = vmatmul.mubr.f32.gmra.mrb[0].mxu0 %v5147
    %v5279 = vpop.f32.mrb[0].mxu0
    %v5280 = vadd.f32 %v5084, %v5279
    %v5281 = vpop.f32.mrb[0].mxu0
    %5282 = vmatprep.mubr.f32.mxu0 0.0
    %5283 = vmatmul.mubr.f32.gmra.mrb[0].mxu0 %v5150
    %v5284 = vpop.f32.mrb[0].mxu0
    %v5285 = vadd.f32 %v5089, %v5284
    %v5286 = vpop.f32.mrb[0].mxu0
    %5287 = vmatprep.mubr.f32.mxu0 0.0
    %5288 = vmatmul.mubr.f32.gmra.mrb[0].mxu0 %v5153
    %v5289 = vpop.f32.mrb[0].mxu0
    %v5290 = vadd.f32 %v5094, %v5289
    %v5291 = vpop.f32.mrb[0].mxu0
    %5292 = vmatprep.mubr.f32.mxu0 0.0
    %5293 = vmatmul.mubr.f32.gmra.mrb[0].mxu0 %v5156
    %v5294 = vpop.f32.mrb[0].mxu0
    %v5295 = vadd.f32 %v5099, %v5294
    %v5296 = vpop.f32.mrb[0].mxu0
    %5297 = vmatprep.mubr.f32.mxu0 0.0
    %5298 = vmatmul.mubr.f32.gmra.mrb[0].mxu0 %v5159
    %v5299 = vpop.f32.mrb[0].mxu0
    %v5300 = vadd.f32 %v5104, %v5299
    %v5301 = vpop.f32.mrb[0].mxu0
    %5302 = vmatprep.mubr.f32.mxu0 0.0
    %5303 = vmatmul.mubr.f32.gmra.mrb[0].mxu0 %v5162
    %v5304 = vpop.f32.mrb[0].mxu0
    %v5305 = vadd.f32 %v5109, %v5304
    %v5306 = vpop.f32.mrb[0].mxu0
    %5307 = vmatprep.mubr.f32.mxu0 0.0
    %5308 = vmatmul.mubr.f32.gmra.mrb[0].mxu0 %v5165
    %v5309 = vpop.f32.mrb[0].mxu0
    %v5310 = vadd.f32 %v5114, %v5309
    %v5311 = vpop.f32.mrb[0].mxu0
    %5312 = vmatprep.mubr.f32.mxu0 0.0
    %5313 = vmatmul.mubr.f32.gmra.mrb[0].mxu0 %v5168
    %v5314 = vpop.f32.mrb[0].mxu0
    %v5315 = vadd.f32 %v5119, %v5314
    %v5316 = vpop.f32.mrb[0].mxu0
    %5317 = vdwg.mxu0
    %5318 = vrot.lane.b32.xlu0 %v1564, 120
    %v5319 = vpop.permute.xlu0 %5318
    %5320 = vrot.lane.b32.xlu0 %v1569, 120
    %v5321 = vpop.permute.xlu0 %5320
    %5322 = vrot.lane.b32.xlu0 %v1564, 104
    %v5323 = vpop.permute.xlu0 %5322
    %5324 = vrot.lane.b32.xlu0 %v1569, 104
    %v5325 = vpop.permute.xlu0 %5324
    %v5326 = vsel %vm1648, %v5319, 0
    %v5328 = vsel %vm1648, %v5321, 0
    %v5330 = vsel %vm1648, %v5323, 0
    %v5332 = vsel %vm1648, %v5325, 0
    %5334 = vmatprep.subr.mxu0 0.0
    %5335 = vmatpush1.xpose.msra.mxu0 %v5330
    %5336 = vmatprep.subr.mxu0 0.0
    %5337 = vmatpush1.xpose.msra.mxu0 %v5332
    %5338 = vmatprep.subr.mxu0 0.0
    %5339 = vmatpush1.xpose.msra.mxu0 0.0
    %5340 = vmatprep.subr.mxu0 0.0
    %5341 = vmatpush1.xpose.msra.mxu0 0.0
    %5342 = vmatprep.subr.mxu0 0.0
    %5343 = vmatpush1.xpose.msra.mxu0 0.0
    %5344 = vmatprep.subr.mxu0 0.0
    %5345 = vmatpush1.xpose.msra.mxu0 0.0
    %5346 = vmatprep.subr.mxu0 0.0
    %5347 = vmatpush1.xpose.msra.mxu0 0.0
    %5348 = vmatprep.subr.mxu0 0.0
    %5349 = vmatpush1.xpose.msra.mxu0 0.0
    %5350 = vmatprep.subr.mxu0 0.0
    %5351 = vmatpush1.xpose.msra.mxu0 0.0
    %5352 = vmatprep.subr.mxu0 0.0
    %5353 = vmatpush1.xpose.msra.mxu0 0.0
    %5354 = vmatprep.subr.mxu0 0.0
    %5355 = vmatpush1.xpose.msra.mxu0 0.0
    %5356 = vmatprep.subr.mxu0 0.0
    %5357 = vmatpush1.xpose.msra.mxu0 0.0
    %5358 = vmatprep.subr.mxu0 0.0
    %5359 = vmatpush1.xpose.msra.mxu0 0.0
    %5360 = vmatprep.subr.mxu0 0.0
    %5361 = vmatpush1.xpose.msra.mxu0 0.0
    %5362 = vmatprep.subr.mxu0 0.0
    %5363 = vmatpush1.xpose.msra.mxu0 0.0
    %5364 = vmatprep.subr.mxu0 0.0
    %5365 = vmatpush1.xpose.msra.mxu0 0.0
    %5366 = vmatprep.subr.mxu0 0.0
    %5367 = vmatpush1.xpose.msra.mxu0 0.0
    %5368 = vmatprep.subr.mxu0 0.0
    %5369 = vmatpush1.xpose.msra.mxu0 0.0
    %5370 = vmatprep.subr.mxu0 0.0
    %5371 = vmatpush1.xpose.msra.mxu0 0.0
    %5372 = vmatprep.subr.mxu0 0.0
    %5373 = vmatpush1.xpose.msra.mxu0 0.0
    %5374 = vmatprep.subr.mxu0 0.0
    %5375 = vmatpush1.xpose.msra.mxu0 0.0
    %5376 = vmatprep.subr.mxu0 0.0
    %5377 = vmatpush1.xpose.msra.mxu0 0.0
    %5378 = vmatprep.subr.mxu0 0.0
    %5379 = vmatpush1.xpose.msra.mxu0 0.0
    %5380 = vmatprep.subr.mxu0 0.0
    %5381 = vmatpush1.xpose.msra.mxu0 0.0
    %5382 = vmatprep.subr.mxu0 0.0
    %5383 = vmatpush1.xpose.msra.mxu0 0.0
    %5384 = vmatprep.subr.mxu0 0.0
    %5385 = vmatpush1.xpose.msra.mxu0 0.0
    %5386 = vmatprep.subr.mxu0 0.0
    %5387 = vmatpush1.xpose.msra.mxu0 0.0
    %5388 = vmatprep.subr.mxu0 0.0
    %5389 = vmatpush1.xpose.msra.mxu0 0.0
    %5390 = vmatprep.subr.mxu0 0.0
    %5391 = vmatpush1.xpose.msra.mxu0 0.0
    %5392 = vmatprep.subr.mxu0 0.0
    %5393 = vmatpush1.xpose.msra.mxu0 0.0
    %5394 = vmatprep.subr.mxu0 0.0
    %5395 = vmatpush1.xpose.msra.mxu0 0.0
    %5396 = vmatprep.subr.mxu0 0.0
    %5397 = vmatpush1.xpose.msra.mxu0 0.0
    %5398 = vmatprep.mubr.f32.mxu0 0.0
    %5399 = vmatmul.mubr.f32.gmra.mrb[0].mxu0 %v5326
    %v5400 = vpop.f32.mrb[0].mxu0
    %v5401 = vadd.f32 0.0, %v5400
    %v5402 = vpop.f32.mrb[0].mxu0
    %5403 = vmatprep.mubr.f32.mxu0 0.0
    %5404 = vmatmul.mubr.f32.gmra.mrb[0].mxu0 %v5328
    %v5405 = vpop.f32.mrb[0].mxu0
    %v5406 = vadd.f32 0.0, %v5405
    %v5407 = vpop.f32.mrb[0].mxu0
    %5408 = vdwg.mxu0
    %5409 = vrot.lane.b32.xlu0 %v1574, 120
    %v5410 = vpop.permute.xlu0 %5409
    %5411 = vrot.lane.b32.xlu0 %v1579, 120
    %v5412 = vpop.permute.xlu0 %5411
    %5413 = vrot.lane.b32.xlu0 %v1574, 104
    %v5414 = vpop.permute.xlu0 %5413
    %5415 = vrot.lane.b32.xlu0 %v1579, 104
    %v5416 = vpop.permute.xlu0 %5415
    %v5417 = vsel %vm1648, %v5410, 0
    %v5419 = vsel %vm1648, %v5412, 0
    %v5421 = vsel %vm1648, %v5414, 0
    %v5423 = vsel %vm1648, %v5416, 0
    %5425 = vmatprep.subr.mxu0 0.0
    %5426 = vmatpush1.xpose.msra.mxu0 %v5421
    %5427 = vmatprep.subr.mxu0 0.0
    %5428 = vmatpush1.xpose.msra.mxu0 %v5423
    %5429 = vmatprep.subr.mxu0 0.0
    %5430 = vmatpush1.xpose.msra.mxu0 0.0
    %5431 = vmatprep.subr.mxu0 0.0
    %5432 = vmatpush1.xpose.msra.mxu0 0.0
    %5433 = vmatprep.subr.mxu0 0.0
    %5434 = vmatpush1.xpose.msra.mxu0 0.0
    %5435 = vmatprep.subr.mxu0 0.0
    %5436 = vmatpush1.xpose.msra.mxu0 0.0
    %5437 = vmatprep.subr.mxu0 0.0
    %5438 = vmatpush1.xpose.msra.mxu0 0.0
    %5439 = vmatprep.subr.mxu0 0.0
    %5440 = vmatpush1.xpose.msra.mxu0 0.0
    %5441 = vmatprep.subr.mxu0 0.0
    %5442 = vmatpush1.xpose.msra.mxu0 0.0
    %5443 = vmatprep.subr.mxu0 0.0
    %5444 = vmatpush1.xpose.msra.mxu0 0.0
    %5445 = vmatprep.subr.mxu0 0.0
    %5446 = vmatpush1.xpose.msra.mxu0 0.0
    %5447 = vmatprep.subr.mxu0 0.0
    %5448 = vmatpush1.xpose.msra.mxu0 0.0
    %5449 = vmatprep.subr.mxu0 0.0
    %5450 = vmatpush1.xpose.msra.mxu0 0.0
    %5451 = vmatprep.subr.mxu0 0.0
    %5452 = vmatpush1.xpose.msra.mxu0 0.0
    %5453 = vmatprep.subr.mxu0 0.0
    %5454 = vmatpush1.xpose.msra.mxu0 0.0
    %5455 = vmatprep.subr.mxu0 0.0
    %5456 = vmatpush1.xpose.msra.mxu0 0.0
    %5457 = vmatprep.subr.mxu0 0.0
    %5458 = vmatpush1.xpose.msra.mxu0 0.0
    %5459 = vmatprep.subr.mxu0 0.0
    %5460 = vmatpush1.xpose.msra.mxu0 0.0
    %5461 = vmatprep.subr.mxu0 0.0
    %5462 = vmatpush1.xpose.msra.mxu0 0.0
    %5463 = vmatprep.subr.mxu0 0.0
    %5464 = vmatpush1.xpose.msra.mxu0 0.0
    %5465 = vmatprep.subr.mxu0 0.0
    %5466 = vmatpush1.xpose.msra.mxu0 0.0
    %5467 = vmatprep.subr.mxu0 0.0
    %5468 = vmatpush1.xpose.msra.mxu0 0.0
    %5469 = vmatprep.subr.mxu0 0.0
    %5470 = vmatpush1.xpose.msra.mxu0 0.0
    %5471 = vmatprep.subr.mxu0 0.0
    %5472 = vmatpush1.xpose.msra.mxu0 0.0
    %5473 = vmatprep.subr.mxu0 0.0
    %5474 = vmatpush1.xpose.msra.mxu0 0.0
    %5475 = vmatprep.subr.mxu0 0.0
    %5476 = vmatpush1.xpose.msra.mxu0 0.0
    %5477 = vmatprep.subr.mxu0 0.0
    %5478 = vmatpush1.xpose.msra.mxu0 0.0
    %5479 = vmatprep.subr.mxu0 0.0
    %5480 = vmatpush1.xpose.msra.mxu0 0.0
    %5481 = vmatprep.subr.mxu0 0.0
    %5482 = vmatpush1.xpose.msra.mxu0 0.0
    %5483 = vmatprep.subr.mxu0 0.0
    %5484 = vmatpush1.xpose.msra.mxu0 0.0
    %5485 = vmatprep.subr.mxu0 0.0
    %5486 = vmatpush1.xpose.msra.mxu0 0.0
    %5487 = vmatprep.subr.mxu0 0.0
    %5488 = vmatpush1.xpose.msra.mxu0 0.0
    %5489 = vmatprep.mubr.f32.mxu0 0.0
    %5490 = vmatmul.mubr.f32.gmra.mrb[0].mxu0 %v5417
    %v5491 = vpop.f32.mrb[0].mxu0
    %v5492 = vadd.f32 0.0, %v5491
    %v5493 = vpop.f32.mrb[0].mxu0
    %5494 = vmatprep.mubr.f32.mxu0 0.0
    %5495 = vmatmul.mubr.f32.gmra.mrb[0].mxu0 %v5419
    %v5496 = vpop.f32.mrb[0].mxu0
    %v5497 = vadd.f32 0.0, %v5496
    %v5498 = vpop.f32.mrb[0].mxu0
    %5499 = vdwg.mxu0
    %5500 = vrot.lane.b32.xlu0 %v1584, 120
    %v5501 = vpop.permute.xlu0 %5500
    %5502 = vrot.lane.b32.xlu0 %v1589, 120
    %v5503 = vpop.permute.xlu0 %5502
    %5504 = vrot.lane.b32.xlu0 %v1584, 104
    %v5505 = vpop.permute.xlu0 %5504
    %5506 = vrot.lane.b32.xlu0 %v1589, 104
    %v5507 = vpop.permute.xlu0 %5506
    %v5508 = vsel %vm1648, %v5501, 0
    %v5510 = vsel %vm1648, %v5503, 0
    %v5512 = vsel %vm1648, %v5505, 0
    %v5514 = vsel %vm1648, %v5507, 0
    %5516 = vmatprep.subr.mxu0 0.0
    %5517 = vmatpush1.xpose.msra.mxu0 %v5512
    %5518 = vmatprep.subr.mxu0 0.0
    %5519 = vmatpush1.xpose.msra.mxu0 %v5514
    %5520 = vmatprep.subr.mxu0 0.0
    %5521 = vmatpush1.xpose.msra.mxu0 0.0
    %5522 = vmatprep.subr.mxu0 0.0
    %5523 = vmatpush1.xpose.msra.mxu0 0.0
    %5524 = vmatprep.subr.mxu0 0.0
    %5525 = vmatpush1.xpose.msra.mxu0 0.0
    %5526 = vmatprep.subr.mxu0 0.0
    %5527 = vmatpush1.xpose.msra.mxu0 0.0
    %5528 = vmatprep.subr.mxu0 0.0
    %5529 = vmatpush1.xpose.msra.mxu0 0.0
    %5530 = vmatprep.subr.mxu0 0.0
    %5531 = vmatpush1.xpose.msra.mxu0 0.0
    %5532 = vmatprep.subr.mxu0 0.0
    %5533 = vmatpush1.xpose.msra.mxu0 0.0
    %5534 = vmatprep.subr.mxu0 0.0
    %5535 = vmatpush1.xpose.msra.mxu0 0.0
    %5536 = vmatprep.subr.mxu0 0.0
    %5537 = vmatpush1.xpose.msra.mxu0 0.0
    %5538 = vmatprep.subr.mxu0 0.0
    %5539 = vmatpush1.xpose.msra.mxu0 0.0
    %5540 = vmatprep.subr.mxu0 0.0
    %5541 = vmatpush1.xpose.msra.mxu0 0.0
    %5542 = vmatprep.subr.mxu0 0.0
    %5543 = vmatpush1.xpose.msra.mxu0 0.0
    %5544 = vmatprep.subr.mxu0 0.0
    %5545 = vmatpush1.xpose.msra.mxu0 0.0
    %5546 = vmatprep.subr.mxu0 0.0
    %5547 = vmatpush1.xpose.msra.mxu0 0.0
    %5548 = vmatprep.subr.mxu0 0.0
    %5549 = vmatpush1.xpose.msra.mxu0 0.0
    %5550 = vmatprep.subr.mxu0 0.0
    %5551 = vmatpush1.xpose.msra.mxu0 0.0
    %5552 = vmatprep.subr.mxu0 0.0
    %5553 = vmatpush1.xpose.msra.mxu0 0.0
    %5554 = vmatprep.subr.mxu0 0.0
    %5555 = vmatpush1.xpose.msra.mxu0 0.0
    %5556 = vmatprep.subr.mxu0 0.0
    %5557 = vmatpush1.xpose.msra.mxu0 0.0
    %5558 = vmatprep.subr.mxu0 0.0
    %5559 = vmatpush1.xpose.msra.mxu0 0.0
    %5560 = vmatprep.subr.mxu0 0.0
    %5561 = vmatpush1.xpose.msra.mxu0 0.0
    %5562 = vmatprep.subr.mxu0 0.0
    %5563 = vmatpush1.xpose.msra.mxu0 0.0
    %5564 = vmatprep.subr.mxu0 0.0
    %5565 = vmatpush1.xpose.msra.mxu0 0.0
    %5566 = vmatprep.subr.mxu0 0.0
    %5567 = vmatpush1.xpose.msra.mxu0 0.0
    %5568 = vmatprep.subr.mxu0 0.0
    %5569 = vmatpush1.xpose.msra.mxu0 0.0
    %5570 = vmatprep.subr.mxu0 0.0
    %5571 = vmatpush1.xpose.msra.mxu0 0.0
    %5572 = vmatprep.subr.mxu0 0.0
    %5573 = vmatpush1.xpose.msra.mxu0 0.0
    %5574 = vmatprep.subr.mxu0 0.0
    %5575 = vmatpush1.xpose.msra.mxu0 0.0
    %5576 = vmatprep.subr.mxu0 0.0
    %5577 = vmatpush1.xpose.msra.mxu0 0.0
    %5578 = vmatprep.subr.mxu0 0.0
    %5579 = vmatpush1.xpose.msra.mxu0 0.0
    %5580 = vmatprep.mubr.f32.mxu0 0.0
    %5581 = vmatmul.mubr.f32.gmra.mrb[0].mxu0 %v5508
    %v5582 = vpop.f32.mrb[0].mxu0
    %v5583 = vadd.f32 0.0, %v5582
    %v5584 = vpop.f32.mrb[0].mxu0
    %5585 = vmatprep.mubr.f32.mxu0 0.0
    %5586 = vmatmul.mubr.f32.gmra.mrb[0].mxu0 %v5510
    %v5587 = vpop.f32.mrb[0].mxu0
    %v5588 = vadd.f32 0.0, %v5587
    %v5589 = vpop.f32.mrb[0].mxu0
    %5590 = vdwg.mxu0
    %5591 = vrot.lane.b32.xlu0 %v1594, 120
    %v5592 = vpop.permute.xlu0 %5591
    %5593 = vrot.lane.b32.xlu0 %v1599, 120
    %v5594 = vpop.permute.xlu0 %5593
    %5595 = vrot.lane.b32.xlu0 %v1594, 104
    %v5596 = vpop.permute.xlu0 %5595
    %5597 = vrot.lane.b32.xlu0 %v1599, 104
    %v5598 = vpop.permute.xlu0 %5597
    %v5599 = vsel %vm1648, %v5592, 0
    %v5601 = vsel %vm1648, %v5594, 0
    %v5603 = vsel %vm1648, %v5596, 0
    %v5605 = vsel %vm1648, %v5598, 0
    %5607 = vmatprep.subr.mxu0 0.0
    %5608 = vmatpush1.xpose.msra.mxu0 %v5603
    %5609 = vmatprep.subr.mxu0 0.0
    %5610 = vmatpush1.xpose.msra.mxu0 %v5605
    %5611 = vmatprep.subr.mxu0 0.0
    %5612 = vmatpush1.xpose.msra.mxu0 0.0
    %5613 = vmatprep.subr.mxu0 0.0
    %5614 = vmatpush1.xpose.msra.mxu0 0.0
    %5615 = vmatprep.subr.mxu0 0.0
    %5616 = vmatpush1.xpose.msra.mxu0 0.0
    %5617 = vmatprep.subr.mxu0 0.0
    %5618 = vmatpush1.xpose.msra.mxu0 0.0
    %5619 = vmatprep.subr.mxu0 0.0
    %5620 = vmatpush1.xpose.msra.mxu0 0.0
    %5621 = vmatprep.subr.mxu0 0.0
    %5622 = vmatpush1.xpose.msra.mxu0 0.0
    %5623 = vmatprep.subr.mxu0 0.0
    %5624 = vmatpush1.xpose.msra.mxu0 0.0
    %5625 = vmatprep.subr.mxu0 0.0
    %5626 = vmatpush1.xpose.msra.mxu0 0.0
    %5627 = vmatprep.subr.mxu0 0.0
    %5628 = vmatpush1.xpose.msra.mxu0 0.0
    %5629 = vmatprep.subr.mxu0 0.0
    %5630 = vmatpush1.xpose.msra.mxu0 0.0
    %5631 = vmatprep.subr.mxu0 0.0
    %5632 = vmatpush1.xpose.msra.mxu0 0.0
    %5633 = vmatprep.subr.mxu0 0.0
    %5634 = vmatpush1.xpose.msra.mxu0 0.0
    %5635 = vmatprep.subr.mxu0 0.0
    %5636 = vmatpush1.xpose.msra.mxu0 0.0
    %5637 = vmatprep.subr.mxu0 0.0
    %5638 = vmatpush1.xpose.msra.mxu0 0.0
    %5639 = vmatprep.subr.mxu0 0.0
    %5640 = vmatpush1.xpose.msra.mxu0 0.0
    %5641 = vmatprep.subr.mxu0 0.0
    %5642 = vmatpush1.xpose.msra.mxu0 0.0
    %5643 = vmatprep.subr.mxu0 0.0
    %5644 = vmatpush1.xpose.msra.mxu0 0.0
    %5645 = vmatprep.subr.mxu0 0.0
    %5646 = vmatpush1.xpose.msra.mxu0 0.0
    %5647 = vmatprep.subr.mxu0 0.0
    %5648 = vmatpush1.xpose.msra.mxu0 0.0
    %5649 = vmatprep.subr.mxu0 0.0
    %5650 = vmatpush1.xpose.msra.mxu0 0.0
    %5651 = vmatprep.subr.mxu0 0.0
    %5652 = vmatpush1.xpose.msra.mxu0 0.0
    %5653 = vmatprep.subr.mxu0 0.0
    %5654 = vmatpush1.xpose.msra.mxu0 0.0
    %5655 = vmatprep.subr.mxu0 0.0
    %5656 = vmatpush1.xpose.msra.mxu0 0.0
    %5657 = vmatprep.subr.mxu0 0.0
    %5658 = vmatpush1.xpose.msra.mxu0 0.0
    %5659 = vmatprep.subr.mxu0 0.0
    %5660 = vmatpush1.xpose.msra.mxu0 0.0
    %5661 = vmatprep.subr.mxu0 0.0
    %5662 = vmatpush1.xpose.msra.mxu0 0.0
    %5663 = vmatprep.subr.mxu0 0.0
    %5664 = vmatpush1.xpose.msra.mxu0 0.0
    %5665 = vmatprep.subr.mxu0 0.0
    %5666 = vmatpush1.xpose.msra.mxu0 0.0
    %5667 = vmatprep.subr.mxu0 0.0
    %5668 = vmatpush1.xpose.msra.mxu0 0.0
    %5669 = vmatprep.subr.mxu0 0.0
    %5670 = vmatpush1.xpose.msra.mxu0 0.0
    %5671 = vmatprep.mubr.f32.mxu0 0.0
    %5672 = vmatmul.mubr.f32.gmra.mrb[0].mxu0 %v5599
    %v5673 = vpop.f32.mrb[0].mxu0
    %v5674 = vadd.f32 0.0, %v5673
    %v5675 = vpop.f32.mrb[0].mxu0
    %5676 = vmatprep.mubr.f32.mxu0 0.0
    %5677 = vmatmul.mubr.f32.gmra.mrb[0].mxu0 %v5601
    %v5678 = vpop.f32.mrb[0].mxu0
    %v5679 = vadd.f32 0.0, %v5678
    %v5680 = vpop.f32.mrb[0].mxu0
    %5681 = vdwg.mxu0
    %5682 = vrot.lane.b32.xlu0 %v1604, 120
    %v5683 = vpop.permute.xlu0 %5682
    %5684 = vrot.lane.b32.xlu0 %v1609, 120
    %v5685 = vpop.permute.xlu0 %5684
    %5686 = vrot.lane.b32.xlu0 %v1604, 104
    %v5687 = vpop.permute.xlu0 %5686
    %5688 = vrot.lane.b32.xlu0 %v1609, 104
    %v5689 = vpop.permute.xlu0 %5688
    %v5690 = vsel %vm1648, %v5683, 0
    %v5692 = vsel %vm1648, %v5685, 0
    %v5694 = vsel %vm1648, %v5687, 0
    %v5696 = vsel %vm1648, %v5689, 0
    %5698 = vmatprep.subr.mxu0 0.0
    %5699 = vmatpush1.xpose.msra.mxu0 %v5694
    %5700 = vmatprep.subr.mxu0 0.0
    %5701 = vmatpush1.xpose.msra.mxu0 %v5696
    %5702 = vmatprep.subr.mxu0 0.0
    %5703 = vmatpush1.xpose.msra.mxu0 0.0
    %5704 = vmatprep.subr.mxu0 0.0
    %5705 = vmatpush1.xpose.msra.mxu0 0.0
    %5706 = vmatprep.subr.mxu0 0.0
    %5707 = vmatpush1.xpose.msra.mxu0 0.0
    %5708 = vmatprep.subr.mxu0 0.0
    %5709 = vmatpush1.xpose.msra.mxu0 0.0
    %5710 = vmatprep.subr.mxu0 0.0
    %5711 = vmatpush1.xpose.msra.mxu0 0.0
    %5712 = vmatprep.subr.mxu0 0.0
    %5713 = vmatpush1.xpose.msra.mxu0 0.0
    %5714 = vmatprep.subr.mxu0 0.0
    %5715 = vmatpush1.xpose.msra.mxu0 0.0
    %5716 = vmatprep.subr.mxu0 0.0
    %5717 = vmatpush1.xpose.msra.mxu0 0.0
    %5718 = vmatprep.subr.mxu0 0.0
    %5719 = vmatpush1.xpose.msra.mxu0 0.0
    %5720 = vmatprep.subr.mxu0 0.0
    %5721 = vmatpush1.xpose.msra.mxu0 0.0
    %5722 = vmatprep.subr.mxu0 0.0
    %5723 = vmatpush1.xpose.msra.mxu0 0.0
    %5724 = vmatprep.subr.mxu0 0.0
    %5725 = vmatpush1.xpose.msra.mxu0 0.0
    %5726 = vmatprep.subr.mxu0 0.0
    %5727 = vmatpush1.xpose.msra.mxu0 0.0
    %5728 = vmatprep.subr.mxu0 0.0
    %5729 = vmatpush1.xpose.msra.mxu0 0.0
    %5730 = vmatprep.subr.mxu0 0.0
    %5731 = vmatpush1.xpose.msra.mxu0 0.0
    %5732 = vmatprep.subr.mxu0 0.0
    %5733 = vmatpush1.xpose.msra.mxu0 0.0
    %5734 = vmatprep.subr.mxu0 0.0
    %5735 = vmatpush1.xpose.msra.mxu0 0.0
    %5736 = vmatprep.subr.mxu0 0.0
    %5737 = vmatpush1.xpose.msra.mxu0 0.0
    %5738 = vmatprep.subr.mxu0 0.0
    %5739 = vmatpush1.xpose.msra.mxu0 0.0
    %5740 = vmatprep.subr.mxu0 0.0
    %5741 = vmatpush1.xpose.msra.mxu0 0.0
    %5742 = vmatprep.subr.mxu0 0.0
    %5743 = vmatpush1.xpose.msra.mxu0 0.0
    %5744 = vmatprep.subr.mxu0 0.0
    %5745 = vmatpush1.xpose.msra.mxu0 0.0
    %5746 = vmatprep.subr.mxu0 0.0
    %5747 = vmatpush1.xpose.msra.mxu0 0.0
    %5748 = vmatprep.subr.mxu0 0.0
    %5749 = vmatpush1.xpose.msra.mxu0 0.0
    %5750 = vmatprep.subr.mxu0 0.0
    %5751 = vmatpush1.xpose.msra.mxu0 0.0
    %5752 = vmatprep.subr.mxu0 0.0
    %5753 = vmatpush1.xpose.msra.mxu0 0.0
    %5754 = vmatprep.subr.mxu0 0.0
    %5755 = vmatpush1.xpose.msra.mxu0 0.0
    %5756 = vmatprep.subr.mxu0 0.0
    %5757 = vmatpush1.xpose.msra.mxu0 0.0
    %5758 = vmatprep.subr.mxu0 0.0
    %5759 = vmatpush1.xpose.msra.mxu0 0.0
    %5760 = vmatprep.subr.mxu0 0.0
    %5761 = vmatpush1.xpose.msra.mxu0 0.0
    %5762 = vmatprep.mubr.f32.mxu0 0.0
    %5763 = vmatmul.mubr.f32.gmra.mrb[0].mxu0 %v5690
    %v5764 = vpop.f32.mrb[0].mxu0
    %v5765 = vadd.f32 0.0, %v5764
    %v5766 = vpop.f32.mrb[0].mxu0
    %5767 = vmatprep.mubr.f32.mxu0 0.0
    %5768 = vmatmul.mubr.f32.gmra.mrb[0].mxu0 %v5692
    %v5769 = vpop.f32.mrb[0].mxu0
    %v5770 = vadd.f32 0.0, %v5769
    %v5771 = vpop.f32.mrb[0].mxu0
    %5772 = vdwg.mxu0
    %5773 = vrot.lane.b32.xlu0 %v1614, 120
    %v5774 = vpop.permute.xlu0 %5773
    %5775 = vrot.lane.b32.xlu0 %v1619, 120
    %v5776 = vpop.permute.xlu0 %5775
    %5777 = vrot.lane.b32.xlu0 %v1614, 104
    %v5778 = vpop.permute.xlu0 %5777
    %5779 = vrot.lane.b32.xlu0 %v1619, 104
    %v5780 = vpop.permute.xlu0 %5779
    %v5781 = vsel %vm1648, %v5774, 0
    %v5783 = vsel %vm1648, %v5776, 0
    %v5785 = vsel %vm1648, %v5778, 0
    %v5787 = vsel %vm1648, %v5780, 0
    %5789 = vmatprep.subr.mxu0 0.0
    %5790 = vmatpush1.xpose.msra.mxu0 %v5785
    %5791 = vmatprep.subr.mxu0 0.0
    %5792 = vmatpush1.xpose.msra.mxu0 %v5787
    %5793 = vmatprep.subr.mxu0 0.0
    %5794 = vmatpush1.xpose.msra.mxu0 0.0
    %5795 = vmatprep.subr.mxu0 0.0
    %5796 = vmatpush1.xpose.msra.mxu0 0.0
    %5797 = vmatprep.subr.mxu0 0.0
    %5798 = vmatpush1.xpose.msra.mxu0 0.0
    %5799 = vmatprep.subr.mxu0 0.0
    %5800 = vmatpush1.xpose.msra.mxu0 0.0
    %5801 = vmatprep.subr.mxu0 0.0
    %5802 = vmatpush1.xpose.msra.mxu0 0.0
    %5803 = vmatprep.subr.mxu0 0.0
    %5804 = vmatpush1.xpose.msra.mxu0 0.0
    %5805 = vmatprep.subr.mxu0 0.0
    %5806 = vmatpush1.xpose.msra.mxu0 0.0
    %5807 = vmatprep.subr.mxu0 0.0
    %5808 = vmatpush1.xpose.msra.mxu0 0.0
    %5809 = vmatprep.subr.mxu0 0.0
    %5810 = vmatpush1.xpose.msra.mxu0 0.0
    %5811 = vmatprep.subr.mxu0 0.0
    %5812 = vmatpush1.xpose.msra.mxu0 0.0
    %5813 = vmatprep.subr.mxu0 0.0
    %5814 = vmatpush1.xpose.msra.mxu0 0.0
    %5815 = vmatprep.subr.mxu0 0.0
    %5816 = vmatpush1.xpose.msra.mxu0 0.0
    %5817 = vmatprep.subr.mxu0 0.0
    %5818 = vmatpush1.xpose.msra.mxu0 0.0
    %5819 = vmatprep.subr.mxu0 0.0
    %5820 = vmatpush1.xpose.msra.mxu0 0.0
    %5821 = vmatprep.subr.mxu0 0.0
    %5822 = vmatpush1.xpose.msra.mxu0 0.0
    %5823 = vmatprep.subr.mxu0 0.0
    %5824 = vmatpush1.xpose.msra.mxu0 0.0
    %5825 = vmatprep.subr.mxu0 0.0
    %5826 = vmatpush1.xpose.msra.mxu0 0.0
    %5827 = vmatprep.subr.mxu0 0.0
    %5828 = vmatpush1.xpose.msra.mxu0 0.0
    %5829 = vmatprep.subr.mxu0 0.0
    %5830 = vmatpush1.xpose.msra.mxu0 0.0
    %5831 = vmatprep.subr.mxu0 0.0
    %5832 = vmatpush1.xpose.msra.mxu0 0.0
    %5833 = vmatprep.subr.mxu0 0.0
    %5834 = vmatpush1.xpose.msra.mxu0 0.0
    %5835 = vmatprep.subr.mxu0 0.0
    %5836 = vmatpush1.xpose.msra.mxu0 0.0
    %5837 = vmatprep.subr.mxu0 0.0
    %5838 = vmatpush1.xpose.msra.mxu0 0.0
    %5839 = vmatprep.subr.mxu0 0.0
    %5840 = vmatpush1.xpose.msra.mxu0 0.0
    %5841 = vmatprep.subr.mxu0 0.0
    %5842 = vmatpush1.xpose.msra.mxu0 0.0
    %5843 = vmatprep.subr.mxu0 0.0
    %5844 = vmatpush1.xpose.msra.mxu0 0.0
    %5845 = vmatprep.subr.mxu0 0.0
    %5846 = vmatpush1.xpose.msra.mxu0 0.0
    %5847 = vmatprep.subr.mxu0 0.0
    %5848 = vmatpush1.xpose.msra.mxu0 0.0
    %5849 = vmatprep.subr.mxu0 0.0
    %5850 = vmatpush1.xpose.msra.mxu0 0.0
    %5851 = vmatprep.subr.mxu0 0.0
    %5852 = vmatpush1.xpose.msra.mxu0 0.0
    %5853 = vmatprep.mubr.f32.mxu0 0.0
    %5854 = vmatmul.mubr.f32.gmra.mrb[0].mxu0 %v5781
    %v5855 = vpop.f32.mrb[0].mxu0
    %v5856 = vadd.f32 0.0, %v5855
    %v5857 = vpop.f32.mrb[0].mxu0
    %5858 = vmatprep.mubr.f32.mxu0 0.0
    %5859 = vmatmul.mubr.f32.gmra.mrb[0].mxu0 %v5783
    %v5860 = vpop.f32.mrb[0].mxu0
    %v5861 = vadd.f32 0.0, %v5860
    %v5862 = vpop.f32.mrb[0].mxu0
    %5863 = vdwg.mxu0
    %5864 = vrot.lane.b32.xlu0 %v1624, 120
    %v5865 = vpop.permute.xlu0 %5864
    %5866 = vrot.lane.b32.xlu0 %v1629, 120
    %v5867 = vpop.permute.xlu0 %5866
    %5868 = vrot.lane.b32.xlu0 %v1624, 104
    %v5869 = vpop.permute.xlu0 %5868
    %5870 = vrot.lane.b32.xlu0 %v1629, 104
    %v5871 = vpop.permute.xlu0 %5870
    %v5872 = vsel %vm1648, %v5865, 0
    %v5874 = vsel %vm1648, %v5867, 0
    %v5876 = vsel %vm1648, %v5869, 0
    %v5878 = vsel %vm1648, %v5871, 0
    %5880 = vmatprep.subr.mxu0 0.0
    %5881 = vmatpush1.xpose.msra.mxu0 %v5876
    %5882 = vmatprep.subr.mxu0 0.0
    %5883 = vmatpush1.xpose.msra.mxu0 %v5878
    %5884 = vmatprep.subr.mxu0 0.0
    %5885 = vmatpush1.xpose.msra.mxu0 0.0
    %5886 = vmatprep.subr.mxu0 0.0
    %5887 = vmatpush1.xpose.msra.mxu0 0.0
    %5888 = vmatprep.subr.mxu0 0.0
    %5889 = vmatpush1.xpose.msra.mxu0 0.0
    %5890 = vmatprep.subr.mxu0 0.0
    %5891 = vmatpush1.xpose.msra.mxu0 0.0
    %5892 = vmatprep.subr.mxu0 0.0
    %5893 = vmatpush1.xpose.msra.mxu0 0.0
    %5894 = vmatprep.subr.mxu0 0.0
    %5895 = vmatpush1.xpose.msra.mxu0 0.0
    %5896 = vmatprep.subr.mxu0 0.0
    %5897 = vmatpush1.xpose.msra.mxu0 0.0
    %5898 = vmatprep.subr.mxu0 0.0
    %5899 = vmatpush1.xpose.msra.mxu0 0.0
    %5900 = vmatprep.subr.mxu0 0.0
    %5901 = vmatpush1.xpose.msra.mxu0 0.0
    %5902 = vmatprep.subr.mxu0 0.0
    %5903 = vmatpush1.xpose.msra.mxu0 0.0
    %5904 = vmatprep.subr.mxu0 0.0
    %5905 = vmatpush1.xpose.msra.mxu0 0.0
    %5906 = vmatprep.subr.mxu0 0.0
    %5907 = vmatpush1.xpose.msra.mxu0 0.0
    %5908 = vmatprep.subr.mxu0 0.0
    %5909 = vmatpush1.xpose.msra.mxu0 0.0
    %5910 = vmatprep.subr.mxu0 0.0
    %5911 = vmatpush1.xpose.msra.mxu0 0.0
    %5912 = vmatprep.subr.mxu0 0.0
    %5913 = vmatpush1.xpose.msra.mxu0 0.0
    %5914 = vmatprep.subr.mxu0 0.0
    %5915 = vmatpush1.xpose.msra.mxu0 0.0
    %5916 = vmatprep.subr.mxu0 0.0
    %5917 = vmatpush1.xpose.msra.mxu0 0.0
    %5918 = vmatprep.subr.mxu0 0.0
    %5919 = vmatpush1.xpose.msra.mxu0 0.0
    %5920 = vmatprep.subr.mxu0 0.0
    %5921 = vmatpush1.xpose.msra.mxu0 0.0
    %5922 = vmatprep.subr.mxu0 0.0
    %5923 = vmatpush1.xpose.msra.mxu0 0.0
    %5924 = vmatprep.subr.mxu0 0.0
    %5925 = vmatpush1.xpose.msra.mxu0 0.0
    %5926 = vmatprep.subr.mxu0 0.0
    %5927 = vmatpush1.xpose.msra.mxu0 0.0
    %5928 = vmatprep.subr.mxu0 0.0
    %5929 = vmatpush1.xpose.msra.mxu0 0.0
    %5930 = vmatprep.subr.mxu0 0.0
    %5931 = vmatpush1.xpose.msra.mxu0 0.0
    %5932 = vmatprep.subr.mxu0 0.0
    %5933 = vmatpush1.xpose.msra.mxu0 0.0
    %5934 = vmatprep.subr.mxu0 0.0
    %5935 = vmatpush1.xpose.msra.mxu0 0.0
    %5936 = vmatprep.subr.mxu0 0.0
    %5937 = vmatpush1.xpose.msra.mxu0 0.0
    %5938 = vmatprep.subr.mxu0 0.0
    %5939 = vmatpush1.xpose.msra.mxu0 0.0
    %5940 = vmatprep.subr.mxu0 0.0
    %5941 = vmatpush1.xpose.msra.mxu0 0.0
    %5942 = vmatprep.subr.mxu0 0.0
    %5943 = vmatpush1.xpose.msra.mxu0 0.0
    %5944 = vmatprep.mubr.f32.mxu0 0.0
    %5945 = vmatmul.mubr.f32.gmra.mrb[0].mxu0 %v5872
    %v5946 = vpop.f32.mrb[0].mxu0
    %v5947 = vadd.f32 0.0, %v5946
    %v5948 = vpop.f32.mrb[0].mxu0
    %5949 = vmatprep.mubr.f32.mxu0 0.0
    %5950 = vmatmul.mubr.f32.gmra.mrb[0].mxu0 %v5874
    %v5951 = vpop.f32.mrb[0].mxu0
    %v5952 = vadd.f32 0.0, %v5951
    %v5953 = vpop.f32.mrb[0].mxu0
    %5954 = vdwg.mxu0
    %5955 = vrot.lane.b32.xlu0 %v1634, 120
    %v5956 = vpop.permute.xlu0 %5955
    %5957 = vrot.lane.b32.xlu0 %v1639, 120
    %v5958 = vpop.permute.xlu0 %5957
    %5959 = vrot.lane.b32.xlu0 %v1634, 104
    %v5960 = vpop.permute.xlu0 %5959
    %5961 = vrot.lane.b32.xlu0 %v1639, 104
    %v5962 = vpop.permute.xlu0 %5961
    %v5963 = vsel %vm1648, %v5956, 0
    %v5965 = vsel %vm1648, %v5958, 0
    %v5967 = vsel %vm1648, %v5960, 0
    %v5969 = vsel %vm1648, %v5962, 0
    %5971 = vmatprep.subr.mxu0 0.0
    %5972 = vmatpush1.xpose.msra.mxu0 %v5967
    %5973 = vmatprep.subr.mxu0 0.0
    %5974 = vmatpush1.xpose.msra.mxu0 %v5969
    %5975 = vmatprep.subr.mxu0 0.0
    %5976 = vmatpush1.xpose.msra.mxu0 0.0
    %5977 = vmatprep.subr.mxu0 0.0
    %5978 = vmatpush1.xpose.msra.mxu0 0.0
    %5979 = vmatprep.subr.mxu0 0.0
    %5980 = vmatpush1.xpose.msra.mxu0 0.0
    %5981 = vmatprep.subr.mxu0 0.0
    %5982 = vmatpush1.xpose.msra.mxu0 0.0
    %5983 = vmatprep.subr.mxu0 0.0
    %5984 = vmatpush1.xpose.msra.mxu0 0.0
    %5985 = vmatprep.subr.mxu0 0.0
    %5986 = vmatpush1.xpose.msra.mxu0 0.0
    %5987 = vmatprep.subr.mxu0 0.0
    %5988 = vmatpush1.xpose.msra.mxu0 0.0
    %5989 = vmatprep.subr.mxu0 0.0
    %5990 = vmatpush1.xpose.msra.mxu0 0.0
    %5991 = vmatprep.subr.mxu0 0.0
    %5992 = vmatpush1.xpose.msra.mxu0 0.0
    %5993 = vmatprep.subr.mxu0 0.0
    %5994 = vmatpush1.xpose.msra.mxu0 0.0
    %5995 = vmatprep.subr.mxu0 0.0
    %5996 = vmatpush1.xpose.msra.mxu0 0.0
    %5997 = vmatprep.subr.mxu0 0.0
    %5998 = vmatpush1.xpose.msra.mxu0 0.0
    %5999 = vmatprep.subr.mxu0 0.0
    %6000 = vmatpush1.xpose.msra.mxu0 0.0
    %6001 = vmatprep.subr.mxu0 0.0
    %6002 = vmatpush1.xpose.msra.mxu0 0.0
    %6003 = vmatprep.subr.mxu0 0.0
    %6004 = vmatpush1.xpose.msra.mxu0 0.0
    %6005 = vmatprep.subr.mxu0 0.0
    %6006 = vmatpush1.xpose.msra.mxu0 0.0
    %6007 = vmatprep.subr.mxu0 0.0
    %6008 = vmatpush1.xpose.msra.mxu0 0.0
    %6009 = vmatprep.subr.mxu0 0.0
    %6010 = vmatpush1.xpose.msra.mxu0 0.0
    %6011 = vmatprep.subr.mxu0 0.0
    %6012 = vmatpush1.xpose.msra.mxu0 0.0
    %6013 = vmatprep.subr.mxu0 0.0
    %6014 = vmatpush1.xpose.msra.mxu0 0.0
    %6015 = vmatprep.subr.mxu0 0.0
    %6016 = vmatpush1.xpose.msra.mxu0 0.0
    %6017 = vmatprep.subr.mxu0 0.0
    %6018 = vmatpush1.xpose.msra.mxu0 0.0
    %6019 = vmatprep.subr.mxu0 0.0
    %6020 = vmatpush1.xpose.msra.mxu0 0.0
    %6021 = vmatprep.subr.mxu0 0.0
    %6022 = vmatpush1.xpose.msra.mxu0 0.0
    %6023 = vmatprep.subr.mxu0 0.0
    %6024 = vmatpush1.xpose.msra.mxu0 0.0
    %6025 = vmatprep.subr.mxu0 0.0
    %6026 = vmatpush1.xpose.msra.mxu0 0.0
    %6027 = vmatprep.subr.mxu0 0.0
    %6028 = vmatpush1.xpose.msra.mxu0 0.0
    %6029 = vmatprep.subr.mxu0 0.0
    %6030 = vmatpush1.xpose.msra.mxu0 0.0
    %6031 = vmatprep.subr.mxu0 0.0
    %6032 = vmatpush1.xpose.msra.mxu0 0.0
    %6033 = vmatprep.subr.mxu0 0.0
    %6034 = vmatpush1.xpose.msra.mxu0 0.0
    %6035 = vmatprep.mubr.f32.mxu0 0.0
    %6036 = vmatmul.mubr.f32.gmra.mrb[0].mxu0 %v5963
    %v6037 = vpop.f32.mrb[0].mxu0
    %v6038 = vadd.f32 0.0, %v6037
    %v6039 = vpop.f32.mrb[0].mxu0
    %6040 = vmatprep.mubr.f32.mxu0 0.0
    %6041 = vmatmul.mubr.f32.gmra.mrb[0].mxu0 %v5965
    %v6042 = vpop.f32.mrb[0].mxu0
    %v6043 = vadd.f32 0.0, %v6042
    %v6044 = vpop.f32.mrb[0].mxu0
    %6045 = vdwg.mxu0
    %v6046 = vsel %vm1192, %v5401, -inf
    %6047 = vmax.xlane.f32.xlu0 %v6046
    %v6048 = vpop.xlane.xlu0 %6047
    %v6049 = vsel %vm1192, %v5406, -inf
    %6050 = vmax.xlane.f32.xlu0 %v6049
    %v6051 = vpop.xlane.xlu0 %6050
    %v6052 = vsel %vm1192, %v5492, -inf
    %6053 = vmax.xlane.f32.xlu0 %v6052
    %v6054 = vpop.xlane.xlu0 %6053
    %v6055 = vsel %vm1192, %v5497, -inf
    %6056 = vmax.xlane.f32.xlu0 %v6055
    %v6057 = vpop.xlane.xlu0 %6056
    %v6058 = vsel %vm1192, %v5583, -inf
    %6059 = vmax.xlane.f32.xlu0 %v6058
    %v6060 = vpop.xlane.xlu0 %6059
    %v6061 = vsel %vm1192, %v5588, -inf
    %6062 = vmax.xlane.f32.xlu0 %v6061
    %v6063 = vpop.xlane.xlu0 %6062
    %v6064 = vsel %vm1192, %v5674, -inf
    %6065 = vmax.xlane.f32.xlu0 %v6064
    %v6066 = vpop.xlane.xlu0 %6065
    %v6067 = vsel %vm1192, %v5679, -inf
    %6068 = vmax.xlane.f32.xlu0 %v6067
    %v6069 = vpop.xlane.xlu0 %6068
    %v6070 = vsel %vm1192, %v5765, -inf
    %6071 = vmax.xlane.f32.xlu0 %v6070
    %v6072 = vpop.xlane.xlu0 %6071
    %v6073 = vsel %vm1192, %v5770, -inf
    %6074 = vmax.xlane.f32.xlu0 %v6073
    %v6075 = vpop.xlane.xlu0 %6074
    %v6076 = vsel %vm1192, %v5856, -inf
    %6077 = vmax.xlane.f32.xlu0 %v6076
    %v6078 = vpop.xlane.xlu0 %6077
    %v6079 = vsel %vm1192, %v5861, -inf
    %6080 = vmax.xlane.f32.xlu0 %v6079
    %v6081 = vpop.xlane.xlu0 %6080
    %v6082 = vsel %vm1192, %v5947, -inf
    %6083 = vmax.xlane.f32.xlu0 %v6082
    %v6084 = vpop.xlane.xlu0 %6083
    %v6085 = vsel %vm1192, %v5952, -inf
    %6086 = vmax.xlane.f32.xlu0 %v6085
    %v6087 = vpop.xlane.xlu0 %6086
    %v6088 = vsel %vm1192, %v6038, -inf
    %6089 = vmax.xlane.f32.xlu0 %v6088
    %v6090 = vpop.xlane.xlu0 %6089
    %v6091 = vsel %vm1192, %v6043, -inf
    %6092 = vmax.xlane.f32.xlu0 %v6091
    %v6093 = vpop.xlane.xlu0 %6092
    %v6094 = vsub.f32 %v5401, %v6048
    %v6095 = vsub.f32 %v5406, %v6051
    %v6096 = vsub.f32 %v5492, %v6054
    %v6097 = vsub.f32 %v5497, %v6057
    %v6098 = vsub.f32 %v5583, %v6060
    %v6099 = vsub.f32 %v5588, %v6063
    %v6100 = vsub.f32 %v5674, %v6066
    %v6101 = vsub.f32 %v5679, %v6069
    %v6102 = vsub.f32 %v5765, %v6072
    %v6103 = vsub.f32 %v5770, %v6075
    %v6104 = vsub.f32 %v5856, %v6078
    %v6105 = vsub.f32 %v5861, %v6081
    %v6106 = vsub.f32 %v5947, %v6084
    %v6107 = vsub.f32 %v5952, %v6087
    %v6108 = vsub.f32 %v6038, %v6090
    %v6109 = vsub.f32 %v6043, %v6093
    %v6110 = vmul.f32 %v6094, 1.442695
    %v6111 = vpow.pop %v6110
    %v6112 = vmul.f32 %v6095, 1.442695
    %v6113 = vpow.pop %v6112
    %v6114 = vmul.f32 %v6096, 1.442695
    %v6115 = vpow.pop %v6114
    %v6116 = vmul.f32 %v6097, 1.442695
    %v6117 = vpow.pop %v6116
    %v6118 = vmul.f32 %v6098, 1.442695
    %v6119 = vpow.pop %v6118
    %v6120 = vmul.f32 %v6099, 1.442695
    %v6121 = vpow.pop %v6120
    %v6122 = vmul.f32 %v6100, 1.442695
    %v6123 = vpow.pop %v6122
    %v6124 = vmul.f32 %v6101, 1.442695
    %v6125 = vpow.pop %v6124
    %v6126 = vmul.f32 %v6102, 1.442695
    %v6127 = vpow.pop %v6126
    %v6128 = vmul.f32 %v6103, 1.442695
    %v6129 = vpow.pop %v6128
    %v6130 = vmul.f32 %v6104, 1.442695
    %v6131 = vpow.pop %v6130
    %v6132 = vmul.f32 %v6105, 1.442695
    %v6133 = vpow.pop %v6132
    %v6134 = vmul.f32 %v6106, 1.442695
    %v6135 = vpow.pop %v6134
    %v6136 = vmul.f32 %v6107, 1.442695
    %v6137 = vpow.pop %v6136
    %v6138 = vmul.f32 %v6108, 1.442695
    %v6139 = vpow.pop %v6138
    %v6140 = vmul.f32 %v6109, 1.442695
    %v6141 = vpow.pop %v6140
    %v6142 = vsel %vm1192, %v6111, 0.0
    %6143 = vadd.xlane.f32.xlu0 %v6142
    %v6144 = vpop.xlane.xlu0 %6143
    %v6145 = vsel %vm1192, %v6113, 0.0
    %6146 = vadd.xlane.f32.xlu0 %v6145
    %v6147 = vpop.xlane.xlu0 %6146
    %v6148 = vsel %vm1192, %v6115, 0.0
    %6149 = vadd.xlane.f32.xlu0 %v6148
    %v6150 = vpop.xlane.xlu0 %6149
    %v6151 = vsel %vm1192, %v6117, 0.0
    %6152 = vadd.xlane.f32.xlu0 %v6151
    %v6153 = vpop.xlane.xlu0 %6152
    %v6154 = vsel %vm1192, %v6119, 0.0
    %6155 = vadd.xlane.f32.xlu0 %v6154
    %v6156 = vpop.xlane.xlu0 %6155
    %v6157 = vsel %vm1192, %v6121, 0.0
    %6158 = vadd.xlane.f32.xlu0 %v6157
    %v6159 = vpop.xlane.xlu0 %6158
    %v6160 = vsel %vm1192, %v6123, 0.0
    %6161 = vadd.xlane.f32.xlu0 %v6160
    %v6162 = vpop.xlane.xlu0 %6161
    %v6163 = vsel %vm1192, %v6125, 0.0
    %6164 = vadd.xlane.f32.xlu0 %v6163
    %v6165 = vpop.xlane.xlu0 %6164
    %v6166 = vsel %vm1192, %v6127, 0.0
    %6167 = vadd.xlane.f32.xlu0 %v6166
    %v6168 = vpop.xlane.xlu0 %6167
    %v6169 = vsel %vm1192, %v6129, 0.0
    %6170 = vadd.xlane.f32.xlu0 %v6169
    %v6171 = vpop.xlane.xlu0 %6170
    %v6172 = vsel %vm1192, %v6131, 0.0
    %6173 = vadd.xlane.f32.xlu0 %v6172
    %v6174 = vpop.xlane.xlu0 %6173
    %v6175 = vsel %vm1192, %v6133, 0.0
    %6176 = vadd.xlane.f32.xlu0 %v6175
    %v6177 = vpop.xlane.xlu0 %6176
    %v6178 = vsel %vm1192, %v6135, 0.0
    %6179 = vadd.xlane.f32.xlu0 %v6178
    %v6180 = vpop.xlane.xlu0 %6179
    %v6181 = vsel %vm1192, %v6137, 0.0
    %6182 = vadd.xlane.f32.xlu0 %v6181
    %v6183 = vpop.xlane.xlu0 %6182
    %v6184 = vsel %vm1192, %v6139, 0.0
    %6185 = vadd.xlane.f32.xlu0 %v6184
    %v6186 = vpop.xlane.xlu0 %6185
    %v6187 = vsel %vm1192, %v6141, 0.0
    %6188 = vadd.xlane.f32.xlu0 %v6187
    %v6189 = vpop.xlane.xlu0 %6188
    %v6190 = vrcp.pop %v6144
    %v6191 = vrcp.pop %v6147
    %v6192 = vrcp.pop %v6150
    %v6193 = vrcp.pop %v6153
    %v6194 = vrcp.pop %v6156
    %v6195 = vrcp.pop %v6159
    %v6196 = vrcp.pop %v6162
    %v6197 = vrcp.pop %v6165
    %v6198 = vrcp.pop %v6168
    %v6199 = vrcp.pop %v6171
    %v6200 = vrcp.pop %v6174
    %v6201 = vrcp.pop %v6177
    %v6202 = vrcp.pop %v6180
    %v6203 = vrcp.pop %v6183
    %v6204 = vrcp.pop %v6186
    %v6205 = vrcp.pop %v6189
    %v6206 = vmul.f32 %v6144, %v6190
    %v6207 = vmul.f32 %v6147, %v6191
    %v6208 = vmul.f32 %v6150, %v6192
    %v6209 = vmul.f32 %v6153, %v6193
    %v6210 = vmul.f32 %v6156, %v6194
    %v6211 = vmul.f32 %v6159, %v6195
    %v6212 = vmul.f32 %v6162, %v6196
    %v6213 = vmul.f32 %v6165, %v6197
    %v6214 = vmul.f32 %v6168, %v6198
    %v6215 = vmul.f32 %v6171, %v6199
    %v6216 = vmul.f32 %v6174, %v6200
    %v6217 = vmul.f32 %v6177, %v6201
    %v6218 = vmul.f32 %v6180, %v6202
    %v6219 = vmul.f32 %v6183, %v6203
    %v6220 = vmul.f32 %v6186, %v6204
    %v6221 = vmul.f32 %v6189, %v6205
    %v6222 = vsub.f32 2.0, %v6206
    %v6223 = vsub.f32 2.0, %v6207
    %v6224 = vsub.f32 2.0, %v6208
    %v6225 = vsub.f32 2.0, %v6209
    %v6226 = vsub.f32 2.0, %v6210
    %v6227 = vsub.f32 2.0, %v6211
    %v6228 = vsub.f32 2.0, %v6212
    %v6229 = vsub.f32 2.0, %v6213
    %v6230 = vsub.f32 2.0, %v6214
    %v6231 = vsub.f32 2.0, %v6215
    %v6232 = vsub.f32 2.0, %v6216
    %v6233 = vsub.f32 2.0, %v6217
    %v6234 = vsub.f32 2.0, %v6218
    %v6235 = vsub.f32 2.0, %v6219
    %v6236 = vsub.f32 2.0, %v6220
    %v6237 = vsub.f32 2.0, %v6221
    %v6238 = vmul.f32 %v6190, %v6222
    %v6239 = vmul.f32 %v6191, %v6223
    %v6240 = vmul.f32 %v6192, %v6224
    %v6241 = vmul.f32 %v6193, %v6225
    %v6242 = vmul.f32 %v6194, %v6226
    %v6243 = vmul.f32 %v6195, %v6227
    %v6244 = vmul.f32 %v6196, %v6228
    %v6245 = vmul.f32 %v6197, %v6229
    %v6246 = vmul.f32 %v6198, %v6230
    %v6247 = vmul.f32 %v6199, %v6231
    %v6248 = vmul.f32 %v6200, %v6232
    %v6249 = vmul.f32 %v6201, %v6233
    %v6250 = vmul.f32 %v6202, %v6234
    %v6251 = vmul.f32 %v6203, %v6235
    %v6252 = vmul.f32 %v6204, %v6236
    %v6253 = vmul.f32 %v6205, %v6237
    %v6254 = vmul.f32 %v6111, %v6238
    %v6255 = vmul.f32 %v6113, %v6239
    %v6256 = vmul.f32 %v6115, %v6240
    %v6257 = vmul.f32 %v6117, %v6241
    %v6258 = vmul.f32 %v6119, %v6242
    %v6259 = vmul.f32 %v6121, %v6243
    %v6260 = vmul.f32 %v6123, %v6244
    %v6261 = vmul.f32 %v6125, %v6245
    %v6262 = vmul.f32 %v6127, %v6246
    %v6263 = vmul.f32 %v6129, %v6247
    %v6264 = vmul.f32 %v6131, %v6248
    %v6265 = vmul.f32 %v6133, %v6249
    %v6266 = vmul.f32 %v6135, %v6250
    %v6267 = vmul.f32 %v6137, %v6251
    %v6268 = vmul.f32 %v6139, %v6252
    %v6269 = vmul.f32 %v6141, %v6253
    %6270 = vrot.lane.b32.xlu0 %v1564, 88
    %v6271 = vpop.permute.xlu0 %6270
    %6272 = vrot.lane.b32.xlu0 %v1569, 88
    %v6273 = vpop.permute.xlu0 %6272
    %v6277 = vsel %vm1192, %v6254, 0
    %v6280 = vsel %vm1192, %v6255, 0
    %6282 = vmatprep.subr.mxu0 0.0
    %6283 = vmatpush1.msra.mxu0 %v6271
    %6284 = vmatprep.subr.mxu0 0.0
    %6285 = vmatpush1.msra.mxu0 %v6273
    %6286 = vmatprep.subr.mxu0 0.0
    %6287 = vmatpush1.msra.mxu0 0.0
    %6288 = vmatprep.subr.mxu0 0.0
    %6289 = vmatpush1.msra.mxu0 0.0
    %6290 = vmatprep.subr.mxu0 0.0
    %6291 = vmatpush1.msra.mxu0 0.0
    %6292 = vmatprep.subr.mxu0 0.0
    %6293 = vmatpush1.msra.mxu0 0.0
    %6294 = vmatprep.subr.mxu0 0.0
    %6295 = vmatpush1.msra.mxu0 0.0
    %6296 = vmatprep.subr.mxu0 0.0
    %6297 = vmatpush1.msra.mxu0 0.0
    %6298 = vmatprep.subr.mxu0 0.0
    %6299 = vmatpush1.msra.mxu0 0.0
    %6300 = vmatprep.subr.mxu0 0.0
    %6301 = vmatpush1.msra.mxu0 0.0
    %6302 = vmatprep.subr.mxu0 0.0
    %6303 = vmatpush1.msra.mxu0 0.0
    %6304 = vmatprep.subr.mxu0 0.0
    %6305 = vmatpush1.msra.mxu0 0.0
    %6306 = vmatprep.subr.mxu0 0.0
    %6307 = vmatpush1.msra.mxu0 0.0
    %6308 = vmatprep.subr.mxu0 0.0
    %6309 = vmatpush1.msra.mxu0 0.0
    %6310 = vmatprep.subr.mxu0 0.0
    %6311 = vmatpush1.msra.mxu0 0.0
    %6312 = vmatprep.subr.mxu0 0.0
    %6313 = vmatpush1.msra.mxu0 0.0
    %6314 = vmatprep.subr.mxu0 0.0
    %6315 = vmatpush1.msra.mxu0 0.0
    %6316 = vmatprep.subr.mxu0 0.0
    %6317 = vmatpush1.msra.mxu0 0.0
    %6318 = vmatprep.subr.mxu0 0.0
    %6319 = vmatpush1.msra.mxu0 0.0
    %6320 = vmatprep.subr.mxu0 0.0
    %6321 = vmatpush1.msra.mxu0 0.0
    %6322 = vmatprep.subr.mxu0 0.0
    %6323 = vmatpush1.msra.mxu0 0.0
    %6324 = vmatprep.subr.mxu0 0.0
    %6325 = vmatpush1.msra.mxu0 0.0
    %6326 = vmatprep.subr.mxu0 0.0
    %6327 = vmatpush1.msra.mxu0 0.0
    %6328 = vmatprep.subr.mxu0 0.0
    %6329 = vmatpush1.msra.mxu0 0.0
    %6330 = vmatprep.subr.mxu0 0.0
    %6331 = vmatpush1.msra.mxu0 0.0
    %6332 = vmatprep.subr.mxu0 0.0
    %6333 = vmatpush1.msra.mxu0 0.0
    %6334 = vmatprep.subr.mxu0 0.0
    %6335 = vmatpush1.msra.mxu0 0.0
    %6336 = vmatprep.subr.mxu0 0.0
    %6337 = vmatpush1.msra.mxu0 0.0
    %6338 = vmatprep.subr.mxu0 0.0
    %6339 = vmatpush1.msra.mxu0 0.0
    %6340 = vmatprep.subr.mxu0 0.0
    %6341 = vmatpush1.msra.mxu0 0.0
    %6342 = vmatprep.subr.mxu0 0.0
    %6343 = vmatpush1.msra.mxu0 0.0
    %6344 = vmatprep.subr.mxu0 0.0
    %6345 = vmatpush1.msra.mxu0 0.0
    %6346 = vmatprep.mubr.f32.mxu0 0.0
    %6347 = vmatmul.mubr.f32.gmra.mrb[0].mxu0 %v6277
    %v6348 = vpop.f32.mrb[0].mxu0
    %v6349 = vadd.f32 0.0, %v6348
    %v6350 = vpop.f32.mrb[0].mxu0
    %6351 = vmatprep.mubr.f32.mxu0 0.0
    %6352 = vmatmul.mubr.f32.gmra.mrb[0].mxu0 %v6280
    %v6353 = vpop.f32.mrb[0].mxu0
    %v6354 = vadd.f32 0.0, %v6353
    %v6355 = vpop.f32.mrb[0].mxu0
    %6356 = vdwg.mxu0
    %6357 = vrot.lane.b32.xlu0 %v1574, 88
    %v6358 = vpop.permute.xlu0 %6357
    %6359 = vrot.lane.b32.xlu0 %v1579, 88
    %v6360 = vpop.permute.xlu0 %6359
    %v6364 = vsel %vm1192, %v6256, 0
    %v6367 = vsel %vm1192, %v6257, 0
    %6369 = vmatprep.subr.mxu0 0.0
    %6370 = vmatpush1.msra.mxu0 %v6358
    %6371 = vmatprep.subr.mxu0 0.0
    %6372 = vmatpush1.msra.mxu0 %v6360
    %6373 = vmatprep.subr.mxu0 0.0
    %6374 = vmatpush1.msra.mxu0 0.0
    %6375 = vmatprep.subr.mxu0 0.0
    %6376 = vmatpush1.msra.mxu0 0.0
    %6377 = vmatprep.subr.mxu0 0.0
    %6378 = vmatpush1.msra.mxu0 0.0
    %6379 = vmatprep.subr.mxu0 0.0
    %6380 = vmatpush1.msra.mxu0 0.0
    %6381 = vmatprep.subr.mxu0 0.0
    %6382 = vmatpush1.msra.mxu0 0.0
    %6383 = vmatprep.subr.mxu0 0.0
    %6384 = vmatpush1.msra.mxu0 0.0
    %6385 = vmatprep.subr.mxu0 0.0
    %6386 = vmatpush1.msra.mxu0 0.0
    %6387 = vmatprep.subr.mxu0 0.0
    %6388 = vmatpush1.msra.mxu0 0.0
    %6389 = vmatprep.subr.mxu0 0.0
    %6390 = vmatpush1.msra.mxu0 0.0
    %6391 = vmatprep.subr.mxu0 0.0
    %6392 = vmatpush1.msra.mxu0 0.0
    %6393 = vmatprep.subr.mxu0 0.0
    %6394 = vmatpush1.msra.mxu0 0.0
    %6395 = vmatprep.subr.mxu0 0.0
    %6396 = vmatpush1.msra.mxu0 0.0
    %6397 = vmatprep.subr.mxu0 0.0
    %6398 = vmatpush1.msra.mxu0 0.0
    %6399 = vmatprep.subr.mxu0 0.0
    %6400 = vmatpush1.msra.mxu0 0.0
    %6401 = vmatprep.subr.mxu0 0.0
    %6402 = vmatpush1.msra.mxu0 0.0
    %6403 = vmatprep.subr.mxu0 0.0
    %6404 = vmatpush1.msra.mxu0 0.0
    %6405 = vmatprep.subr.mxu0 0.0
    %6406 = vmatpush1.msra.mxu0 0.0
    %6407 = vmatprep.subr.mxu0 0.0
    %6408 = vmatpush1.msra.mxu0 0.0
    %6409 = vmatprep.subr.mxu0 0.0
    %6410 = vmatpush1.msra.mxu0 0.0
    %6411 = vmatprep.subr.mxu0 0.0
    %6412 = vmatpush1.msra.mxu0 0.0
    %6413 = vmatprep.subr.mxu0 0.0
    %6414 = vmatpush1.msra.mxu0 0.0
    %6415 = vmatprep.subr.mxu0 0.0
    %6416 = vmatpush1.msra.mxu0 0.0
    %6417 = vmatprep.subr.mxu0 0.0
    %6418 = vmatpush1.msra.mxu0 0.0
    %6419 = vmatprep.subr.mxu0 0.0
    %6420 = vmatpush1.msra.mxu0 0.0
    %6421 = vmatprep.subr.mxu0 0.0
    %6422 = vmatpush1.msra.mxu0 0.0
    %6423 = vmatprep.subr.mxu0 0.0
    %6424 = vmatpush1.msra.mxu0 0.0
    %6425 = vmatprep.subr.mxu0 0.0
    %6426 = vmatpush1.msra.mxu0 0.0
    %6427 = vmatprep.subr.mxu0 0.0
    %6428 = vmatpush1.msra.mxu0 0.0
    %6429 = vmatprep.subr.mxu0 0.0
    %6430 = vmatpush1.msra.mxu0 0.0
    %6431 = vmatprep.subr.mxu0 0.0
    %6432 = vmatpush1.msra.mxu0 0.0
    %6433 = vmatprep.mubr.f32.mxu0 0.0
    %6434 = vmatmul.mubr.f32.gmra.mrb[0].mxu0 %v6364
    %v6435 = vpop.f32.mrb[0].mxu0
    %v6436 = vadd.f32 0.0, %v6435
    %v6437 = vpop.f32.mrb[0].mxu0
    %6438 = vmatprep.mubr.f32.mxu0 0.0
    %6439 = vmatmul.mubr.f32.gmra.mrb[0].mxu0 %v6367
    %v6440 = vpop.f32.mrb[0].mxu0
    %v6441 = vadd.f32 0.0, %v6440
    %v6442 = vpop.f32.mrb[0].mxu0
    %6443 = vdwg.mxu0
    %6444 = vrot.lane.b32.xlu0 %v1584, 88
    %v6445 = vpop.permute.xlu0 %6444
    %6446 = vrot.lane.b32.xlu0 %v1589, 88
    %v6447 = vpop.permute.xlu0 %6446
    %v6451 = vsel %vm1192, %v6258, 0
    %v6454 = vsel %vm1192, %v6259, 0
    %6456 = vmatprep.subr.mxu0 0.0
    %6457 = vmatpush1.msra.mxu0 %v6445
    %6458 = vmatprep.subr.mxu0 0.0
    %6459 = vmatpush1.msra.mxu0 %v6447
    %6460 = vmatprep.subr.mxu0 0.0
    %6461 = vmatpush1.msra.mxu0 0.0
    %6462 = vmatprep.subr.mxu0 0.0
    %6463 = vmatpush1.msra.mxu0 0.0
    %6464 = vmatprep.subr.mxu0 0.0
    %6465 = vmatpush1.msra.mxu0 0.0
    %6466 = vmatprep.subr.mxu0 0.0
    %6467 = vmatpush1.msra.mxu0 0.0
    %6468 = vmatprep.subr.mxu0 0.0
    %6469 = vmatpush1.msra.mxu0 0.0
    %6470 = vmatprep.subr.mxu0 0.0
    %6471 = vmatpush1.msra.mxu0 0.0
    %6472 = vmatprep.subr.mxu0 0.0
    %6473 = vmatpush1.msra.mxu0 0.0
    %6474 = vmatprep.subr.mxu0 0.0
    %6475 = vmatpush1.msra.mxu0 0.0
    %6476 = vmatprep.subr.mxu0 0.0
    %6477 = vmatpush1.msra.mxu0 0.0
    %6478 = vmatprep.subr.mxu0 0.0
    %6479 = vmatpush1.msra.mxu0 0.0
    %6480 = vmatprep.subr.mxu0 0.0
    %6481 = vmatpush1.msra.mxu0 0.0
    %6482 = vmatprep.subr.mxu0 0.0
    %6483 = vmatpush1.msra.mxu0 0.0
    %6484 = vmatprep.subr.mxu0 0.0
    %6485 = vmatpush1.msra.mxu0 0.0
    %6486 = vmatprep.subr.mxu0 0.0
    %6487 = vmatpush1.msra.mxu0 0.0
    %6488 = vmatprep.subr.mxu0 0.0
    %6489 = vmatpush1.msra.mxu0 0.0
    %6490 = vmatprep.subr.mxu0 0.0
    %6491 = vmatpush1.msra.mxu0 0.0
    %6492 = vmatprep.subr.mxu0 0.0
    %6493 = vmatpush1.msra.mxu0 0.0
    %6494 = vmatprep.subr.mxu0 0.0
    %6495 = vmatpush1.msra.mxu0 0.0
    %6496 = vmatprep.subr.mxu0 0.0
    %6497 = vmatpush1.msra.mxu0 0.0
    %6498 = vmatprep.subr.mxu0 0.0
    %6499 = vmatpush1.msra.mxu0 0.0
    %6500 = vmatprep.subr.mxu0 0.0
    %6501 = vmatpush1.msra.mxu0 0.0
    %6502 = vmatprep.subr.mxu0 0.0
    %6503 = vmatpush1.msra.mxu0 0.0
    %6504 = vmatprep.subr.mxu0 0.0
    %6505 = vmatpush1.msra.mxu0 0.0
    %6506 = vmatprep.subr.mxu0 0.0
    %6507 = vmatpush1.msra.mxu0 0.0
    %6508 = vmatprep.subr.mxu0 0.0
    %6509 = vmatpush1.msra.mxu0 0.0
    %6510 = vmatprep.subr.mxu0 0.0
    %6511 = vmatpush1.msra.mxu0 0.0
    %6512 = vmatprep.subr.mxu0 0.0
    %6513 = vmatpush1.msra.mxu0 0.0
    %6514 = vmatprep.subr.mxu0 0.0
    %6515 = vmatpush1.msra.mxu0 0.0
    %6516 = vmatprep.subr.mxu0 0.0
    %6517 = vmatpush1.msra.mxu0 0.0
    %6518 = vmatprep.subr.mxu0 0.0
    %6519 = vmatpush1.msra.mxu0 0.0
    %6520 = vmatprep.mubr.f32.mxu0 0.0
    %6521 = vmatmul.mubr.f32.gmra.mrb[0].mxu0 %v6451
    %v6522 = vpop.f32.mrb[0].mxu0
    %v6523 = vadd.f32 0.0, %v6522
    %v6524 = vpop.f32.mrb[0].mxu0
    %6525 = vmatprep.mubr.f32.mxu0 0.0
    %6526 = vmatmul.mubr.f32.gmra.mrb[0].mxu0 %v6454
    %v6527 = vpop.f32.mrb[0].mxu0
    %v6528 = vadd.f32 0.0, %v6527
    %v6529 = vpop.f32.mrb[0].mxu0
    %6530 = vdwg.mxu0
    %6531 = vrot.lane.b32.xlu0 %v1594, 88
    %v6532 = vpop.permute.xlu0 %6531
    %6533 = vrot.lane.b32.xlu0 %v1599, 88
    %v6534 = vpop.permute.xlu0 %6533
    %v6538 = vsel %vm1192, %v6260, 0
    %v6541 = vsel %vm1192, %v6261, 0
    %6543 = vmatprep.subr.mxu0 0.0
    %6544 = vmatpush1.msra.mxu0 %v6532
    %6545 = vmatprep.subr.mxu0 0.0
    %6546 = vmatpush1.msra.mxu0 %v6534
    %6547 = vmatprep.subr.mxu0 0.0
    %6548 = vmatpush1.msra.mxu0 0.0
    %6549 = vmatprep.subr.mxu0 0.0
    %6550 = vmatpush1.msra.mxu0 0.0
    %6551 = vmatprep.subr.mxu0 0.0
    %6552 = vmatpush1.msra.mxu0 0.0
    %6553 = vmatprep.subr.mxu0 0.0
    %6554 = vmatpush1.msra.mxu0 0.0
    %6555 = vmatprep.subr.mxu0 0.0
    %6556 = vmatpush1.msra.mxu0 0.0
    %6557 = vmatprep.subr.mxu0 0.0
    %6558 = vmatpush1.msra.mxu0 0.0
    %6559 = vmatprep.subr.mxu0 0.0
    %6560 = vmatpush1.msra.mxu0 0.0
    %6561 = vmatprep.subr.mxu0 0.0
    %6562 = vmatpush1.msra.mxu0 0.0
    %6563 = vmatprep.subr.mxu0 0.0
    %6564 = vmatpush1.msra.mxu0 0.0
    %6565 = vmatprep.subr.mxu0 0.0
    %6566 = vmatpush1.msra.mxu0 0.0
    %6567 = vmatprep.subr.mxu0 0.0
    %6568 = vmatpush1.msra.mxu0 0.0
    %6569 = vmatprep.subr.mxu0 0.0
    %6570 = vmatpush1.msra.mxu0 0.0
    %6571 = vmatprep.subr.mxu0 0.0
    %6572 = vmatpush1.msra.mxu0 0.0
    %6573 = vmatprep.subr.mxu0 0.0
    %6574 = vmatpush1.msra.mxu0 0.0
    %6575 = vmatprep.subr.mxu0 0.0
    %6576 = vmatpush1.msra.mxu0 0.0
    %6577 = vmatprep.subr.mxu0 0.0
    %6578 = vmatpush1.msra.mxu0 0.0
    %6579 = vmatprep.subr.mxu0 0.0
    %6580 = vmatpush1.msra.mxu0 0.0
    %6581 = vmatprep.subr.mxu0 0.0
    %6582 = vmatpush1.msra.mxu0 0.0
    %6583 = vmatprep.subr.mxu0 0.0
    %6584 = vmatpush1.msra.mxu0 0.0
    %6585 = vmatprep.subr.mxu0 0.0
    %6586 = vmatpush1.msra.mxu0 0.0
    %6587 = vmatprep.subr.mxu0 0.0
    %6588 = vmatpush1.msra.mxu0 0.0
    %6589 = vmatprep.subr.mxu0 0.0
    %6590 = vmatpush1.msra.mxu0 0.0
    %6591 = vmatprep.subr.mxu0 0.0
    %6592 = vmatpush1.msra.mxu0 0.0
    %6593 = vmatprep.subr.mxu0 0.0
    %6594 = vmatpush1.msra.mxu0 0.0
    %6595 = vmatprep.subr.mxu0 0.0
    %6596 = vmatpush1.msra.mxu0 0.0
    %6597 = vmatprep.subr.mxu0 0.0
    %6598 = vmatpush1.msra.mxu0 0.0
    %6599 = vmatprep.subr.mxu0 0.0
    %6600 = vmatpush1.msra.mxu0 0.0
    %6601 = vmatprep.subr.mxu0 0.0
    %6602 = vmatpush1.msra.mxu0 0.0
    %6603 = vmatprep.subr.mxu0 0.0
    %6604 = vmatpush1.msra.mxu0 0.0
    %6605 = vmatprep.subr.mxu0 0.0
    %6606 = vmatpush1.msra.mxu0 0.0
    %6607 = vmatprep.mubr.f32.mxu0 0.0
    %6608 = vmatmul.mubr.f32.gmra.mrb[0].mxu0 %v6538
    %v6609 = vpop.f32.mrb[0].mxu0
    %v6610 = vadd.f32 0.0, %v6609
    %v6611 = vpop.f32.mrb[0].mxu0
    %6612 = vmatprep.mubr.f32.mxu0 0.0
    %6613 = vmatmul.mubr.f32.gmra.mrb[0].mxu0 %v6541
    %v6614 = vpop.f32.mrb[0].mxu0
    %v6615 = vadd.f32 0.0, %v6614
    %v6616 = vpop.f32.mrb[0].mxu0
    %6617 = vdwg.mxu0
    %6618 = vrot.lane.b32.xlu0 %v1604, 88
    %v6619 = vpop.permute.xlu0 %6618
    %6620 = vrot.lane.b32.xlu0 %v1609, 88
    %v6621 = vpop.permute.xlu0 %6620
    %v6625 = vsel %vm1192, %v6262, 0
    %v6628 = vsel %vm1192, %v6263, 0
    %6630 = vmatprep.subr.mxu0 0.0
    %6631 = vmatpush1.msra.mxu0 %v6619
    %6632 = vmatprep.subr.mxu0 0.0
    %6633 = vmatpush1.msra.mxu0 %v6621
    %6634 = vmatprep.subr.mxu0 0.0
    %6635 = vmatpush1.msra.mxu0 0.0
    %6636 = vmatprep.subr.mxu0 0.0
    %6637 = vmatpush1.msra.mxu0 0.0
    %6638 = vmatprep.subr.mxu0 0.0
    %6639 = vmatpush1.msra.mxu0 0.0
    %6640 = vmatprep.subr.mxu0 0.0
    %6641 = vmatpush1.msra.mxu0 0.0
    %6642 = vmatprep.subr.mxu0 0.0
    %6643 = vmatpush1.msra.mxu0 0.0
    %6644 = vmatprep.subr.mxu0 0.0
    %6645 = vmatpush1.msra.mxu0 0.0
    %6646 = vmatprep.subr.mxu0 0.0
    %6647 = vmatpush1.msra.mxu0 0.0
    %6648 = vmatprep.subr.mxu0 0.0
    %6649 = vmatpush1.msra.mxu0 0.0
    %6650 = vmatprep.subr.mxu0 0.0
    %6651 = vmatpush1.msra.mxu0 0.0
    %6652 = vmatprep.subr.mxu0 0.0
    %6653 = vmatpush1.msra.mxu0 0.0
    %6654 = vmatprep.subr.mxu0 0.0
    %6655 = vmatpush1.msra.mxu0 0.0
    %6656 = vmatprep.subr.mxu0 0.0
    %6657 = vmatpush1.msra.mxu0 0.0
    %6658 = vmatprep.subr.mxu0 0.0
    %6659 = vmatpush1.msra.mxu0 0.0
    %6660 = vmatprep.subr.mxu0 0.0
    %6661 = vmatpush1.msra.mxu0 0.0
    %6662 = vmatprep.subr.mxu0 0.0
    %6663 = vmatpush1.msra.mxu0 0.0
    %6664 = vmatprep.subr.mxu0 0.0
    %6665 = vmatpush1.msra.mxu0 0.0
    %6666 = vmatprep.subr.mxu0 0.0
    %6667 = vmatpush1.msra.mxu0 0.0
    %6668 = vmatprep.subr.mxu0 0.0
    %6669 = vmatpush1.msra.mxu0 0.0
    %6670 = vmatprep.subr.mxu0 0.0
    %6671 = vmatpush1.msra.mxu0 0.0
    %6672 = vmatprep.subr.mxu0 0.0
    %6673 = vmatpush1.msra.mxu0 0.0
    %6674 = vmatprep.subr.mxu0 0.0
    %6675 = vmatpush1.msra.mxu0 0.0
    %6676 = vmatprep.subr.mxu0 0.0
    %6677 = vmatpush1.msra.mxu0 0.0
    %6678 = vmatprep.subr.mxu0 0.0
    %6679 = vmatpush1.msra.mxu0 0.0
    %6680 = vmatprep.subr.mxu0 0.0
    %6681 = vmatpush1.msra.mxu0 0.0
    %6682 = vmatprep.subr.mxu0 0.0
    %6683 = vmatpush1.msra.mxu0 0.0
    %6684 = vmatprep.subr.mxu0 0.0
    %6685 = vmatpush1.msra.mxu0 0.0
    %6686 = vmatprep.subr.mxu0 0.0
    %6687 = vmatpush1.msra.mxu0 0.0
    %6688 = vmatprep.subr.mxu0 0.0
    %6689 = vmatpush1.msra.mxu0 0.0
    %6690 = vmatprep.subr.mxu0 0.0
    %6691 = vmatpush1.msra.mxu0 0.0
    %6692 = vmatprep.subr.mxu0 0.0
    %6693 = vmatpush1.msra.mxu0 0.0
    %6694 = vmatprep.mubr.f32.mxu0 0.0
    %6695 = vmatmul.mubr.f32.gmra.mrb[0].mxu0 %v6625
    %v6696 = vpop.f32.mrb[0].mxu0
    %v6697 = vadd.f32 0.0, %v6696
    %v6698 = vpop.f32.mrb[0].mxu0
    %6699 = vmatprep.mubr.f32.mxu0 0.0
    %6700 = vmatmul.mubr.f32.gmra.mrb[0].mxu0 %v6628
    %v6701 = vpop.f32.mrb[0].mxu0
    %v6702 = vadd.f32 0.0, %v6701
    %v6703 = vpop.f32.mrb[0].mxu0
    %6704 = vdwg.mxu0
    %6705 = vrot.lane.b32.xlu0 %v1614, 88
    %v6706 = vpop.permute.xlu0 %6705
    %6707 = vrot.lane.b32.xlu0 %v1619, 88
    %v6708 = vpop.permute.xlu0 %6707
    %v6712 = vsel %vm1192, %v6264, 0
    %v6715 = vsel %vm1192, %v6265, 0
    %6717 = vmatprep.subr.mxu0 0.0
    %6718 = vmatpush1.msra.mxu0 %v6706
    %6719 = vmatprep.subr.mxu0 0.0
    %6720 = vmatpush1.msra.mxu0 %v6708
    %6721 = vmatprep.subr.mxu0 0.0
    %6722 = vmatpush1.msra.mxu0 0.0
    %6723 = vmatprep.subr.mxu0 0.0
    %6724 = vmatpush1.msra.mxu0 0.0
    %6725 = vmatprep.subr.mxu0 0.0
    %6726 = vmatpush1.msra.mxu0 0.0
    %6727 = vmatprep.subr.mxu0 0.0
    %6728 = vmatpush1.msra.mxu0 0.0
    %6729 = vmatprep.subr.mxu0 0.0
    %6730 = vmatpush1.msra.mxu0 0.0
    %6731 = vmatprep.subr.mxu0 0.0
    %6732 = vmatpush1.msra.mxu0 0.0
    %6733 = vmatprep.subr.mxu0 0.0
    %6734 = vmatpush1.msra.mxu0 0.0
    %6735 = vmatprep.subr.mxu0 0.0
    %6736 = vmatpush1.msra.mxu0 0.0
    %6737 = vmatprep.subr.mxu0 0.0
    %6738 = vmatpush1.msra.mxu0 0.0
    %6739 = vmatprep.subr.mxu0 0.0
    %6740 = vmatpush1.msra.mxu0 0.0
    %6741 = vmatprep.subr.mxu0 0.0
    %6742 = vmatpush1.msra.mxu0 0.0
    %6743 = vmatprep.subr.mxu0 0.0
    %6744 = vmatpush1.msra.mxu0 0.0
    %6745 = vmatprep.subr.mxu0 0.0
    %6746 = vmatpush1.msra.mxu0 0.0
    %6747 = vmatprep.subr.mxu0 0.0
    %6748 = vmatpush1.msra.mxu0 0.0
    %6749 = vmatprep.subr.mxu0 0.0
    %6750 = vmatpush1.msra.mxu0 0.0
    %6751 = vmatprep.subr.mxu0 0.0
    %6752 = vmatpush1.msra.mxu0 0.0
    %6753 = vmatprep.subr.mxu0 0.0
    %6754 = vmatpush1.msra.mxu0 0.0
    %6755 = vmatprep.subr.mxu0 0.0
    %6756 = vmatpush1.msra.mxu0 0.0
    %6757 = vmatprep.subr.mxu0 0.0
    %6758 = vmatpush1.msra.mxu0 0.0
    %6759 = vmatprep.subr.mxu0 0.0
    %6760 = vmatpush1.msra.mxu0 0.0
    %6761 = vmatprep.subr.mxu0 0.0
    %6762 = vmatpush1.msra.mxu0 0.0
    %6763 = vmatprep.subr.mxu0 0.0
    %6764 = vmatpush1.msra.mxu0 0.0
    %6765 = vmatprep.subr.mxu0 0.0
    %6766 = vmatpush1.msra.mxu0 0.0
    %6767 = vmatprep.subr.mxu0 0.0
    %6768 = vmatpush1.msra.mxu0 0.0
    %6769 = vmatprep.subr.mxu0 0.0
    %6770 = vmatpush1.msra.mxu0 0.0
    %6771 = vmatprep.subr.mxu0 0.0
    %6772 = vmatpush1.msra.mxu0 0.0
    %6773 = vmatprep.subr.mxu0 0.0
    %6774 = vmatpush1.msra.mxu0 0.0
    %6775 = vmatprep.subr.mxu0 0.0
    %6776 = vmatpush1.msra.mxu0 0.0
    %6777 = vmatprep.subr.mxu0 0.0
    %6778 = vmatpush1.msra.mxu0 0.0
    %6779 = vmatprep.subr.mxu0 0.0
    %6780 = vmatpush1.msra.mxu0 0.0
    %6781 = vmatprep.mubr.f32.mxu0 0.0
    %6782 = vmatmul.mubr.f32.gmra.mrb[0].mxu0 %v6712
    %v6783 = vpop.f32.mrb[0].mxu0
    %v6784 = vadd.f32 0.0, %v6783
    %v6785 = vpop.f32.mrb[0].mxu0
    %6786 = vmatprep.mubr.f32.mxu0 0.0
    %6787 = vmatmul.mubr.f32.gmra.mrb[0].mxu0 %v6715
    %v6788 = vpop.f32.mrb[0].mxu0
    %v6789 = vadd.f32 0.0, %v6788
    %v6790 = vpop.f32.mrb[0].mxu0
    %6791 = vdwg.mxu0
    %6792 = vrot.lane.b32.xlu0 %v1624, 88
    %v6793 = vpop.permute.xlu0 %6792
    %6794 = vrot.lane.b32.xlu0 %v1629, 88
    %v6795 = vpop.permute.xlu0 %6794
    %v6799 = vsel %vm1192, %v6266, 0
    %v6802 = vsel %vm1192, %v6267, 0
    %6804 = vmatprep.subr.mxu0 0.0
    %6805 = vmatpush1.msra.mxu0 %v6793
    %6806 = vmatprep.subr.mxu0 0.0
    %6807 = vmatpush1.msra.mxu0 %v6795
    %6808 = vmatprep.subr.mxu0 0.0
    %6809 = vmatpush1.msra.mxu0 0.0
    %6810 = vmatprep.subr.mxu0 0.0
    %6811 = vmatpush1.msra.mxu0 0.0
    %6812 = vmatprep.subr.mxu0 0.0
    %6813 = vmatpush1.msra.mxu0 0.0
    %6814 = vmatprep.subr.mxu0 0.0
    %6815 = vmatpush1.msra.mxu0 0.0
    %6816 = vmatprep.subr.mxu0 0.0
    %6817 = vmatpush1.msra.mxu0 0.0
    %6818 = vmatprep.subr.mxu0 0.0
    %6819 = vmatpush1.msra.mxu0 0.0
    %6820 = vmatprep.subr.mxu0 0.0
    %6821 = vmatpush1.msra.mxu0 0.0
    %6822 = vmatprep.subr.mxu0 0.0
    %6823 = vmatpush1.msra.mxu0 0.0
    %6824 = vmatprep.subr.mxu0 0.0
    %6825 = vmatpush1.msra.mxu0 0.0
    %6826 = vmatprep.subr.mxu0 0.0
    %6827 = vmatpush1.msra.mxu0 0.0
    %6828 = vmatprep.subr.mxu0 0.0
    %6829 = vmatpush1.msra.mxu0 0.0
    %6830 = vmatprep.subr.mxu0 0.0
    %6831 = vmatpush1.msra.mxu0 0.0
    %6832 = vmatprep.subr.mxu0 0.0
    %6833 = vmatpush1.msra.mxu0 0.0
    %6834 = vmatprep.subr.mxu0 0.0
    %6835 = vmatpush1.msra.mxu0 0.0
    %6836 = vmatprep.subr.mxu0 0.0
    %6837 = vmatpush1.msra.mxu0 0.0
    %6838 = vmatprep.subr.mxu0 0.0
    %6839 = vmatpush1.msra.mxu0 0.0
    %6840 = vmatprep.subr.mxu0 0.0
    %6841 = vmatpush1.msra.mxu0 0.0
    %6842 = vmatprep.subr.mxu0 0.0
    %6843 = vmatpush1.msra.mxu0 0.0
    %6844 = vmatprep.subr.mxu0 0.0
    %6845 = vmatpush1.msra.mxu0 0.0
    %6846 = vmatprep.subr.mxu0 0.0
    %6847 = vmatpush1.msra.mxu0 0.0
    %6848 = vmatprep.subr.mxu0 0.0
    %6849 = vmatpush1.msra.mxu0 0.0
    %6850 = vmatprep.subr.mxu0 0.0
    %6851 = vmatpush1.msra.mxu0 0.0
    %6852 = vmatprep.subr.mxu0 0.0
    %6853 = vmatpush1.msra.mxu0 0.0
    %6854 = vmatprep.subr.mxu0 0.0
    %6855 = vmatpush1.msra.mxu0 0.0
    %6856 = vmatprep.subr.mxu0 0.0
    %6857 = vmatpush1.msra.mxu0 0.0
    %6858 = vmatprep.subr.mxu0 0.0
    %6859 = vmatpush1.msra.mxu0 0.0
    %6860 = vmatprep.subr.mxu0 0.0
    %6861 = vmatpush1.msra.mxu0 0.0
    %6862 = vmatprep.subr.mxu0 0.0
    %6863 = vmatpush1.msra.mxu0 0.0
    %6864 = vmatprep.subr.mxu0 0.0
    %6865 = vmatpush1.msra.mxu0 0.0
    %6866 = vmatprep.subr.mxu0 0.0
    %6867 = vmatpush1.msra.mxu0 0.0
    %6868 = vmatprep.mubr.f32.mxu0 0.0
    %6869 = vmatmul.mubr.f32.gmra.mrb[0].mxu0 %v6799
    %v6870 = vpop.f32.mrb[0].mxu0
    %v6871 = vadd.f32 0.0, %v6870
    %v6872 = vpop.f32.mrb[0].mxu0
    %6873 = vmatprep.mubr.f32.mxu0 0.0
    %6874 = vmatmul.mubr.f32.gmra.mrb[0].mxu0 %v6802
    %v6875 = vpop.f32.mrb[0].mxu0
    %v6876 = vadd.f32 0.0, %v6875
    %v6877 = vpop.f32.mrb[0].mxu0
    %6878 = vdwg.mxu0
    %6879 = vrot.lane.b32.xlu0 %v1634, 88
    %v6880 = vpop.permute.xlu0 %6879
    %6881 = vrot.lane.b32.xlu0 %v1639, 88
    %v6882 = vpop.permute.xlu0 %6881
    %v6886 = vsel %vm1192, %v6268, 0
    %v6889 = vsel %vm1192, %v6269, 0
    %6891 = vmatprep.subr.mxu0 0.0
    %6892 = vmatpush1.msra.mxu0 %v6880
    %6893 = vmatprep.subr.mxu0 0.0
    %6894 = vmatpush1.msra.mxu0 %v6882
    %6895 = vmatprep.subr.mxu0 0.0
    %6896 = vmatpush1.msra.mxu0 0.0
    %6897 = vmatprep.subr.mxu0 0.0
    %6898 = vmatpush1.msra.mxu0 0.0
    %6899 = vmatprep.subr.mxu0 0.0
    %6900 = vmatpush1.msra.mxu0 0.0
    %6901 = vmatprep.subr.mxu0 0.0
    %6902 = vmatpush1.msra.mxu0 0.0
    %6903 = vmatprep.subr.mxu0 0.0
    %6904 = vmatpush1.msra.mxu0 0.0
    %6905 = vmatprep.subr.mxu0 0.0
    %6906 = vmatpush1.msra.mxu0 0.0
    %6907 = vmatprep.subr.mxu0 0.0
    %6908 = vmatpush1.msra.mxu0 0.0
    %6909 = vmatprep.subr.mxu0 0.0
    %6910 = vmatpush1.msra.mxu0 0.0
    %6911 = vmatprep.subr.mxu0 0.0
    %6912 = vmatpush1.msra.mxu0 0.0
    %6913 = vmatprep.subr.mxu0 0.0
    %6914 = vmatpush1.msra.mxu0 0.0
    %6915 = vmatprep.subr.mxu0 0.0
    %6916 = vmatpush1.msra.mxu0 0.0
    %6917 = vmatprep.subr.mxu0 0.0
    %6918 = vmatpush1.msra.mxu0 0.0
    %6919 = vmatprep.subr.mxu0 0.0
    %6920 = vmatpush1.msra.mxu0 0.0
    %6921 = vmatprep.subr.mxu0 0.0
    %6922 = vmatpush1.msra.mxu0 0.0
    %6923 = vmatprep.subr.mxu0 0.0
    %6924 = vmatpush1.msra.mxu0 0.0
    %6925 = vmatprep.subr.mxu0 0.0
    %6926 = vmatpush1.msra.mxu0 0.0
    %6927 = vmatprep.subr.mxu0 0.0
    %6928 = vmatpush1.msra.mxu0 0.0
    %6929 = vmatprep.subr.mxu0 0.0
    %6930 = vmatpush1.msra.mxu0 0.0
    %6931 = vmatprep.subr.mxu0 0.0
    %6932 = vmatpush1.msra.mxu0 0.0
    %6933 = vmatprep.subr.mxu0 0.0
    %6934 = vmatpush1.msra.mxu0 0.0
    %6935 = vmatprep.subr.mxu0 0.0
    %6936 = vmatpush1.msra.mxu0 0.0
    %6937 = vmatprep.subr.mxu0 0.0
    %6938 = vmatpush1.msra.mxu0 0.0
    %6939 = vmatprep.subr.mxu0 0.0
    %6940 = vmatpush1.msra.mxu0 0.0
    %6941 = vmatprep.subr.mxu0 0.0
    %6942 = vmatpush1.msra.mxu0 0.0
    %6943 = vmatprep.subr.mxu0 0.0
    %6944 = vmatpush1.msra.mxu0 0.0
    %6945 = vmatprep.subr.mxu0 0.0
    %6946 = vmatpush1.msra.mxu0 0.0
    %6947 = vmatprep.subr.mxu0 0.0
    %6948 = vmatpush1.msra.mxu0 0.0
    %6949 = vmatprep.subr.mxu0 0.0
    %6950 = vmatpush1.msra.mxu0 0.0
    %6951 = vmatprep.subr.mxu0 0.0
    %6952 = vmatpush1.msra.mxu0 0.0
    %6953 = vmatprep.subr.mxu0 0.0
    %6954 = vmatpush1.msra.mxu0 0.0
    %6955 = vmatprep.mubr.f32.mxu0 0.0
    %6956 = vmatmul.mubr.f32.gmra.mrb[0].mxu0 %v6886
    %v6957 = vpop.f32.mrb[0].mxu0
    %v6958 = vadd.f32 0.0, %v6957
    %v6959 = vpop.f32.mrb[0].mxu0
    %6960 = vmatprep.mubr.f32.mxu0 0.0
    %6961 = vmatmul.mubr.f32.gmra.mrb[0].mxu0 %v6889
    %v6962 = vpop.f32.mrb[0].mxu0
    %v6963 = vadd.f32 0.0, %v6962
    %v6964 = vpop.f32.mrb[0].mxu0
    %6965 = vdwg.mxu0
    %v6966 = vld [vmem:[%s4 + $0x18] sm:$0xf]
    %v6968 = vsel %vm1648, %v6349, 0
    %v6971 = vsel %vm1648, %v6354, 0
    %v6974 = vsel %vm1648, %v6436, 0
    %v6977 = vsel %vm1648, %v6441, 0
    %v6980 = vsel %vm1648, %v6523, 0
    %v6983 = vsel %vm1648, %v6528, 0
    %v6986 = vsel %vm1648, %v6610, 0
    %v6989 = vsel %vm1648, %v6615, 0
    %v6992 = vsel %vm1648, %v6697, 0
    %v6995 = vsel %vm1648, %v6702, 0
    %v6998 = vsel %vm1648, %v6784, 0
    %v7001 = vsel %vm1648, %v6789, 0
    %v7004 = vsel %vm1648, %v6871, 0
    %v7007 = vsel %vm1648, %v6876, 0
    %v7010 = vsel %vm1648, %v6958, 0
    %v7013 = vsel %vm1648, %v6963, 0
    %v7016 = vsel %vm4973, %v6966, 0
    %7018 = vmatprep.subr.mxu0 0.0
    %7019 = vmatpush1.msra.mxu0 %v7016
    %7020 = vmatprep.subr.mxu0 0.0
    %7021 = vmatpush1.msra.mxu0 0.0
    %7022 = vmatprep.subr.mxu0 0.0
    %7023 = vmatpush1.msra.mxu0 0.0
    %7024 = vmatprep.subr.mxu0 0.0
    %7025 = vmatpush1.msra.mxu0 0.0
    %7026 = vmatprep.subr.mxu0 0.0
    %7027 = vmatpush1.msra.mxu0 0.0
    %7028 = vmatprep.subr.mxu0 0.0
    %7029 = vmatpush1.msra.mxu0 0.0
    %7030 = vmatprep.subr.mxu0 0.0
    %7031 = vmatpush1.msra.mxu0 0.0
    %7032 = vmatprep.subr.mxu0 0.0
    %7033 = vmatpush1.msra.mxu0 0.0
    %7034 = vmatprep.subr.mxu0 0.0
    %7035 = vmatpush1.msra.mxu0 0.0
    %7036 = vmatprep.subr.mxu0 0.0
    %7037 = vmatpush1.msra.mxu0 0.0
    %7038 = vmatprep.subr.mxu0 0.0
    %7039 = vmatpush1.msra.mxu0 0.0
    %7040 = vmatprep.subr.mxu0 0.0
    %7041 = vmatpush1.msra.mxu0 0.0
    %7042 = vmatprep.subr.mxu0 0.0
    %7043 = vmatpush1.msra.mxu0 0.0
    %7044 = vmatprep.subr.mxu0 0.0
    %7045 = vmatpush1.msra.mxu0 0.0
    %7046 = vmatprep.subr.mxu0 0.0
    %7047 = vmatpush1.msra.mxu0 0.0
    %7048 = vmatprep.subr.mxu0 0.0
    %7049 = vmatpush1.msra.mxu0 0.0
    %7050 = vmatprep.subr.mxu0 0.0
    %7051 = vmatpush1.msra.mxu0 0.0
    %7052 = vmatprep.subr.mxu0 0.0
    %7053 = vmatpush1.msra.mxu0 0.0
    %7054 = vmatprep.subr.mxu0 0.0
    %7055 = vmatpush1.msra.mxu0 0.0
    %7056 = vmatprep.subr.mxu0 0.0
    %7057 = vmatpush1.msra.mxu0 0.0
    %7058 = vmatprep.subr.mxu0 0.0
    %7059 = vmatpush1.msra.mxu0 0.0
    %7060 = vmatprep.subr.mxu0 0.0
    %7061 = vmatpush1.msra.mxu0 0.0
    %7062 = vmatprep.subr.mxu0 0.0
    %7063 = vmatpush1.msra.mxu0 0.0
    %7064 = vmatprep.subr.mxu0 0.0
    %7065 = vmatpush1.msra.mxu0 0.0
    %7066 = vmatprep.subr.mxu0 0.0
    %7067 = vmatpush1.msra.mxu0 0.0
    %7068 = vmatprep.subr.mxu0 0.0
    %7069 = vmatpush1.msra.mxu0 0.0
    %7070 = vmatprep.subr.mxu0 0.0
    %7071 = vmatpush1.msra.mxu0 0.0
    %7072 = vmatprep.subr.mxu0 0.0
    %7073 = vmatpush1.msra.mxu0 0.0
    %7074 = vmatprep.subr.mxu0 0.0
    %7075 = vmatpush1.msra.mxu0 0.0
    %7076 = vmatprep.subr.mxu0 0.0
    %7077 = vmatpush1.msra.mxu0 0.0
    %7078 = vmatprep.subr.mxu0 0.0
    %7079 = vmatpush1.msra.mxu0 0.0
    %7080 = vmatprep.subr.mxu0 0.0
    %7081 = vmatpush1.msra.mxu0 0.0
    %7082 = vmatprep.mubr.f32.mxu0 0.0
    %7083 = vmatmul.mubr.f32.gmra.mrb[0].mxu0 %v6968
    %v7084 = vpop.f32.mrb[0].mxu0
    %v7085 = vadd.f32 0.0, %v7084
    %v7086 = vpop.f32.mrb[0].mxu0
    %7087 = vmatprep.mubr.f32.mxu0 0.0
    %7088 = vmatmul.mubr.f32.gmra.mrb[0].mxu0 %v6971
    %v7089 = vpop.f32.mrb[0].mxu0
    %v7090 = vadd.f32 0.0, %v7089
    %v7091 = vpop.f32.mrb[0].mxu0
    %7092 = vmatprep.mubr.f32.mxu0 0.0
    %7093 = vmatmul.mubr.f32.gmra.mrb[0].mxu0 %v6974
    %v7094 = vpop.f32.mrb[0].mxu0
    %v7095 = vadd.f32 0.0, %v7094
    %v7096 = vpop.f32.mrb[0].mxu0
    %7097 = vmatprep.mubr.f32.mxu0 0.0
    %7098 = vmatmul.mubr.f32.gmra.mrb[0].mxu0 %v6977
    %v7099 = vpop.f32.mrb[0].mxu0
    %v7100 = vadd.f32 0.0, %v7099
    %v7101 = vpop.f32.mrb[0].mxu0
    %7102 = vmatprep.mubr.f32.mxu0 0.0
    %7103 = vmatmul.mubr.f32.gmra.mrb[0].mxu0 %v6980
    %v7104 = vpop.f32.mrb[0].mxu0
    %v7105 = vadd.f32 0.0, %v7104
    %v7106 = vpop.f32.mrb[0].mxu0
    %7107 = vmatprep.mubr.f32.mxu0 0.0
    %7108 = vmatmul.mubr.f32.gmra.mrb[0].mxu0 %v6983
    %v7109 = vpop.f32.mrb[0].mxu0
    %v7110 = vadd.f32 0.0, %v7109
    %v7111 = vpop.f32.mrb[0].mxu0
    %7112 = vmatprep.mubr.f32.mxu0 0.0
    %7113 = vmatmul.mubr.f32.gmra.mrb[0].mxu0 %v6986
    %v7114 = vpop.f32.mrb[0].mxu0
    %v7115 = vadd.f32 0.0, %v7114
    %v7116 = vpop.f32.mrb[0].mxu0
    %7117 = vmatprep.mubr.f32.mxu0 0.0
    %7118 = vmatmul.mubr.f32.gmra.mrb[0].mxu0 %v6989
    %v7119 = vpop.f32.mrb[0].mxu0
    %v7120 = vadd.f32 0.0, %v7119
    %v7121 = vpop.f32.mrb[0].mxu0
    %7122 = vmatprep.mubr.f32.mxu0 0.0
    %7123 = vmatmul.mubr.f32.gmra.mrb[0].mxu0 %v6992
    %v7124 = vpop.f32.mrb[0].mxu0
    %v7125 = vadd.f32 0.0, %v7124
    %v7126 = vpop.f32.mrb[0].mxu0
    %7127 = vmatprep.mubr.f32.mxu0 0.0
    %7128 = vmatmul.mubr.f32.gmra.mrb[0].mxu0 %v6995
    %v7129 = vpop.f32.mrb[0].mxu0
    %v7130 = vadd.f32 0.0, %v7129
    %v7131 = vpop.f32.mrb[0].mxu0
    %7132 = vmatprep.mubr.f32.mxu0 0.0
    %7133 = vmatmul.mubr.f32.gmra.mrb[0].mxu0 %v6998
    %v7134 = vpop.f32.mrb[0].mxu0
    %v7135 = vadd.f32 0.0, %v7134
    %v7136 = vpop.f32.mrb[0].mxu0
    %7137 = vmatprep.mubr.f32.mxu0 0.0
    %7138 = vmatmul.mubr.f32.gmra.mrb[0].mxu0 %v7001
    %v7139 = vpop.f32.mrb[0].mxu0
    %v7140 = vadd.f32 0.0, %v7139
    %v7141 = vpop.f32.mrb[0].mxu0
    %7142 = vmatprep.mubr.f32.mxu0 0.0
    %7143 = vmatmul.mubr.f32.gmra.mrb[0].mxu0 %v7004
    %v7144 = vpop.f32.mrb[0].mxu0
    %v7145 = vadd.f32 0.0, %v7144
    %v7146 = vpop.f32.mrb[0].mxu0
    %7147 = vmatprep.mubr.f32.mxu0 0.0
    %7148 = vmatmul.mubr.f32.gmra.mrb[0].mxu0 %v7007
    %v7149 = vpop.f32.mrb[0].mxu0
    %v7150 = vadd.f32 0.0, %v7149
    %v7151 = vpop.f32.mrb[0].mxu0
    %7152 = vmatprep.mubr.f32.mxu0 0.0
    %7153 = vmatmul.mubr.f32.gmra.mrb[0].mxu0 %v7010
    %v7154 = vpop.f32.mrb[0].mxu0
    %v7155 = vadd.f32 0.0, %v7154
    %v7156 = vpop.f32.mrb[0].mxu0
    %7157 = vmatprep.mubr.f32.mxu0 0.0
    %7158 = vmatmul.mubr.f32.gmra.mrb[0].mxu0 %v7013
    %v7159 = vpop.f32.mrb[0].mxu0
    %v7160 = vadd.f32 0.0, %v7159
    %v7161 = vpop.f32.mrb[0].mxu0
    %7162 = vdwg.mxu0
    %v7163 = vadd.f32 %v5240, %v7085
    %v7164 = vadd.f32 %v5245, %v7090
    %v7165 = vadd.f32 %v5250, %v7095
    %v7166 = vadd.f32 %v5255, %v7100
    %v7167 = vadd.f32 %v5260, %v7105
    %v7168 = vadd.f32 %v5265, %v7110
    %v7169 = vadd.f32 %v5270, %v7115
    %v7170 = vadd.f32 %v5275, %v7120
    %v7171 = vadd.f32 %v5280, %v7125
    %v7172 = vadd.f32 %v5285, %v7130
    %v7173 = vadd.f32 %v5290, %v7135
    %v7174 = vadd.f32 %v5295, %v7140
    %v7175 = vadd.f32 %v5300, %v7145
    %v7176 = vadd.f32 %v5305, %v7150
    %v7177 = vadd.f32 %v5310, %v7155
    %v7178 = vadd.f32 %v5315, %v7160
    %7179 = vrot.lane.b32.xlu0 %v1564, 116
    %v7180 = vpop.permute.xlu0 %7179
    %7181 = vrot.lane.b32.xlu0 %v1569, 116
    %v7182 = vpop.permute.xlu0 %7181
    %7183 = vrot.lane.b32.xlu0 %v1564, 100
    %v7184 = vpop.permute.xlu0 %7183
    %7185 = vrot.lane.b32.xlu0 %v1569, 100
    %v7186 = vpop.permute.xlu0 %7185
    %v7187 = vsel %vm1648, %v7180, 0
    %v7189 = vsel %vm1648, %v7182, 0
    %v7191 = vsel %vm1648, %v7184, 0
    %v7193 = vsel %vm1648, %v7186, 0
    %7195 = vmatprep.subr.mxu0 0.0
    %7196 = vmatpush1.xpose.msra.mxu0 %v7191
    %7197 = vmatprep.subr.mxu0 0.0
    %7198 = vmatpush1.xpose.msra.mxu0 %v7193
    %7199 = vmatprep.subr.mxu0 0.0
    %7200 = vmatpush1.xpose.msra.mxu0 0.0
    %7201 = vmatprep.subr.mxu0 0.0
    %7202 = vmatpush1.xpose.msra.mxu0 0.0
    %7203 = vmatprep.subr.mxu0 0.0
    %7204 = vmatpush1.xpose.msra.mxu0 0.0
    %7205 = vmatprep.subr.mxu0 0.0
    %7206 = vmatpush1.xpose.msra.mxu0 0.0
    %7207 = vmatprep.subr.mxu0 0.0
    %7208 = vmatpush1.xpose.msra.mxu0 0.0
    %7209 = vmatprep.subr.mxu0 0.0
    %7210 = vmatpush1.xpose.msra.mxu0 0.0
    %7211 = vmatprep.subr.mxu0 0.0
    %7212 = vmatpush1.xpose.msra.mxu0 0.0
    %7213 = vmatprep.subr.mxu0 0.0
    %7214 = vmatpush1.xpose.msra.mxu0 0.0
    %7215 = vmatprep.subr.mxu0 0.0
    %7216 = vmatpush1.xpose.msra.mxu0 0.0
    %7217 = vmatprep.subr.mxu0 0.0
    %7218 = vmatpush1.xpose.msra.mxu0 0.0
    %7219 = vmatprep.subr.mxu0 0.0
    %7220 = vmatpush1.xpose.msra.mxu0 0.0
    %7221 = vmatprep.subr.mxu0 0.0
    %7222 = vmatpush1.xpose.msra.mxu0 0.0
    %7223 = vmatprep.subr.mxu0 0.0
    %7224 = vmatpush1.xpose.msra.mxu0 0.0
    %7225 = vmatprep.subr.mxu0 0.0
    %7226 = vmatpush1.xpose.msra.mxu0 0.0
    %7227 = vmatprep.subr.mxu0 0.0
    %7228 = vmatpush1.xpose.msra.mxu0 0.0
    %7229 = vmatprep.subr.mxu0 0.0
    %7230 = vmatpush1.xpose.msra.mxu0 0.0
    %7231 = vmatprep.subr.mxu0 0.0
    %7232 = vmatpush1.xpose.msra.mxu0 0.0
    %7233 = vmatprep.subr.mxu0 0.0
    %7234 = vmatpush1.xpose.msra.mxu0 0.0
    %7235 = vmatprep.subr.mxu0 0.0
    %7236 = vmatpush1.xpose.msra.mxu0 0.0
    %7237 = vmatprep.subr.mxu0 0.0
    %7238 = vmatpush1.xpose.msra.mxu0 0.0
    %7239 = vmatprep.subr.mxu0 0.0
    %7240 = vmatpush1.xpose.msra.mxu0 0.0
    %7241 = vmatprep.subr.mxu0 0.0
    %7242 = vmatpush1.xpose.msra.mxu0 0.0
    %7243 = vmatprep.subr.mxu0 0.0
    %7244 = vmatpush1.xpose.msra.mxu0 0.0
    %7245 = vmatprep.subr.mxu0 0.0
    %7246 = vmatpush1.xpose.msra.mxu0 0.0
    %7247 = vmatprep.subr.mxu0 0.0
    %7248 = vmatpush1.xpose.msra.mxu0 0.0
    %7249 = vmatprep.subr.mxu0 0.0
    %7250 = vmatpush1.xpose.msra.mxu0 0.0
    %7251 = vmatprep.subr.mxu0 0.0
    %7252 = vmatpush1.xpose.msra.mxu0 0.0
    %7253 = vmatprep.subr.mxu0 0.0
    %7254 = vmatpush1.xpose.msra.mxu0 0.0
    %7255 = vmatprep.subr.mxu0 0.0
    %7256 = vmatpush1.xpose.msra.mxu0 0.0
    %7257 = vmatprep.subr.mxu0 0.0
    %7258 = vmatpush1.xpose.msra.mxu0 0.0
    %7259 = vmatprep.mubr.f32.mxu0 0.0
    %7260 = vmatmul.mubr.f32.gmra.mrb[0].mxu0 %v7187
    %v7261 = vpop.f32.mrb[0].mxu0
    %v7262 = vadd.f32 0.0, %v7261
    %v7263 = vpop.f32.mrb[0].mxu0
    %7264 = vmatprep.mubr.f32.mxu0 0.0
    %7265 = vmatmul.mubr.f32.gmra.mrb[0].mxu0 %v7189
    %v7266 = vpop.f32.mrb[0].mxu0
    %v7267 = vadd.f32 0.0, %v7266
    %v7268 = vpop.f32.mrb[0].mxu0
    %7269 = vdwg.mxu0
    %7270 = vrot.lane.b32.xlu0 %v1574, 116
    %v7271 = vpop.permute.xlu0 %7270
    %7272 = vrot.lane.b32.xlu0 %v1579, 116
    %v7273 = vpop.permute.xlu0 %7272
    %7274 = vrot.lane.b32.xlu0 %v1574, 100
    %v7275 = vpop.permute.xlu0 %7274
    %7276 = vrot.lane.b32.xlu0 %v1579, 100
    %v7277 = vpop.permute.xlu0 %7276
    %v7278 = vsel %vm1648, %v7271, 0
    %v7280 = vsel %vm1648, %v7273, 0
    %v7282 = vsel %vm1648, %v7275, 0
    %v7284 = vsel %vm1648, %v7277, 0
    %7286 = vmatprep.subr.mxu0 0.0
    %7287 = vmatpush1.xpose.msra.mxu0 %v7282
    %7288 = vmatprep.subr.mxu0 0.0
    %7289 = vmatpush1.xpose.msra.mxu0 %v7284
    %7290 = vmatprep.subr.mxu0 0.0
    %7291 = vmatpush1.xpose.msra.mxu0 0.0
    %7292 = vmatprep.subr.mxu0 0.0
    %7293 = vmatpush1.xpose.msra.mxu0 0.0
    %7294 = vmatprep.subr.mxu0 0.0
    %7295 = vmatpush1.xpose.msra.mxu0 0.0
    %7296 = vmatprep.subr.mxu0 0.0
    %7297 = vmatpush1.xpose.msra.mxu0 0.0
    %7298 = vmatprep.subr.mxu0 0.0
    %7299 = vmatpush1.xpose.msra.mxu0 0.0
    %7300 = vmatprep.subr.mxu0 0.0
    %7301 = vmatpush1.xpose.msra.mxu0 0.0
    %7302 = vmatprep.subr.mxu0 0.0
    %7303 = vmatpush1.xpose.msra.mxu0 0.0
    %7304 = vmatprep.subr.mxu0 0.0
    %7305 = vmatpush1.xpose.msra.mxu0 0.0
    %7306 = vmatprep.subr.mxu0 0.0
    %7307 = vmatpush1.xpose.msra.mxu0 0.0
    %7308 = vmatprep.subr.mxu0 0.0
    %7309 = vmatpush1.xpose.msra.mxu0 0.0
    %7310 = vmatprep.subr.mxu0 0.0
    %7311 = vmatpush1.xpose.msra.mxu0 0.0
    %7312 = vmatprep.subr.mxu0 0.0
    %7313 = vmatpush1.xpose.msra.mxu0 0.0
    %7314 = vmatprep.subr.mxu0 0.0
    %7315 = vmatpush1.xpose.msra.mxu0 0.0
    %7316 = vmatprep.subr.mxu0 0.0
    %7317 = vmatpush1.xpose.msra.mxu0 0.0
    %7318 = vmatprep.subr.mxu0 0.0
    %7319 = vmatpush1.xpose.msra.mxu0 0.0
    %7320 = vmatprep.subr.mxu0 0.0
    %7321 = vmatpush1.xpose.msra.mxu0 0.0
    %7322 = vmatprep.subr.mxu0 0.0
    %7323 = vmatpush1.xpose.msra.mxu0 0.0
    %7324 = vmatprep.subr.mxu0 0.0
    %7325 = vmatpush1.xpose.msra.mxu0 0.0
    %7326 = vmatprep.subr.mxu0 0.0
    %7327 = vmatpush1.xpose.msra.mxu0 0.0
    %7328 = vmatprep.subr.mxu0 0.0
    %7329 = vmatpush1.xpose.msra.mxu0 0.0
    %7330 = vmatprep.subr.mxu0 0.0
    %7331 = vmatpush1.xpose.msra.mxu0 0.0
    %7332 = vmatprep.subr.mxu0 0.0
    %7333 = vmatpush1.xpose.msra.mxu0 0.0
    %7334 = vmatprep.subr.mxu0 0.0
    %7335 = vmatpush1.xpose.msra.mxu0 0.0
    %7336 = vmatprep.subr.mxu0 0.0
    %7337 = vmatpush1.xpose.msra.mxu0 0.0
    %7338 = vmatprep.subr.mxu0 0.0
    %7339 = vmatpush1.xpose.msra.mxu0 0.0
    %7340 = vmatprep.subr.mxu0 0.0
    %7341 = vmatpush1.xpose.msra.mxu0 0.0
    %7342 = vmatprep.subr.mxu0 0.0
    %7343 = vmatpush1.xpose.msra.mxu0 0.0
    %7344 = vmatprep.subr.mxu0 0.0
    %7345 = vmatpush1.xpose.msra.mxu0 0.0
    %7346 = vmatprep.subr.mxu0 0.0
    %7347 = vmatpush1.xpose.msra.mxu0 0.0
    %7348 = vmatprep.subr.mxu0 0.0
    %7349 = vmatpush1.xpose.msra.mxu0 0.0
    %7350 = vmatprep.mubr.f32.mxu0 0.0
    %7351 = vmatmul.mubr.f32.gmra.mrb[0].mxu0 %v7278
    %v7352 = vpop.f32.mrb[0].mxu0
    %v7353 = vadd.f32 0.0, %v7352
    %v7354 = vpop.f32.mrb[0].mxu0
    %7355 = vmatprep.mubr.f32.mxu0 0.0
    %7356 = vmatmul.mubr.f32.gmra.mrb[0].mxu0 %v7280
    %v7357 = vpop.f32.mrb[0].mxu0
    %v7358 = vadd.f32 0.0, %v7357
    %v7359 = vpop.f32.mrb[0].mxu0
    %7360 = vdwg.mxu0
    %7361 = vrot.lane.b32.xlu0 %v1584, 116
    %v7362 = vpop.permute.xlu0 %7361
    %7363 = vrot.lane.b32.xlu0 %v1589, 116
    %v7364 = vpop.permute.xlu0 %7363
    %7365 = vrot.lane.b32.xlu0 %v1584, 100
    %v7366 = vpop.permute.xlu0 %7365
    %7367 = vrot.lane.b32.xlu0 %v1589, 100
    %v7368 = vpop.permute.xlu0 %7367
    %v7369 = vsel %vm1648, %v7362, 0
    %v7371 = vsel %vm1648, %v7364, 0
    %v7373 = vsel %vm1648, %v7366, 0
    %v7375 = vsel %vm1648, %v7368, 0
    %7377 = vmatprep.subr.mxu0 0.0
    %7378 = vmatpush1.xpose.msra.mxu0 %v7373
    %7379 = vmatprep.subr.mxu0 0.0
    %7380 = vmatpush1.xpose.msra.mxu0 %v7375
    %7381 = vmatprep.subr.mxu0 0.0
    %7382 = vmatpush1.xpose.msra.mxu0 0.0
    %7383 = vmatprep.subr.mxu0 0.0
    %7384 = vmatpush1.xpose.msra.mxu0 0.0
    %7385 = vmatprep.subr.mxu0 0.0
    %7386 = vmatpush1.xpose.msra.mxu0 0.0
    %7387 = vmatprep.subr.mxu0 0.0
    %7388 = vmatpush1.xpose.msra.mxu0 0.0
    %7389 = vmatprep.subr.mxu0 0.0
    %7390 = vmatpush1.xpose.msra.mxu0 0.0
    %7391 = vmatprep.subr.mxu0 0.0
    %7392 = vmatpush1.xpose.msra.mxu0 0.0
    %7393 = vmatprep.subr.mxu0 0.0
    %7394 = vmatpush1.xpose.msra.mxu0 0.0
    %7395 = vmatprep.subr.mxu0 0.0
    %7396 = vmatpush1.xpose.msra.mxu0 0.0
    %7397 = vmatprep.subr.mxu0 0.0
    %7398 = vmatpush1.xpose.msra.mxu0 0.0
    %7399 = vmatprep.subr.mxu0 0.0
    %7400 = vmatpush1.xpose.msra.mxu0 0.0
    %7401 = vmatprep.subr.mxu0 0.0
    %7402 = vmatpush1.xpose.msra.mxu0 0.0
    %7403 = vmatprep.subr.mxu0 0.0
    %7404 = vmatpush1.xpose.msra.mxu0 0.0
    %7405 = vmatprep.subr.mxu0 0.0
    %7406 = vmatpush1.xpose.msra.mxu0 0.0
    %7407 = vmatprep.subr.mxu0 0.0
    %7408 = vmatpush1.xpose.msra.mxu0 0.0
    %7409 = vmatprep.subr.mxu0 0.0
    %7410 = vmatpush1.xpose.msra.mxu0 0.0
    %7411 = vmatprep.subr.mxu0 0.0
    %7412 = vmatpush1.xpose.msra.mxu0 0.0
    %7413 = vmatprep.subr.mxu0 0.0
    %7414 = vmatpush1.xpose.msra.mxu0 0.0
    %7415 = vmatprep.subr.mxu0 0.0
    %7416 = vmatpush1.xpose.msra.mxu0 0.0
    %7417 = vmatprep.subr.mxu0 0.0
    %7418 = vmatpush1.xpose.msra.mxu0 0.0
    %7419 = vmatprep.subr.mxu0 0.0
    %7420 = vmatpush1.xpose.msra.mxu0 0.0
    %7421 = vmatprep.subr.mxu0 0.0
    %7422 = vmatpush1.xpose.msra.mxu0 0.0
    %7423 = vmatprep.subr.mxu0 0.0
    %7424 = vmatpush1.xpose.msra.mxu0 0.0
    %7425 = vmatprep.subr.mxu0 0.0
    %7426 = vmatpush1.xpose.msra.mxu0 0.0
    %7427 = vmatprep.subr.mxu0 0.0
    %7428 = vmatpush1.xpose.msra.mxu0 0.0
    %7429 = vmatprep.subr.mxu0 0.0
    %7430 = vmatpush1.xpose.msra.mxu0 0.0
    %7431 = vmatprep.subr.mxu0 0.0
    %7432 = vmatpush1.xpose.msra.mxu0 0.0
    %7433 = vmatprep.subr.mxu0 0.0
    %7434 = vmatpush1.xpose.msra.mxu0 0.0
    %7435 = vmatprep.subr.mxu0 0.0
    %7436 = vmatpush1.xpose.msra.mxu0 0.0
    %7437 = vmatprep.subr.mxu0 0.0
    %7438 = vmatpush1.xpose.msra.mxu0 0.0
    %7439 = vmatprep.subr.mxu0 0.0
    %7440 = vmatpush1.xpose.msra.mxu0 0.0
    %7441 = vmatprep.mubr.f32.mxu0 0.0
    %7442 = vmatmul.mubr.f32.gmra.mrb[0].mxu0 %v7369
    %v7443 = vpop.f32.mrb[0].mxu0
    %v7444 = vadd.f32 0.0, %v7443
    %v7445 = vpop.f32.mrb[0].mxu0
    %7446 = vmatprep.mubr.f32.mxu0 0.0
    %7447 = vmatmul.mubr.f32.gmra.mrb[0].mxu0 %v7371
    %v7448 = vpop.f32.mrb[0].mxu0
    %v7449 = vadd.f32 0.0, %v7448
    %v7450 = vpop.f32.mrb[0].mxu0
    %7451 = vdwg.mxu0
    %7452 = vrot.lane.b32.xlu0 %v1594, 116
    %v7453 = vpop.permute.xlu0 %7452
    %7454 = vrot.lane.b32.xlu0 %v1599, 116
    %v7455 = vpop.permute.xlu0 %7454
    %7456 = vrot.lane.b32.xlu0 %v1594, 100
    %v7457 = vpop.permute.xlu0 %7456
    %7458 = vrot.lane.b32.xlu0 %v1599, 100
    %v7459 = vpop.permute.xlu0 %7458
    %v7460 = vsel %vm1648, %v7453, 0
    %v7462 = vsel %vm1648, %v7455, 0
    %v7464 = vsel %vm1648, %v7457, 0
    %v7466 = vsel %vm1648, %v7459, 0
    %7468 = vmatprep.subr.mxu0 0.0
    %7469 = vmatpush1.xpose.msra.mxu0 %v7464
    %7470 = vmatprep.subr.mxu0 0.0
    %7471 = vmatpush1.xpose.msra.mxu0 %v7466
    %7472 = vmatprep.subr.mxu0 0.0
    %7473 = vmatpush1.xpose.msra.mxu0 0.0
    %7474 = vmatprep.subr.mxu0 0.0
    %7475 = vmatpush1.xpose.msra.mxu0 0.0
    %7476 = vmatprep.subr.mxu0 0.0
    %7477 = vmatpush1.xpose.msra.mxu0 0.0
    %7478 = vmatprep.subr.mxu0 0.0
    %7479 = vmatpush1.xpose.msra.mxu0 0.0
    %7480 = vmatprep.subr.mxu0 0.0
    %7481 = vmatpush1.xpose.msra.mxu0 0.0
    %7482 = vmatprep.subr.mxu0 0.0
    %7483 = vmatpush1.xpose.msra.mxu0 0.0
    %7484 = vmatprep.subr.mxu0 0.0
    %7485 = vmatpush1.xpose.msra.mxu0 0.0
    %7486 = vmatprep.subr.mxu0 0.0
    %7487 = vmatpush1.xpose.msra.mxu0 0.0
    %7488 = vmatprep.subr.mxu0 0.0
    %7489 = vmatpush1.xpose.msra.mxu0 0.0
    %7490 = vmatprep.subr.mxu0 0.0
    %7491 = vmatpush1.xpose.msra.mxu0 0.0
    %7492 = vmatprep.subr.mxu0 0.0
    %7493 = vmatpush1.xpose.msra.mxu0 0.0
    %7494 = vmatprep.subr.mxu0 0.0
    %7495 = vmatpush1.xpose.msra.mxu0 0.0
    %7496 = vmatprep.subr.mxu0 0.0
    %7497 = vmatpush1.xpose.msra.mxu0 0.0
    %7498 = vmatprep.subr.mxu0 0.0
    %7499 = vmatpush1.xpose.msra.mxu0 0.0
    %7500 = vmatprep.subr.mxu0 0.0
    %7501 = vmatpush1.xpose.msra.mxu0 0.0
    %7502 = vmatprep.subr.mxu0 0.0
    %7503 = vmatpush1.xpose.msra.mxu0 0.0
    %7504 = vmatprep.subr.mxu0 0.0
    %7505 = vmatpush1.xpose.msra.mxu0 0.0
    %7506 = vmatprep.subr.mxu0 0.0
    %7507 = vmatpush1.xpose.msra.mxu0 0.0
    %7508 = vmatprep.subr.mxu0 0.0
    %7509 = vmatpush1.xpose.msra.mxu0 0.0
    %7510 = vmatprep.subr.mxu0 0.0
    %7511 = vmatpush1.xpose.msra.mxu0 0.0
    %7512 = vmatprep.subr.mxu0 0.0
    %7513 = vmatpush1.xpose.msra.mxu0 0.0
    %7514 = vmatprep.subr.mxu0 0.0
    %7515 = vmatpush1.xpose.msra.mxu0 0.0
    %7516 = vmatprep.subr.mxu0 0.0
    %7517 = vmatpush1.xpose.msra.mxu0 0.0
    %7518 = vmatprep.subr.mxu0 0.0
    %7519 = vmatpush1.xpose.msra.mxu0 0.0
    %7520 = vmatprep.subr.mxu0 0.0
    %7521 = vmatpush1.xpose.msra.mxu0 0.0
    %7522 = vmatprep.subr.mxu0 0.0
    %7523 = vmatpush1.xpose.msra.mxu0 0.0
    %7524 = vmatprep.subr.mxu0 0.0
    %7525 = vmatpush1.xpose.msra.mxu0 0.0
    %7526 = vmatprep.subr.mxu0 0.0
    %7527 = vmatpush1.xpose.msra.mxu0 0.0
    %7528 = vmatprep.subr.mxu0 0.0
    %7529 = vmatpush1.xpose.msra.mxu0 0.0
    %7530 = vmatprep.subr.mxu0 0.0
    %7531 = vmatpush1.xpose.msra.mxu0 0.0
    %7532 = vmatprep.mubr.f32.mxu0 0.0
    %7533 = vmatmul.mubr.f32.gmra.mrb[0].mxu0 %v7460
    %v7534 = vpop.f32.mrb[0].mxu0
    %v7535 = vadd.f32 0.0, %v7534
    %v7536 = vpop.f32.mrb[0].mxu0
    %7537 = vmatprep.mubr.f32.mxu0 0.0
    %7538 = vmatmul.mubr.f32.gmra.mrb[0].mxu0 %v7462
    %v7539 = vpop.f32.mrb[0].mxu0
    %v7540 = vadd.f32 0.0, %v7539
    %v7541 = vpop.f32.mrb[0].mxu0
    %7542 = vdwg.mxu0
    %7543 = vrot.lane.b32.xlu0 %v1604, 116
    %v7544 = vpop.permute.xlu0 %7543
    %7545 = vrot.lane.b32.xlu0 %v1609, 116
    %v7546 = vpop.permute.xlu0 %7545
    %7547 = vrot.lane.b32.xlu0 %v1604, 100
    %v7548 = vpop.permute.xlu0 %7547
    %7549 = vrot.lane.b32.xlu0 %v1609, 100
    %v7550 = vpop.permute.xlu0 %7549
    %v7551 = vsel %vm1648, %v7544, 0
    %v7553 = vsel %vm1648, %v7546, 0
    %v7555 = vsel %vm1648, %v7548, 0
    %v7557 = vsel %vm1648, %v7550, 0
    %7559 = vmatprep.subr.mxu0 0.0
    %7560 = vmatpush1.xpose.msra.mxu0 %v7555
    %7561 = vmatprep.subr.mxu0 0.0
    %7562 = vmatpush1.xpose.msra.mxu0 %v7557
    %7563 = vmatprep.subr.mxu0 0.0
    %7564 = vmatpush1.xpose.msra.mxu0 0.0
    %7565 = vmatprep.subr.mxu0 0.0
    %7566 = vmatpush1.xpose.msra.mxu0 0.0
    %7567 = vmatprep.subr.mxu0 0.0
    %7568 = vmatpush1.xpose.msra.mxu0 0.0
    %7569 = vmatprep.subr.mxu0 0.0
    %7570 = vmatpush1.xpose.msra.mxu0 0.0
    %7571 = vmatprep.subr.mxu0 0.0
    %7572 = vmatpush1.xpose.msra.mxu0 0.0
    %7573 = vmatprep.subr.mxu0 0.0
    %7574 = vmatpush1.xpose.msra.mxu0 0.0
    %7575 = vmatprep.subr.mxu0 0.0
    %7576 = vmatpush1.xpose.msra.mxu0 0.0
    %7577 = vmatprep.subr.mxu0 0.0
    %7578 = vmatpush1.xpose.msra.mxu0 0.0
    %7579 = vmatprep.subr.mxu0 0.0
    %7580 = vmatpush1.xpose.msra.mxu0 0.0
    %7581 = vmatprep.subr.mxu0 0.0
    %7582 = vmatpush1.xpose.msra.mxu0 0.0
    %7583 = vmatprep.subr.mxu0 0.0
    %7584 = vmatpush1.xpose.msra.mxu0 0.0
    %7585 = vmatprep.subr.mxu0 0.0
    %7586 = vmatpush1.xpose.msra.mxu0 0.0
    %7587 = vmatprep.subr.mxu0 0.0
    %7588 = vmatpush1.xpose.msra.mxu0 0.0
    %7589 = vmatprep.subr.mxu0 0.0
    %7590 = vmatpush1.xpose.msra.mxu0 0.0
    %7591 = vmatprep.subr.mxu0 0.0
    %7592 = vmatpush1.xpose.msra.mxu0 0.0
    %7593 = vmatprep.subr.mxu0 0.0
    %7594 = vmatpush1.xpose.msra.mxu0 0.0
    %7595 = vmatprep.subr.mxu0 0.0
    %7596 = vmatpush1.xpose.msra.mxu0 0.0
    %7597 = vmatprep.subr.mxu0 0.0
    %7598 = vmatpush1.xpose.msra.mxu0 0.0
    %7599 = vmatprep.subr.mxu0 0.0
    %7600 = vmatpush1.xpose.msra.mxu0 0.0
    %7601 = vmatprep.subr.mxu0 0.0
    %7602 = vmatpush1.xpose.msra.mxu0 0.0
    %7603 = vmatprep.subr.mxu0 0.0
    %7604 = vmatpush1.xpose.msra.mxu0 0.0
    %7605 = vmatprep.subr.mxu0 0.0
    %7606 = vmatpush1.xpose.msra.mxu0 0.0
    %7607 = vmatprep.subr.mxu0 0.0
    %7608 = vmatpush1.xpose.msra.mxu0 0.0
    %7609 = vmatprep.subr.mxu0 0.0
    %7610 = vmatpush1.xpose.msra.mxu0 0.0
    %7611 = vmatprep.subr.mxu0 0.0
    %7612 = vmatpush1.xpose.msra.mxu0 0.0
    %7613 = vmatprep.subr.mxu0 0.0
    %7614 = vmatpush1.xpose.msra.mxu0 0.0
    %7615 = vmatprep.subr.mxu0 0.0
    %7616 = vmatpush1.xpose.msra.mxu0 0.0
    %7617 = vmatprep.subr.mxu0 0.0
    %7618 = vmatpush1.xpose.msra.mxu0 0.0
    %7619 = vmatprep.subr.mxu0 0.0
    %7620 = vmatpush1.xpose.msra.mxu0 0.0
    %7621 = vmatprep.subr.mxu0 0.0
    %7622 = vmatpush1.xpose.msra.mxu0 0.0
    %7623 = vmatprep.mubr.f32.mxu0 0.0
    %7624 = vmatmul.mubr.f32.gmra.mrb[0].mxu0 %v7551
    %v7625 = vpop.f32.mrb[0].mxu0
    %v7626 = vadd.f32 0.0, %v7625
    %v7627 = vpop.f32.mrb[0].mxu0
    %7628 = vmatprep.mubr.f32.mxu0 0.0
    %7629 = vmatmul.mubr.f32.gmra.mrb[0].mxu0 %v7553
    %v7630 = vpop.f32.mrb[0].mxu0
    %v7631 = vadd.f32 0.0, %v7630
    %v7632 = vpop.f32.mrb[0].mxu0
    %7633 = vdwg.mxu0
    %7634 = vrot.lane.b32.xlu0 %v1614, 116
    %v7635 = vpop.permute.xlu0 %7634
    %7636 = vrot.lane.b32.xlu0 %v1619, 116
    %v7637 = vpop.permute.xlu0 %7636
    %7638 = vrot.lane.b32.xlu0 %v1614, 100
    %v7639 = vpop.permute.xlu0 %7638
    %7640 = vrot.lane.b32.xlu0 %v1619, 100
    %v7641 = vpop.permute.xlu0 %7640
    %v7642 = vsel %vm1648, %v7635, 0
    %v7644 = vsel %vm1648, %v7637, 0
    %v7646 = vsel %vm1648, %v7639, 0
    %v7648 = vsel %vm1648, %v7641, 0
    %7650 = vmatprep.subr.mxu0 0.0
    %7651 = vmatpush1.xpose.msra.mxu0 %v7646
    %7652 = vmatprep.subr.mxu0 0.0
    %7653 = vmatpush1.xpose.msra.mxu0 %v7648
    %7654 = vmatprep.subr.mxu0 0.0
    %7655 = vmatpush1.xpose.msra.mxu0 0.0
    %7656 = vmatprep.subr.mxu0 0.0
    %7657 = vmatpush1.xpose.msra.mxu0 0.0
    %7658 = vmatprep.subr.mxu0 0.0
    %7659 = vmatpush1.xpose.msra.mxu0 0.0
    %7660 = vmatprep.subr.mxu0 0.0
    %7661 = vmatpush1.xpose.msra.mxu0 0.0
    %7662 = vmatprep.subr.mxu0 0.0
    %7663 = vmatpush1.xpose.msra.mxu0 0.0
    %7664 = vmatprep.subr.mxu0 0.0
    %7665 = vmatpush1.xpose.msra.mxu0 0.0
    %7666 = vmatprep.subr.mxu0 0.0
    %7667 = vmatpush1.xpose.msra.mxu0 0.0
    %7668 = vmatprep.subr.mxu0 0.0
    %7669 = vmatpush1.xpose.msra.mxu0 0.0
    %7670 = vmatprep.subr.mxu0 0.0
    %7671 = vmatpush1.xpose.msra.mxu0 0.0
    %7672 = vmatprep.subr.mxu0 0.0
    %7673 = vmatpush1.xpose.msra.mxu0 0.0
    %7674 = vmatprep.subr.mxu0 0.0
    %7675 = vmatpush1.xpose.msra.mxu0 0.0
    %7676 = vmatprep.subr.mxu0 0.0
    %7677 = vmatpush1.xpose.msra.mxu0 0.0
    %7678 = vmatprep.subr.mxu0 0.0
    %7679 = vmatpush1.xpose.msra.mxu0 0.0
    %7680 = vmatprep.subr.mxu0 0.0
    %7681 = vmatpush1.xpose.msra.mxu0 0.0
    %7682 = vmatprep.subr.mxu0 0.0
    %7683 = vmatpush1.xpose.msra.mxu0 0.0
    %7684 = vmatprep.subr.mxu0 0.0
    %7685 = vmatpush1.xpose.msra.mxu0 0.0
    %7686 = vmatprep.subr.mxu0 0.0
    %7687 = vmatpush1.xpose.msra.mxu0 0.0
    %7688 = vmatprep.subr.mxu0 0.0
    %7689 = vmatpush1.xpose.msra.mxu0 0.0
    %7690 = vmatprep.subr.mxu0 0.0
    %7691 = vmatpush1.xpose.msra.mxu0 0.0
    %7692 = vmatprep.subr.mxu0 0.0
    %7693 = vmatpush1.xpose.msra.mxu0 0.0
    %7694 = vmatprep.subr.mxu0 0.0
    %7695 = vmatpush1.xpose.msra.mxu0 0.0
    %7696 = vmatprep.subr.mxu0 0.0
    %7697 = vmatpush1.xpose.msra.mxu0 0.0
    %7698 = vmatprep.subr.mxu0 0.0
    %7699 = vmatpush1.xpose.msra.mxu0 0.0
    %7700 = vmatprep.subr.mxu0 0.0
    %7701 = vmatpush1.xpose.msra.mxu0 0.0
    %7702 = vmatprep.subr.mxu0 0.0
    %7703 = vmatpush1.xpose.msra.mxu0 0.0
    %7704 = vmatprep.subr.mxu0 0.0
    %7705 = vmatpush1.xpose.msra.mxu0 0.0
    %7706 = vmatprep.subr.mxu0 0.0
    %7707 = vmatpush1.xpose.msra.mxu0 0.0
    %7708 = vmatprep.subr.mxu0 0.0
    %7709 = vmatpush1.xpose.msra.mxu0 0.0
    %7710 = vmatprep.subr.mxu0 0.0
    %7711 = vmatpush1.xpose.msra.mxu0 0.0
    %7712 = vmatprep.subr.mxu0 0.0
    %7713 = vmatpush1.xpose.msra.mxu0 0.0
    %7714 = vmatprep.mubr.f32.mxu0 0.0
    %7715 = vmatmul.mubr.f32.gmra.mrb[0].mxu0 %v7642
    %v7716 = vpop.f32.mrb[0].mxu0
    %v7717 = vadd.f32 0.0, %v7716
    %v7718 = vpop.f32.mrb[0].mxu0
    %7719 = vmatprep.mubr.f32.mxu0 0.0
    %7720 = vmatmul.mubr.f32.gmra.mrb[0].mxu0 %v7644
    %v7721 = vpop.f32.mrb[0].mxu0
    %v7722 = vadd.f32 0.0, %v7721
    %v7723 = vpop.f32.mrb[0].mxu0
    %7724 = vdwg.mxu0
    %7725 = vrot.lane.b32.xlu0 %v1624, 116
    %v7726 = vpop.permute.xlu0 %7725
    %7727 = vrot.lane.b32.xlu0 %v1629, 116
    %v7728 = vpop.permute.xlu0 %7727
    %7729 = vrot.lane.b32.xlu0 %v1624, 100
    %v7730 = vpop.permute.xlu0 %7729
    %7731 = vrot.lane.b32.xlu0 %v1629, 100
    %v7732 = vpop.permute.xlu0 %7731
    %v7733 = vsel %vm1648, %v7726, 0
    %v7735 = vsel %vm1648, %v7728, 0
    %v7737 = vsel %vm1648, %v7730, 0
    %v7739 = vsel %vm1648, %v7732, 0
    %7741 = vmatprep.subr.mxu0 0.0
    %7742 = vmatpush1.xpose.msra.mxu0 %v7737
    %7743 = vmatprep.subr.mxu0 0.0
    %7744 = vmatpush1.xpose.msra.mxu0 %v7739
    %7745 = vmatprep.subr.mxu0 0.0
    %7746 = vmatpush1.xpose.msra.mxu0 0.0
    %7747 = vmatprep.subr.mxu0 0.0
    %7748 = vmatpush1.xpose.msra.mxu0 0.0
    %7749 = vmatprep.subr.mxu0 0.0
    %7750 = vmatpush1.xpose.msra.mxu0 0.0
    %7751 = vmatprep.subr.mxu0 0.0
    %7752 = vmatpush1.xpose.msra.mxu0 0.0
    %7753 = vmatprep.subr.mxu0 0.0
    %7754 = vmatpush1.xpose.msra.mxu0 0.0
    %7755 = vmatprep.subr.mxu0 0.0
    %7756 = vmatpush1.xpose.msra.mxu0 0.0
    %7757 = vmatprep.subr.mxu0 0.0
    %7758 = vmatpush1.xpose.msra.mxu0 0.0
    %7759 = vmatprep.subr.mxu0 0.0
    %7760 = vmatpush1.xpose.msra.mxu0 0.0
    %7761 = vmatprep.subr.mxu0 0.0
    %7762 = vmatpush1.xpose.msra.mxu0 0.0
    %7763 = vmatprep.subr.mxu0 0.0
    %7764 = vmatpush1.xpose.msra.mxu0 0.0
    %7765 = vmatprep.subr.mxu0 0.0
    %7766 = vmatpush1.xpose.msra.mxu0 0.0
    %7767 = vmatprep.subr.mxu0 0.0
    %7768 = vmatpush1.xpose.msra.mxu0 0.0
    %7769 = vmatprep.subr.mxu0 0.0
    %7770 = vmatpush1.xpose.msra.mxu0 0.0
    %7771 = vmatprep.subr.mxu0 0.0
    %7772 = vmatpush1.xpose.msra.mxu0 0.0
    %7773 = vmatprep.subr.mxu0 0.0
    %7774 = vmatpush1.xpose.msra.mxu0 0.0
    %7775 = vmatprep.subr.mxu0 0.0
    %7776 = vmatpush1.xpose.msra.mxu0 0.0
    %7777 = vmatprep.subr.mxu0 0.0
    %7778 = vmatpush1.xpose.msra.mxu0 0.0
    %7779 = vmatprep.subr.mxu0 0.0
    %7780 = vmatpush1.xpose.msra.mxu0 0.0
    %7781 = vmatprep.subr.mxu0 0.0
    %7782 = vmatpush1.xpose.msra.mxu0 0.0
    %7783 = vmatprep.subr.mxu0 0.0
    %7784 = vmatpush1.xpose.msra.mxu0 0.0
    %7785 = vmatprep.subr.mxu0 0.0
    %7786 = vmatpush1.xpose.msra.mxu0 0.0
    %7787 = vmatprep.subr.mxu0 0.0
    %7788 = vmatpush1.xpose.msra.mxu0 0.0
    %7789 = vmatprep.subr.mxu0 0.0
    %7790 = vmatpush1.xpose.msra.mxu0 0.0
    %7791 = vmatprep.subr.mxu0 0.0
    %7792 = vmatpush1.xpose.msra.mxu0 0.0
    %7793 = vmatprep.subr.mxu0 0.0
    %7794 = vmatpush1.xpose.msra.mxu0 0.0
    %7795 = vmatprep.subr.mxu0 0.0
    %7796 = vmatpush1.xpose.msra.mxu0 0.0
    %7797 = vmatprep.subr.mxu0 0.0
    %7798 = vmatpush1.xpose.msra.mxu0 0.0
    %7799 = vmatprep.subr.mxu0 0.0
    %7800 = vmatpush1.xpose.msra.mxu0 0.0
    %7801 = vmatprep.subr.mxu0 0.0
    %7802 = vmatpush1.xpose.msra.mxu0 0.0
    %7803 = vmatprep.subr.mxu0 0.0
    %7804 = vmatpush1.xpose.msra.mxu0 0.0
    %7805 = vmatprep.mubr.f32.mxu0 0.0
    %7806 = vmatmul.mubr.f32.gmra.mrb[0].mxu0 %v7733
    %v7807 = vpop.f32.mrb[0].mxu0
    %v7808 = vadd.f32 0.0, %v7807
    %v7809 = vpop.f32.mrb[0].mxu0
    %7810 = vmatprep.mubr.f32.mxu0 0.0
    %7811 = vmatmul.mubr.f32.gmra.mrb[0].mxu0 %v7735
    %v7812 = vpop.f32.mrb[0].mxu0
    %v7813 = vadd.f32 0.0, %v7812
    %v7814 = vpop.f32.mrb[0].mxu0
    %7815 = vdwg.mxu0
    %7816 = vrot.lane.b32.xlu0 %v1634, 116
    %v7817 = vpop.permute.xlu0 %7816
    %7818 = vrot.lane.b32.xlu0 %v1639, 116
    %v7819 = vpop.permute.xlu0 %7818
    %7820 = vrot.lane.b32.xlu0 %v1634, 100
    %v7821 = vpop.permute.xlu0 %7820
    %7822 = vrot.lane.b32.xlu0 %v1639, 100
    %v7823 = vpop.permute.xlu0 %7822
    %v7824 = vsel %vm1648, %v7817, 0
    %v7826 = vsel %vm1648, %v7819, 0
    %v7828 = vsel %vm1648, %v7821, 0
    %v7830 = vsel %vm1648, %v7823, 0
    %7832 = vmatprep.subr.mxu0 0.0
    %7833 = vmatpush1.xpose.msra.mxu0 %v7828
    %7834 = vmatprep.subr.mxu0 0.0
    %7835 = vmatpush1.xpose.msra.mxu0 %v7830
    %7836 = vmatprep.subr.mxu0 0.0
    %7837 = vmatpush1.xpose.msra.mxu0 0.0
    %7838 = vmatprep.subr.mxu0 0.0
    %7839 = vmatpush1.xpose.msra.mxu0 0.0
    %7840 = vmatprep.subr.mxu0 0.0
    %7841 = vmatpush1.xpose.msra.mxu0 0.0
    %7842 = vmatprep.subr.mxu0 0.0
    %7843 = vmatpush1.xpose.msra.mxu0 0.0
    %7844 = vmatprep.subr.mxu0 0.0
    %7845 = vmatpush1.xpose.msra.mxu0 0.0
    %7846 = vmatprep.subr.mxu0 0.0
    %7847 = vmatpush1.xpose.msra.mxu0 0.0
    %7848 = vmatprep.subr.mxu0 0.0
    %7849 = vmatpush1.xpose.msra.mxu0 0.0
    %7850 = vmatprep.subr.mxu0 0.0
    %7851 = vmatpush1.xpose.msra.mxu0 0.0
    %7852 = vmatprep.subr.mxu0 0.0
    %7853 = vmatpush1.xpose.msra.mxu0 0.0
    %7854 = vmatprep.subr.mxu0 0.0
    %7855 = vmatpush1.xpose.msra.mxu0 0.0
    %7856 = vmatprep.subr.mxu0 0.0
    %7857 = vmatpush1.xpose.msra.mxu0 0.0
    %7858 = vmatprep.subr.mxu0 0.0
    %7859 = vmatpush1.xpose.msra.mxu0 0.0
    %7860 = vmatprep.subr.mxu0 0.0
    %7861 = vmatpush1.xpose.msra.mxu0 0.0
    %7862 = vmatprep.subr.mxu0 0.0
    %7863 = vmatpush1.xpose.msra.mxu0 0.0
    %7864 = vmatprep.subr.mxu0 0.0
    %7865 = vmatpush1.xpose.msra.mxu0 0.0
    %7866 = vmatprep.subr.mxu0 0.0
    %7867 = vmatpush1.xpose.msra.mxu0 0.0
    %7868 = vmatprep.subr.mxu0 0.0
    %7869 = vmatpush1.xpose.msra.mxu0 0.0
    %7870 = vmatprep.subr.mxu0 0.0
    %7871 = vmatpush1.xpose.msra.mxu0 0.0
    %7872 = vmatprep.subr.mxu0 0.0
    %7873 = vmatpush1.xpose.msra.mxu0 0.0
    %7874 = vmatprep.subr.mxu0 0.0
    %7875 = vmatpush1.xpose.msra.mxu0 0.0
    %7876 = vmatprep.subr.mxu0 0.0
    %7877 = vmatpush1.xpose.msra.mxu0 0.0
    %7878 = vmatprep.subr.mxu0 0.0
    %7879 = vmatpush1.xpose.msra.mxu0 0.0
    %7880 = vmatprep.subr.mxu0 0.0
    %7881 = vmatpush1.xpose.msra.mxu0 0.0
    %7882 = vmatprep.subr.mxu0 0.0
    %7883 = vmatpush1.xpose.msra.mxu0 0.0
    %7884 = vmatprep.subr.mxu0 0.0
    %7885 = vmatpush1.xpose.msra.mxu0 0.0
    %7886 = vmatprep.subr.mxu0 0.0
    %7887 = vmatpush1.xpose.msra.mxu0 0.0
    %7888 = vmatprep.subr.mxu0 0.0
    %7889 = vmatpush1.xpose.msra.mxu0 0.0
    %7890 = vmatprep.subr.mxu0 0.0
    %7891 = vmatpush1.xpose.msra.mxu0 0.0
    %7892 = vmatprep.subr.mxu0 0.0
    %7893 = vmatpush1.xpose.msra.mxu0 0.0
    %7894 = vmatprep.subr.mxu0 0.0
    %7895 = vmatpush1.xpose.msra.mxu0 0.0
    %7896 = vmatprep.mubr.f32.mxu0 0.0
    %7897 = vmatmul.mubr.f32.gmra.mrb[0].mxu0 %v7824
    %v7898 = vpop.f32.mrb[0].mxu0
    %v7899 = vadd.f32 0.0, %v7898
    %v7900 = vpop.f32.mrb[0].mxu0
    %7901 = vmatprep.mubr.f32.mxu0 0.0
    %7902 = vmatmul.mubr.f32.gmra.mrb[0].mxu0 %v7826
    %v7903 = vpop.f32.mrb[0].mxu0
    %v7904 = vadd.f32 0.0, %v7903
    %v7905 = vpop.f32.mrb[0].mxu0
    %7906 = vdwg.mxu0
    %v7907 = vsel %vm1192, %v7262, -inf
    %7908 = vmax.xlane.f32.xlu0 %v7907
    %v7909 = vpop.xlane.xlu0 %7908
    %v7910 = vsel %vm1192, %v7267, -inf
    %7911 = vmax.xlane.f32.xlu0 %v7910
    %v7912 = vpop.xlane.xlu0 %7911
    %v7913 = vsel %vm1192, %v7353, -inf
    %7914 = vmax.xlane.f32.xlu0 %v7913
    %v7915 = vpop.xlane.xlu0 %7914
    %v7916 = vsel %vm1192, %v7358, -inf
    %7917 = vmax.xlane.f32.xlu0 %v7916
    %v7918 = vpop.xlane.xlu0 %7917
    %v7919 = vsel %vm1192, %v7444, -inf
    %7920 = vmax.xlane.f32.xlu0 %v7919
    %v7921 = vpop.xlane.xlu0 %7920
    %v7922 = vsel %vm1192, %v7449, -inf
    %7923 = vmax.xlane.f32.xlu0 %v7922
    %v7924 = vpop.xlane.xlu0 %7923
    %v7925 = vsel %vm1192, %v7535, -inf
    %7926 = vmax.xlane.f32.xlu0 %v7925
    %v7927 = vpop.xlane.xlu0 %7926
    %v7928 = vsel %vm1192, %v7540, -inf
    %7929 = vmax.xlane.f32.xlu0 %v7928
    %v7930 = vpop.xlane.xlu0 %7929
    %v7931 = vsel %vm1192, %v7626, -inf
    %7932 = vmax.xlane.f32.xlu0 %v7931
    %v7933 = vpop.xlane.xlu0 %7932
    %v7934 = vsel %vm1192, %v7631, -inf
    %7935 = vmax.xlane.f32.xlu0 %v7934
    %v7936 = vpop.xlane.xlu0 %7935
    %v7937 = vsel %vm1192, %v7717, -inf
    %7938 = vmax.xlane.f32.xlu0 %v7937
    %v7939 = vpop.xlane.xlu0 %7938
    %v7940 = vsel %vm1192, %v7722, -inf
    %7941 = vmax.xlane.f32.xlu0 %v7940
    %v7942 = vpop.xlane.xlu0 %7941
    %v7943 = vsel %vm1192, %v7808, -inf
    %7944 = vmax.xlane.f32.xlu0 %v7943
    %v7945 = vpop.xlane.xlu0 %7944
    %v7946 = vsel %vm1192, %v7813, -inf
    %7947 = vmax.xlane.f32.xlu0 %v7946
    %v7948 = vpop.xlane.xlu0 %7947
    %v7949 = vsel %vm1192, %v7899, -inf
    %7950 = vmax.xlane.f32.xlu0 %v7949
    %v7951 = vpop.xlane.xlu0 %7950
    %v7952 = vsel %vm1192, %v7904, -inf
    %7953 = vmax.xlane.f32.xlu0 %v7952
    %v7954 = vpop.xlane.xlu0 %7953
    %v7955 = vsub.f32 %v7262, %v7909
    %v7956 = vsub.f32 %v7267, %v7912
    %v7957 = vsub.f32 %v7353, %v7915
    %v7958 = vsub.f32 %v7358, %v7918
    %v7959 = vsub.f32 %v7444, %v7921
    %v7960 = vsub.f32 %v7449, %v7924
    %v7961 = vsub.f32 %v7535, %v7927
    %v7962 = vsub.f32 %v7540, %v7930
    %v7963 = vsub.f32 %v7626, %v7933
    %v7964 = vsub.f32 %v7631, %v7936
    %v7965 = vsub.f32 %v7717, %v7939
    %v7966 = vsub.f32 %v7722, %v7942
    %v7967 = vsub.f32 %v7808, %v7945
    %v7968 = vsub.f32 %v7813, %v7948
    %v7969 = vsub.f32 %v7899, %v7951
    %v7970 = vsub.f32 %v7904, %v7954
    %v7971 = vmul.f32 %v7955, 1.442695
    %v7972 = vpow.pop %v7971
    %v7973 = vmul.f32 %v7956, 1.442695
    %v7974 = vpow.pop %v7973
    %v7975 = vmul.f32 %v7957, 1.442695
    %v7976 = vpow.pop %v7975
    %v7977 = vmul.f32 %v7958, 1.442695
    %v7978 = vpow.pop %v7977
    %v7979 = vmul.f32 %v7959, 1.442695
    %v7980 = vpow.pop %v7979
    %v7981 = vmul.f32 %v7960, 1.442695
    %v7982 = vpow.pop %v7981
    %v7983 = vmul.f32 %v7961, 1.442695
    %v7984 = vpow.pop %v7983
    %v7985 = vmul.f32 %v7962, 1.442695
    %v7986 = vpow.pop %v7985
    %v7987 = vmul.f32 %v7963, 1.442695
    %v7988 = vpow.pop %v7987
    %v7989 = vmul.f32 %v7964, 1.442695
    %v7990 = vpow.pop %v7989
    %v7991 = vmul.f32 %v7965, 1.442695
    %v7992 = vpow.pop %v7991
    %v7993 = vmul.f32 %v7966, 1.442695
    %v7994 = vpow.pop %v7993
    %v7995 = vmul.f32 %v7967, 1.442695
    %v7996 = vpow.pop %v7995
    %v7997 = vmul.f32 %v7968, 1.442695
    %v7998 = vpow.pop %v7997
    %v7999 = vmul.f32 %v7969, 1.442695
    %v8000 = vpow.pop %v7999
    %v8001 = vmul.f32 %v7970, 1.442695
    %v8002 = vpow.pop %v8001
    %v8003 = vsel %vm1192, %v7972, 0.0
    %8004 = vadd.xlane.f32.xlu0 %v8003
    %v8005 = vpop.xlane.xlu0 %8004
    %v8006 = vsel %vm1192, %v7974, 0.0
    %8007 = vadd.xlane.f32.xlu0 %v8006
    %v8008 = vpop.xlane.xlu0 %8007
    %v8009 = vsel %vm1192, %v7976, 0.0
    %8010 = vadd.xlane.f32.xlu0 %v8009
    %v8011 = vpop.xlane.xlu0 %8010
    %v8012 = vsel %vm1192, %v7978, 0.0
    %8013 = vadd.xlane.f32.xlu0 %v8012
    %v8014 = vpop.xlane.xlu0 %8013
    %v8015 = vsel %vm1192, %v7980, 0.0
    %8016 = vadd.xlane.f32.xlu0 %v8015
    %v8017 = vpop.xlane.xlu0 %8016
    %v8018 = vsel %vm1192, %v7982, 0.0
    %8019 = vadd.xlane.f32.xlu0 %v8018
    %v8020 = vpop.xlane.xlu0 %8019
    %v8021 = vsel %vm1192, %v7984, 0.0
    %8022 = vadd.xlane.f32.xlu0 %v8021
    %v8023 = vpop.xlane.xlu0 %8022
    %v8024 = vsel %vm1192, %v7986, 0.0
    %8025 = vadd.xlane.f32.xlu0 %v8024
    %v8026 = vpop.xlane.xlu0 %8025
    %v8027 = vsel %vm1192, %v7988, 0.0
    %8028 = vadd.xlane.f32.xlu0 %v8027
    %v8029 = vpop.xlane.xlu0 %8028
    %v8030 = vsel %vm1192, %v7990, 0.0
    %8031 = vadd.xlane.f32.xlu0 %v8030
    %v8032 = vpop.xlane.xlu0 %8031
    %v8033 = vsel %vm1192, %v7992, 0.0
    %8034 = vadd.xlane.f32.xlu0 %v8033
    %v8035 = vpop.xlane.xlu0 %8034
    %v8036 = vsel %vm1192, %v7994, 0.0
    %8037 = vadd.xlane.f32.xlu0 %v8036
    %v8038 = vpop.xlane.xlu0 %8037
    %v8039 = vsel %vm1192, %v7996, 0.0
    %8040 = vadd.xlane.f32.xlu0 %v8039
    %v8041 = vpop.xlane.xlu0 %8040
    %v8042 = vsel %vm1192, %v7998, 0.0
    %8043 = vadd.xlane.f32.xlu0 %v8042
    %v8044 = vpop.xlane.xlu0 %8043
    %v8045 = vsel %vm1192, %v8000, 0.0
    %8046 = vadd.xlane.f32.xlu0 %v8045
    %v8047 = vpop.xlane.xlu0 %8046
    %v8048 = vsel %vm1192, %v8002, 0.0
    %8049 = vadd.xlane.f32.xlu0 %v8048
    %v8050 = vpop.xlane.xlu0 %8049
    %v8051 = vrcp.pop %v8005
    %v8052 = vrcp.pop %v8008
    %v8053 = vrcp.pop %v8011
    %v8054 = vrcp.pop %v8014
    %v8055 = vrcp.pop %v8017
    %v8056 = vrcp.pop %v8020
    %v8057 = vrcp.pop %v8023
    %v8058 = vrcp.pop %v8026
    %v8059 = vrcp.pop %v8029
    %v8060 = vrcp.pop %v8032
    %v8061 = vrcp.pop %v8035
    %v8062 = vrcp.pop %v8038
    %v8063 = vrcp.pop %v8041
    %v8064 = vrcp.pop %v8044
    %v8065 = vrcp.pop %v8047
    %v8066 = vrcp.pop %v8050
    %v8067 = vmul.f32 %v8005, %v8051
    %v8068 = vmul.f32 %v8008, %v8052
    %v8069 = vmul.f32 %v8011, %v8053
    %v8070 = vmul.f32 %v8014, %v8054
    %v8071 = vmul.f32 %v8017, %v8055
    %v8072 = vmul.f32 %v8020, %v8056
    %v8073 = vmul.f32 %v8023, %v8057
    %v8074 = vmul.f32 %v8026, %v8058
    %v8075 = vmul.f32 %v8029, %v8059
    %v8076 = vmul.f32 %v8032, %v8060
    %v8077 = vmul.f32 %v8035, %v8061
    %v8078 = vmul.f32 %v8038, %v8062
    %v8079 = vmul.f32 %v8041, %v8063
    %v8080 = vmul.f32 %v8044, %v8064
    %v8081 = vmul.f32 %v8047, %v8065
    %v8082 = vmul.f32 %v8050, %v8066
    %v8083 = vsub.f32 2.0, %v8067
    %v8084 = vsub.f32 2.0, %v8068
    %v8085 = vsub.f32 2.0, %v8069
    %v8086 = vsub.f32 2.0, %v8070
    %v8087 = vsub.f32 2.0, %v8071
    %v8088 = vsub.f32 2.0, %v8072
    %v8089 = vsub.f32 2.0, %v8073
    %v8090 = vsub.f32 2.0, %v8074
    %v8091 = vsub.f32 2.0, %v8075
    %v8092 = vsub.f32 2.0, %v8076
    %v8093 = vsub.f32 2.0, %v8077
    %v8094 = vsub.f32 2.0, %v8078
    %v8095 = vsub.f32 2.0, %v8079
    %v8096 = vsub.f32 2.0, %v8080
    %v8097 = vsub.f32 2.0, %v8081
    %v8098 = vsub.f32 2.0, %v8082
    %v8099 = vmul.f32 %v8051, %v8083
    %v8100 = vmul.f32 %v8052, %v8084
    %v8101 = vmul.f32 %v8053, %v8085
    %v8102 = vmul.f32 %v8054, %v8086
    %v8103 = vmul.f32 %v8055, %v8087
    %v8104 = vmul.f32 %v8056, %v8088
    %v8105 = vmul.f32 %v8057, %v8089
    %v8106 = vmul.f32 %v8058, %v8090
    %v8107 = vmul.f32 %v8059, %v8091
    %v8108 = vmul.f32 %v8060, %v8092
    %v8109 = vmul.f32 %v8061, %v8093
    %v8110 = vmul.f32 %v8062, %v8094
    %v8111 = vmul.f32 %v8063, %v8095
    %v8112 = vmul.f32 %v8064, %v8096
    %v8113 = vmul.f32 %v8065, %v8097
    %v8114 = vmul.f32 %v8066, %v8098
    %v8115 = vmul.f32 %v7972, %v8099
    %v8116 = vmul.f32 %v7974, %v8100
    %v8117 = vmul.f32 %v7976, %v8101
    %v8118 = vmul.f32 %v7978, %v8102
    %v8119 = vmul.f32 %v7980, %v8103
    %v8120 = vmul.f32 %v7982, %v8104
    %v8121 = vmul.f32 %v7984, %v8105
    %v8122 = vmul.f32 %v7986, %v8106
    %v8123 = vmul.f32 %v7988, %v8107
    %v8124 = vmul.f32 %v7990, %v8108
    %v8125 = vmul.f32 %v7992, %v8109
    %v8126 = vmul.f32 %v7994, %v8110
    %v8127 = vmul.f32 %v7996, %v8111
    %v8128 = vmul.f32 %v7998, %v8112
    %v8129 = vmul.f32 %v8000, %v8113
    %v8130 = vmul.f32 %v8002, %v8114
    %8131 = vrot.lane.b32.xlu0 %v1564, 84
    %v8132 = vpop.permute.xlu0 %8131
    %8133 = vrot.lane.b32.xlu0 %v1569, 84
    %v8134 = vpop.permute.xlu0 %8133
    %v8138 = vsel %vm1192, %v8115, 0
    %v8141 = vsel %vm1192, %v8116, 0
    %8143 = vmatprep.subr.mxu0 0.0
    %8144 = vmatpush1.msra.mxu0 %v8132
    %8145 = vmatprep.subr.mxu0 0.0
    %8146 = vmatpush1.msra.mxu0 %v8134
    %8147 = vmatprep.subr.mxu0 0.0
    %8148 = vmatpush1.msra.mxu0 0.0
    %8149 = vmatprep.subr.mxu0 0.0
    %8150 = vmatpush1.msra.mxu0 0.0
    %8151 = vmatprep.subr.mxu0 0.0
    %8152 = vmatpush1.msra.mxu0 0.0
    %8153 = vmatprep.subr.mxu0 0.0
    %8154 = vmatpush1.msra.mxu0 0.0
    %8155 = vmatprep.subr.mxu0 0.0
    %8156 = vmatpush1.msra.mxu0 0.0
    %8157 = vmatprep.subr.mxu0 0.0
    %8158 = vmatpush1.msra.mxu0 0.0
    %8159 = vmatprep.subr.mxu0 0.0
    %8160 = vmatpush1.msra.mxu0 0.0
    %8161 = vmatprep.subr.mxu0 0.0
    %8162 = vmatpush1.msra.mxu0 0.0
    %8163 = vmatprep.subr.mxu0 0.0
    %8164 = vmatpush1.msra.mxu0 0.0
    %8165 = vmatprep.subr.mxu0 0.0
    %8166 = vmatpush1.msra.mxu0 0.0
    %8167 = vmatprep.subr.mxu0 0.0
    %8168 = vmatpush1.msra.mxu0 0.0
    %8169 = vmatprep.subr.mxu0 0.0
    %8170 = vmatpush1.msra.mxu0 0.0
    %8171 = vmatprep.subr.mxu0 0.0
    %8172 = vmatpush1.msra.mxu0 0.0
    %8173 = vmatprep.subr.mxu0 0.0
    %8174 = vmatpush1.msra.mxu0 0.0
    %8175 = vmatprep.subr.mxu0 0.0
    %8176 = vmatpush1.msra.mxu0 0.0
    %8177 = vmatprep.subr.mxu0 0.0
    %8178 = vmatpush1.msra.mxu0 0.0
    %8179 = vmatprep.subr.mxu0 0.0
    %8180 = vmatpush1.msra.mxu0 0.0
    %8181 = vmatprep.subr.mxu0 0.0
    %8182 = vmatpush1.msra.mxu0 0.0
    %8183 = vmatprep.subr.mxu0 0.0
    %8184 = vmatpush1.msra.mxu0 0.0
    %8185 = vmatprep.subr.mxu0 0.0
    %8186 = vmatpush1.msra.mxu0 0.0
    %8187 = vmatprep.subr.mxu0 0.0
    %8188 = vmatpush1.msra.mxu0 0.0
    %8189 = vmatprep.subr.mxu0 0.0
    %8190 = vmatpush1.msra.mxu0 0.0
    %8191 = vmatprep.subr.mxu0 0.0
    %8192 = vmatpush1.msra.mxu0 0.0
    %8193 = vmatprep.subr.mxu0 0.0
    %8194 = vmatpush1.msra.mxu0 0.0
    %8195 = vmatprep.subr.mxu0 0.0
    %8196 = vmatpush1.msra.mxu0 0.0
    %8197 = vmatprep.subr.mxu0 0.0
    %8198 = vmatpush1.msra.mxu0 0.0
    %8199 = vmatprep.subr.mxu0 0.0
    %8200 = vmatpush1.msra.mxu0 0.0
    %8201 = vmatprep.subr.mxu0 0.0
    %8202 = vmatpush1.msra.mxu0 0.0
    %8203 = vmatprep.subr.mxu0 0.0
    %8204 = vmatpush1.msra.mxu0 0.0
    %8205 = vmatprep.subr.mxu0 0.0
    %8206 = vmatpush1.msra.mxu0 0.0
    %8207 = vmatprep.mubr.f32.mxu0 0.0
    %8208 = vmatmul.mubr.f32.gmra.mrb[0].mxu0 %v8138
    %v8209 = vpop.f32.mrb[0].mxu0
    %v8210 = vadd.f32 0.0, %v8209
    %v8211 = vpop.f32.mrb[0].mxu0
    %8212 = vmatprep.mubr.f32.mxu0 0.0
    %8213 = vmatmul.mubr.f32.gmra.mrb[0].mxu0 %v8141
    %v8214 = vpop.f32.mrb[0].mxu0
    %v8215 = vadd.f32 0.0, %v8214
    %v8216 = vpop.f32.mrb[0].mxu0
    %8217 = vdwg.mxu0
    %8218 = vrot.lane.b32.xlu0 %v1574, 84
    %v8219 = vpop.permute.xlu0 %8218
    %8220 = vrot.lane.b32.xlu0 %v1579, 84
    %v8221 = vpop.permute.xlu0 %8220
    %v8225 = vsel %vm1192, %v8117, 0
    %v8228 = vsel %vm1192, %v8118, 0
    %8230 = vmatprep.subr.mxu0 0.0
    %8231 = vmatpush1.msra.mxu0 %v8219
    %8232 = vmatprep.subr.mxu0 0.0
    %8233 = vmatpush1.msra.mxu0 %v8221
    %8234 = vmatprep.subr.mxu0 0.0
    %8235 = vmatpush1.msra.mxu0 0.0
    %8236 = vmatprep.subr.mxu0 0.0
    %8237 = vmatpush1.msra.mxu0 0.0
    %8238 = vmatprep.subr.mxu0 0.0
    %8239 = vmatpush1.msra.mxu0 0.0
    %8240 = vmatprep.subr.mxu0 0.0
    %8241 = vmatpush1.msra.mxu0 0.0
    %8242 = vmatprep.subr.mxu0 0.0
    %8243 = vmatpush1.msra.mxu0 0.0
    %8244 = vmatprep.subr.mxu0 0.0
    %8245 = vmatpush1.msra.mxu0 0.0
    %8246 = vmatprep.subr.mxu0 0.0
    %8247 = vmatpush1.msra.mxu0 0.0
    %8248 = vmatprep.subr.mxu0 0.0
    %8249 = vmatpush1.msra.mxu0 0.0
    %8250 = vmatprep.subr.mxu0 0.0
    %8251 = vmatpush1.msra.mxu0 0.0
    %8252 = vmatprep.subr.mxu0 0.0
    %8253 = vmatpush1.msra.mxu0 0.0
    %8254 = vmatprep.subr.mxu0 0.0
    %8255 = vmatpush1.msra.mxu0 0.0
    %8256 = vmatprep.subr.mxu0 0.0
    %8257 = vmatpush1.msra.mxu0 0.0
    %8258 = vmatprep.subr.mxu0 0.0
    %8259 = vmatpush1.msra.mxu0 0.0
    %8260 = vmatprep.subr.mxu0 0.0
    %8261 = vmatpush1.msra.mxu0 0.0
    %8262 = vmatprep.subr.mxu0 0.0
    %8263 = vmatpush1.msra.mxu0 0.0
    %8264 = vmatprep.subr.mxu0 0.0
    %8265 = vmatpush1.msra.mxu0 0.0
    %8266 = vmatprep.subr.mxu0 0.0
    %8267 = vmatpush1.msra.mxu0 0.0
    %8268 = vmatprep.subr.mxu0 0.0
    %8269 = vmatpush1.msra.mxu0 0.0
    %8270 = vmatprep.subr.mxu0 0.0
    %8271 = vmatpush1.msra.mxu0 0.0
    %8272 = vmatprep.subr.mxu0 0.0
    %8273 = vmatpush1.msra.mxu0 0.0
    %8274 = vmatprep.subr.mxu0 0.0
    %8275 = vmatpush1.msra.mxu0 0.0
    %8276 = vmatprep.subr.mxu0 0.0
    %8277 = vmatpush1.msra.mxu0 0.0
    %8278 = vmatprep.subr.mxu0 0.0
    %8279 = vmatpush1.msra.mxu0 0.0
    %8280 = vmatprep.subr.mxu0 0.0
    %8281 = vmatpush1.msra.mxu0 0.0
    %8282 = vmatprep.subr.mxu0 0.0
    %8283 = vmatpush1.msra.mxu0 0.0
    %8284 = vmatprep.subr.mxu0 0.0
    %8285 = vmatpush1.msra.mxu0 0.0
    %8286 = vmatprep.subr.mxu0 0.0
    %8287 = vmatpush1.msra.mxu0 0.0
    %8288 = vmatprep.subr.mxu0 0.0
    %8289 = vmatpush1.msra.mxu0 0.0
    %8290 = vmatprep.subr.mxu0 0.0
    %8291 = vmatpush1.msra.mxu0 0.0
    %8292 = vmatprep.subr.mxu0 0.0
    %8293 = vmatpush1.msra.mxu0 0.0
    %8294 = vmatprep.mubr.f32.mxu0 0.0
    %8295 = vmatmul.mubr.f32.gmra.mrb[0].mxu0 %v8225
    %v8296 = vpop.f32.mrb[0].mxu0
    %v8297 = vadd.f32 0.0, %v8296
    %v8298 = vpop.f32.mrb[0].mxu0
    %8299 = vmatprep.mubr.f32.mxu0 0.0
    %8300 = vmatmul.mubr.f32.gmra.mrb[0].mxu0 %v8228
    %v8301 = vpop.f32.mrb[0].mxu0
    %v8302 = vadd.f32 0.0, %v8301
    %v8303 = vpop.f32.mrb[0].mxu0
    %8304 = vdwg.mxu0
    %8305 = vrot.lane.b32.xlu0 %v1584, 84
    %v8306 = vpop.permute.xlu0 %8305
    %8307 = vrot.lane.b32.xlu0 %v1589, 84
    %v8308 = vpop.permute.xlu0 %8307
    %v8312 = vsel %vm1192, %v8119, 0
    %v8315 = vsel %vm1192, %v8120, 0
    %8317 = vmatprep.subr.mxu0 0.0
    %8318 = vmatpush1.msra.mxu0 %v8306
    %8319 = vmatprep.subr.mxu0 0.0
    %8320 = vmatpush1.msra.mxu0 %v8308
    %8321 = vmatprep.subr.mxu0 0.0
    %8322 = vmatpush1.msra.mxu0 0.0
    %8323 = vmatprep.subr.mxu0 0.0
    %8324 = vmatpush1.msra.mxu0 0.0
    %8325 = vmatprep.subr.mxu0 0.0
    %8326 = vmatpush1.msra.mxu0 0.0
    %8327 = vmatprep.subr.mxu0 0.0
    %8328 = vmatpush1.msra.mxu0 0.0
    %8329 = vmatprep.subr.mxu0 0.0
    %8330 = vmatpush1.msra.mxu0 0.0
    %8331 = vmatprep.subr.mxu0 0.0
    %8332 = vmatpush1.msra.mxu0 0.0
    %8333 = vmatprep.subr.mxu0 0.0
    %8334 = vmatpush1.msra.mxu0 0.0
    %8335 = vmatprep.subr.mxu0 0.0
    %8336 = vmatpush1.msra.mxu0 0.0
    %8337 = vmatprep.subr.mxu0 0.0
    %8338 = vmatpush1.msra.mxu0 0.0
    %8339 = vmatprep.subr.mxu0 0.0
    %8340 = vmatpush1.msra.mxu0 0.0
    %8341 = vmatprep.subr.mxu0 0.0
    %8342 = vmatpush1.msra.mxu0 0.0
    %8343 = vmatprep.subr.mxu0 0.0
    %8344 = vmatpush1.msra.mxu0 0.0
    %8345 = vmatprep.subr.mxu0 0.0
    %8346 = vmatpush1.msra.mxu0 0.0
    %8347 = vmatprep.subr.mxu0 0.0
    %8348 = vmatpush1.msra.mxu0 0.0
    %8349 = vmatprep.subr.mxu0 0.0
    %8350 = vmatpush1.msra.mxu0 0.0
    %8351 = vmatprep.subr.mxu0 0.0
    %8352 = vmatpush1.msra.mxu0 0.0
    %8353 = vmatprep.subr.mxu0 0.0
    %8354 = vmatpush1.msra.mxu0 0.0
    %8355 = vmatprep.subr.mxu0 0.0
    %8356 = vmatpush1.msra.mxu0 0.0
    %8357 = vmatprep.subr.mxu0 0.0
    %8358 = vmatpush1.msra.mxu0 0.0
    %8359 = vmatprep.subr.mxu0 0.0
    %8360 = vmatpush1.msra.mxu0 0.0
    %8361 = vmatprep.subr.mxu0 0.0
    %8362 = vmatpush1.msra.mxu0 0.0
    %8363 = vmatprep.subr.mxu0 0.0
    %8364 = vmatpush1.msra.mxu0 0.0
    %8365 = vmatprep.subr.mxu0 0.0
    %8366 = vmatpush1.msra.mxu0 0.0
    %8367 = vmatprep.subr.mxu0 0.0
    %8368 = vmatpush1.msra.mxu0 0.0
    %8369 = vmatprep.subr.mxu0 0.0
    %8370 = vmatpush1.msra.mxu0 0.0
    %8371 = vmatprep.subr.mxu0 0.0
    %8372 = vmatpush1.msra.mxu0 0.0
    %8373 = vmatprep.subr.mxu0 0.0
    %8374 = vmatpush1.msra.mxu0 0.0
    %8375 = vmatprep.subr.mxu0 0.0
    %8376 = vmatpush1.msra.mxu0 0.0
    %8377 = vmatprep.subr.mxu0 0.0
    %8378 = vmatpush1.msra.mxu0 0.0
    %8379 = vmatprep.subr.mxu0 0.0
    %8380 = vmatpush1.msra.mxu0 0.0
    %8381 = vmatprep.mubr.f32.mxu0 0.0
    %8382 = vmatmul.mubr.f32.gmra.mrb[0].mxu0 %v8312
    %v8383 = vpop.f32.mrb[0].mxu0
    %v8384 = vadd.f32 0.0, %v8383
    %v8385 = vpop.f32.mrb[0].mxu0
    %8386 = vmatprep.mubr.f32.mxu0 0.0
    %8387 = vmatmul.mubr.f32.gmra.mrb[0].mxu0 %v8315
    %v8388 = vpop.f32.mrb[0].mxu0
    %v8389 = vadd.f32 0.0, %v8388
    %v8390 = vpop.f32.mrb[0].mxu0
    %8391 = vdwg.mxu0
    %8392 = vrot.lane.b32.xlu0 %v1594, 84
    %v8393 = vpop.permute.xlu0 %8392
    %8394 = vrot.lane.b32.xlu0 %v1599, 84
    %v8395 = vpop.permute.xlu0 %8394
    %v8399 = vsel %vm1192, %v8121, 0
    %v8402 = vsel %vm1192, %v8122, 0
    %8404 = vmatprep.subr.mxu0 0.0
    %8405 = vmatpush1.msra.mxu0 %v8393
    %8406 = vmatprep.subr.mxu0 0.0
    %8407 = vmatpush1.msra.mxu0 %v8395
    %8408 = vmatprep.subr.mxu0 0.0
    %8409 = vmatpush1.msra.mxu0 0.0
    %8410 = vmatprep.subr.mxu0 0.0
    %8411 = vmatpush1.msra.mxu0 0.0
    %8412 = vmatprep.subr.mxu0 0.0
    %8413 = vmatpush1.msra.mxu0 0.0
    %8414 = vmatprep.subr.mxu0 0.0
    %8415 = vmatpush1.msra.mxu0 0.0
    %8416 = vmatprep.subr.mxu0 0.0
    %8417 = vmatpush1.msra.mxu0 0.0
    %8418 = vmatprep.subr.mxu0 0.0
    %8419 = vmatpush1.msra.mxu0 0.0
    %8420 = vmatprep.subr.mxu0 0.0
    %8421 = vmatpush1.msra.mxu0 0.0
    %8422 = vmatprep.subr.mxu0 0.0
    %8423 = vmatpush1.msra.mxu0 0.0
    %8424 = vmatprep.subr.mxu0 0.0
    %8425 = vmatpush1.msra.mxu0 0.0
    %8426 = vmatprep.subr.mxu0 0.0
    %8427 = vmatpush1.msra.mxu0 0.0
    %8428 = vmatprep.subr.mxu0 0.0
    %8429 = vmatpush1.msra.mxu0 0.0
    %8430 = vmatprep.subr.mxu0 0.0
    %8431 = vmatpush1.msra.mxu0 0.0
    %8432 = vmatprep.subr.mxu0 0.0
    %8433 = vmatpush1.msra.mxu0 0.0
    %8434 = vmatprep.subr.mxu0 0.0
    %8435 = vmatpush1.msra.mxu0 0.0
    %8436 = vmatprep.subr.mxu0 0.0
    %8437 = vmatpush1.msra.mxu0 0.0
    %8438 = vmatprep.subr.mxu0 0.0
    %8439 = vmatpush1.msra.mxu0 0.0
    %8440 = vmatprep.subr.mxu0 0.0
    %8441 = vmatpush1.msra.mxu0 0.0
    %8442 = vmatprep.subr.mxu0 0.0
    %8443 = vmatpush1.msra.mxu0 0.0
    %8444 = vmatprep.subr.mxu0 0.0
    %8445 = vmatpush1.msra.mxu0 0.0
    %8446 = vmatprep.subr.mxu0 0.0
    %8447 = vmatpush1.msra.mxu0 0.0
    %8448 = vmatprep.subr.mxu0 0.0
    %8449 = vmatpush1.msra.mxu0 0.0
    %8450 = vmatprep.subr.mxu0 0.0
    %8451 = vmatpush1.msra.mxu0 0.0
    %8452 = vmatprep.subr.mxu0 0.0
    %8453 = vmatpush1.msra.mxu0 0.0
    %8454 = vmatprep.subr.mxu0 0.0
    %8455 = vmatpush1.msra.mxu0 0.0
    %8456 = vmatprep.subr.mxu0 0.0
    %8457 = vmatpush1.msra.mxu0 0.0
    %8458 = vmatprep.subr.mxu0 0.0
    %8459 = vmatpush1.msra.mxu0 0.0
    %8460 = vmatprep.subr.mxu0 0.0
    %8461 = vmatpush1.msra.mxu0 0.0
    %8462 = vmatprep.subr.mxu0 0.0
    %8463 = vmatpush1.msra.mxu0 0.0
    %8464 = vmatprep.subr.mxu0 0.0
    %8465 = vmatpush1.msra.mxu0 0.0
    %8466 = vmatprep.subr.mxu0 0.0
    %8467 = vmatpush1.msra.mxu0 0.0
    %8468 = vmatprep.mubr.f32.mxu0 0.0
    %8469 = vmatmul.mubr.f32.gmra.mrb[0].mxu0 %v8399
    %v8470 = vpop.f32.mrb[0].mxu0
    %v8471 = vadd.f32 0.0, %v8470
    %v8472 = vpop.f32.mrb[0].mxu0
    %8473 = vmatprep.mubr.f32.mxu0 0.0
    %8474 = vmatmul.mubr.f32.gmra.mrb[0].mxu0 %v8402
    %v8475 = vpop.f32.mrb[0].mxu0
    %v8476 = vadd.f32 0.0, %v8475
    %v8477 = vpop.f32.mrb[0].mxu0
    %8478 = vdwg.mxu0
    %8479 = vrot.lane.b32.xlu0 %v1604, 84
    %v8480 = vpop.permute.xlu0 %8479
    %8481 = vrot.lane.b32.xlu0 %v1609, 84
    %v8482 = vpop.permute.xlu0 %8481
    %v8486 = vsel %vm1192, %v8123, 0
    %v8489 = vsel %vm1192, %v8124, 0
    %8491 = vmatprep.subr.mxu0 0.0
    %8492 = vmatpush1.msra.mxu0 %v8480
    %8493 = vmatprep.subr.mxu0 0.0
    %8494 = vmatpush1.msra.mxu0 %v8482
    %8495 = vmatprep.subr.mxu0 0.0
    %8496 = vmatpush1.msra.mxu0 0.0
    %8497 = vmatprep.subr.mxu0 0.0
    %8498 = vmatpush1.msra.mxu0 0.0
    %8499 = vmatprep.subr.mxu0 0.0
    %8500 = vmatpush1.msra.mxu0 0.0
    %8501 = vmatprep.subr.mxu0 0.0
    %8502 = vmatpush1.msra.mxu0 0.0
    %8503 = vmatprep.subr.mxu0 0.0
    %8504 = vmatpush1.msra.mxu0 0.0
    %8505 = vmatprep.subr.mxu0 0.0
    %8506 = vmatpush1.msra.mxu0 0.0
    %8507 = vmatprep.subr.mxu0 0.0
    %8508 = vmatpush1.msra.mxu0 0.0
    %8509 = vmatprep.subr.mxu0 0.0
    %8510 = vmatpush1.msra.mxu0 0.0
    %8511 = vmatprep.subr.mxu0 0.0
    %8512 = vmatpush1.msra.mxu0 0.0
    %8513 = vmatprep.subr.mxu0 0.0
    %8514 = vmatpush1.msra.mxu0 0.0
    %8515 = vmatprep.subr.mxu0 0.0
    %8516 = vmatpush1.msra.mxu0 0.0
    %8517 = vmatprep.subr.mxu0 0.0
    %8518 = vmatpush1.msra.mxu0 0.0
    %8519 = vmatprep.subr.mxu0 0.0
    %8520 = vmatpush1.msra.mxu0 0.0
    %8521 = vmatprep.subr.mxu0 0.0
    %8522 = vmatpush1.msra.mxu0 0.0
    %8523 = vmatprep.subr.mxu0 0.0
    %8524 = vmatpush1.msra.mxu0 0.0
    %8525 = vmatprep.subr.mxu0 0.0
    %8526 = vmatpush1.msra.mxu0 0.0
    %8527 = vmatprep.subr.mxu0 0.0
    %8528 = vmatpush1.msra.mxu0 0.0
    %8529 = vmatprep.subr.mxu0 0.0
    %8530 = vmatpush1.msra.mxu0 0.0
    %8531 = vmatprep.subr.mxu0 0.0
    %8532 = vmatpush1.msra.mxu0 0.0
    %8533 = vmatprep.subr.mxu0 0.0
    %8534 = vmatpush1.msra.mxu0 0.0
    %8535 = vmatprep.subr.mxu0 0.0
    %8536 = vmatpush1.msra.mxu0 0.0
    %8537 = vmatprep.subr.mxu0 0.0
    %8538 = vmatpush1.msra.mxu0 0.0
    %8539 = vmatprep.subr.mxu0 0.0
    %8540 = vmatpush1.msra.mxu0 0.0
    %8541 = vmatprep.subr.mxu0 0.0
    %8542 = vmatpush1.msra.mxu0 0.0
    %8543 = vmatprep.subr.mxu0 0.0
    %8544 = vmatpush1.msra.mxu0 0.0
    %8545 = vmatprep.subr.mxu0 0.0
    %8546 = vmatpush1.msra.mxu0 0.0
    %8547 = vmatprep.subr.mxu0 0.0
    %8548 = vmatpush1.msra.mxu0 0.0
    %8549 = vmatprep.subr.mxu0 0.0
    %8550 = vmatpush1.msra.mxu0 0.0
    %8551 = vmatprep.subr.mxu0 0.0
    %8552 = vmatpush1.msra.mxu0 0.0
    %8553 = vmatprep.subr.mxu0 0.0
    %8554 = vmatpush1.msra.mxu0 0.0
    %8555 = vmatprep.mubr.f32.mxu0 0.0
    %8556 = vmatmul.mubr.f32.gmra.mrb[0].mxu0 %v8486
    %v8557 = vpop.f32.mrb[0].mxu0
    %v8558 = vadd.f32 0.0, %v8557
    %v8559 = vpop.f32.mrb[0].mxu0
    %8560 = vmatprep.mubr.f32.mxu0 0.0
    %8561 = vmatmul.mubr.f32.gmra.mrb[0].mxu0 %v8489
    %v8562 = vpop.f32.mrb[0].mxu0
    %v8563 = vadd.f32 0.0, %v8562
    %v8564 = vpop.f32.mrb[0].mxu0
    %8565 = vdwg.mxu0
    %8566 = vrot.lane.b32.xlu0 %v1614, 84
    %v8567 = vpop.permute.xlu0 %8566
    %8568 = vrot.lane.b32.xlu0 %v1619, 84
    %v8569 = vpop.permute.xlu0 %8568
    %v8573 = vsel %vm1192, %v8125, 0
    %v8576 = vsel %vm1192, %v8126, 0
    %8578 = vmatprep.subr.mxu0 0.0
    %8579 = vmatpush1.msra.mxu0 %v8567
    %8580 = vmatprep.subr.mxu0 0.0
    %8581 = vmatpush1.msra.mxu0 %v8569
    %8582 = vmatprep.subr.mxu0 0.0
    %8583 = vmatpush1.msra.mxu0 0.0
    %8584 = vmatprep.subr.mxu0 0.0
    %8585 = vmatpush1.msra.mxu0 0.0
    %8586 = vmatprep.subr.mxu0 0.0
    %8587 = vmatpush1.msra.mxu0 0.0
    %8588 = vmatprep.subr.mxu0 0.0
    %8589 = vmatpush1.msra.mxu0 0.0
    %8590 = vmatprep.subr.mxu0 0.0
    %8591 = vmatpush1.msra.mxu0 0.0
    %8592 = vmatprep.subr.mxu0 0.0
    %8593 = vmatpush1.msra.mxu0 0.0
    %8594 = vmatprep.subr.mxu0 0.0
    %8595 = vmatpush1.msra.mxu0 0.0
    %8596 = vmatprep.subr.mxu0 0.0
    %8597 = vmatpush1.msra.mxu0 0.0
    %8598 = vmatprep.subr.mxu0 0.0
    %8599 = vmatpush1.msra.mxu0 0.0
    %8600 = vmatprep.subr.mxu0 0.0
    %8601 = vmatpush1.msra.mxu0 0.0
    %8602 = vmatprep.subr.mxu0 0.0
    %8603 = vmatpush1.msra.mxu0 0.0
    %8604 = vmatprep.subr.mxu0 0.0
    %8605 = vmatpush1.msra.mxu0 0.0
    %8606 = vmatprep.subr.mxu0 0.0
    %8607 = vmatpush1.msra.mxu0 0.0
    %8608 = vmatprep.subr.mxu0 0.0
    %8609 = vmatpush1.msra.mxu0 0.0
    %8610 = vmatprep.subr.mxu0 0.0
    %8611 = vmatpush1.msra.mxu0 0.0
    %8612 = vmatprep.subr.mxu0 0.0
    %8613 = vmatpush1.msra.mxu0 0.0
    %8614 = vmatprep.subr.mxu0 0.0
    %8615 = vmatpush1.msra.mxu0 0.0
    %8616 = vmatprep.subr.mxu0 0.0
    %8617 = vmatpush1.msra.mxu0 0.0
    %8618 = vmatprep.subr.mxu0 0.0
    %8619 = vmatpush1.msra.mxu0 0.0
    %8620 = vmatprep.subr.mxu0 0.0
    %8621 = vmatpush1.msra.mxu0 0.0
    %8622 = vmatprep.subr.mxu0 0.0
    %8623 = vmatpush1.msra.mxu0 0.0
    %8624 = vmatprep.subr.mxu0 0.0
    %8625 = vmatpush1.msra.mxu0 0.0
    %8626 = vmatprep.subr.mxu0 0.0
    %8627 = vmatpush1.msra.mxu0 0.0
    %8628 = vmatprep.subr.mxu0 0.0
    %8629 = vmatpush1.msra.mxu0 0.0
    %8630 = vmatprep.subr.mxu0 0.0
    %8631 = vmatpush1.msra.mxu0 0.0
    %8632 = vmatprep.subr.mxu0 0.0
    %8633 = vmatpush1.msra.mxu0 0.0
    %8634 = vmatprep.subr.mxu0 0.0
    %8635 = vmatpush1.msra.mxu0 0.0
    %8636 = vmatprep.subr.mxu0 0.0
    %8637 = vmatpush1.msra.mxu0 0.0
    %8638 = vmatprep.subr.mxu0 0.0
    %8639 = vmatpush1.msra.mxu0 0.0
    %8640 = vmatprep.subr.mxu0 0.0
    %8641 = vmatpush1.msra.mxu0 0.0
    %8642 = vmatprep.mubr.f32.mxu0 0.0
    %8643 = vmatmul.mubr.f32.gmra.mrb[0].mxu0 %v8573
    %v8644 = vpop.f32.mrb[0].mxu0
    %v8645 = vadd.f32 0.0, %v8644
    %v8646 = vpop.f32.mrb[0].mxu0
    %8647 = vmatprep.mubr.f32.mxu0 0.0
    %8648 = vmatmul.mubr.f32.gmra.mrb[0].mxu0 %v8576
    %v8649 = vpop.f32.mrb[0].mxu0
    %v8650 = vadd.f32 0.0, %v8649
    %v8651 = vpop.f32.mrb[0].mxu0
    %8652 = vdwg.mxu0
    %8653 = vrot.lane.b32.xlu0 %v1624, 84
    %v8654 = vpop.permute.xlu0 %8653
    %8655 = vrot.lane.b32.xlu0 %v1629, 84
    %v8656 = vpop.permute.xlu0 %8655
    %v8660 = vsel %vm1192, %v8127, 0
    %v8663 = vsel %vm1192, %v8128, 0
    %8665 = vmatprep.subr.mxu0 0.0
    %8666 = vmatpush1.msra.mxu0 %v8654
    %8667 = vmatprep.subr.mxu0 0.0
    %8668 = vmatpush1.msra.mxu0 %v8656
    %8669 = vmatprep.subr.mxu0 0.0
    %8670 = vmatpush1.msra.mxu0 0.0
    %8671 = vmatprep.subr.mxu0 0.0
    %8672 = vmatpush1.msra.mxu0 0.0
    %8673 = vmatprep.subr.mxu0 0.0
    %8674 = vmatpush1.msra.mxu0 0.0
    %8675 = vmatprep.subr.mxu0 0.0
    %8676 = vmatpush1.msra.mxu0 0.0
    %8677 = vmatprep.subr.mxu0 0.0
    %8678 = vmatpush1.msra.mxu0 0.0
    %8679 = vmatprep.subr.mxu0 0.0
    %8680 = vmatpush1.msra.mxu0 0.0
    %8681 = vmatprep.subr.mxu0 0.0
    %8682 = vmatpush1.msra.mxu0 0.0
    %8683 = vmatprep.subr.mxu0 0.0
    %8684 = vmatpush1.msra.mxu0 0.0
    %8685 = vmatprep.subr.mxu0 0.0
    %8686 = vmatpush1.msra.mxu0 0.0
    %8687 = vmatprep.subr.mxu0 0.0
    %8688 = vmatpush1.msra.mxu0 0.0
    %8689 = vmatprep.subr.mxu0 0.0
    %8690 = vmatpush1.msra.mxu0 0.0
    %8691 = vmatprep.subr.mxu0 0.0
    %8692 = vmatpush1.msra.mxu0 0.0
    %8693 = vmatprep.subr.mxu0 0.0
    %8694 = vmatpush1.msra.mxu0 0.0
    %8695 = vmatprep.subr.mxu0 0.0
    %8696 = vmatpush1.msra.mxu0 0.0
    %8697 = vmatprep.subr.mxu0 0.0
    %8698 = vmatpush1.msra.mxu0 0.0
    %8699 = vmatprep.subr.mxu0 0.0
    %8700 = vmatpush1.msra.mxu0 0.0
    %8701 = vmatprep.subr.mxu0 0.0
    %8702 = vmatpush1.msra.mxu0 0.0
    %8703 = vmatprep.subr.mxu0 0.0
    %8704 = vmatpush1.msra.mxu0 0.0
    %8705 = vmatprep.subr.mxu0 0.0
    %8706 = vmatpush1.msra.mxu0 0.0
    %8707 = vmatprep.subr.mxu0 0.0
    %8708 = vmatpush1.msra.mxu0 0.0
    %8709 = vmatprep.subr.mxu0 0.0
    %8710 = vmatpush1.msra.mxu0 0.0
    %8711 = vmatprep.subr.mxu0 0.0
    %8712 = vmatpush1.msra.mxu0 0.0
    %8713 = vmatprep.subr.mxu0 0.0
    %8714 = vmatpush1.msra.mxu0 0.0
    %8715 = vmatprep.subr.mxu0 0.0
    %8716 = vmatpush1.msra.mxu0 0.0
    %8717 = vmatprep.subr.mxu0 0.0
    %8718 = vmatpush1.msra.mxu0 0.0
    %8719 = vmatprep.subr.mxu0 0.0
    %8720 = vmatpush1.msra.mxu0 0.0
    %8721 = vmatprep.subr.mxu0 0.0
    %8722 = vmatpush1.msra.mxu0 0.0
    %8723 = vmatprep.subr.mxu0 0.0
    %8724 = vmatpush1.msra.mxu0 0.0
    %8725 = vmatprep.subr.mxu0 0.0
    %8726 = vmatpush1.msra.mxu0 0.0
    %8727 = vmatprep.subr.mxu0 0.0
    %8728 = vmatpush1.msra.mxu0 0.0
    %8729 = vmatprep.mubr.f32.mxu0 0.0
    %8730 = vmatmul.mubr.f32.gmra.mrb[0].mxu0 %v8660
    %v8731 = vpop.f32.mrb[0].mxu0
    %v8732 = vadd.f32 0.0, %v8731
    %v8733 = vpop.f32.mrb[0].mxu0
    %8734 = vmatprep.mubr.f32.mxu0 0.0
    %8735 = vmatmul.mubr.f32.gmra.mrb[0].mxu0 %v8663
    %v8736 = vpop.f32.mrb[0].mxu0
    %v8737 = vadd.f32 0.0, %v8736
    %v8738 = vpop.f32.mrb[0].mxu0
    %8739 = vdwg.mxu0
    %8740 = vrot.lane.b32.xlu0 %v1634, 84
    %v8741 = vpop.permute.xlu0 %8740
    %8742 = vrot.lane.b32.xlu0 %v1639, 84
    %v8743 = vpop.permute.xlu0 %8742
    %v8747 = vsel %vm1192, %v8129, 0
    %v8750 = vsel %vm1192, %v8130, 0
    %8752 = vmatprep.subr.mxu0 0.0
    %8753 = vmatpush1.msra.mxu0 %v8741
    %8754 = vmatprep.subr.mxu0 0.0
    %8755 = vmatpush1.msra.mxu0 %v8743
    %8756 = vmatprep.subr.mxu0 0.0
    %8757 = vmatpush1.msra.mxu0 0.0
    %8758 = vmatprep.subr.mxu0 0.0
    %8759 = vmatpush1.msra.mxu0 0.0
    %8760 = vmatprep.subr.mxu0 0.0
    %8761 = vmatpush1.msra.mxu0 0.0
    %8762 = vmatprep.subr.mxu0 0.0
    %8763 = vmatpush1.msra.mxu0 0.0
    %8764 = vmatprep.subr.mxu0 0.0
    %8765 = vmatpush1.msra.mxu0 0.0
    %8766 = vmatprep.subr.mxu0 0.0
    %8767 = vmatpush1.msra.mxu0 0.0
    %8768 = vmatprep.subr.mxu0 0.0
    %8769 = vmatpush1.msra.mxu0 0.0
    %8770 = vmatprep.subr.mxu0 0.0
    %8771 = vmatpush1.msra.mxu0 0.0
    %8772 = vmatprep.subr.mxu0 0.0
    %8773 = vmatpush1.msra.mxu0 0.0
    %8774 = vmatprep.subr.mxu0 0.0
    %8775 = vmatpush1.msra.mxu0 0.0
    %8776 = vmatprep.subr.mxu0 0.0
    %8777 = vmatpush1.msra.mxu0 0.0
    %8778 = vmatprep.subr.mxu0 0.0
    %8779 = vmatpush1.msra.mxu0 0.0
    %8780 = vmatprep.subr.mxu0 0.0
    %8781 = vmatpush1.msra.mxu0 0.0
    %8782 = vmatprep.subr.mxu0 0.0
    %8783 = vmatpush1.msra.mxu0 0.0
    %8784 = vmatprep.subr.mxu0 0.0
    %8785 = vmatpush1.msra.mxu0 0.0
    %8786 = vmatprep.subr.mxu0 0.0
    %8787 = vmatpush1.msra.mxu0 0.0
    %8788 = vmatprep.subr.mxu0 0.0
    %8789 = vmatpush1.msra.mxu0 0.0
    %8790 = vmatprep.subr.mxu0 0.0
    %8791 = vmatpush1.msra.mxu0 0.0
    %8792 = vmatprep.subr.mxu0 0.0
    %8793 = vmatpush1.msra.mxu0 0.0
    %8794 = vmatprep.subr.mxu0 0.0
    %8795 = vmatpush1.msra.mxu0 0.0
    %8796 = vmatprep.subr.mxu0 0.0
    %8797 = vmatpush1.msra.mxu0 0.0
    %8798 = vmatprep.subr.mxu0 0.0
    %8799 = vmatpush1.msra.mxu0 0.0
    %8800 = vmatprep.subr.mxu0 0.0
    %8801 = vmatpush1.msra.mxu0 0.0
    %8802 = vmatprep.subr.mxu0 0.0
    %8803 = vmatpush1.msra.mxu0 0.0
    %8804 = vmatprep.subr.mxu0 0.0
    %8805 = vmatpush1.msra.mxu0 0.0
    %8806 = vmatprep.subr.mxu0 0.0
    %8807 = vmatpush1.msra.mxu0 0.0
    %8808 = vmatprep.subr.mxu0 0.0
    %8809 = vmatpush1.msra.mxu0 0.0
    %8810 = vmatprep.subr.mxu0 0.0
    %8811 = vmatpush1.msra.mxu0 0.0
    %8812 = vmatprep.subr.mxu0 0.0
    %8813 = vmatpush1.msra.mxu0 0.0
    %8814 = vmatprep.subr.mxu0 0.0
    %8815 = vmatpush1.msra.mxu0 0.0
    %8816 = vmatprep.mubr.f32.mxu0 0.0
    %8817 = vmatmul.mubr.f32.gmra.mrb[0].mxu0 %v8747
    %v8818 = vpop.f32.mrb[0].mxu0
    %v8819 = vadd.f32 0.0, %v8818
    %v8820 = vpop.f32.mrb[0].mxu0
    %8821 = vmatprep.mubr.f32.mxu0 0.0
    %8822 = vmatmul.mubr.f32.gmra.mrb[0].mxu0 %v8750
    %v8823 = vpop.f32.mrb[0].mxu0
    %v8824 = vadd.f32 0.0, %v8823
    %v8825 = vpop.f32.mrb[0].mxu0
    %8826 = vdwg.mxu0
    %v8827 = vld [vmem:[%s4 + $0x1c] sm:$0xf]
    %v8829 = vsel %vm1648, %v8210, 0
    %v8832 = vsel %vm1648, %v8215, 0
    %v8835 = vsel %vm1648, %v8297, 0
    %v8838 = vsel %vm1648, %v8302, 0
    %v8841 = vsel %vm1648, %v8384, 0
    %v8844 = vsel %vm1648, %v8389, 0
    %v8847 = vsel %vm1648, %v8471, 0
    %v8850 = vsel %vm1648, %v8476, 0
    %v8853 = vsel %vm1648, %v8558, 0
    %v8856 = vsel %vm1648, %v8563, 0
    %v8859 = vsel %vm1648, %v8645, 0
    %v8862 = vsel %vm1648, %v8650, 0
    %v8865 = vsel %vm1648, %v8732, 0
    %v8868 = vsel %vm1648, %v8737, 0
    %v8871 = vsel %vm1648, %v8819, 0
    %v8874 = vsel %vm1648, %v8824, 0
    %v8877 = vsel %vm4973, %v8827, 0
    %8879 = vmatprep.subr.mxu0 0.0
    %8880 = vmatpush1.msra.mxu0 %v8877
    %8881 = vmatprep.subr.mxu0 0.0
    %8882 = vmatpush1.msra.mxu0 0.0
    %8883 = vmatprep.subr.mxu0 0.0
    %8884 = vmatpush1.msra.mxu0 0.0
    %8885 = vmatprep.subr.mxu0 0.0
    %8886 = vmatpush1.msra.mxu0 0.0
    %8887 = vmatprep.subr.mxu0 0.0
    %8888 = vmatpush1.msra.mxu0 0.0
    %8889 = vmatprep.subr.mxu0 0.0
    %8890 = vmatpush1.msra.mxu0 0.0
    %8891 = vmatprep.subr.mxu0 0.0
    %8892 = vmatpush1.msra.mxu0 0.0
    %8893 = vmatprep.subr.mxu0 0.0
    %8894 = vmatpush1.msra.mxu0 0.0
    %8895 = vmatprep.subr.mxu0 0.0
    %8896 = vmatpush1.msra.mxu0 0.0
    %8897 = vmatprep.subr.mxu0 0.0
    %8898 = vmatpush1.msra.mxu0 0.0
    %8899 = vmatprep.subr.mxu0 0.0
    %8900 = vmatpush1.msra.mxu0 0.0
    %8901 = vmatprep.subr.mxu0 0.0
    %8902 = vmatpush1.msra.mxu0 0.0
    %8903 = vmatprep.subr.mxu0 0.0
    %8904 = vmatpush1.msra.mxu0 0.0
    %8905 = vmatprep.subr.mxu0 0.0
    %8906 = vmatpush1.msra.mxu0 0.0
    %8907 = vmatprep.subr.mxu0 0.0
    %8908 = vmatpush1.msra.mxu0 0.0
    %8909 = vmatprep.subr.mxu0 0.0
    %8910 = vmatpush1.msra.mxu0 0.0
    %8911 = vmatprep.subr.mxu0 0.0
    %8912 = vmatpush1.msra.mxu0 0.0
    %8913 = vmatprep.subr.mxu0 0.0
    %8914 = vmatpush1.msra.mxu0 0.0
    %8915 = vmatprep.subr.mxu0 0.0
    %8916 = vmatpush1.msra.mxu0 0.0
    %8917 = vmatprep.subr.mxu0 0.0
    %8918 = vmatpush1.msra.mxu0 0.0
    %8919 = vmatprep.subr.mxu0 0.0
    %8920 = vmatpush1.msra.mxu0 0.0
    %8921 = vmatprep.subr.mxu0 0.0
    %8922 = vmatpush1.msra.mxu0 0.0
    %8923 = vmatprep.subr.mxu0 0.0
    %8924 = vmatpush1.msra.mxu0 0.0
    %8925 = vmatprep.subr.mxu0 0.0
    %8926 = vmatpush1.msra.mxu0 0.0
    %8927 = vmatprep.subr.mxu0 0.0
    %8928 = vmatpush1.msra.mxu0 0.0
    %8929 = vmatprep.subr.mxu0 0.0
    %8930 = vmatpush1.msra.mxu0 0.0
    %8931 = vmatprep.subr.mxu0 0.0
    %8932 = vmatpush1.msra.mxu0 0.0
    %8933 = vmatprep.subr.mxu0 0.0
    %8934 = vmatpush1.msra.mxu0 0.0
    %8935 = vmatprep.subr.mxu0 0.0
    %8936 = vmatpush1.msra.mxu0 0.0
    %8937 = vmatprep.subr.mxu0 0.0
    %8938 = vmatpush1.msra.mxu0 0.0
    %8939 = vmatprep.subr.mxu0 0.0
    %8940 = vmatpush1.msra.mxu0 0.0
    %8941 = vmatprep.subr.mxu0 0.0
    %8942 = vmatpush1.msra.mxu0 0.0
    %8943 = vmatprep.mubr.f32.mxu0 0.0
    %8944 = vmatmul.mubr.f32.gmra.mrb[0].mxu0 %v8829
    %v8945 = vpop.f32.mrb[0].mxu0
    %v8946 = vadd.f32 0.0, %v8945
    %v8947 = vpop.f32.mrb[0].mxu0
    %8948 = vmatprep.mubr.f32.mxu0 0.0
    %8949 = vmatmul.mubr.f32.gmra.mrb[0].mxu0 %v8832
    %v8950 = vpop.f32.mrb[0].mxu0
    %v8951 = vadd.f32 0.0, %v8950
    %v8952 = vpop.f32.mrb[0].mxu0
    %8953 = vmatprep.mubr.f32.mxu0 0.0
    %8954 = vmatmul.mubr.f32.gmra.mrb[0].mxu0 %v8835
    %v8955 = vpop.f32.mrb[0].mxu0
    %v8956 = vadd.f32 0.0, %v8955
    %v8957 = vpop.f32.mrb[0].mxu0
    %8958 = vmatprep.mubr.f32.mxu0 0.0
    %8959 = vmatmul.mubr.f32.gmra.mrb[0].mxu0 %v8838
    %v8960 = vpop.f32.mrb[0].mxu0
    %v8961 = vadd.f32 0.0, %v8960
    %v8962 = vpop.f32.mrb[0].mxu0
    %8963 = vmatprep.mubr.f32.mxu0 0.0
    %8964 = vmatmul.mubr.f32.gmra.mrb[0].mxu0 %v8841
    %v8965 = vpop.f32.mrb[0].mxu0
    %v8966 = vadd.f32 0.0, %v8965
    %v8967 = vpop.f32.mrb[0].mxu0
    %8968 = vmatprep.mubr.f32.mxu0 0.0
    %8969 = vmatmul.mubr.f32.gmra.mrb[0].mxu0 %v8844
    %v8970 = vpop.f32.mrb[0].mxu0
    %v8971 = vadd.f32 0.0, %v8970
    %v8972 = vpop.f32.mrb[0].mxu0
    %8973 = vmatprep.mubr.f32.mxu0 0.0
    %8974 = vmatmul.mubr.f32.gmra.mrb[0].mxu0 %v8847
    %v8975 = vpop.f32.mrb[0].mxu0
    %v8976 = vadd.f32 0.0, %v8975
    %v8977 = vpop.f32.mrb[0].mxu0
    %8978 = vmatprep.mubr.f32.mxu0 0.0
    %8979 = vmatmul.mubr.f32.gmra.mrb[0].mxu0 %v8850
    %v8980 = vpop.f32.mrb[0].mxu0
    %v8981 = vadd.f32 0.0, %v8980
    %v8982 = vpop.f32.mrb[0].mxu0
    %8983 = vmatprep.mubr.f32.mxu0 0.0
    %8984 = vmatmul.mubr.f32.gmra.mrb[0].mxu0 %v8853
    %v8985 = vpop.f32.mrb[0].mxu0
    %v8986 = vadd.f32 0.0, %v8985
    %v8987 = vpop.f32.mrb[0].mxu0
    %8988 = vmatprep.mubr.f32.mxu0 0.0
    %8989 = vmatmul.mubr.f32.gmra.mrb[0].mxu0 %v8856
    %v8990 = vpop.f32.mrb[0].mxu0
    %v8991 = vadd.f32 0.0, %v8990
    %v8992 = vpop.f32.mrb[0].mxu0
    %8993 = vmatprep.mubr.f32.mxu0 0.0
    %8994 = vmatmul.mubr.f32.gmra.mrb[0].mxu0 %v8859
    %v8995 = vpop.f32.mrb[0].mxu0
    %v8996 = vadd.f32 0.0, %v8995
    %v8997 = vpop.f32.mrb[0].mxu0
    %8998 = vmatprep.mubr.f32.mxu0 0.0
    %8999 = vmatmul.mubr.f32.gmra.mrb[0].mxu0 %v8862
    %v9000 = vpop.f32.mrb[0].mxu0
    %v9001 = vadd.f32 0.0, %v9000
    %v9002 = vpop.f32.mrb[0].mxu0
    %9003 = vmatprep.mubr.f32.mxu0 0.0
    %9004 = vmatmul.mubr.f32.gmra.mrb[0].mxu0 %v8865
    %v9005 = vpop.f32.mrb[0].mxu0
    %v9006 = vadd.f32 0.0, %v9005
    %v9007 = vpop.f32.mrb[0].mxu0
    %9008 = vmatprep.mubr.f32.mxu0 0.0
    %9009 = vmatmul.mubr.f32.gmra.mrb[0].mxu0 %v8868
    %v9010 = vpop.f32.mrb[0].mxu0
    %v9011 = vadd.f32 0.0, %v9010
    %v9012 = vpop.f32.mrb[0].mxu0
    %9013 = vmatprep.mubr.f32.mxu0 0.0
    %9014 = vmatmul.mubr.f32.gmra.mrb[0].mxu0 %v8871
    %v9015 = vpop.f32.mrb[0].mxu0
    %v9016 = vadd.f32 0.0, %v9015
    %v9017 = vpop.f32.mrb[0].mxu0
    %9018 = vmatprep.mubr.f32.mxu0 0.0
    %9019 = vmatmul.mubr.f32.gmra.mrb[0].mxu0 %v8874
    %v9020 = vpop.f32.mrb[0].mxu0
    %v9021 = vadd.f32 0.0, %v9020
    %v9022 = vpop.f32.mrb[0].mxu0
    %9023 = vdwg.mxu0
    %v9024 = vadd.f32 %v7163, %v8946
    %v9025 = vadd.f32 %v7164, %v8951
    %v9026 = vadd.f32 %v7165, %v8956
    %v9027 = vadd.f32 %v7166, %v8961
    %v9028 = vadd.f32 %v7167, %v8966
    %v9029 = vadd.f32 %v7168, %v8971
    %v9030 = vadd.f32 %v7169, %v8976
    %v9031 = vadd.f32 %v7170, %v8981
    %v9032 = vadd.f32 %v7171, %v8986
    %v9033 = vadd.f32 %v7172, %v8991
    %v9034 = vadd.f32 %v7173, %v8996
    %v9035 = vadd.f32 %v7174, %v9001
    %v9036 = vadd.f32 %v7175, %v9006
    %v9037 = vadd.f32 %v7176, %v9011
    %v9038 = vadd.f32 %v7177, %v9016
    %v9039 = vadd.f32 %v7178, %v9021
    %v9040 = vadd.f32 %v1112, %v9024
    %v9041 = vadd.f32 %v1117, %v9025
    %v9042 = vadd.f32 %v1122, %v9026
    %v9043 = vadd.f32 %v1127, %v9027
    %v9044 = vadd.f32 %v1132, %v9028
    %v9045 = vadd.f32 %v1137, %v9029
    %v9046 = vadd.f32 %v1142, %v9030
    %v9047 = vadd.f32 %v1147, %v9031
    %v9048 = vadd.f32 %v1152, %v9032
    %v9049 = vadd.f32 %v1157, %v9033
    %v9050 = vadd.f32 %v1162, %v9034
    %v9051 = vadd.f32 %v1167, %v9035
    %v9052 = vadd.f32 %v1172, %v9036
    %v9053 = vadd.f32 %v1177, %v9037
    %v9054 = vadd.f32 %v1182, %v9038
    %v9055 = vadd.f32 %v1187, %v9039
    %v9056 = vld [vmem:[%s3 + $0x4] sm:$0x1]
    %v9057 = vlaneseq
    %v9058 = vshrl.u32 %v9057, 7
    %v9059 = vsub.s32 0, %v9058
    %v9060 = vrot.slane %v9056, %v9059
    %v9061 = vadd.f32 %v9040, %v9060
    %v9062 = vadd.f32 %v9041, %v9060
    %v9063 = vadd.f32 %v9042, %v9060
    %v9064 = vadd.f32 %v9043, %v9060
    %v9065 = vadd.f32 %v9044, %v9060
    %v9066 = vadd.f32 %v9045, %v9060
    %v9067 = vadd.f32 %v9046, %v9060
    %v9068 = vadd.f32 %v9047, %v9060
    %v9069 = vadd.f32 %v9048, %v9060
    %v9070 = vadd.f32 %v9049, %v9060
    %v9071 = vadd.f32 %v9050, %v9060
    %v9072 = vadd.f32 %v9051, %v9060
    %v9073 = vadd.f32 %v9052, %v9060
    %v9074 = vadd.f32 %v9053, %v9060
    %v9075 = vadd.f32 %v9054, %v9060
    %v9076 = vadd.f32 %v9055, %v9060
    %v9077 = vld [vmem:[%s3 + $0x5] sm:$0x1]
    %v9078 = vld [vmem:[%s3 + $0x6] sm:$0x1]
    %v9079 = vsel %vm1192, %v9061, 0.0
    %9080 = vadd.xlane.f32.xlu0 %v9079
    %v9081 = vpop.xlane.xlu0 %9080
    %v9082 = vsel %vm1192, %v9062, 0.0
    %9083 = vadd.xlane.f32.xlu0 %v9082
    %v9084 = vpop.xlane.xlu0 %9083
    %v9085 = vsel %vm1192, %v9063, 0.0
    %9086 = vadd.xlane.f32.xlu0 %v9085
    %v9087 = vpop.xlane.xlu0 %9086
    %v9088 = vsel %vm1192, %v9064, 0.0
    %9089 = vadd.xlane.f32.xlu0 %v9088
    %v9090 = vpop.xlane.xlu0 %9089
    %v9091 = vsel %vm1192, %v9065, 0.0
    %9092 = vadd.xlane.f32.xlu0 %v9091
    %v9093 = vpop.xlane.xlu0 %9092
    %v9094 = vsel %vm1192, %v9066, 0.0
    %9095 = vadd.xlane.f32.xlu0 %v9094
    %v9096 = vpop.xlane.xlu0 %9095
    %v9097 = vsel %vm1192, %v9067, 0.0
    %9098 = vadd.xlane.f32.xlu0 %v9097
    %v9099 = vpop.xlane.xlu0 %9098
    %v9100 = vsel %vm1192, %v9068, 0.0
    %9101 = vadd.xlane.f32.xlu0 %v9100
    %v9102 = vpop.xlane.xlu0 %9101
    %v9103 = vsel %vm1192, %v9069, 0.0
    %9104 = vadd.xlane.f32.xlu0 %v9103
    %v9105 = vpop.xlane.xlu0 %9104
    %v9106 = vsel %vm1192, %v9070, 0.0
    %9107 = vadd.xlane.f32.xlu0 %v9106
    %v9108 = vpop.xlane.xlu0 %9107
    %v9109 = vsel %vm1192, %v9071, 0.0
    %9110 = vadd.xlane.f32.xlu0 %v9109
    %v9111 = vpop.xlane.xlu0 %9110
    %v9112 = vsel %vm1192, %v9072, 0.0
    %9113 = vadd.xlane.f32.xlu0 %v9112
    %v9114 = vpop.xlane.xlu0 %9113
    %v9115 = vsel %vm1192, %v9073, 0.0
    %9116 = vadd.xlane.f32.xlu0 %v9115
    %v9117 = vpop.xlane.xlu0 %9116
    %v9118 = vsel %vm1192, %v9074, 0.0
    %9119 = vadd.xlane.f32.xlu0 %v9118
    %v9120 = vpop.xlane.xlu0 %9119
    %v9121 = vsel %vm1192, %v9075, 0.0
    %9122 = vadd.xlane.f32.xlu0 %v9121
    %v9123 = vpop.xlane.xlu0 %9122
    %v9124 = vsel %vm1192, %v9076, 0.0
    %9125 = vadd.xlane.f32.xlu0 %v9124
    %v9126 = vpop.xlane.xlu0 %9125
    %v9127 = vmul.f32 %v9081, %v1241
    %v9128 = vmul.f32 %v9084, %v1241
    %v9129 = vmul.f32 %v9087, %v1241
    %v9130 = vmul.f32 %v9090, %v1241
    %v9131 = vmul.f32 %v9093, %v1241
    %v9132 = vmul.f32 %v9096, %v1241
    %v9133 = vmul.f32 %v9099, %v1241
    %v9134 = vmul.f32 %v9102, %v1241
    %v9135 = vmul.f32 %v9105, %v1241
    %v9136 = vmul.f32 %v9108, %v1241
    %v9137 = vmul.f32 %v9111, %v1241
    %v9138 = vmul.f32 %v9114, %v1241
    %v9139 = vmul.f32 %v9117, %v1241
    %v9140 = vmul.f32 %v9120, %v1241
    %v9141 = vmul.f32 %v9123, %v1241
    %v9142 = vmul.f32 %v9126, %v1241
    %v9143 = vsub.f32 %v9061, %v9127
    %v9144 = vsub.f32 %v9062, %v9128
    %v9145 = vsub.f32 %v9063, %v9129
    %v9146 = vsub.f32 %v9064, %v9130
    %v9147 = vsub.f32 %v9065, %v9131
    %v9148 = vsub.f32 %v9066, %v9132
    %v9149 = vsub.f32 %v9067, %v9133
    %v9150 = vsub.f32 %v9068, %v9134
    %v9151 = vsub.f32 %v9069, %v9135
    %v9152 = vsub.f32 %v9070, %v9136
    %v9153 = vsub.f32 %v9071, %v9137
    %v9154 = vsub.f32 %v9072, %v9138
    %v9155 = vsub.f32 %v9073, %v9139
    %v9156 = vsub.f32 %v9074, %v9140
    %v9157 = vsub.f32 %v9075, %v9141
    %v9158 = vsub.f32 %v9076, %v9142
    %v9159 = vmul.f32 %v9143, %v9143
    %v9160 = vmul.f32 %v9144, %v9144
    %v9161 = vmul.f32 %v9145, %v9145
    %v9162 = vmul.f32 %v9146, %v9146
    %v9163 = vmul.f32 %v9147, %v9147
    %v9164 = vmul.f32 %v9148, %v9148
    %v9165 = vmul.f32 %v9149, %v9149
    %v9166 = vmul.f32 %v9150, %v9150
    %v9167 = vmul.f32 %v9151, %v9151
    %v9168 = vmul.f32 %v9152, %v9152
    %v9169 = vmul.f32 %v9153, %v9153
    %v9170 = vmul.f32 %v9154, %v9154
    %v9171 = vmul.f32 %v9155, %v9155
    %v9172 = vmul.f32 %v9156, %v9156
    %v9173 = vmul.f32 %v9157, %v9157
    %v9174 = vmul.f32 %v9158, %v9158
    %v9175 = vsel %vm1192, %v9159, 0.0
    %9176 = vadd.xlane.f32.xlu0 %v9175
    %v9177 = vpop.xlane.xlu0 %9176
    %v9178 = vsel %vm1192, %v9160, 0.0
    %9179 = vadd.xlane.f32.xlu0 %v9178
    %v9180 = vpop.xlane.xlu0 %9179
    %v9181 = vsel %vm1192, %v9161, 0.0
    %9182 = vadd.xlane.f32.xlu0 %v9181
    %v9183 = vpop.xlane.xlu0 %9182
    %v9184 = vsel %vm1192, %v9162, 0.0
    %9185 = vadd.xlane.f32.xlu0 %v9184
    %v9186 = vpop.xlane.xlu0 %9185
    %v9187 = vsel %vm1192, %v9163, 0.0
    %9188 = vadd.xlane.f32.xlu0 %v9187
    %v9189 = vpop.xlane.xlu0 %9188
    %v9190 = vsel %vm1192, %v9164, 0.0
    %9191 = vadd.xlane.f32.xlu0 %v9190
    %v9192 = vpop.xlane.xlu0 %9191
    %v9193 = vsel %vm1192, %v9165, 0.0
    %9194 = vadd.xlane.f32.xlu0 %v9193
    %v9195 = vpop.xlane.xlu0 %9194
    %v9196 = vsel %vm1192, %v9166, 0.0
    %9197 = vadd.xlane.f32.xlu0 %v9196
    %v9198 = vpop.xlane.xlu0 %9197
    %v9199 = vsel %vm1192, %v9167, 0.0
    %9200 = vadd.xlane.f32.xlu0 %v9199
    %v9201 = vpop.xlane.xlu0 %9200
    %v9202 = vsel %vm1192, %v9168, 0.0
    %9203 = vadd.xlane.f32.xlu0 %v9202
    %v9204 = vpop.xlane.xlu0 %9203
    %v9205 = vsel %vm1192, %v9169, 0.0
    %9206 = vadd.xlane.f32.xlu0 %v9205
    %v9207 = vpop.xlane.xlu0 %9206
    %v9208 = vsel %vm1192, %v9170, 0.0
    %9209 = vadd.xlane.f32.xlu0 %v9208
    %v9210 = vpop.xlane.xlu0 %9209
    %v9211 = vsel %vm1192, %v9171, 0.0
    %9212 = vadd.xlane.f32.xlu0 %v9211
    %v9213 = vpop.xlane.xlu0 %9212
    %v9214 = vsel %vm1192, %v9172, 0.0
    %9215 = vadd.xlane.f32.xlu0 %v9214
    %v9216 = vpop.xlane.xlu0 %9215
    %v9217 = vsel %vm1192, %v9173, 0.0
    %9218 = vadd.xlane.f32.xlu0 %v9217
    %v9219 = vpop.xlane.xlu0 %9218
    %v9220 = vsel %vm1192, %v9174, 0.0
    %9221 = vadd.xlane.f32.xlu0 %v9220
    %v9222 = vpop.xlane.xlu0 %9221
    %v9223 = vmul.f32 %v9177, %v1241
    %v9224 = vmul.f32 %v9180, %v1241
    %v9225 = vmul.f32 %v9183, %v1241
    %v9226 = vmul.f32 %v9186, %v1241
    %v9227 = vmul.f32 %v9189, %v1241
    %v9228 = vmul.f32 %v9192, %v1241
    %v9229 = vmul.f32 %v9195, %v1241
    %v9230 = vmul.f32 %v9198, %v1241
    %v9231 = vmul.f32 %v9201, %v1241
    %v9232 = vmul.f32 %v9204, %v1241
    %v9233 = vmul.f32 %v9207, %v1241
    %v9234 = vmul.f32 %v9210, %v1241
    %v9235 = vmul.f32 %v9213, %v1241
    %v9236 = vmul.f32 %v9216, %v1241
    %v9237 = vmul.f32 %v9219, %v1241
    %v9238 = vmul.f32 %v9222, %v1241
    %v9239 = vadd.f32 %v9223, 1e-05
    %v9240 = vadd.f32 %v9224, 1e-05
    %v9241 = vadd.f32 %v9225, 1e-05
    %v9242 = vadd.f32 %v9226, 1e-05
    %v9243 = vadd.f32 %v9227, 1e-05
    %v9244 = vadd.f32 %v9228, 1e-05
    %v9245 = vadd.f32 %v9229, 1e-05
    %v9246 = vadd.f32 %v9230, 1e-05
    %v9247 = vadd.f32 %v9231, 1e-05
    %v9248 = vadd.f32 %v9232, 1e-05
    %v9249 = vadd.f32 %v9233, 1e-05
    %v9250 = vadd.f32 %v9234, 1e-05
    %v9251 = vadd.f32 %v9235, 1e-05
    %v9252 = vadd.f32 %v9236, 1e-05
    %v9253 = vadd.f32 %v9237, 1e-05
    %v9254 = vadd.f32 %v9238, 1e-05
    %v9255 = vrsqrt.pop %v9239
    %v9256 = vrsqrt.pop %v9240
    %v9257 = vrsqrt.pop %v9241
    %v9258 = vrsqrt.pop %v9242
    %v9259 = vrsqrt.pop %v9243
    %v9260 = vrsqrt.pop %v9244
    %v9261 = vrsqrt.pop %v9245
    %v9262 = vrsqrt.pop %v9246
    %v9263 = vrsqrt.pop %v9247
    %v9264 = vrsqrt.pop %v9248
    %v9265 = vrsqrt.pop %v9249
    %v9266 = vrsqrt.pop %v9250
    %v9267 = vrsqrt.pop %v9251
    %v9268 = vrsqrt.pop %v9252
    %v9269 = vrsqrt.pop %v9253
    %v9270 = vrsqrt.pop %v9254
    %v9271 = vmul.f32 %v9143, %v9255
    %v9272 = vmul.f32 %v9144, %v9256
    %v9273 = vmul.f32 %v9145, %v9257
    %v9274 = vmul.f32 %v9146, %v9258
    %v9275 = vmul.f32 %v9147, %v9259
    %v9276 = vmul.f32 %v9148, %v9260
    %v9277 = vmul.f32 %v9149, %v9261
    %v9278 = vmul.f32 %v9150, %v9262
    %v9279 = vmul.f32 %v9151, %v9263
    %v9280 = vmul.f32 %v9152, %v9264
    %v9281 = vmul.f32 %v9153, %v9265
    %v9282 = vmul.f32 %v9154, %v9266
    %v9283 = vmul.f32 %v9155, %v9267
    %v9284 = vmul.f32 %v9156, %v9268
    %v9285 = vmul.f32 %v9157, %v9269
    %v9286 = vmul.f32 %v9158, %v9270
    %v9287 = vlaneseq
    %v9288 = vshrl.u32 %v9287, 7
    %v9289 = vsub.s32 0, %v9288
    %v9290 = vrot.slane %v9077, %v9289
    %v9291 = vmul.f32 %v9271, %v9290
    %v9292 = vmul.f32 %v9272, %v9290
    %v9293 = vmul.f32 %v9273, %v9290
    %v9294 = vmul.f32 %v9274, %v9290
    %v9295 = vmul.f32 %v9275, %v9290
    %v9296 = vmul.f32 %v9276, %v9290
    %v9297 = vmul.f32 %v9277, %v9290
    %v9298 = vmul.f32 %v9278, %v9290
    %v9299 = vmul.f32 %v9279, %v9290
    %v9300 = vmul.f32 %v9280, %v9290
    %v9301 = vmul.f32 %v9281, %v9290
    %v9302 = vmul.f32 %v9282, %v9290
    %v9303 = vmul.f32 %v9283, %v9290
    %v9304 = vmul.f32 %v9284, %v9290
    %v9305 = vmul.f32 %v9285, %v9290
    %v9306 = vmul.f32 %v9286, %v9290
    %v9307 = vlaneseq
    %v9308 = vshrl.u32 %v9307, 7
    %v9309 = vsub.s32 0, %v9308
    %v9310 = vrot.slane %v9078, %v9309
    %v9311 = vadd.f32 %v9291, %v9310
    %v9312 = vadd.f32 %v9292, %v9310
    %v9313 = vadd.f32 %v9293, %v9310
    %v9314 = vadd.f32 %v9294, %v9310
    %v9315 = vadd.f32 %v9295, %v9310
    %v9316 = vadd.f32 %v9296, %v9310
    %v9317 = vadd.f32 %v9297, %v9310
    %v9318 = vadd.f32 %v9298, %v9310
    %v9319 = vadd.f32 %v9299, %v9310
    %v9320 = vadd.f32 %v9300, %v9310
    %v9321 = vadd.f32 %v9301, %v9310
    %v9322 = vadd.f32 %v9302, %v9310
    %v9323 = vadd.f32 %v9303, %v9310
    %v9324 = vadd.f32 %v9304, %v9310
    %v9325 = vadd.f32 %v9305, %v9310
    %v9326 = vadd.f32 %v9306, %v9310
    %v9327 = vld [vmem:[%s4 + $0x20] sm:$0xff]
    %v9328 = vld [vmem:[%s4 + $0x28] sm:$0xff]
    %v9329 = vld [vmem:[%s3 + $0x7] sm:$0x1]
    %v9330 = vlaneseq
    %v9331 = vshrl.u32 %v9330, 7
    %v9332 = vsub.s32 0, %v9331
    %v9333 = vrot.slane %v9329, %v9332
    %v9335 = vsel %vm1192, %v9311, 0
    %v9338 = vsel %vm1192, %v9312, 0
    %v9341 = vsel %vm1192, %v9313, 0
    %v9344 = vsel %vm1192, %v9314, 0
    %v9347 = vsel %vm1192, %v9315, 0
    %v9350 = vsel %vm1192, %v9316, 0
    %v9353 = vsel %vm1192, %v9317, 0
    %v9356 = vsel %vm1192, %v9318, 0
    %v9359 = vsel %vm1192, %v9319, 0
    %v9362 = vsel %vm1192, %v9320, 0
    %v9365 = vsel %vm1192, %v9321, 0
    %v9368 = vsel %vm1192, %v9322, 0
    %v9371 = vsel %vm1192, %v9323, 0
    %v9374 = vsel %vm1192, %v9324, 0
    %v9377 = vsel %vm1192, %v9325, 0
    %v9380 = vsel %vm1192, %v9326, 0
    %9382 = vmatprep.subr.mxu0 0.0
    %9383 = vmatpush1.msra.mxu0 %v9327
    %9384 = vmatprep.subr.mxu0 0.0
    %9385 = vmatpush1.msra.mxu0 %v9328
    %9386 = vmatprep.subr.mxu0 0.0
    %9387 = vmatpush1.msra.mxu0 0.0
    %9388 = vmatprep.subr.mxu0 0.0
    %9389 = vmatpush1.msra.mxu0 0.0
    %9390 = vmatprep.subr.mxu0 0.0
    %9391 = vmatpush1.msra.mxu0 0.0
    %9392 = vmatprep.subr.mxu0 0.0
    %9393 = vmatpush1.msra.mxu0 0.0
    %9394 = vmatprep.subr.mxu0 0.0
    %9395 = vmatpush1.msra.mxu0 0.0
    %9396 = vmatprep.subr.mxu0 0.0
    %9397 = vmatpush1.msra.mxu0 0.0
    %9398 = vmatprep.subr.mxu0 0.0
    %9399 = vmatpush1.msra.mxu0 0.0
    %9400 = vmatprep.subr.mxu0 0.0
    %9401 = vmatpush1.msra.mxu0 0.0
    %9402 = vmatprep.subr.mxu0 0.0
    %9403 = vmatpush1.msra.mxu0 0.0
    %9404 = vmatprep.subr.mxu0 0.0
    %9405 = vmatpush1.msra.mxu0 0.0
    %9406 = vmatprep.subr.mxu0 0.0
    %9407 = vmatpush1.msra.mxu0 0.0
    %9408 = vmatprep.subr.mxu0 0.0
    %9409 = vmatpush1.msra.mxu0 0.0
    %9410 = vmatprep.subr.mxu0 0.0
    %9411 = vmatpush1.msra.mxu0 0.0
    %9412 = vmatprep.subr.mxu0 0.0
    %9413 = vmatpush1.msra.mxu0 0.0
    %9414 = vmatprep.subr.mxu0 0.0
    %9415 = vmatpush1.msra.mxu0 0.0
    %9416 = vmatprep.subr.mxu0 0.0
    %9417 = vmatpush1.msra.mxu0 0.0
    %9418 = vmatprep.subr.mxu0 0.0
    %9419 = vmatpush1.msra.mxu0 0.0
    %9420 = vmatprep.subr.mxu0 0.0
    %9421 = vmatpush1.msra.mxu0 0.0
    %9422 = vmatprep.subr.mxu0 0.0
    %9423 = vmatpush1.msra.mxu0 0.0
    %9424 = vmatprep.subr.mxu0 0.0
    %9425 = vmatpush1.msra.mxu0 0.0
    %9426 = vmatprep.subr.mxu0 0.0
    %9427 = vmatpush1.msra.mxu0 0.0
    %9428 = vmatprep.subr.mxu0 0.0
    %9429 = vmatpush1.msra.mxu0 0.0
    %9430 = vmatprep.subr.mxu0 0.0
    %9431 = vmatpush1.msra.mxu0 0.0
    %9432 = vmatprep.subr.mxu0 0.0
    %9433 = vmatpush1.msra.mxu0 0.0
    %9434 = vmatprep.subr.mxu0 0.0
    %9435 = vmatpush1.msra.mxu0 0.0
    %9436 = vmatprep.subr.mxu0 0.0
    %9437 = vmatpush1.msra.mxu0 0.0
    %9438 = vmatprep.subr.mxu0 0.0
    %9439 = vmatpush1.msra.mxu0 0.0
    %9440 = vmatprep.subr.mxu0 0.0
    %9441 = vmatpush1.msra.mxu0 0.0
    %9442 = vmatprep.subr.mxu0 0.0
    %9443 = vmatpush1.msra.mxu0 0.0
    %9444 = vmatprep.subr.mxu0 0.0
    %9445 = vmatpush1.msra.mxu0 0.0
    %9446 = vmatprep.mubr.f32.mxu0 0.0
    %9447 = vmatmul.mubr.f32.gmra.mrb[0].mxu0 %v9335
    %v9448 = vpop.f32.mrb[0].mxu0
    %v9449 = vadd.f32 %v9333, %v9448
    %v9450 = vpop.f32.mrb[0].mxu0
    %9451 = vmatprep.mubr.f32.mxu0 0.0
    %9452 = vmatmul.mubr.f32.gmra.mrb[0].mxu0 %v9338
    %v9453 = vpop.f32.mrb[0].mxu0
    %v9454 = vadd.f32 %v9333, %v9453
    %v9455 = vpop.f32.mrb[0].mxu0
    %9456 = vmatprep.mubr.f32.mxu0 0.0
    %9457 = vmatmul.mubr.f32.gmra.mrb[0].mxu0 %v9341
    %v9458 = vpop.f32.mrb[0].mxu0
    %v9459 = vadd.f32 %v9333, %v9458
    %v9460 = vpop.f32.mrb[0].mxu0
    %9461 = vmatprep.mubr.f32.mxu0 0.0
    %9462 = vmatmul.mubr.f32.gmra.mrb[0].mxu0 %v9344
    %v9463 = vpop.f32.mrb[0].mxu0
    %v9464 = vadd.f32 %v9333, %v9463
    %v9465 = vpop.f32.mrb[0].mxu0
    %9466 = vmatprep.mubr.f32.mxu0 0.0
    %9467 = vmatmul.mubr.f32.gmra.mrb[0].mxu0 %v9347
    %v9468 = vpop.f32.mrb[0].mxu0
    %v9469 = vadd.f32 %v9333, %v9468
    %v9470 = vpop.f32.mrb[0].mxu0
    %9471 = vmatprep.mubr.f32.mxu0 0.0
    %9472 = vmatmul.mubr.f32.gmra.mrb[0].mxu0 %v9350
    %v9473 = vpop.f32.mrb[0].mxu0
    %v9474 = vadd.f32 %v9333, %v9473
    %v9475 = vpop.f32.mrb[0].mxu0
    %9476 = vmatprep.mubr.f32.mxu0 0.0
    %9477 = vmatmul.mubr.f32.gmra.mrb[0].mxu0 %v9353
    %v9478 = vpop.f32.mrb[0].mxu0
    %v9479 = vadd.f32 %v9333, %v9478
    %v9480 = vpop.f32.mrb[0].mxu0
    %9481 = vmatprep.mubr.f32.mxu0 0.0
    %9482 = vmatmul.mubr.f32.gmra.mrb[0].mxu0 %v9356
    %v9483 = vpop.f32.mrb[0].mxu0
    %v9484 = vadd.f32 %v9333, %v9483
    %v9485 = vpop.f32.mrb[0].mxu0
    %9486 = vmatprep.mubr.f32.mxu0 0.0
    %9487 = vmatmul.mubr.f32.gmra.mrb[0].mxu0 %v9359
    %v9488 = vpop.f32.mrb[0].mxu0
    %v9489 = vadd.f32 %v9333, %v9488
    %v9490 = vpop.f32.mrb[0].mxu0
    %9491 = vmatprep.mubr.f32.mxu0 0.0
    %9492 = vmatmul.mubr.f32.gmra.mrb[0].mxu0 %v9362
    %v9493 = vpop.f32.mrb[0].mxu0
    %v9494 = vadd.f32 %v9333, %v9493
    %v9495 = vpop.f32.mrb[0].mxu0
    %9496 = vmatprep.mubr.f32.mxu0 0.0
    %9497 = vmatmul.mubr.f32.gmra.mrb[0].mxu0 %v9365
    %v9498 = vpop.f32.mrb[0].mxu0
    %v9499 = vadd.f32 %v9333, %v9498
    %v9500 = vpop.f32.mrb[0].mxu0
    %9501 = vmatprep.mubr.f32.mxu0 0.0
    %9502 = vmatmul.mubr.f32.gmra.mrb[0].mxu0 %v9368
    %v9503 = vpop.f32.mrb[0].mxu0
    %v9504 = vadd.f32 %v9333, %v9503
    %v9505 = vpop.f32.mrb[0].mxu0
    %9506 = vmatprep.mubr.f32.mxu0 0.0
    %9507 = vmatmul.mubr.f32.gmra.mrb[0].mxu0 %v9371
    %v9508 = vpop.f32.mrb[0].mxu0
    %v9509 = vadd.f32 %v9333, %v9508
    %v9510 = vpop.f32.mrb[0].mxu0
    %9511 = vmatprep.mubr.f32.mxu0 0.0
    %9512 = vmatmul.mubr.f32.gmra.mrb[0].mxu0 %v9374
    %v9513 = vpop.f32.mrb[0].mxu0
    %v9514 = vadd.f32 %v9333, %v9513
    %v9515 = vpop.f32.mrb[0].mxu0
    %9516 = vmatprep.mubr.f32.mxu0 0.0
    %9517 = vmatmul.mubr.f32.gmra.mrb[0].mxu0 %v9377
    %v9518 = vpop.f32.mrb[0].mxu0
    %v9519 = vadd.f32 %v9333, %v9518
    %v9520 = vpop.f32.mrb[0].mxu0
    %9521 = vmatprep.mubr.f32.mxu0 0.0
    %9522 = vmatmul.mubr.f32.gmra.mrb[0].mxu0 %v9380
    %v9523 = vpop.f32.mrb[0].mxu0
    %v9524 = vadd.f32 %v9333, %v9523
    %v9525 = vpop.f32.mrb[0].mxu0
    %9526 = vdwg.mxu0
    %v9527 = vmul.f32 %v9449, 0.5
    %v9528 = vmul.f32 %v9454, 0.5
    %v9529 = vmul.f32 %v9459, 0.5
    %v9530 = vmul.f32 %v9464, 0.5
    %v9531 = vmul.f32 %v9469, 0.5
    %v9532 = vmul.f32 %v9474, 0.5
    %v9533 = vmul.f32 %v9479, 0.5
    %v9534 = vmul.f32 %v9484, 0.5
    %v9535 = vmul.f32 %v9489, 0.5
    %v9536 = vmul.f32 %v9494, 0.5
    %v9537 = vmul.f32 %v9499, 0.5
    %v9538 = vmul.f32 %v9504, 0.5
    %v9539 = vmul.f32 %v9509, 0.5
    %v9540 = vmul.f32 %v9514, 0.5
    %v9541 = vmul.f32 %v9519, 0.5
    %v9542 = vmul.f32 %v9524, 0.5
    %v9543 = vmul.f32 %v9449, 0.70710677
    %v9544 = vmul.f32 %v9454, 0.70710677
    %v9545 = vmul.f32 %v9459, 0.70710677
    %v9546 = vmul.f32 %v9464, 0.70710677
    %v9547 = vmul.f32 %v9469, 0.70710677
    %v9548 = vmul.f32 %v9474, 0.70710677
    %v9549 = vmul.f32 %v9479, 0.70710677
    %v9550 = vmul.f32 %v9484, 0.70710677
    %v9551 = vmul.f32 %v9489, 0.70710677
    %v9552 = vmul.f32 %v9494, 0.70710677
    %v9553 = vmul.f32 %v9499, 0.70710677
    %v9554 = vmul.f32 %v9504, 0.70710677
    %v9555 = vmul.f32 %v9509, 0.70710677
    %v9556 = vmul.f32 %v9514, 0.70710677
    %v9557 = vmul.f32 %v9519, 0.70710677
    %v9558 = vmul.f32 %v9524, 0.70710677
    %v9559 = vand.u32 2147483647, %v9543
    %v9560 = vand.u32 2147483647, %v9544
    %v9561 = vand.u32 2147483647, %v9545
    %v9562 = vand.u32 2147483647, %v9546
    %v9563 = vand.u32 2147483647, %v9547
    %v9564 = vand.u32 2147483647, %v9548
    %v9565 = vand.u32 2147483647, %v9549
    %v9566 = vand.u32 2147483647, %v9550
    %v9567 = vand.u32 2147483647, %v9551
    %v9568 = vand.u32 2147483647, %v9552
    %v9569 = vand.u32 2147483647, %v9553
    %v9570 = vand.u32 2147483647, %v9554
    %v9571 = vand.u32 2147483647, %v9555
    %v9572 = vand.u32 2147483647, %v9556
    %v9573 = vand.u32 2147483647, %v9557
    %v9574 = vand.u32 2147483647, %v9558
    %v9575 = vmul.f32 %v9559, 0.3275911
    %v9576 = vmul.f32 %v9560, 0.3275911
    %v9577 = vmul.f32 %v9561, 0.3275911
    %v9578 = vmul.f32 %v9562, 0.3275911
    %v9579 = vmul.f32 %v9563, 0.3275911
    %v9580 = vmul.f32 %v9564, 0.3275911
    %v9581 = vmul.f32 %v9565, 0.3275911
    %v9582 = vmul.f32 %v9566, 0.3275911
    %v9583 = vmul.f32 %v9567, 0.3275911
    %v9584 = vmul.f32 %v9568, 0.3275911
    %v9585 = vmul.f32 %v9569, 0.3275911
    %v9586 = vmul.f32 %v9570, 0.3275911
    %v9587 = vmul.f32 %v9571, 0.3275911
    %v9588 = vmul.f32 %v9572, 0.3275911
    %v9589 = vmul.f32 %v9573, 0.3275911
    %v9590 = vmul.f32 %v9574, 0.3275911
    %v9591 = vadd.f32 %v9575, 1.0
    %v9592 = vadd.f32 %v9576, 1.0
    %v9593 = vadd.f32 %v9577, 1.0
    %v9594 = vadd.f32 %v9578, 1.0
    %v9595 = vadd.f32 %v9579, 1.0
    %v9596 = vadd.f32 %v9580, 1.0
    %v9597 = vadd.f32 %v9581, 1.0
    %v9598 = vadd.f32 %v9582, 1.0
    %v9599 = vadd.f32 %v9583, 1.0
    %v9600 = vadd.f32 %v9584, 1.0
    %v9601 = vadd.f32 %v9585, 1.0
    %v9602 = vadd.f32 %v9586, 1.0
    %v9603 = vadd.f32 %v9587, 1.0
    %v9604 = vadd.f32 %v9588, 1.0
    %v9605 = vadd.f32 %v9589, 1.0
    %v9606 = vadd.f32 %v9590, 1.0
    %v9607 = vrcp.pop %v9591
    %v9608 = vrcp.pop %v9592
    %v9609 = vrcp.pop %v9593
    %v9610 = vrcp.pop %v9594
    %v9611 = vrcp.pop %v9595
    %v9612 = vrcp.pop %v9596
    %v9613 = vrcp.pop %v9597
    %v9614 = vrcp.pop %v9598
    %v9615 = vrcp.pop %v9599
    %v9616 = vrcp.pop %v9600
    %v9617 = vrcp.pop %v9601
    %v9618 = vrcp.pop %v9602
    %v9619 = vrcp.pop %v9603
    %v9620 = vrcp.pop %v9604
    %v9621 = vrcp.pop %v9605
    %v9622 = vrcp.pop %v9606
    %v9623 = vmul.f32 %v9591, %v9607
    %v9624 = vmul.f32 %v9592, %v9608
    %v9625 = vmul.f32 %v9593, %v9609
    %v9626 = vmul.f32 %v9594, %v9610
    %v9627 = vmul.f32 %v9595, %v9611
    %v9628 = vmul.f32 %v9596, %v9612
    %v9629 = vmul.f32 %v9597, %v9613
    %v9630 = vmul.f32 %v9598, %v9614
    %v9631 = vmul.f32 %v9599, %v9615
    %v9632 = vmul.f32 %v9600, %v9616
    %v9633 = vmul.f32 %v9601, %v9617
    %v9634 = vmul.f32 %v9602, %v9618
    %v9635 = vmul.f32 %v9603, %v9619
    %v9636 = vmul.f32 %v9604, %v9620
    %v9637 = vmul.f32 %v9605, %v9621
    %v9638 = vmul.f32 %v9606, %v9622
    %v9639 = vsub.f32 2.0, %v9623
    %v9640 = vsub.f32 2.0, %v9624
    %v9641 = vsub.f32 2.0, %v9625
    %v9642 = vsub.f32 2.0, %v9626
    %v9643 = vsub.f32 2.0, %v9627
    %v9644 = vsub.f32 2.0, %v9628
    %v9645 = vsub.f32 2.0, %v9629
    %v9646 = vsub.f32 2.0, %v9630
    %v9647 = vsub.f32 2.0, %v9631
    %v9648 = vsub.f32 2.0, %v9632
    %v9649 = vsub.f32 2.0, %v9633
    %v9650 = vsub.f32 2.0, %v9634
    %v9651 = vsub.f32 2.0, %v9635
    %v9652 = vsub.f32 2.0, %v9636
    %v9653 = vsub.f32 2.0, %v9637
    %v9654 = vsub.f32 2.0, %v9638
    %v9655 = vmul.f32 %v9607, %v9639
    %v9656 = vmul.f32 %v9608, %v9640
    %v9657 = vmul.f32 %v9609, %v9641
    %v9658 = vmul.f32 %v9610, %v9642
    %v9659 = vmul.f32 %v9611, %v9643
    %v9660 = vmul.f32 %v9612, %v9644
    %v9661 = vmul.f32 %v9613, %v9645
    %v9662 = vmul.f32 %v9614, %v9646
    %v9663 = vmul.f32 %v9615, %v9647
    %v9664 = vmul.f32 %v9616, %v9648
    %v9665 = vmul.f32 %v9617, %v9649
    %v9666 = vmul.f32 %v9618, %v9650
    %v9667 = vmul.f32 %v9619, %v9651
    %v9668 = vmul.f32 %v9620, %v9652
    %v9669 = vmul.f32 %v9621, %v9653
    %v9670 = vmul.f32 %v9622, %v9654
    %v9671 = vmul.f32 %v9655, 1.0614054
    %v9672 = vmul.f32 %v9656, 1.0614054
    %v9673 = vmul.f32 %v9657, 1.0614054
    %v9674 = vmul.f32 %v9658, 1.0614054
    %v9675 = vmul.f32 %v9659, 1.0614054
    %v9676 = vmul.f32 %v9660, 1.0614054
    %v9677 = vmul.f32 %v9661, 1.0614054
    %v9678 = vmul.f32 %v9662, 1.0614054
    %v9679 = vmul.f32 %v9663, 1.0614054
    %v9680 = vmul.f32 %v9664, 1.0614054
    %v9681 = vmul.f32 %v9665, 1.0614054
    %v9682 = vmul.f32 %v9666, 1.0614054
    %v9683 = vmul.f32 %v9667, 1.0614054
    %v9684 = vmul.f32 %v9668, 1.0614054
    %v9685 = vmul.f32 %v9669, 1.0614054
    %v9686 = vmul.f32 %v9670, 1.0614054
    %v9687 = vadd.f32 %v9671, -1.4531521
    %v9688 = vadd.f32 %v9672, -1.4531521
    %v9689 = vadd.f32 %v9673, -1.4531521
    %v9690 = vadd.f32 %v9674, -1.4531521
    %v9691 = vadd.f32 %v9675, -1.4531521
    %v9692 = vadd.f32 %v9676, -1.4531521
    %v9693 = vadd.f32 %v9677, -1.4531521
    %v9694 = vadd.f32 %v9678, -1.4531521
    %v9695 = vadd.f32 %v9679, -1.4531521
    %v9696 = vadd.f32 %v9680, -1.4531521
    %v9697 = vadd.f32 %v9681, -1.4531521
    %v9698 = vadd.f32 %v9682, -1.4531521
    %v9699 = vadd.f32 %v9683, -1.4531521
    %v9700 = vadd.f32 %v9684, -1.4531521
    %v9701 = vadd.f32 %v9685, -1.4531521
    %v9702 = vadd.f32 %v9686, -1.4531521
    %v9703 = vmul.f32 %v9687, %v9655
    %v9704 = vmul.f32 %v9688, %v9656
    %v9705 = vmul.f32 %v9689, %v9657
    %v9706 = vmul.f32 %v9690, %v9658
    %v9707 = vmul.f32 %v9691, %v9659
    %v9708 = vmul.f32 %v9692, %v9660
    %v9709 = vmul.f32 %v9693, %v9661
    %v9710 = vmul.f32 %v9694, %v9662
    %v9711 = vmul.f32 %v9695, %v9663
    %v9712 = vmul.f32 %v9696, %v9664
    %v9713 = vmul.f32 %v9697, %v9665
    %v9714 = vmul.f32 %v9698, %v9666
    %v9715 = vmul.f32 %v9699, %v9667
    %v9716 = vmul.f32 %v9700, %v9668
    %v9717 = vmul.f32 %v9701, %v9669
    %v9718 = vmul.f32 %v9702, %v9670
    %v9719 = vadd.f32 %v9703, 1.4214138
    %v9720 = vadd.f32 %v9704, 1.4214138
    %v9721 = vadd.f32 %v9705, 1.4214138
    %v9722 = vadd.f32 %v9706, 1.4214138
    %v9723 = vadd.f32 %v9707, 1.4214138
    %v9724 = vadd.f32 %v9708, 1.4214138
    %v9725 = vadd.f32 %v9709, 1.4214138
    %v9726 = vadd.f32 %v9710, 1.4214138
    %v9727 = vadd.f32 %v9711, 1.4214138
    %v9728 = vadd.f32 %v9712, 1.4214138
    %v9729 = vadd.f32 %v9713, 1.4214138
    %v9730 = vadd.f32 %v9714, 1.4214138
    %v9731 = vadd.f32 %v9715, 1.4214138
    %v9732 = vadd.f32 %v9716, 1.4214138
    %v9733 = vadd.f32 %v9717, 1.4214138
    %v9734 = vadd.f32 %v9718, 1.4214138
    %v9735 = vmul.f32 %v9719, %v9655
    %v9736 = vmul.f32 %v9720, %v9656
    %v9737 = vmul.f32 %v9721, %v9657
    %v9738 = vmul.f32 %v9722, %v9658
    %v9739 = vmul.f32 %v9723, %v9659
    %v9740 = vmul.f32 %v9724, %v9660
    %v9741 = vmul.f32 %v9725, %v9661
    %v9742 = vmul.f32 %v9726, %v9662
    %v9743 = vmul.f32 %v9727, %v9663
    %v9744 = vmul.f32 %v9728, %v9664
    %v9745 = vmul.f32 %v9729, %v9665
    %v9746 = vmul.f32 %v9730, %v9666
    %v9747 = vmul.f32 %v9731, %v9667
    %v9748 = vmul.f32 %v9732, %v9668
    %v9749 = vmul.f32 %v9733, %v9669
    %v9750 = vmul.f32 %v9734, %v9670
    %v9751 = vadd.f32 %v9735, -0.28449672
    %v9752 = vadd.f32 %v9736, -0.28449672
    %v9753 = vadd.f32 %v9737, -0.28449672
    %v9754 = vadd.f32 %v9738, -0.28449672
    %v9755 = vadd.f32 %v9739, -0.28449672
    %v9756 = vadd.f32 %v9740, -0.28449672
    %v9757 = vadd.f32 %v9741, -0.28449672
    %v9758 = vadd.f32 %v9742, -0.28449672
    %v9759 = vadd.f32 %v9743, -0.28449672
    %v9760 = vadd.f32 %v9744, -0.28449672
    %v9761 = vadd.f32 %v9745, -0.28449672
    %v9762 = vadd.f32 %v9746, -0.28449672
    %v9763 = vadd.f32 %v9747, -0.28449672
    %v9764 = vadd.f32 %v9748, -0.28449672
    %v9765 = vadd.f32 %v9749, -0.28449672
    %v9766 = vadd.f32 %v9750, -0.28449672
    %v9767 = vmul.f32 %v9751, %v9655
    %v9768 = vmul.f32 %v9752, %v9656
    %v9769 = vmul.f32 %v9753, %v9657
    %v9770 = vmul.f32 %v9754, %v9658
    %v9771 = vmul.f32 %v9755, %v9659
    %v9772 = vmul.f32 %v9756, %v9660
    %v9773 = vmul.f32 %v9757, %v9661
    %v9774 = vmul.f32 %v9758, %v9662
    %v9775 = vmul.f32 %v9759, %v9663
    %v9776 = vmul.f32 %v9760, %v9664
    %v9777 = vmul.f32 %v9761, %v9665
    %v9778 = vmul.f32 %v9762, %v9666
    %v9779 = vmul.f32 %v9763, %v9667
    %v9780 = vmul.f32 %v9764, %v9668
    %v9781 = vmul.f32 %v9765, %v9669
    %v9782 = vmul.f32 %v9766, %v9670
    %v9783 = vadd.f32 %v9767, 0.2548296
    %v9784 = vadd.f32 %v9768, 0.2548296
    %v9785 = vadd.f32 %v9769, 0.2548296
    %v9786 = vadd.f32 %v9770, 0.2548296
    %v9787 = vadd.f32 %v9771, 0.2548296
    %v9788 = vadd.f32 %v9772, 0.2548296
    %v9789 = vadd.f32 %v9773, 0.2548296
    %v9790 = vadd.f32 %v9774, 0.2548296
    %v9791 = vadd.f32 %v9775, 0.2548296
    %v9792 = vadd.f32 %v9776, 0.2548296
    %v9793 = vadd.f32 %v9777, 0.2548296
    %v9794 = vadd.f32 %v9778, 0.2548296
    %v9795 = vadd.f32 %v9779, 0.2548296
    %v9796 = vadd.f32 %v9780, 0.2548296
    %v9797 = vadd.f32 %v9781, 0.2548296
    %v9798 = vadd.f32 %v9782, 0.2548296
    %v9799 = vmul.f32 %v9783, %v9655
    %v9800 = vmul.f32 %v9784, %v9656
    %v9801 = vmul.f32 %v9785, %v9657
    %v9802 = vmul.f32 %v9786, %v9658
    %v9803 = vmul.f32 %v9787, %v9659
    %v9804 = vmul.f32 %v9788, %v9660
    %v9805 = vmul.f32 %v9789, %v9661
    %v9806 = vmul.f32 %v9790, %v9662
    %v9807 = vmul.f32 %v9791, %v9663
    %v9808 = vmul.f32 %v9792, %v9664
    %v9809 = vmul.f32 %v9793, %v9665
    %v9810 = vmul.f32 %v9794, %v9666
    %v9811 = vmul.f32 %v9795, %v9667
    %v9812 = vmul.f32 %v9796, %v9668
    %v9813 = vmul.f32 %v9797, %v9669
    %v9814 = vmul.f32 %v9798, %v9670
    %v9815 = vsub.f32 0.0, %v9559
    %v9816 = vsub.f32 0.0, %v9560
    %v9817 = vsub.f32 0.0, %v9561
    %v9818 = vsub.f32 0.0, %v9562
    %v9819 = vsub.f32 0.0, %v9563
    %v9820 = vsub.f32 0.0, %v9564
    %v9821 = vsub.f32 0.0, %v9565
    %v9822 = vsub.f32 0.0, %v9566
    %v9823 = vsub.f32 0.0, %v9567
    %v9824 = vsub.f32 0.0, %v9568
    %v9825 = vsub.f32 0.0, %v9569
    %v9826 = vsub.f32 0.0, %v9570
    %v9827 = vsub.f32 0.0, %v9571
    %v9828 = vsub.f32 0.0, %v9572
    %v9829 = vsub.f32 0.0, %v9573
    %v9830 = vsub.f32 0.0, %v9574
    %v9831 = vmul.f32 %v9815, %v9559
    %v9832 = vmul.f32 %v9816, %v9560
    %v9833 = vmul.f32 %v9817, %v9561
    %v9834 = vmul.f32 %v9818, %v9562
    %v9835 = vmul.f32 %v9819, %v9563
    %v9836 = vmul.f32 %v9820, %v9564
    %v9837 = vmul.f32 %v9821, %v9565
    %v9838 = vmul.f32 %v9822, %v9566
    %v9839 = vmul.f32 %v9823, %v9567
    %v9840 = vmul.f32 %v9824, %v9568
    %v9841 = vmul.f32 %v9825, %v9569
    %v9842 = vmul.f32 %v9826, %v9570
    %v9843 = vmul.f32 %v9827, %v9571
    %v9844 = vmul.f32 %v9828, %v9572
    %v9845 = vmul.f32 %v9829, %v9573
    %v9846 = vmul.f32 %v9830, %v9574
    %v9847 = vmul.f32 %v9831, 1.442695
    %v9848 = vpow.pop %v9847
    %v9849 = vmul.f32 %v9832, 1.442695
    %v9850 = vpow.pop %v9849
    %v9851 = vmul.f32 %v9833, 1.442695
    %v9852 = vpow.pop %v9851
    %v9853 = vmul.f32 %v9834, 1.442695
    %v9854 = vpow.pop %v9853
    %v9855 = vmul.f32 %v9835, 1.442695
    %v9856 = vpow.pop %v9855
    %v9857 = vmul.f32 %v9836, 1.442695
    %v9858 = vpow.pop %v9857
    %v9859 = vmul.f32 %v9837, 1.442695
    %v9860 = vpow.pop %v9859
    %v9861 = vmul.f32 %v9838, 1.442695
    %v9862 = vpow.pop %v9861
    %v9863 = vmul.f32 %v9839, 1.442695
    %v9864 = vpow.pop %v9863
    %v9865 = vmul.f32 %v9840, 1.442695
    %v9866 = vpow.pop %v9865
    %v9867 = vmul.f32 %v9841, 1.442695
    %v9868 = vpow.pop %v9867
    %v9869 = vmul.f32 %v9842, 1.442695
    %v9870 = vpow.pop %v9869
    %v9871 = vmul.f32 %v9843, 1.442695
    %v9872 = vpow.pop %v9871
    %v9873 = vmul.f32 %v9844, 1.442695
    %v9874 = vpow.pop %v9873
    %v9875 = vmul.f32 %v9845, 1.442695
    %v9876 = vpow.pop %v9875
    %v9877 = vmul.f32 %v9846, 1.442695
    %v9878 = vpow.pop %v9877
    %v9879 = vmul.f32 %v9799, %v9848
    %v9880 = vmul.f32 %v9800, %v9850
    %v9881 = vmul.f32 %v9801, %v9852
    %v9882 = vmul.f32 %v9802, %v9854
    %v9883 = vmul.f32 %v9803, %v9856
    %v9884 = vmul.f32 %v9804, %v9858
    %v9885 = vmul.f32 %v9805, %v9860
    %v9886 = vmul.f32 %v9806, %v9862
    %v9887 = vmul.f32 %v9807, %v9864
    %v9888 = vmul.f32 %v9808, %v9866
    %v9889 = vmul.f32 %v9809, %v9868
    %v9890 = vmul.f32 %v9810, %v9870
    %v9891 = vmul.f32 %v9811, %v9872
    %v9892 = vmul.f32 %v9812, %v9874
    %v9893 = vmul.f32 %v9813, %v9876
    %v9894 = vmul.f32 %v9814, %v9878
    %v9895 = vsub.f32 1.0, %v9879
    %v9896 = vsub.f32 1.0, %v9880
    %v9897 = vsub.f32 1.0, %v9881
    %v9898 = vsub.f32 1.0, %v9882
    %v9899 = vsub.f32 1.0, %v9883
    %v9900 = vsub.f32 1.0, %v9884
    %v9901 = vsub.f32 1.0, %v9885
    %v9902 = vsub.f32 1.0, %v9886
    %v9903 = vsub.f32 1.0, %v9887
    %v9904 = vsub.f32 1.0, %v9888
    %v9905 = vsub.f32 1.0, %v9889
    %v9906 = vsub.f32 1.0, %v9890
    %v9907 = vsub.f32 1.0, %v9891
    %v9908 = vsub.f32 1.0, %v9892
    %v9909 = vsub.f32 1.0, %v9893
    %v9910 = vsub.f32 1.0, %v9894
    %vm9911 = vcmp.ge.f32.partialorder %v9543, 0.0
    %vm9912 = vcmp.ge.f32.partialorder %v9544, 0.0
    %vm9913 = vcmp.ge.f32.partialorder %v9545, 0.0
    %vm9914 = vcmp.ge.f32.partialorder %v9546, 0.0
    %vm9915 = vcmp.ge.f32.partialorder %v9547, 0.0
    %vm9916 = vcmp.ge.f32.partialorder %v9548, 0.0
    %vm9917 = vcmp.ge.f32.partialorder %v9549, 0.0
    %vm9918 = vcmp.ge.f32.partialorder %v9550, 0.0
    %vm9919 = vcmp.ge.f32.partialorder %v9551, 0.0
    %vm9920 = vcmp.ge.f32.partialorder %v9552, 0.0
    %vm9921 = vcmp.ge.f32.partialorder %v9553, 0.0
    %vm9922 = vcmp.ge.f32.partialorder %v9554, 0.0
    %vm9923 = vcmp.ge.f32.partialorder %v9555, 0.0
    %vm9924 = vcmp.ge.f32.partialorder %v9556, 0.0
    %vm9925 = vcmp.ge.f32.partialorder %v9557, 0.0
    %vm9926 = vcmp.ge.f32.partialorder %v9558, 0.0
    %v9927 = vsub.f32 0.0, %v9895
    %v9928 = vsub.f32 0.0, %v9896
    %v9929 = vsub.f32 0.0, %v9897
    %v9930 = vsub.f32 0.0, %v9898
    %v9931 = vsub.f32 0.0, %v9899
    %v9932 = vsub.f32 0.0, %v9900
    %v9933 = vsub.f32 0.0, %v9901
    %v9934 = vsub.f32 0.0, %v9902
    %v9935 = vsub.f32 0.0, %v9903
    %v9936 = vsub.f32 0.0, %v9904
    %v9937 = vsub.f32 0.0, %v9905
    %v9938 = vsub.f32 0.0, %v9906
    %v9939 = vsub.f32 0.0, %v9907
    %v9940 = vsub.f32 0.0, %v9908
    %v9941 = vsub.f32 0.0, %v9909
    %v9942 = vsub.f32 0.0, %v9910
    %v9943 = vsel %vm9911, %v9895, %v9927
    %v9944 = vsel %vm9912, %v9896, %v9928
    %v9945 = vsel %vm9913, %v9897, %v9929
    %v9946 = vsel %vm9914, %v9898, %v9930
    %v9947 = vsel %vm9915, %v9899, %v9931
    %v9948 = vsel %vm9916, %v9900, %v9932
    %v9949 = vsel %vm9917, %v9901, %v9933
    %v9950 = vsel %vm9918, %v9902, %v9934
    %v9951 = vsel %vm9919, %v9903, %v9935
    %v9952 = vsel %vm9920, %v9904, %v9936
    %v9953 = vsel %vm9921, %v9905, %v9937
    %v9954 = vsel %vm9922, %v9906, %v9938
    %v9955 = vsel %vm9923, %v9907, %v9939
    %v9956 = vsel %vm9924, %v9908, %v9940
    %v9957 = vsel %vm9925, %v9909, %v9941
    %v9958 = vsel %vm9926, %v9910, %v9942
    %v9959 = vadd.f32 %v9943, 1.0
    %v9960 = vadd.f32 %v9944, 1.0
    %v9961 = vadd.f32 %v9945, 1.0
    %v9962 = vadd.f32 %v9946, 1.0
    %v9963 = vadd.f32 %v9947, 1.0
    %v9964 = vadd.f32 %v9948, 1.0
    %v9965 = vadd.f32 %v9949, 1.0
    %v9966 = vadd.f32 %v9950, 1.0
    %v9967 = vadd.f32 %v9951, 1.0
    %v9968 = vadd.f32 %v9952, 1.0
    %v9969 = vadd.f32 %v9953, 1.0
    %v9970 = vadd.f32 %v9954, 1.0
    %v9971 = vadd.f32 %v9955, 1.0
    %v9972 = vadd.f32 %v9956, 1.0
    %v9973 = vadd.f32 %v9957, 1.0
    %v9974 = vadd.f32 %v9958, 1.0
    %v9975 = vmul.f32 %v9527, %v9959
    %v9976 = vmul.f32 %v9528, %v9960
    %v9977 = vmul.f32 %v9529, %v9961
    %v9978 = vmul.f32 %v9530, %v9962
    %v9979 = vmul.f32 %v9531, %v9963
    %v9980 = vmul.f32 %v9532, %v9964
    %v9981 = vmul.f32 %v9533, %v9965
    %v9982 = vmul.f32 %v9534, %v9966
    %v9983 = vmul.f32 %v9535, %v9967
    %v9984 = vmul.f32 %v9536, %v9968
    %v9985 = vmul.f32 %v9537, %v9969
    %v9986 = vmul.f32 %v9538, %v9970
    %v9987 = vmul.f32 %v9539, %v9971
    %v9988 = vmul.f32 %v9540, %v9972
    %v9989 = vmul.f32 %v9541, %v9973
    %v9990 = vmul.f32 %v9542, %v9974
    %v9991 = vld [vmem:[%s4 + $0x30] sm:$0xff]
    %v9992 = vld [vmem:[%s4 + $0x38] sm:$0xff]
    %v9993 = vld [vmem:[%s4 + $0x40] sm:$0xff]
    %v9994 = vld [vmem:[%s4 + $0x48] sm:$0xff]
    %v9995 = vld [vmem:[%s4 + $0x50] sm:$0xff]
    %v9996 = vld [vmem:[%s4 + $0x58] sm:$0xff]
    %v9997 = vld [vmem:[%s4 + $0x60] sm:$0xff]
    %v9998 = vld [vmem:[%s4 + $0x68] sm:$0xff]
    %v9999 = vld [vmem:[%s3 + $0x8] sm:$0x1]
    %v10000 = vlaneseq
    %v10001 = vshrl.u32 %v10000, 7
    %v10002 = vsub.s32 0, %v10001
    %v10003 = vrot.slane %v9999, %v10002
    %vm10004 = vcmask 523264
    %v10006 = vsel %vm10004, %v9975, 0
    %v10009 = vsel %vm10004, %v9976, 0
    %v10012 = vsel %vm10004, %v9977, 0
    %v10015 = vsel %vm10004, %v9978, 0
    %v10018 = vsel %vm10004, %v9979, 0
    %v10021 = vsel %vm10004, %v9980, 0
    %v10024 = vsel %vm10004, %v9981, 0
    %v10027 = vsel %vm10004, %v9982, 0
    %v10030 = vsel %vm10004, %v9983, 0
    %v10033 = vsel %vm10004, %v9984, 0
    %v10036 = vsel %vm10004, %v9985, 0
    %v10039 = vsel %vm10004, %v9986, 0
    %v10042 = vsel %vm10004, %v9987, 0
    %v10045 = vsel %vm10004, %v9988, 0
    %v10048 = vsel %vm10004, %v9989, 0
    %v10051 = vsel %vm10004, %v9990, 0
    %10053 = vmatprep.subr.mxu0 0.0
    %10054 = vmatpush1.msra.mxu0 %v9991
    %10055 = vmatprep.subr.mxu0 0.0
    %10056 = vmatpush1.msra.mxu0 %v9992
    %10057 = vmatprep.subr.mxu0 0.0
    %10058 = vmatpush1.msra.mxu0 %v9993
    %10059 = vmatprep.subr.mxu0 0.0
    %10060 = vmatpush1.msra.mxu0 %v9994
    %10061 = vmatprep.subr.mxu0 0.0
    %10062 = vmatpush1.msra.mxu0 %v9995
    %10063 = vmatprep.subr.mxu0 0.0
    %10064 = vmatpush1.msra.mxu0 %v9996
    %10065 = vmatprep.subr.mxu0 0.0
    %10066 = vmatpush1.msra.mxu0 %v9997
    %10067 = vmatprep.subr.mxu0 0.0
    %10068 = vmatpush1.msra.mxu0 %v9998
    %10069 = vmatprep.subr.mxu0 0.0
    %10070 = vmatpush1.msra.mxu0 0.0
    %10071 = vmatprep.subr.mxu0 0.0
    %10072 = vmatpush1.msra.mxu0 0.0
    %10073 = vmatprep.subr.mxu0 0.0
    %10074 = vmatpush1.msra.mxu0 0.0
    %10075 = vmatprep.subr.mxu0 0.0
    %10076 = vmatpush1.msra.mxu0 0.0
    %10077 = vmatprep.subr.mxu0 0.0
    %10078 = vmatpush1.msra.mxu0 0.0
    %10079 = vmatprep.subr.mxu0 0.0
    %10080 = vmatpush1.msra.mxu0 0.0
    %10081 = vmatprep.subr.mxu0 0.0
    %10082 = vmatpush1.msra.mxu0 0.0
    %10083 = vmatprep.subr.mxu0 0.0
    %10084 = vmatpush1.msra.mxu0 0.0
    %10085 = vmatprep.subr.mxu0 0.0
    %10086 = vmatpush1.msra.mxu0 0.0
    %10087 = vmatprep.subr.mxu0 0.0
    %10088 = vmatpush1.msra.mxu0 0.0
    %10089 = vmatprep.subr.mxu0 0.0
    %10090 = vmatpush1.msra.mxu0 0.0
    %10091 = vmatprep.subr.mxu0 0.0
    %10092 = vmatpush1.msra.mxu0 0.0
    %10093 = vmatprep.subr.mxu0 0.0
    %10094 = vmatpush1.msra.mxu0 0.0
    %10095 = vmatprep.subr.mxu0 0.0
    %10096 = vmatpush1.msra.mxu0 0.0
    %10097 = vmatprep.subr.mxu0 0.0
    %10098 = vmatpush1.msra.mxu0 0.0
    %10099 = vmatprep.subr.mxu0 0.0
    %10100 = vmatpush1.msra.mxu0 0.0
    %10101 = vmatprep.subr.mxu0 0.0
    %10102 = vmatpush1.msra.mxu0 0.0
    %10103 = vmatprep.subr.mxu0 0.0
    %10104 = vmatpush1.msra.mxu0 0.0
    %10105 = vmatprep.subr.mxu0 0.0
    %10106 = vmatpush1.msra.mxu0 0.0
    %10107 = vmatprep.subr.mxu0 0.0
    %10108 = vmatpush1.msra.mxu0 0.0
    %10109 = vmatprep.subr.mxu0 0.0
    %10110 = vmatpush1.msra.mxu0 0.0
    %10111 = vmatprep.subr.mxu0 0.0
    %10112 = vmatpush1.msra.mxu0 0.0
    %10113 = vmatprep.subr.mxu0 0.0
    %10114 = vmatpush1.msra.mxu0 0.0
    %10115 = vmatprep.subr.mxu0 0.0
    %10116 = vmatpush1.msra.mxu0 0.0
    %10117 = vmatprep.mubr.f32.mxu0 0.0
    %10118 = vmatmul.mubr.f32.gmra.mrb[0].mxu0 %v10006
    %v10119 = vpop.f32.mrb[0].mxu0
    %v10120 = vadd.f32 %v10003, %v10119
    %v10121 = vpop.f32.mrb[0].mxu0
    %10122 = vmatprep.mubr.f32.mxu0 0.0
    %10123 = vmatmul.mubr.f32.gmra.mrb[0].mxu0 %v10009
    %v10124 = vpop.f32.mrb[0].mxu0
    %v10125 = vadd.f32 %v10003, %v10124
    %v10126 = vpop.f32.mrb[0].mxu0
    %10127 = vmatprep.mubr.f32.mxu0 0.0
    %10128 = vmatmul.mubr.f32.gmra.mrb[0].mxu0 %v10012
    %v10129 = vpop.f32.mrb[0].mxu0
    %v10130 = vadd.f32 %v10003, %v10129
    %v10131 = vpop.f32.mrb[0].mxu0
    %10132 = vmatprep.mubr.f32.mxu0 0.0
    %10133 = vmatmul.mubr.f32.gmra.mrb[0].mxu0 %v10015
    %v10134 = vpop.f32.mrb[0].mxu0
    %v10135 = vadd.f32 %v10003, %v10134
    %v10136 = vpop.f32.mrb[0].mxu0
    %10137 = vmatprep.mubr.f32.mxu0 0.0
    %10138 = vmatmul.mubr.f32.gmra.mrb[0].mxu0 %v10018
    %v10139 = vpop.f32.mrb[0].mxu0
    %v10140 = vadd.f32 %v10003, %v10139
    %v10141 = vpop.f32.mrb[0].mxu0
    %10142 = vmatprep.mubr.f32.mxu0 0.0
    %10143 = vmatmul.mubr.f32.gmra.mrb[0].mxu0 %v10021
    %v10144 = vpop.f32.mrb[0].mxu0
    %v10145 = vadd.f32 %v10003, %v10144
    %v10146 = vpop.f32.mrb[0].mxu0
    %10147 = vmatprep.mubr.f32.mxu0 0.0
    %10148 = vmatmul.mubr.f32.gmra.mrb[0].mxu0 %v10024
    %v10149 = vpop.f32.mrb[0].mxu0
    %v10150 = vadd.f32 %v10003, %v10149
    %v10151 = vpop.f32.mrb[0].mxu0
    %10152 = vmatprep.mubr.f32.mxu0 0.0
    %10153 = vmatmul.mubr.f32.gmra.mrb[0].mxu0 %v10027
    %v10154 = vpop.f32.mrb[0].mxu0
    %v10155 = vadd.f32 %v10003, %v10154
    %v10156 = vpop.f32.mrb[0].mxu0
    %10157 = vmatprep.mubr.f32.mxu0 0.0
    %10158 = vmatmul.mubr.f32.gmra.mrb[0].mxu0 %v10030
    %v10159 = vpop.f32.mrb[0].mxu0
    %v10160 = vadd.f32 %v10003, %v10159
    %v10161 = vpop.f32.mrb[0].mxu0
    %10162 = vmatprep.mubr.f32.mxu0 0.0
    %10163 = vmatmul.mubr.f32.gmra.mrb[0].mxu0 %v10033
    %v10164 = vpop.f32.mrb[0].mxu0
    %v10165 = vadd.f32 %v10003, %v10164
    %v10166 = vpop.f32.mrb[0].mxu0
    %10167 = vmatprep.mubr.f32.mxu0 0.0
    %10168 = vmatmul.mubr.f32.gmra.mrb[0].mxu0 %v10036
    %v10169 = vpop.f32.mrb[0].mxu0
    %v10170 = vadd.f32 %v10003, %v10169
    %v10171 = vpop.f32.mrb[0].mxu0
    %10172 = vmatprep.mubr.f32.mxu0 0.0
    %10173 = vmatmul.mubr.f32.gmra.mrb[0].mxu0 %v10039
    %v10174 = vpop.f32.mrb[0].mxu0
    %v10175 = vadd.f32 %v10003, %v10174
    %v10176 = vpop.f32.mrb[0].mxu0
    %10177 = vmatprep.mubr.f32.mxu0 0.0
    %10178 = vmatmul.mubr.f32.gmra.mrb[0].mxu0 %v10042
    %v10179 = vpop.f32.mrb[0].mxu0
    %v10180 = vadd.f32 %v10003, %v10179
    %v10181 = vpop.f32.mrb[0].mxu0
    %10182 = vmatprep.mubr.f32.mxu0 0.0
    %10183 = vmatmul.mubr.f32.gmra.mrb[0].mxu0 %v10045
    %v10184 = vpop.f32.mrb[0].mxu0
    %v10185 = vadd.f32 %v10003, %v10184
    %v10186 = vpop.f32.mrb[0].mxu0
    %10187 = vmatprep.mubr.f32.mxu0 0.0
    %10188 = vmatmul.mubr.f32.gmra.mrb[0].mxu0 %v10048
    %v10189 = vpop.f32.mrb[0].mxu0
    %v10190 = vadd.f32 %v10003, %v10189
    %v10191 = vpop.f32.mrb[0].mxu0
    %10192 = vmatprep.mubr.f32.mxu0 0.0
    %10193 = vmatmul.mubr.f32.gmra.mrb[0].mxu0 %v10051
    %v10194 = vpop.f32.mrb[0].mxu0
    %v10195 = vadd.f32 %v10003, %v10194
    %v10196 = vpop.f32.mrb[0].mxu0
    %10197 = vdwg.mxu0
    %v10198 = vadd.f32 %v9061, %v10120
    %v10199 = vadd.f32 %v9062, %v10125
    %v10200 = vadd.f32 %v9063, %v10130
    %v10201 = vadd.f32 %v9064, %v10135
    %v10202 = vadd.f32 %v9065, %v10140
    %v10203 = vadd.f32 %v9066, %v10145
    %v10204 = vadd.f32 %v9067, %v10150
    %v10205 = vadd.f32 %v9068, %v10155
    %v10206 = vadd.f32 %v9069, %v10160
    %v10207 = vadd.f32 %v9070, %v10165
    %v10208 = vadd.f32 %v9071, %v10170
    %v10209 = vadd.f32 %v9072, %v10175
    %v10210 = vadd.f32 %v9073, %v10180
    %v10211 = vadd.f32 %v9074, %v10185
    %v10212 = vadd.f32 %v9075, %v10190
    %v10213 = vadd.f32 %v9076, %v10195
    %10214 = vst.msk [vmem:[#allocation3] sm:$0xff] %vm1192, %v10198
    %10215 = vst.msk [vmem:[#allocation3 + $0x8] sm:$0xff] %vm1192, %v10199
    %10216 = vst.msk [vmem:[#allocation3 + $0x10] sm:$0xff] %vm1192, %v10200
    %10217 = vst.msk [vmem:[#allocation3 + $0x18] sm:$0xff] %vm1192, %v10201
    %10218 = vst.msk [vmem:[#allocation3 + $0x20] sm:$0xff] %vm1192, %v10202
    %10219 = vst.msk [vmem:[#allocation3 + $0x28] sm:$0xff] %vm1192, %v10203
    %10220 = vst.msk [vmem:[#allocation3 + $0x30] sm:$0xff] %vm1192, %v10204
    %10221 = vst.msk [vmem:[#allocation3 + $0x38] sm:$0xff] %vm1192, %v10205
    %10222 = vst.msk [vmem:[#allocation3 + $0x40] sm:$0xff] %vm1192, %v10206
    %10223 = vst.msk [vmem:[#allocation3 + $0x48] sm:$0xff] %vm1192, %v10207
    %10224 = vst.msk [vmem:[#allocation3 + $0x50] sm:$0xff] %vm1192, %v10208
    %10225 = vst.msk [vmem:[#allocation3 + $0x58] sm:$0xff] %vm1192, %v10209
    %10226 = vst.msk [vmem:[#allocation3 + $0x60] sm:$0xff] %vm1192, %v10210
    %10227 = vst.msk [vmem:[#allocation3 + $0x68] sm:$0xff] %vm1192, %v10211
    %10228 = vst.msk [vmem:[#allocation3 + $0x70] sm:$0xff] %vm1192, %v10212
    %10229 = vst.msk [vmem:[#allocation3 + $0x78] sm:$0xff] %vm1192, %v10213
    %v10230 = vld [vmem:[#allocation3] ss:$16 sm:$0x3]
    %v10231 = vld [vmem:[#allocation3] ss:$16 sm:$0xc]
    %v10232 = vor.u32 %v10230, %v10231
    %v10233 = vld [vmem:[#allocation3] ss:$16 sm:$0x30]
    %v10234 = vor.u32 %v10232, %v10233
    %v10235 = vld [vmem:[#allocation3] ss:$16 sm:$0xc0]
    %v10236 = vor.u32 %v10234, %v10235
    %v10237 = vld [vmem:[%s5] sm:$0xff]
    %v10238 = vld [vmem:[%s5 + $0x8] sm:$0xff]
    %s10239 = scalar_lea.vmem [#allocation3], 1
    %v10240 = vld [vmem:[%s10239] ss:$16 sm:$0x3]
    %v10241 = vld [vmem:[%s10239] ss:$16 sm:$0xc]
    %v10242 = vor.u32 %v10240, %v10241
    %v10243 = vld [vmem:[%s10239] ss:$16 sm:$0x30]
    %v10244 = vor.u32 %v10242, %v10243
    %v10245 = vld [vmem:[%s10239] ss:$16 sm:$0xc0]
    %v10246 = vor.u32 %v10244, %v10245
    %v10247 = vld [vmem:[%s5 + $0x10] sm:$0xff]
    %v10248 = vld [vmem:[%s5 + $0x18] sm:$0xff]
    %v10250 = vsel %vm1192, %v10246, 0
    %10252 = vmatprep.subr.mxu0 0.0
    %10253 = vmatpush1.msra.mxu0 %v10247
    %10254 = vmatprep.subr.mxu0 0.0
    %10255 = vmatpush1.msra.mxu0 %v10248
    %10256 = vmatprep.subr.mxu0 0.0
    %10257 = vmatpush1.msra.mxu0 0.0
    %10258 = vmatprep.subr.mxu0 0.0
    %10259 = vmatpush1.msra.mxu0 0.0
    %10260 = vmatprep.subr.mxu0 0.0
    %10261 = vmatpush1.msra.mxu0 0.0
    %10262 = vmatprep.subr.mxu0 0.0
    %10263 = vmatpush1.msra.mxu0 0.0
    %10264 = vmatprep.subr.mxu0 0.0
    %10265 = vmatpush1.msra.mxu0 0.0
    %10266 = vmatprep.subr.mxu0 0.0
    %10267 = vmatpush1.msra.mxu0 0.0
    %10268 = vmatprep.subr.mxu0 0.0
    %10269 = vmatpush1.msra.mxu0 0.0
    %10270 = vmatprep.subr.mxu0 0.0
    %10271 = vmatpush1.msra.mxu0 0.0
    %10272 = vmatprep.subr.mxu0 0.0
    %10273 = vmatpush1.msra.mxu0 0.0
    %10274 = vmatprep.subr.mxu0 0.0
    %10275 = vmatpush1.msra.mxu0 0.0
    %10276 = vmatprep.subr.mxu0 0.0
    %10277 = vmatpush1.msra.mxu0 0.0
    %10278 = vmatprep.subr.mxu0 0.0
    %10279 = vmatpush1.msra.mxu0 0.0
    %10280 = vmatprep.subr.mxu0 0.0
    %10281 = vmatpush1.msra.mxu0 0.0
    %10282 = vmatprep.subr.mxu0 0.0
    %10283 = vmatpush1.msra.mxu0 0.0
    %10284 = vmatprep.subr.mxu0 0.0
    %10285 = vmatpush1.msra.mxu0 0.0
    %10286 = vmatprep.subr.mxu0 0.0
    %10287 = vmatpush1.msra.mxu0 0.0
    %10288 = vmatprep.subr.mxu0 0.0
    %10289 = vmatpush1.msra.mxu0 0.0
    %10290 = vmatprep.subr.mxu0 0.0
    %10291 = vmatpush1.msra.mxu0 0.0
    %10292 = vmatprep.subr.mxu0 0.0
    %10293 = vmatpush1.msra.mxu0 0.0
    %10294 = vmatprep.subr.mxu0 0.0
    %10295 = vmatpush1.msra.mxu0 0.0
    %10296 = vmatprep.subr.mxu0 0.0
    %10297 = vmatpush1.msra.mxu0 0.0
    %10298 = vmatprep.subr.mxu0 0.0
    %10299 = vmatpush1.msra.mxu0 0.0
    %10300 = vmatprep.subr.mxu0 0.0
    %10301 = vmatpush1.msra.mxu0 0.0
    %10302 = vmatprep.subr.mxu0 0.0
    %10303 = vmatpush1.msra.mxu0 0.0
    %10304 = vmatprep.subr.mxu0 0.0
    %10305 = vmatpush1.msra.mxu0 0.0
    %10306 = vmatprep.subr.mxu0 0.0
    %10307 = vmatpush1.msra.mxu0 0.0
    %10308 = vmatprep.subr.mxu0 0.0
    %10309 = vmatpush1.msra.mxu0 0.0
    %10310 = vmatprep.subr.mxu0 0.0
    %10311 = vmatpush1.msra.mxu0 0.0
    %10312 = vmatprep.subr.mxu0 0.0
    %10313 = vmatpush1.msra.mxu0 0.0
    %10314 = vmatprep.subr.mxu0 0.0
    %10315 = vmatpush1.msra.mxu0 0.0
    %10316 = vmatprep.mubr.f32.mxu0 0.0
    %10317 = vmatmul.mubr.f32.gmra.mrb[0].mxu0 %v10250
    %v10318 = vpop.f32.mrb[0].mxu0
    %v10319 = vadd.f32 0.0, %v10318
    %v10320 = vpop.f32.mrb[0].mxu0
    %10321 = vdwg.mxu0
    %v10323 = vsel %vm1192, %v10236, 0
    %10325 = vmatprep.subr.mxu0 0.0
    %10326 = vmatpush1.msra.mxu0 %v10237
    %10327 = vmatprep.subr.mxu0 0.0
    %10328 = vmatpush1.msra.mxu0 %v10238
    %10329 = vmatprep.subr.mxu0 0.0
    %10330 = vmatpush1.msra.mxu0 0.0
    %10331 = vmatprep.subr.mxu0 0.0
    %10332 = vmatpush1.msra.mxu0 0.0
    %10333 = vmatprep.subr.mxu0 0.0
    %10334 = vmatpush1.msra.mxu0 0.0
    %10335 = vmatprep.subr.mxu0 0.0
    %10336 = vmatpush1.msra.mxu0 0.0
    %10337 = vmatprep.subr.mxu0 0.0
    %10338 = vmatpush1.msra.mxu0 0.0
    %10339 = vmatprep.subr.mxu0 0.0
    %10340 = vmatpush1.msra.mxu0 0.0
    %10341 = vmatprep.subr.mxu0 0.0
    %10342 = vmatpush1.msra.mxu0 0.0
    %10343 = vmatprep.subr.mxu0 0.0
    %10344 = vmatpush1.msra.mxu0 0.0
    %10345 = vmatprep.subr.mxu0 0.0
    %10346 = vmatpush1.msra.mxu0 0.0
    %10347 = vmatprep.subr.mxu0 0.0
    %10348 = vmatpush1.msra.mxu0 0.0
    %10349 = vmatprep.subr.mxu0 0.0
    %10350 = vmatpush1.msra.mxu0 0.0
    %10351 = vmatprep.subr.mxu0 0.0
    %10352 = vmatpush1.msra.mxu0 0.0
    %10353 = vmatprep.subr.mxu0 0.0
    %10354 = vmatpush1.msra.mxu0 0.0
    %10355 = vmatprep.subr.mxu0 0.0
    %10356 = vmatpush1.msra.mxu0 0.0
    %10357 = vmatprep.subr.mxu0 0.0
    %10358 = vmatpush1.msra.mxu0 0.0
    %10359 = vmatprep.subr.mxu0 0.0
    %10360 = vmatpush1.msra.mxu0 0.0
    %10361 = vmatprep.subr.mxu0 0.0
    %10362 = vmatpush1.msra.mxu0 0.0
    %10363 = vmatprep.subr.mxu0 0.0
    %10364 = vmatpush1.msra.mxu0 0.0
    %10365 = vmatprep.subr.mxu0 0.0
    %10366 = vmatpush1.msra.mxu0 0.0
    %10367 = vmatprep.subr.mxu0 0.0
    %10368 = vmatpush1.msra.mxu0 0.0
    %10369 = vmatprep.subr.mxu0 0.0
    %10370 = vmatpush1.msra.mxu0 0.0
    %10371 = vmatprep.subr.mxu0 0.0
    %10372 = vmatpush1.msra.mxu0 0.0
    %10373 = vmatprep.subr.mxu0 0.0
    %10374 = vmatpush1.msra.mxu0 0.0
    %10375 = vmatprep.subr.mxu0 0.0
    %10376 = vmatpush1.msra.mxu0 0.0
    %10377 = vmatprep.subr.mxu0 0.0
    %10378 = vmatpush1.msra.mxu0 0.0
    %10379 = vmatprep.subr.mxu0 0.0
    %10380 = vmatpush1.msra.mxu0 0.0
    %10381 = vmatprep.subr.mxu0 0.0
    %10382 = vmatpush1.msra.mxu0 0.0
    %10383 = vmatprep.subr.mxu0 0.0
    %10384 = vmatpush1.msra.mxu0 0.0
    %10385 = vmatprep.subr.mxu0 0.0
    %10386 = vmatpush1.msra.mxu0 0.0
    %10387 = vmatprep.subr.mxu0 0.0
    %10388 = vmatpush1.msra.mxu0 0.0
    %10389 = vmatprep.mubr.f32.mxu0 0.0
    %10390 = vmatmul.mubr.f32.gmra.mrb[0].mxu0 %v10323
    %v10391 = vpop.f32.mrb[0].mxu0
    %v10392 = vadd.f32 %v10319, %v10391
    %v10393 = vpop.f32.mrb[0].mxu0
    %10394 = vdwg.mxu0
    %s10395 = scalar_lea.vmem [#allocation3], 2
    %v10396 = vld [vmem:[%s10395] ss:$16 sm:$0x3]
    %v10397 = vld [vmem:[%s10395] ss:$16 sm:$0xc]
    %v10398 = vor.u32 %v10396, %v10397
    %v10399 = vld [vmem:[%s10395] ss:$16 sm:$0x30]
    %v10400 = vor.u32 %v10398, %v10399
    %v10401 = vld [vmem:[%s10395] ss:$16 sm:$0xc0]
    %v10402 = vor.u32 %v10400, %v10401
    %v10403 = vld [vmem:[%s5 + $0x20] sm:$0xff]
    %v10404 = vld [vmem:[%s5 + $0x28] sm:$0xff]
    %v10406 = vsel %vm1192, %v10402, 0
    %10408 = vmatprep.subr.mxu0 0.0
    %10409 = vmatpush1.msra.mxu0 %v10403
    %10410 = vmatprep.subr.mxu0 0.0
    %10411 = vmatpush1.msra.mxu0 %v10404
    %10412 = vmatprep.subr.mxu0 0.0
    %10413 = vmatpush1.msra.mxu0 0.0
    %10414 = vmatprep.subr.mxu0 0.0
    %10415 = vmatpush1.msra.mxu0 0.0
    %10416 = vmatprep.subr.mxu0 0.0
    %10417 = vmatpush1.msra.mxu0 0.0
    %10418 = vmatprep.subr.mxu0 0.0
    %10419 = vmatpush1.msra.mxu0 0.0
    %10420 = vmatprep.subr.mxu0 0.0
    %10421 = vmatpush1.msra.mxu0 0.0
    %10422 = vmatprep.subr.mxu0 0.0
    %10423 = vmatpush1.msra.mxu0 0.0
    %10424 = vmatprep.subr.mxu0 0.0
    %10425 = vmatpush1.msra.mxu0 0.0
    %10426 = vmatprep.subr.mxu0 0.0
    %10427 = vmatpush1.msra.mxu0 0.0
    %10428 = vmatprep.subr.mxu0 0.0
    %10429 = vmatpush1.msra.mxu0 0.0
    %10430 = vmatprep.subr.mxu0 0.0
    %10431 = vmatpush1.msra.mxu0 0.0
    %10432 = vmatprep.subr.mxu0 0.0
    %10433 = vmatpush1.msra.mxu0 0.0
    %10434 = vmatprep.subr.mxu0 0.0
    %10435 = vmatpush1.msra.mxu0 0.0
    %10436 = vmatprep.subr.mxu0 0.0
    %10437 = vmatpush1.msra.mxu0 0.0
    %10438 = vmatprep.subr.mxu0 0.0
    %10439 = vmatpush1.msra.mxu0 0.0
    %10440 = vmatprep.subr.mxu0 0.0
    %10441 = vmatpush1.msra.mxu0 0.0
    %10442 = vmatprep.subr.mxu0 0.0
    %10443 = vmatpush1.msra.mxu0 0.0
    %10444 = vmatprep.subr.mxu0 0.0
    %10445 = vmatpush1.msra.mxu0 0.0
    %10446 = vmatprep.subr.mxu0 0.0
    %10447 = vmatpush1.msra.mxu0 0.0
    %10448 = vmatprep.subr.mxu0 0.0
    %10449 = vmatpush1.msra.mxu0 0.0
    %10450 = vmatprep.subr.mxu0 0.0
    %10451 = vmatpush1.msra.mxu0 0.0
    %10452 = vmatprep.subr.mxu0 0.0
    %10453 = vmatpush1.msra.mxu0 0.0
    %10454 = vmatprep.subr.mxu0 0.0
    %10455 = vmatpush1.msra.mxu0 0.0
    %10456 = vmatprep.subr.mxu0 0.0
    %10457 = vmatpush1.msra.mxu0 0.0
    %10458 = vmatprep.subr.mxu0 0.0
    %10459 = vmatpush1.msra.mxu0 0.0
    %10460 = vmatprep.subr.mxu0 0.0
    %10461 = vmatpush1.msra.mxu0 0.0
    %10462 = vmatprep.subr.mxu0 0.0
    %10463 = vmatpush1.msra.mxu0 0.0
    %10464 = vmatprep.subr.mxu0 0.0
    %10465 = vmatpush1.msra.mxu0 0.0
    %10466 = vmatprep.subr.mxu0 0.0
    %10467 = vmatpush1.msra.mxu0 0.0
    %10468 = vmatprep.subr.mxu0 0.0
    %10469 = vmatpush1.msra.mxu0 0.0
    %10470 = vmatprep.subr.mxu0 0.0
    %10471 = vmatpush1.msra.mxu0 0.0
    %10472 = vmatprep.mubr.f32.mxu0 0.0
    %10473 = vmatmul.mubr.f32.gmra.mrb[0].mxu0 %v10406
    %v10474 = vpop.f32.mrb[0].mxu0
    %v10475 = vadd.f32 0.0, %v10474
    %v10476 = vpop.f32.mrb[0].mxu0
    %10477 = vdwg.mxu0
    %v10478 = vadd.f32 %v10392, %v10475
    %s10479 = scalar_lea.vmem [#allocation3], 3
    %v10480 = vld [vmem:[%s10479] ss:$16 sm:$0x3]
    %v10481 = vld [vmem:[%s10479] ss:$16 sm:$0xc]
    %v10482 = vor.u32 %v10480, %v10481
    %v10483 = vld [vmem:[%s10479] ss:$16 sm:$0x30]
    %v10484 = vor.u32 %v10482, %v10483
    %v10485 = vld [vmem:[%s10479] ss:$16 sm:$0xc0]
    %v10486 = vor.u32 %v10484, %v10485
    %v10487 = vld [vmem:[%s5 + $0x30] sm:$0xff]
    %v10488 = vld [vmem:[%s5 + $0x38] sm:$0xff]
    %v10490 = vsel %vm1192, %v10486, 0
    %10492 = vmatprep.subr.mxu0 0.0
    %10493 = vmatpush1.msra.mxu0 %v10487
    %10494 = vmatprep.subr.mxu0 0.0
    %10495 = vmatpush1.msra.mxu0 %v10488
    %10496 = vmatprep.subr.mxu0 0.0
    %10497 = vmatpush1.msra.mxu0 0.0
    %10498 = vmatprep.subr.mxu0 0.0
    %10499 = vmatpush1.msra.mxu0 0.0
    %10500 = vmatprep.subr.mxu0 0.0
    %10501 = vmatpush1.msra.mxu0 0.0
    %10502 = vmatprep.subr.mxu0 0.0
    %10503 = vmatpush1.msra.mxu0 0.0
    %10504 = vmatprep.subr.mxu0 0.0
    %10505 = vmatpush1.msra.mxu0 0.0
    %10506 = vmatprep.subr.mxu0 0.0
    %10507 = vmatpush1.msra.mxu0 0.0
    %10508 = vmatprep.subr.mxu0 0.0
    %10509 = vmatpush1.msra.mxu0 0.0
    %10510 = vmatprep.subr.mxu0 0.0
    %10511 = vmatpush1.msra.mxu0 0.0
    %10512 = vmatprep.subr.mxu0 0.0
    %10513 = vmatpush1.msra.mxu0 0.0
    %10514 = vmatprep.subr.mxu0 0.0
    %10515 = vmatpush1.msra.mxu0 0.0
    %10516 = vmatprep.subr.mxu0 0.0
    %10517 = vmatpush1.msra.mxu0 0.0
    %10518 = vmatprep.subr.mxu0 0.0
    %10519 = vmatpush1.msra.mxu0 0.0
    %10520 = vmatprep.subr.mxu0 0.0
    %10521 = vmatpush1.msra.mxu0 0.0
    %10522 = vmatprep.subr.mxu0 0.0
    %10523 = vmatpush1.msra.mxu0 0.0
    %10524 = vmatprep.subr.mxu0 0.0
    %10525 = vmatpush1.msra.mxu0 0.0
    %10526 = vmatprep.subr.mxu0 0.0
    %10527 = vmatpush1.msra.mxu0 0.0
    %10528 = vmatprep.subr.mxu0 0.0
    %10529 = vmatpush1.msra.mxu0 0.0
    %10530 = vmatprep.subr.mxu0 0.0
    %10531 = vmatpush1.msra.mxu0 0.0
    %10532 = vmatprep.subr.mxu0 0.0
    %10533 = vmatpush1.msra.mxu0 0.0
    %10534 = vmatprep.subr.mxu0 0.0
    %10535 = vmatpush1.msra.mxu0 0.0
    %10536 = vmatprep.subr.mxu0 0.0
    %10537 = vmatpush1.msra.mxu0 0.0
    %10538 = vmatprep.subr.mxu0 0.0
    %10539 = vmatpush1.msra.mxu0 0.0
    %10540 = vmatprep.subr.mxu0 0.0
    %10541 = vmatpush1.msra.mxu0 0.0
    %10542 = vmatprep.subr.mxu0 0.0
    %10543 = vmatpush1.msra.mxu0 0.0
    %10544 = vmatprep.subr.mxu0 0.0
    %10545 = vmatpush1.msra.mxu0 0.0
    %10546 = vmatprep.subr.mxu0 0.0
    %10547 = vmatpush1.msra.mxu0 0.0
    %10548 = vmatprep.subr.mxu0 0.0
    %10549 = vmatpush1.msra.mxu0 0.0
    %10550 = vmatprep.subr.mxu0 0.0
    %10551 = vmatpush1.msra.mxu0 0.0
    %10552 = vmatprep.subr.mxu0 0.0
    %10553 = vmatpush1.msra.mxu0 0.0
    %10554 = vmatprep.subr.mxu0 0.0
    %10555 = vmatpush1.msra.mxu0 0.0
    %10556 = vmatprep.mubr.f32.mxu0 0.0
    %10557 = vmatmul.mubr.f32.gmra.mrb[0].mxu0 %v10490
    %v10558 = vpop.f32.mrb[0].mxu0
    %v10559 = vadd.f32 0.0, %v10558
    %v10560 = vpop.f32.mrb[0].mxu0
    %10561 = vdwg.mxu0
    %v10562 = vadd.f32 %v10478, %v10559
    %s10563 = scalar_lea.vmem [#allocation3], 4
    %v10564 = vld [vmem:[%s10563] ss:$16 sm:$0x3]
    %v10565 = vld [vmem:[%s10563] ss:$16 sm:$0xc]
    %v10566 = vor.u32 %v10564, %v10565
    %v10567 = vld [vmem:[%s10563] ss:$16 sm:$0x30]
    %v10568 = vor.u32 %v10566, %v10567
    %v10569 = vld [vmem:[%s10563] ss:$16 sm:$0xc0]
    %v10570 = vor.u32 %v10568, %v10569
    %v10571 = vld [vmem:[%s5 + $0x40] sm:$0xff]
    %v10572 = vld [vmem:[%s5 + $0x48] sm:$0xff]
    %v10574 = vsel %vm1192, %v10570, 0
    %10576 = vmatprep.subr.mxu0 0.0
    %10577 = vmatpush1.msra.mxu0 %v10571
    %10578 = vmatprep.subr.mxu0 0.0
    %10579 = vmatpush1.msra.mxu0 %v10572
    %10580 = vmatprep.subr.mxu0 0.0
    %10581 = vmatpush1.msra.mxu0 0.0
    %10582 = vmatprep.subr.mxu0 0.0
    %10583 = vmatpush1.msra.mxu0 0.0
    %10584 = vmatprep.subr.mxu0 0.0
    %10585 = vmatpush1.msra.mxu0 0.0
    %10586 = vmatprep.subr.mxu0 0.0
    %10587 = vmatpush1.msra.mxu0 0.0
    %10588 = vmatprep.subr.mxu0 0.0
    %10589 = vmatpush1.msra.mxu0 0.0
    %10590 = vmatprep.subr.mxu0 0.0
    %10591 = vmatpush1.msra.mxu0 0.0
    %10592 = vmatprep.subr.mxu0 0.0
    %10593 = vmatpush1.msra.mxu0 0.0
    %10594 = vmatprep.subr.mxu0 0.0
    %10595 = vmatpush1.msra.mxu0 0.0
    %10596 = vmatprep.subr.mxu0 0.0
    %10597 = vmatpush1.msra.mxu0 0.0
    %10598 = vmatprep.subr.mxu0 0.0
    %10599 = vmatpush1.msra.mxu0 0.0
    %10600 = vmatprep.subr.mxu0 0.0
    %10601 = vmatpush1.msra.mxu0 0.0
    %10602 = vmatprep.subr.mxu0 0.0
    %10603 = vmatpush1.msra.mxu0 0.0
    %10604 = vmatprep.subr.mxu0 0.0
    %10605 = vmatpush1.msra.mxu0 0.0
    %10606 = vmatprep.subr.mxu0 0.0
    %10607 = vmatpush1.msra.mxu0 0.0
    %10608 = vmatprep.subr.mxu0 0.0
    %10609 = vmatpush1.msra.mxu0 0.0
    %10610 = vmatprep.subr.mxu0 0.0
    %10611 = vmatpush1.msra.mxu0 0.0
    %10612 = vmatprep.subr.mxu0 0.0
    %10613 = vmatpush1.msra.mxu0 0.0
    %10614 = vmatprep.subr.mxu0 0.0
    %10615 = vmatpush1.msra.mxu0 0.0
    %10616 = vmatprep.subr.mxu0 0.0
    %10617 = vmatpush1.msra.mxu0 0.0
    %10618 = vmatprep.subr.mxu0 0.0
    %10619 = vmatpush1.msra.mxu0 0.0
    %10620 = vmatprep.subr.mxu0 0.0
    %10621 = vmatpush1.msra.mxu0 0.0
    %10622 = vmatprep.subr.mxu0 0.0
    %10623 = vmatpush1.msra.mxu0 0.0
    %10624 = vmatprep.subr.mxu0 0.0
    %10625 = vmatpush1.msra.mxu0 0.0
    %10626 = vmatprep.subr.mxu0 0.0
    %10627 = vmatpush1.msra.mxu0 0.0
    %10628 = vmatprep.subr.mxu0 0.0
    %10629 = vmatpush1.msra.mxu0 0.0
    %10630 = vmatprep.subr.mxu0 0.0
    %10631 = vmatpush1.msra.mxu0 0.0
    %10632 = vmatprep.subr.mxu0 0.0
    %10633 = vmatpush1.msra.mxu0 0.0
    %10634 = vmatprep.subr.mxu0 0.0
    %10635 = vmatpush1.msra.mxu0 0.0
    %10636 = vmatprep.subr.mxu0 0.0
    %10637 = vmatpush1.msra.mxu0 0.0
    %10638 = vmatprep.subr.mxu0 0.0
    %10639 = vmatpush1.msra.mxu0 0.0
    %10640 = vmatprep.mubr.f32.mxu0 0.0
    %10641 = vmatmul.mubr.f32.gmra.mrb[0].mxu0 %v10574
    %v10642 = vpop.f32.mrb[0].mxu0
    %v10643 = vadd.f32 0.0, %v10642
    %v10644 = vpop.f32.mrb[0].mxu0
    %10645 = vdwg.mxu0
    %v10646 = vadd.f32 %v10562, %v10643
    %s10647 = scalar_lea.vmem [#allocation3], 5
    %v10648 = vld [vmem:[%s10647] ss:$16 sm:$0x3]
    %v10649 = vld [vmem:[%s10647] ss:$16 sm:$0xc]
    %v10650 = vor.u32 %v10648, %v10649
    %v10651 = vld [vmem:[%s10647] ss:$16 sm:$0x30]
    %v10652 = vor.u32 %v10650, %v10651
    %v10653 = vld [vmem:[%s10647] ss:$16 sm:$0xc0]
    %v10654 = vor.u32 %v10652, %v10653
    %v10655 = vld [vmem:[%s5 + $0x50] sm:$0xff]
    %v10656 = vld [vmem:[%s5 + $0x58] sm:$0xff]
    %v10658 = vsel %vm1192, %v10654, 0
    %10660 = vmatprep.subr.mxu0 0.0
    %10661 = vmatpush1.msra.mxu0 %v10655
    %10662 = vmatprep.subr.mxu0 0.0
    %10663 = vmatpush1.msra.mxu0 %v10656
    %10664 = vmatprep.subr.mxu0 0.0
    %10665 = vmatpush1.msra.mxu0 0.0
    %10666 = vmatprep.subr.mxu0 0.0
    %10667 = vmatpush1.msra.mxu0 0.0
    %10668 = vmatprep.subr.mxu0 0.0
    %10669 = vmatpush1.msra.mxu0 0.0
    %10670 = vmatprep.subr.mxu0 0.0
    %10671 = vmatpush1.msra.mxu0 0.0
    %10672 = vmatprep.subr.mxu0 0.0
    %10673 = vmatpush1.msra.mxu0 0.0
    %10674 = vmatprep.subr.mxu0 0.0
    %10675 = vmatpush1.msra.mxu0 0.0
    %10676 = vmatprep.subr.mxu0 0.0
    %10677 = vmatpush1.msra.mxu0 0.0
    %10678 = vmatprep.subr.mxu0 0.0
    %10679 = vmatpush1.msra.mxu0 0.0
    %10680 = vmatprep.subr.mxu0 0.0
    %10681 = vmatpush1.msra.mxu0 0.0
    %10682 = vmatprep.subr.mxu0 0.0
    %10683 = vmatpush1.msra.mxu0 0.0
    %10684 = vmatprep.subr.mxu0 0.0
    %10685 = vmatpush1.msra.mxu0 0.0
    %10686 = vmatprep.subr.mxu0 0.0
    %10687 = vmatpush1.msra.mxu0 0.0
    %10688 = vmatprep.subr.mxu0 0.0
    %10689 = vmatpush1.msra.mxu0 0.0
    %10690 = vmatprep.subr.mxu0 0.0
    %10691 = vmatpush1.msra.mxu0 0.0
    %10692 = vmatprep.subr.mxu0 0.0
    %10693 = vmatpush1.msra.mxu0 0.0
    %10694 = vmatprep.subr.mxu0 0.0
    %10695 = vmatpush1.msra.mxu0 0.0
    %10696 = vmatprep.subr.mxu0 0.0
    %10697 = vmatpush1.msra.mxu0 0.0
    %10698 = vmatprep.subr.mxu0 0.0
    %10699 = vmatpush1.msra.mxu0 0.0
    %10700 = vmatprep.subr.mxu0 0.0
    %10701 = vmatpush1.msra.mxu0 0.0
    %10702 = vmatprep.subr.mxu0 0.0
    %10703 = vmatpush1.msra.mxu0 0.0
    %10704 = vmatprep.subr.mxu0 0.0
    %10705 = vmatpush1.msra.mxu0 0.0
    %10706 = vmatprep.subr.mxu0 0.0
    %10707 = vmatpush1.msra.mxu0 0.0
    %10708 = vmatprep.subr.mxu0 0.0
    %10709 = vmatpush1.msra.mxu0 0.0
    %10710 = vmatprep.subr.mxu0 0.0
    %10711 = vmatpush1.msra.mxu0 0.0
    %10712 = vmatprep.subr.mxu0 0.0
    %10713 = vmatpush1.msra.mxu0 0.0
    %10714 = vmatprep.subr.mxu0 0.0
    %10715 = vmatpush1.msra.mxu0 0.0
    %10716 = vmatprep.subr.mxu0 0.0
    %10717 = vmatpush1.msra.mxu0 0.0
    %10718 = vmatprep.subr.mxu0 0.0
    %10719 = vmatpush1.msra.mxu0 0.0
    %10720 = vmatprep.subr.mxu0 0.0
    %10721 = vmatpush1.msra.mxu0 0.0
    %10722 = vmatprep.subr.mxu0 0.0
    %10723 = vmatpush1.msra.mxu0 0.0
    %10724 = vmatprep.mubr.f32.mxu0 0.0
    %10725 = vmatmul.mubr.f32.gmra.mrb[0].mxu0 %v10658
    %v10726 = vpop.f32.mrb[0].mxu0
    %v10727 = vadd.f32 0.0, %v10726
    %v10728 = vpop.f32.mrb[0].mxu0
    %10729 = vdwg.mxu0
    %v10730 = vadd.f32 %v10646, %v10727
    %s10731 = scalar_lea.vmem [#allocation3], 6
    %v10732 = vld [vmem:[%s10731] ss:$16 sm:$0x3]
    %v10733 = vld [vmem:[%s10731] ss:$16 sm:$0xc]
    %v10734 = vor.u32 %v10732, %v10733
    %v10735 = vld [vmem:[%s10731] ss:$16 sm:$0x30]
    %v10736 = vor.u32 %v10734, %v10735
    %v10737 = vld [vmem:[%s10731] ss:$16 sm:$0xc0]
    %v10738 = vor.u32 %v10736, %v10737
    %v10739 = vld [vmem:[%s5 + $0x60] sm:$0xff]
    %v10740 = vld [vmem:[%s5 + $0x68] sm:$0xff]
    %v10742 = vsel %vm1192, %v10738, 0
    %10744 = vmatprep.subr.mxu0 0.0
    %10745 = vmatpush1.msra.mxu0 %v10739
    %10746 = vmatprep.subr.mxu0 0.0
    %10747 = vmatpush1.msra.mxu0 %v10740
    %10748 = vmatprep.subr.mxu0 0.0
    %10749 = vmatpush1.msra.mxu0 0.0
    %10750 = vmatprep.subr.mxu0 0.0
    %10751 = vmatpush1.msra.mxu0 0.0
    %10752 = vmatprep.subr.mxu0 0.0
    %10753 = vmatpush1.msra.mxu0 0.0
    %10754 = vmatprep.subr.mxu0 0.0
    %10755 = vmatpush1.msra.mxu0 0.0
    %10756 = vmatprep.subr.mxu0 0.0
    %10757 = vmatpush1.msra.mxu0 0.0
    %10758 = vmatprep.subr.mxu0 0.0
    %10759 = vmatpush1.msra.mxu0 0.0
    %10760 = vmatprep.subr.mxu0 0.0
    %10761 = vmatpush1.msra.mxu0 0.0
    %10762 = vmatprep.subr.mxu0 0.0
    %10763 = vmatpush1.msra.mxu0 0.0
    %10764 = vmatprep.subr.mxu0 0.0
    %10765 = vmatpush1.msra.mxu0 0.0
    %10766 = vmatprep.subr.mxu0 0.0
    %10767 = vmatpush1.msra.mxu0 0.0
    %10768 = vmatprep.subr.mxu0 0.0
    %10769 = vmatpush1.msra.mxu0 0.0
    %10770 = vmatprep.subr.mxu0 0.0
    %10771 = vmatpush1.msra.mxu0 0.0
    %10772 = vmatprep.subr.mxu0 0.0
    %10773 = vmatpush1.msra.mxu0 0.0
    %10774 = vmatprep.subr.mxu0 0.0
    %10775 = vmatpush1.msra.mxu0 0.0
    %10776 = vmatprep.subr.mxu0 0.0
    %10777 = vmatpush1.msra.mxu0 0.0
    %10778 = vmatprep.subr.mxu0 0.0
    %10779 = vmatpush1.msra.mxu0 0.0
    %10780 = vmatprep.subr.mxu0 0.0
    %10781 = vmatpush1.msra.mxu0 0.0
    %10782 = vmatprep.subr.mxu0 0.0
    %10783 = vmatpush1.msra.mxu0 0.0
    %10784 = vmatprep.subr.mxu0 0.0
    %10785 = vmatpush1.msra.mxu0 0.0
    %10786 = vmatprep.subr.mxu0 0.0
    %10787 = vmatpush1.msra.mxu0 0.0
    %10788 = vmatprep.subr.mxu0 0.0
    %10789 = vmatpush1.msra.mxu0 0.0
    %10790 = vmatprep.subr.mxu0 0.0
    %10791 = vmatpush1.msra.mxu0 0.0
    %10792 = vmatprep.subr.mxu0 0.0
    %10793 = vmatpush1.msra.mxu0 0.0
    %10794 = vmatprep.subr.mxu0 0.0
    %10795 = vmatpush1.msra.mxu0 0.0
    %10796 = vmatprep.subr.mxu0 0.0
    %10797 = vmatpush1.msra.mxu0 0.0
    %10798 = vmatprep.subr.mxu0 0.0
    %10799 = vmatpush1.msra.mxu0 0.0
    %10800 = vmatprep.subr.mxu0 0.0
    %10801 = vmatpush1.msra.mxu0 0.0
    %10802 = vmatprep.subr.mxu0 0.0
    %10803 = vmatpush1.msra.mxu0 0.0
    %10804 = vmatprep.subr.mxu0 0.0
    %10805 = vmatpush1.msra.mxu0 0.0
    %10806 = vmatprep.subr.mxu0 0.0
    %10807 = vmatpush1.msra.mxu0 0.0
    %10808 = vmatprep.mubr.f32.mxu0 0.0
    %10809 = vmatmul.mubr.f32.gmra.mrb[0].mxu0 %v10742
    %v10810 = vpop.f32.mrb[0].mxu0
    %v10811 = vadd.f32 0.0, %v10810
    %v10812 = vpop.f32.mrb[0].mxu0
    %10813 = vdwg.mxu0
    %v10814 = vadd.f32 %v10730, %v10811
    %s10815 = scalar_lea.vmem [#allocation3], 7
    %v10816 = vld [vmem:[%s10815] ss:$16 sm:$0x3]
    %v10817 = vld [vmem:[%s10815] ss:$16 sm:$0xc]
    %v10818 = vor.u32 %v10816, %v10817
    %v10819 = vld [vmem:[%s10815] ss:$16 sm:$0x30]
    %v10820 = vor.u32 %v10818, %v10819
    %v10821 = vld [vmem:[%s10815] ss:$16 sm:$0xc0]
    %v10822 = vor.u32 %v10820, %v10821
    %v10823 = vld [vmem:[%s5 + $0x70] sm:$0xff]
    %v10824 = vld [vmem:[%s5 + $0x78] sm:$0xff]
    %v10826 = vsel %vm1192, %v10822, 0
    %10828 = vmatprep.subr.mxu0 0.0
    %10829 = vmatpush1.msra.mxu0 %v10823
    %10830 = vmatprep.subr.mxu0 0.0
    %10831 = vmatpush1.msra.mxu0 %v10824
    %10832 = vmatprep.subr.mxu0 0.0
    %10833 = vmatpush1.msra.mxu0 0.0
    %10834 = vmatprep.subr.mxu0 0.0
    %10835 = vmatpush1.msra.mxu0 0.0
    %10836 = vmatprep.subr.mxu0 0.0
    %10837 = vmatpush1.msra.mxu0 0.0
    %10838 = vmatprep.subr.mxu0 0.0
    %10839 = vmatpush1.msra.mxu0 0.0
    %10840 = vmatprep.subr.mxu0 0.0
    %10841 = vmatpush1.msra.mxu0 0.0
    %10842 = vmatprep.subr.mxu0 0.0
    %10843 = vmatpush1.msra.mxu0 0.0
    %10844 = vmatprep.subr.mxu0 0.0
    %10845 = vmatpush1.msra.mxu0 0.0
    %10846 = vmatprep.subr.mxu0 0.0
    %10847 = vmatpush1.msra.mxu0 0.0
    %10848 = vmatprep.subr.mxu0 0.0
    %10849 = vmatpush1.msra.mxu0 0.0
    %10850 = vmatprep.subr.mxu0 0.0
    %10851 = vmatpush1.msra.mxu0 0.0
    %10852 = vmatprep.subr.mxu0 0.0
    %10853 = vmatpush1.msra.mxu0 0.0
    %10854 = vmatprep.subr.mxu0 0.0
    %10855 = vmatpush1.msra.mxu0 0.0
    %10856 = vmatprep.subr.mxu0 0.0
    %10857 = vmatpush1.msra.mxu0 0.0
    %10858 = vmatprep.subr.mxu0 0.0
    %10859 = vmatpush1.msra.mxu0 0.0
    %10860 = vmatprep.subr.mxu0 0.0
    %10861 = vmatpush1.msra.mxu0 0.0
    %10862 = vmatprep.subr.mxu0 0.0
    %10863 = vmatpush1.msra.mxu0 0.0
    %10864 = vmatprep.subr.mxu0 0.0
    %10865 = vmatpush1.msra.mxu0 0.0
    %10866 = vmatprep.subr.mxu0 0.0
    %10867 = vmatpush1.msra.mxu0 0.0
    %10868 = vmatprep.subr.mxu0 0.0
    %10869 = vmatpush1.msra.mxu0 0.0
    %10870 = vmatprep.subr.mxu0 0.0
    %10871 = vmatpush1.msra.mxu0 0.0
    %10872 = vmatprep.subr.mxu0 0.0
    %10873 = vmatpush1.msra.mxu0 0.0
    %10874 = vmatprep.subr.mxu0 0.0
    %10875 = vmatpush1.msra.mxu0 0.0
    %10876 = vmatprep.subr.mxu0 0.0
    %10877 = vmatpush1.msra.mxu0 0.0
    %10878 = vmatprep.subr.mxu0 0.0
    %10879 = vmatpush1.msra.mxu0 0.0
    %10880 = vmatprep.subr.mxu0 0.0
    %10881 = vmatpush1.msra.mxu0 0.0
    %10882 = vmatprep.subr.mxu0 0.0
    %10883 = vmatpush1.msra.mxu0 0.0
    %10884 = vmatprep.subr.mxu0 0.0
    %10885 = vmatpush1.msra.mxu0 0.0
    %10886 = vmatprep.subr.mxu0 0.0
    %10887 = vmatpush1.msra.mxu0 0.0
    %10888 = vmatprep.subr.mxu0 0.0
    %10889 = vmatpush1.msra.mxu0 0.0
    %10890 = vmatprep.subr.mxu0 0.0
    %10891 = vmatpush1.msra.mxu0 0.0
    %10892 = vmatprep.mubr.f32.mxu0 0.0
    %10893 = vmatmul.mubr.f32.gmra.mrb[0].mxu0 %v10826
    %v10894 = vpop.f32.mrb[0].mxu0
    %v10895 = vadd.f32 0.0, %v10894
    %v10896 = vpop.f32.mrb[0].mxu0
    %10897 = vdwg.mxu0
    %v10898 = vadd.f32 %v10814, %v10895
    %s10899 = scalar_lea.vmem [#allocation3], 8
    %v10900 = vld [vmem:[%s10899] ss:$16 sm:$0x3]
    %v10901 = vld [vmem:[%s10899] ss:$16 sm:$0xc]
    %v10902 = vor.u32 %v10900, %v10901
    %v10903 = vld [vmem:[%s10899] ss:$16 sm:$0x30]
    %v10904 = vor.u32 %v10902, %v10903
    %v10905 = vld [vmem:[%s10899] ss:$16 sm:$0xc0]
    %v10906 = vor.u32 %v10904, %v10905
    %v10907 = vld [vmem:[%s5 + $0x80] sm:$0xff]
    %v10908 = vld [vmem:[%s5 + $0x88] sm:$0xff]
    %v10910 = vsel %vm1192, %v10906, 0
    %10912 = vmatprep.subr.mxu0 0.0
    %10913 = vmatpush1.msra.mxu0 %v10907
    %10914 = vmatprep.subr.mxu0 0.0
    %10915 = vmatpush1.msra.mxu0 %v10908
    %10916 = vmatprep.subr.mxu0 0.0
    %10917 = vmatpush1.msra.mxu0 0.0
    %10918 = vmatprep.subr.mxu0 0.0
    %10919 = vmatpush1.msra.mxu0 0.0
    %10920 = vmatprep.subr.mxu0 0.0
    %10921 = vmatpush1.msra.mxu0 0.0
    %10922 = vmatprep.subr.mxu0 0.0
    %10923 = vmatpush1.msra.mxu0 0.0
    %10924 = vmatprep.subr.mxu0 0.0
    %10925 = vmatpush1.msra.mxu0 0.0
    %10926 = vmatprep.subr.mxu0 0.0
    %10927 = vmatpush1.msra.mxu0 0.0
    %10928 = vmatprep.subr.mxu0 0.0
    %10929 = vmatpush1.msra.mxu0 0.0
    %10930 = vmatprep.subr.mxu0 0.0
    %10931 = vmatpush1.msra.mxu0 0.0
    %10932 = vmatprep.subr.mxu0 0.0
    %10933 = vmatpush1.msra.mxu0 0.0
    %10934 = vmatprep.subr.mxu0 0.0
    %10935 = vmatpush1.msra.mxu0 0.0
    %10936 = vmatprep.subr.mxu0 0.0
    %10937 = vmatpush1.msra.mxu0 0.0
    %10938 = vmatprep.subr.mxu0 0.0
    %10939 = vmatpush1.msra.mxu0 0.0
    %10940 = vmatprep.subr.mxu0 0.0
    %10941 = vmatpush1.msra.mxu0 0.0
    %10942 = vmatprep.subr.mxu0 0.0
    %10943 = vmatpush1.msra.mxu0 0.0
    %10944 = vmatprep.subr.mxu0 0.0
    %10945 = vmatpush1.msra.mxu0 0.0
    %10946 = vmatprep.subr.mxu0 0.0
    %10947 = vmatpush1.msra.mxu0 0.0
    %10948 = vmatprep.subr.mxu0 0.0
    %10949 = vmatpush1.msra.mxu0 0.0
    %10950 = vmatprep.subr.mxu0 0.0
    %10951 = vmatpush1.msra.mxu0 0.0
    %10952 = vmatprep.subr.mxu0 0.0
    %10953 = vmatpush1.msra.mxu0 0.0
    %10954 = vmatprep.subr.mxu0 0.0
    %10955 = vmatpush1.msra.mxu0 0.0
    %10956 = vmatprep.subr.mxu0 0.0
    %10957 = vmatpush1.msra.mxu0 0.0
    %10958 = vmatprep.subr.mxu0 0.0
    %10959 = vmatpush1.msra.mxu0 0.0
    %10960 = vmatprep.subr.mxu0 0.0
    %10961 = vmatpush1.msra.mxu0 0.0
    %10962 = vmatprep.subr.mxu0 0.0
    %10963 = vmatpush1.msra.mxu0 0.0
    %10964 = vmatprep.subr.mxu0 0.0
    %10965 = vmatpush1.msra.mxu0 0.0
    %10966 = vmatprep.subr.mxu0 0.0
    %10967 = vmatpush1.msra.mxu0 0.0
    %10968 = vmatprep.subr.mxu0 0.0
    %10969 = vmatpush1.msra.mxu0 0.0
    %10970 = vmatprep.subr.mxu0 0.0
    %10971 = vmatpush1.msra.mxu0 0.0
    %10972 = vmatprep.subr.mxu0 0.0
    %10973 = vmatpush1.msra.mxu0 0.0
    %10974 = vmatprep.subr.mxu0 0.0
    %10975 = vmatpush1.msra.mxu0 0.0
    %10976 = vmatprep.mubr.f32.mxu0 0.0
    %10977 = vmatmul.mubr.f32.gmra.mrb[0].mxu0 %v10910
    %v10978 = vpop.f32.mrb[0].mxu0
    %v10979 = vadd.f32 0.0, %v10978
    %v10980 = vpop.f32.mrb[0].mxu0
    %10981 = vdwg.mxu0
    %v10982 = vadd.f32 %v10898, %v10979
    %s10983 = scalar_lea.vmem [#allocation3], 9
    %v10984 = vld [vmem:[%s10983] ss:$16 sm:$0x3]
    %v10985 = vld [vmem:[%s10983] ss:$16 sm:$0xc]
    %v10986 = vor.u32 %v10984, %v10985
    %v10987 = vld [vmem:[%s10983] ss:$16 sm:$0x30]
    %v10988 = vor.u32 %v10986, %v10987
    %v10989 = vld [vmem:[%s10983] ss:$16 sm:$0xc0]
    %v10990 = vor.u32 %v10988, %v10989
    %v10991 = vld [vmem:[%s5 + $0x90] sm:$0xff]
    %v10992 = vld [vmem:[%s5 + $0x98] sm:$0xff]
    %v10994 = vsel %vm1192, %v10990, 0
    %10996 = vmatprep.subr.mxu0 0.0
    %10997 = vmatpush1.msra.mxu0 %v10991
    %10998 = vmatprep.subr.mxu0 0.0
    %10999 = vmatpush1.msra.mxu0 %v10992
    %11000 = vmatprep.subr.mxu0 0.0
    %11001 = vmatpush1.msra.mxu0 0.0
    %11002 = vmatprep.subr.mxu0 0.0
    %11003 = vmatpush1.msra.mxu0 0.0
    %11004 = vmatprep.subr.mxu0 0.0
    %11005 = vmatpush1.msra.mxu0 0.0
    %11006 = vmatprep.subr.mxu0 0.0
    %11007 = vmatpush1.msra.mxu0 0.0
    %11008 = vmatprep.subr.mxu0 0.0
    %11009 = vmatpush1.msra.mxu0 0.0
    %11010 = vmatprep.subr.mxu0 0.0
    %11011 = vmatpush1.msra.mxu0 0.0
    %11012 = vmatprep.subr.mxu0 0.0
    %11013 = vmatpush1.msra.mxu0 0.0
    %11014 = vmatprep.subr.mxu0 0.0
    %11015 = vmatpush1.msra.mxu0 0.0
    %11016 = vmatprep.subr.mxu0 0.0
    %11017 = vmatpush1.msra.mxu0 0.0
    %11018 = vmatprep.subr.mxu0 0.0
    %11019 = vmatpush1.msra.mxu0 0.0
    %11020 = vmatprep.subr.mxu0 0.0
    %11021 = vmatpush1.msra.mxu0 0.0
    %11022 = vmatprep.subr.mxu0 0.0
    %11023 = vmatpush1.msra.mxu0 0.0
    %11024 = vmatprep.subr.mxu0 0.0
    %11025 = vmatpush1.msra.mxu0 0.0
    %11026 = vmatprep.subr.mxu0 0.0
    %11027 = vmatpush1.msra.mxu0 0.0
    %11028 = vmatprep.subr.mxu0 0.0
    %11029 = vmatpush1.msra.mxu0 0.0
    %11030 = vmatprep.subr.mxu0 0.0
    %11031 = vmatpush1.msra.mxu0 0.0
    %11032 = vmatprep.subr.mxu0 0.0
    %11033 = vmatpush1.msra.mxu0 0.0
    %11034 = vmatprep.subr.mxu0 0.0
    %11035 = vmatpush1.msra.mxu0 0.0
    %11036 = vmatprep.subr.mxu0 0.0
    %11037 = vmatpush1.msra.mxu0 0.0
    %11038 = vmatprep.subr.mxu0 0.0
    %11039 = vmatpush1.msra.mxu0 0.0
    %11040 = vmatprep.subr.mxu0 0.0
    %11041 = vmatpush1.msra.mxu0 0.0
    %11042 = vmatprep.subr.mxu0 0.0
    %11043 = vmatpush1.msra.mxu0 0.0
    %11044 = vmatprep.subr.mxu0 0.0
    %11045 = vmatpush1.msra.mxu0 0.0
    %11046 = vmatprep.subr.mxu0 0.0
    %11047 = vmatpush1.msra.mxu0 0.0
    %11048 = vmatprep.subr.mxu0 0.0
    %11049 = vmatpush1.msra.mxu0 0.0
    %11050 = vmatprep.subr.mxu0 0.0
    %11051 = vmatpush1.msra.mxu0 0.0
    %11052 = vmatprep.subr.mxu0 0.0
    %11053 = vmatpush1.msra.mxu0 0.0
    %11054 = vmatprep.subr.mxu0 0.0
    %11055 = vmatpush1.msra.mxu0 0.0
    %11056 = vmatprep.subr.mxu0 0.0
    %11057 = vmatpush1.msra.mxu0 0.0
    %11058 = vmatprep.subr.mxu0 0.0
    %11059 = vmatpush1.msra.mxu0 0.0
    %11060 = vmatprep.mubr.f32.mxu0 0.0
    %11061 = vmatmul.mubr.f32.gmra.mrb[0].mxu0 %v10994
    %v11062 = vpop.f32.mrb[0].mxu0
    %v11063 = vadd.f32 0.0, %v11062
    %v11064 = vpop.f32.mrb[0].mxu0
    %11065 = vdwg.mxu0
    %v11066 = vadd.f32 %v10982, %v11063
    %s11067 = scalar_lea.vmem [#allocation3], 10
    %v11068 = vld [vmem:[%s11067] ss:$16 sm:$0x3]
    %v11069 = vld [vmem:[%s11067] ss:$16 sm:$0xc]
    %v11070 = vor.u32 %v11068, %v11069
    %v11071 = vld [vmem:[%s11067] ss:$16 sm:$0x30]
    %v11072 = vor.u32 %v11070, %v11071
    %v11073 = vld [vmem:[%s11067] ss:$16 sm:$0xc0]
    %v11074 = vor.u32 %v11072, %v11073
    %v11075 = vld [vmem:[%s5 + $0xa0] sm:$0xff]
    %v11076 = vld [vmem:[%s5 + $0xa8] sm:$0xff]
    %v11078 = vsel %vm1192, %v11074, 0
    %11080 = vmatprep.subr.mxu0 0.0
    %11081 = vmatpush1.msra.mxu0 %v11075
    %11082 = vmatprep.subr.mxu0 0.0
    %11083 = vmatpush1.msra.mxu0 %v11076
    %11084 = vmatprep.subr.mxu0 0.0
    %11085 = vmatpush1.msra.mxu0 0.0
    %11086 = vmatprep.subr.mxu0 0.0
    %11087 = vmatpush1.msra.mxu0 0.0
    %11088 = vmatprep.subr.mxu0 0.0
    %11089 = vmatpush1.msra.mxu0 0.0
    %11090 = vmatprep.subr.mxu0 0.0
    %11091 = vmatpush1.msra.mxu0 0.0
    %11092 = vmatprep.subr.mxu0 0.0
    %11093 = vmatpush1.msra.mxu0 0.0
    %11094 = vmatprep.subr.mxu0 0.0
    %11095 = vmatpush1.msra.mxu0 0.0
    %11096 = vmatprep.subr.mxu0 0.0
    %11097 = vmatpush1.msra.mxu0 0.0
    %11098 = vmatprep.subr.mxu0 0.0
    %11099 = vmatpush1.msra.mxu0 0.0
    %11100 = vmatprep.subr.mxu0 0.0
    %11101 = vmatpush1.msra.mxu0 0.0
    %11102 = vmatprep.subr.mxu0 0.0
    %11103 = vmatpush1.msra.mxu0 0.0
    %11104 = vmatprep.subr.mxu0 0.0
    %11105 = vmatpush1.msra.mxu0 0.0
    %11106 = vmatprep.subr.mxu0 0.0
    %11107 = vmatpush1.msra.mxu0 0.0
    %11108 = vmatprep.subr.mxu0 0.0
    %11109 = vmatpush1.msra.mxu0 0.0
    %11110 = vmatprep.subr.mxu0 0.0
    %11111 = vmatpush1.msra.mxu0 0.0
    %11112 = vmatprep.subr.mxu0 0.0
    %11113 = vmatpush1.msra.mxu0 0.0
    %11114 = vmatprep.subr.mxu0 0.0
    %11115 = vmatpush1.msra.mxu0 0.0
    %11116 = vmatprep.subr.mxu0 0.0
    %11117 = vmatpush1.msra.mxu0 0.0
    %11118 = vmatprep.subr.mxu0 0.0
    %11119 = vmatpush1.msra.mxu0 0.0
    %11120 = vmatprep.subr.mxu0 0.0
    %11121 = vmatpush1.msra.mxu0 0.0
    %11122 = vmatprep.subr.mxu0 0.0
    %11123 = vmatpush1.msra.mxu0 0.0
    %11124 = vmatprep.subr.mxu0 0.0
    %11125 = vmatpush1.msra.mxu0 0.0
    %11126 = vmatprep.subr.mxu0 0.0
    %11127 = vmatpush1.msra.mxu0 0.0
    %11128 = vmatprep.subr.mxu0 0.0
    %11129 = vmatpush1.msra.mxu0 0.0
    %11130 = vmatprep.subr.mxu0 0.0
    %11131 = vmatpush1.msra.mxu0 0.0
    %11132 = vmatprep.subr.mxu0 0.0
    %11133 = vmatpush1.msra.mxu0 0.0
    %11134 = vmatprep.subr.mxu0 0.0
    %11135 = vmatpush1.msra.mxu0 0.0
    %11136 = vmatprep.subr.mxu0 0.0
    %11137 = vmatpush1.msra.mxu0 0.0
    %11138 = vmatprep.subr.mxu0 0.0
    %11139 = vmatpush1.msra.mxu0 0.0
    %11140 = vmatprep.subr.mxu0 0.0
    %11141 = vmatpush1.msra.mxu0 0.0
    %11142 = vmatprep.subr.mxu0 0.0
    %11143 = vmatpush1.msra.mxu0 0.0
    %11144 = vmatprep.mubr.f32.mxu0 0.0
    %11145 = vmatmul.mubr.f32.gmra.mrb[0].mxu0 %v11078
    %v11146 = vpop.f32.mrb[0].mxu0
    %v11147 = vadd.f32 0.0, %v11146
    %v11148 = vpop.f32.mrb[0].mxu0
    %11149 = vdwg.mxu0
    %v11150 = vadd.f32 %v11066, %v11147
    %s11151 = scalar_lea.vmem [#allocation3], 11
    %v11152 = vld [vmem:[%s11151] ss:$16 sm:$0x3]
    %v11153 = vld [vmem:[%s11151] ss:$16 sm:$0xc]
    %v11154 = vor.u32 %v11152, %v11153
    %v11155 = vld [vmem:[%s11151] ss:$16 sm:$0x30]
    %v11156 = vor.u32 %v11154, %v11155
    %v11157 = vld [vmem:[%s11151] ss:$16 sm:$0xc0]
    %v11158 = vor.u32 %v11156, %v11157
    %v11159 = vld [vmem:[%s5 + $0xb0] sm:$0xff]
    %v11160 = vld [vmem:[%s5 + $0xb8] sm:$0xff]
    %v11162 = vsel %vm1192, %v11158, 0
    %11164 = vmatprep.subr.mxu0 0.0
    %11165 = vmatpush1.msra.mxu0 %v11159
    %11166 = vmatprep.subr.mxu0 0.0
    %11167 = vmatpush1.msra.mxu0 %v11160
    %11168 = vmatprep.subr.mxu0 0.0
    %11169 = vmatpush1.msra.mxu0 0.0
    %11170 = vmatprep.subr.mxu0 0.0
    %11171 = vmatpush1.msra.mxu0 0.0
    %11172 = vmatprep.subr.mxu0 0.0
    %11173 = vmatpush1.msra.mxu0 0.0
    %11174 = vmatprep.subr.mxu0 0.0
    %11175 = vmatpush1.msra.mxu0 0.0
    %11176 = vmatprep.subr.mxu0 0.0
    %11177 = vmatpush1.msra.mxu0 0.0
    %11178 = vmatprep.subr.mxu0 0.0
    %11179 = vmatpush1.msra.mxu0 0.0
    %11180 = vmatprep.subr.mxu0 0.0
    %11181 = vmatpush1.msra.mxu0 0.0
    %11182 = vmatprep.subr.mxu0 0.0
    %11183 = vmatpush1.msra.mxu0 0.0
    %11184 = vmatprep.subr.mxu0 0.0
    %11185 = vmatpush1.msra.mxu0 0.0
    %11186 = vmatprep.subr.mxu0 0.0
    %11187 = vmatpush1.msra.mxu0 0.0
    %11188 = vmatprep.subr.mxu0 0.0
    %11189 = vmatpush1.msra.mxu0 0.0
    %11190 = vmatprep.subr.mxu0 0.0
    %11191 = vmatpush1.msra.mxu0 0.0
    %11192 = vmatprep.subr.mxu0 0.0
    %11193 = vmatpush1.msra.mxu0 0.0
    %11194 = vmatprep.subr.mxu0 0.0
    %11195 = vmatpush1.msra.mxu0 0.0
    %11196 = vmatprep.subr.mxu0 0.0
    %11197 = vmatpush1.msra.mxu0 0.0
    %11198 = vmatprep.subr.mxu0 0.0
    %11199 = vmatpush1.msra.mxu0 0.0
    %11200 = vmatprep.subr.mxu0 0.0
    %11201 = vmatpush1.msra.mxu0 0.0
    %11202 = vmatprep.subr.mxu0 0.0
    %11203 = vmatpush1.msra.mxu0 0.0
    %11204 = vmatprep.subr.mxu0 0.0
    %11205 = vmatpush1.msra.mxu0 0.0
    %11206 = vmatprep.subr.mxu0 0.0
    %11207 = vmatpush1.msra.mxu0 0.0
    %11208 = vmatprep.subr.mxu0 0.0
    %11209 = vmatpush1.msra.mxu0 0.0
    %11210 = vmatprep.subr.mxu0 0.0
    %11211 = vmatpush1.msra.mxu0 0.0
    %11212 = vmatprep.subr.mxu0 0.0
    %11213 = vmatpush1.msra.mxu0 0.0
    %11214 = vmatprep.subr.mxu0 0.0
    %11215 = vmatpush1.msra.mxu0 0.0
    %11216 = vmatprep.subr.mxu0 0.0
    %11217 = vmatpush1.msra.mxu0 0.0
    %11218 = vmatprep.subr.mxu0 0.0
    %11219 = vmatpush1.msra.mxu0 0.0
    %11220 = vmatprep.subr.mxu0 0.0
    %11221 = vmatpush1.msra.mxu0 0.0
    %11222 = vmatprep.subr.mxu0 0.0
    %11223 = vmatpush1.msra.mxu0 0.0
    %11224 = vmatprep.subr.mxu0 0.0
    %11225 = vmatpush1.msra.mxu0 0.0
    %11226 = vmatprep.subr.mxu0 0.0
    %11227 = vmatpush1.msra.mxu0 0.0
    %11228 = vmatprep.mubr.f32.mxu0 0.0
    %11229 = vmatmul.mubr.f32.gmra.mrb[0].mxu0 %v11162
    %v11230 = vpop.f32.mrb[0].mxu0
    %v11231 = vadd.f32 0.0, %v11230
    %v11232 = vpop.f32.mrb[0].mxu0
    %11233 = vdwg.mxu0
    %v11234 = vadd.f32 %v11150, %v11231
    %s11235 = scalar_lea.vmem [#allocation3], 12
    %v11236 = vld [vmem:[%s11235] ss:$16 sm:$0x3]
    %v11237 = vld [vmem:[%s11235] ss:$16 sm:$0xc]
    %v11238 = vor.u32 %v11236, %v11237
    %v11239 = vld [vmem:[%s11235] ss:$16 sm:$0x30]
    %v11240 = vor.u32 %v11238, %v11239
    %v11241 = vld [vmem:[%s11235] ss:$16 sm:$0xc0]
    %v11242 = vor.u32 %v11240, %v11241
    %v11243 = vld [vmem:[%s5 + $0xc0] sm:$0xff]
    %v11244 = vld [vmem:[%s5 + $0xc8] sm:$0xff]
    %v11246 = vsel %vm1192, %v11242, 0
    %11248 = vmatprep.subr.mxu0 0.0
    %11249 = vmatpush1.msra.mxu0 %v11243
    %11250 = vmatprep.subr.mxu0 0.0
    %11251 = vmatpush1.msra.mxu0 %v11244
    %11252 = vmatprep.subr.mxu0 0.0
    %11253 = vmatpush1.msra.mxu0 0.0
    %11254 = vmatprep.subr.mxu0 0.0
    %11255 = vmatpush1.msra.mxu0 0.0
    %11256 = vmatprep.subr.mxu0 0.0
    %11257 = vmatpush1.msra.mxu0 0.0
    %11258 = vmatprep.subr.mxu0 0.0
    %11259 = vmatpush1.msra.mxu0 0.0
    %11260 = vmatprep.subr.mxu0 0.0
    %11261 = vmatpush1.msra.mxu0 0.0
    %11262 = vmatprep.subr.mxu0 0.0
    %11263 = vmatpush1.msra.mxu0 0.0
    %11264 = vmatprep.subr.mxu0 0.0
    %11265 = vmatpush1.msra.mxu0 0.0
    %11266 = vmatprep.subr.mxu0 0.0
    %11267 = vmatpush1.msra.mxu0 0.0
    %11268 = vmatprep.subr.mxu0 0.0
    %11269 = vmatpush1.msra.mxu0 0.0
    %11270 = vmatprep.subr.mxu0 0.0
    %11271 = vmatpush1.msra.mxu0 0.0
    %11272 = vmatprep.subr.mxu0 0.0
    %11273 = vmatpush1.msra.mxu0 0.0
    %11274 = vmatprep.subr.mxu0 0.0
    %11275 = vmatpush1.msra.mxu0 0.0
    %11276 = vmatprep.subr.mxu0 0.0
    %11277 = vmatpush1.msra.mxu0 0.0
    %11278 = vmatprep.subr.mxu0 0.0
    %11279 = vmatpush1.msra.mxu0 0.0
    %11280 = vmatprep.subr.mxu0 0.0
    %11281 = vmatpush1.msra.mxu0 0.0
    %11282 = vmatprep.subr.mxu0 0.0
    %11283 = vmatpush1.msra.mxu0 0.0
    %11284 = vmatprep.subr.mxu0 0.0
    %11285 = vmatpush1.msra.mxu0 0.0
    %11286 = vmatprep.subr.mxu0 0.0
    %11287 = vmatpush1.msra.mxu0 0.0
    %11288 = vmatprep.subr.mxu0 0.0
    %11289 = vmatpush1.msra.mxu0 0.0
    %11290 = vmatprep.subr.mxu0 0.0
    %11291 = vmatpush1.msra.mxu0 0.0
    %11292 = vmatprep.subr.mxu0 0.0
    %11293 = vmatpush1.msra.mxu0 0.0
    %11294 = vmatprep.subr.mxu0 0.0
    %11295 = vmatpush1.msra.mxu0 0.0
    %11296 = vmatprep.subr.mxu0 0.0
    %11297 = vmatpush1.msra.mxu0 0.0
    %11298 = vmatprep.subr.mxu0 0.0
    %11299 = vmatpush1.msra.mxu0 0.0
    %11300 = vmatprep.subr.mxu0 0.0
    %11301 = vmatpush1.msra.mxu0 0.0
    %11302 = vmatprep.subr.mxu0 0.0
    %11303 = vmatpush1.msra.mxu0 0.0
    %11304 = vmatprep.subr.mxu0 0.0
    %11305 = vmatpush1.msra.mxu0 0.0
    %11306 = vmatprep.subr.mxu0 0.0
    %11307 = vmatpush1.msra.mxu0 0.0
    %11308 = vmatprep.subr.mxu0 0.0
    %11309 = vmatpush1.msra.mxu0 0.0
    %11310 = vmatprep.subr.mxu0 0.0
    %11311 = vmatpush1.msra.mxu0 0.0
    %11312 = vmatprep.mubr.f32.mxu0 0.0
    %11313 = vmatmul.mubr.f32.gmra.mrb[0].mxu0 %v11246
    %v11314 = vpop.f32.mrb[0].mxu0
    %v11315 = vadd.f32 0.0, %v11314
    %v11316 = vpop.f32.mrb[0].mxu0
    %11317 = vdwg.mxu0
    %v11318 = vadd.f32 %v11234, %v11315
    %s11319 = scalar_lea.vmem [#allocation3], 13
    %v11320 = vld [vmem:[%s11319] ss:$16 sm:$0x3]
    %v11321 = vld [vmem:[%s11319] ss:$16 sm:$0xc]
    %v11322 = vor.u32 %v11320, %v11321
    %v11323 = vld [vmem:[%s11319] ss:$16 sm:$0x30]
    %v11324 = vor.u32 %v11322, %v11323
    %v11325 = vld [vmem:[%s11319] ss:$16 sm:$0xc0]
    %v11326 = vor.u32 %v11324, %v11325
    %v11327 = vld [vmem:[%s5 + $0xd0] sm:$0xff]
    %v11328 = vld [vmem:[%s5 + $0xd8] sm:$0xff]
    %v11330 = vsel %vm1192, %v11326, 0
    %11332 = vmatprep.subr.mxu0 0.0
    %11333 = vmatpush1.msra.mxu0 %v11327
    %11334 = vmatprep.subr.mxu0 0.0
    %11335 = vmatpush1.msra.mxu0 %v11328
    %11336 = vmatprep.subr.mxu0 0.0
    %11337 = vmatpush1.msra.mxu0 0.0
    %11338 = vmatprep.subr.mxu0 0.0
    %11339 = vmatpush1.msra.mxu0 0.0
    %11340 = vmatprep.subr.mxu0 0.0
    %11341 = vmatpush1.msra.mxu0 0.0
    %11342 = vmatprep.subr.mxu0 0.0
    %11343 = vmatpush1.msra.mxu0 0.0
    %11344 = vmatprep.subr.mxu0 0.0
    %11345 = vmatpush1.msra.mxu0 0.0
    %11346 = vmatprep.subr.mxu0 0.0
    %11347 = vmatpush1.msra.mxu0 0.0
    %11348 = vmatprep.subr.mxu0 0.0
    %11349 = vmatpush1.msra.mxu0 0.0
    %11350 = vmatprep.subr.mxu0 0.0
    %11351 = vmatpush1.msra.mxu0 0.0
    %11352 = vmatprep.subr.mxu0 0.0
    %11353 = vmatpush1.msra.mxu0 0.0
    %11354 = vmatprep.subr.mxu0 0.0
    %11355 = vmatpush1.msra.mxu0 0.0
    %11356 = vmatprep.subr.mxu0 0.0
    %11357 = vmatpush1.msra.mxu0 0.0
    %11358 = vmatprep.subr.mxu0 0.0
    %11359 = vmatpush1.msra.mxu0 0.0
    %11360 = vmatprep.subr.mxu0 0.0
    %11361 = vmatpush1.msra.mxu0 0.0
    %11362 = vmatprep.subr.mxu0 0.0
    %11363 = vmatpush1.msra.mxu0 0.0
    %11364 = vmatprep.subr.mxu0 0.0
    %11365 = vmatpush1.msra.mxu0 0.0
    %11366 = vmatprep.subr.mxu0 0.0
    %11367 = vmatpush1.msra.mxu0 0.0
    %11368 = vmatprep.subr.mxu0 0.0
    %11369 = vmatpush1.msra.mxu0 0.0
    %11370 = vmatprep.subr.mxu0 0.0
    %11371 = vmatpush1.msra.mxu0 0.0
    %11372 = vmatprep.subr.mxu0 0.0
    %11373 = vmatpush1.msra.mxu0 0.0
    %11374 = vmatprep.subr.mxu0 0.0
    %11375 = vmatpush1.msra.mxu0 0.0
    %11376 = vmatprep.subr.mxu0 0.0
    %11377 = vmatpush1.msra.mxu0 0.0
    %11378 = vmatprep.subr.mxu0 0.0
    %11379 = vmatpush1.msra.mxu0 0.0
    %11380 = vmatprep.subr.mxu0 0.0
    %11381 = vmatpush1.msra.mxu0 0.0
    %11382 = vmatprep.subr.mxu0 0.0
    %11383 = vmatpush1.msra.mxu0 0.0
    %11384 = vmatprep.subr.mxu0 0.0
    %11385 = vmatpush1.msra.mxu0 0.0
    %11386 = vmatprep.subr.mxu0 0.0
    %11387 = vmatpush1.msra.mxu0 0.0
    %11388 = vmatprep.subr.mxu0 0.0
    %11389 = vmatpush1.msra.mxu0 0.0
    %11390 = vmatprep.subr.mxu0 0.0
    %11391 = vmatpush1.msra.mxu0 0.0
    %11392 = vmatprep.subr.mxu0 0.0
    %11393 = vmatpush1.msra.mxu0 0.0
    %11394 = vmatprep.subr.mxu0 0.0
    %11395 = vmatpush1.msra.mxu0 0.0
    %11396 = vmatprep.mubr.f32.mxu0 0.0
    %11397 = vmatmul.mubr.f32.gmra.mrb[0].mxu0 %v11330
    %v11398 = vpop.f32.mrb[0].mxu0
    %v11399 = vadd.f32 0.0, %v11398
    %v11400 = vpop.f32.mrb[0].mxu0
    %11401 = vdwg.mxu0
    %v11402 = vadd.f32 %v11318, %v11399
    %s11403 = scalar_lea.vmem [#allocation3], 14
    %v11404 = vld [vmem:[%s11403] ss:$16 sm:$0x3]
    %v11405 = vld [vmem:[%s11403] ss:$16 sm:$0xc]
    %v11406 = vor.u32 %v11404, %v11405
    %v11407 = vld [vmem:[%s11403] ss:$16 sm:$0x30]
    %v11408 = vor.u32 %v11406, %v11407
    %v11409 = vld [vmem:[%s11403] ss:$16 sm:$0xc0]
    %v11410 = vor.u32 %v11408, %v11409
    %v11411 = vld [vmem:[%s5 + $0xe0] sm:$0xff]
    %v11412 = vld [vmem:[%s5 + $0xe8] sm:$0xff]
    %v11414 = vsel %vm1192, %v11410, 0
    %11416 = vmatprep.subr.mxu0 0.0
    %11417 = vmatpush1.msra.mxu0 %v11411
    %11418 = vmatprep.subr.mxu0 0.0
    %11419 = vmatpush1.msra.mxu0 %v11412
    %11420 = vmatprep.subr.mxu0 0.0
    %11421 = vmatpush1.msra.mxu0 0.0
    %11422 = vmatprep.subr.mxu0 0.0
    %11423 = vmatpush1.msra.mxu0 0.0
    %11424 = vmatprep.subr.mxu0 0.0
    %11425 = vmatpush1.msra.mxu0 0.0
    %11426 = vmatprep.subr.mxu0 0.0
    %11427 = vmatpush1.msra.mxu0 0.0
    %11428 = vmatprep.subr.mxu0 0.0
    %11429 = vmatpush1.msra.mxu0 0.0
    %11430 = vmatprep.subr.mxu0 0.0
    %11431 = vmatpush1.msra.mxu0 0.0
    %11432 = vmatprep.subr.mxu0 0.0
    %11433 = vmatpush1.msra.mxu0 0.0
    %11434 = vmatprep.subr.mxu0 0.0
    %11435 = vmatpush1.msra.mxu0 0.0
    %11436 = vmatprep.subr.mxu0 0.0
    %11437 = vmatpush1.msra.mxu0 0.0
    %11438 = vmatprep.subr.mxu0 0.0
    %11439 = vmatpush1.msra.mxu0 0.0
    %11440 = vmatprep.subr.mxu0 0.0
    %11441 = vmatpush1.msra.mxu0 0.0
    %11442 = vmatprep.subr.mxu0 0.0
    %11443 = vmatpush1.msra.mxu0 0.0
    %11444 = vmatprep.subr.mxu0 0.0
    %11445 = vmatpush1.msra.mxu0 0.0
    %11446 = vmatprep.subr.mxu0 0.0
    %11447 = vmatpush1.msra.mxu0 0.0
    %11448 = vmatprep.subr.mxu0 0.0
    %11449 = vmatpush1.msra.mxu0 0.0
    %11450 = vmatprep.subr.mxu0 0.0
    %11451 = vmatpush1.msra.mxu0 0.0
    %11452 = vmatprep.subr.mxu0 0.0
    %11453 = vmatpush1.msra.mxu0 0.0
    %11454 = vmatprep.subr.mxu0 0.0
    %11455 = vmatpush1.msra.mxu0 0.0
    %11456 = vmatprep.subr.mxu0 0.0
    %11457 = vmatpush1.msra.mxu0 0.0
    %11458 = vmatprep.subr.mxu0 0.0
    %11459 = vmatpush1.msra.mxu0 0.0
    %11460 = vmatprep.subr.mxu0 0.0
    %11461 = vmatpush1.msra.mxu0 0.0
    %11462 = vmatprep.subr.mxu0 0.0
    %11463 = vmatpush1.msra.mxu0 0.0
    %11464 = vmatprep.subr.mxu0 0.0
    %11465 = vmatpush1.msra.mxu0 0.0
    %11466 = vmatprep.subr.mxu0 0.0
    %11467 = vmatpush1.msra.mxu0 0.0
    %11468 = vmatprep.subr.mxu0 0.0
    %11469 = vmatpush1.msra.mxu0 0.0
    %11470 = vmatprep.subr.mxu0 0.0
    %11471 = vmatpush1.msra.mxu0 0.0
    %11472 = vmatprep.subr.mxu0 0.0
    %11473 = vmatpush1.msra.mxu0 0.0
    %11474 = vmatprep.subr.mxu0 0.0
    %11475 = vmatpush1.msra.mxu0 0.0
    %11476 = vmatprep.subr.mxu0 0.0
    %11477 = vmatpush1.msra.mxu0 0.0
    %11478 = vmatprep.subr.mxu0 0.0
    %11479 = vmatpush1.msra.mxu0 0.0
    %11480 = vmatprep.mubr.f32.mxu0 0.0
    %11481 = vmatmul.mubr.f32.gmra.mrb[0].mxu0 %v11414
    %v11482 = vpop.f32.mrb[0].mxu0
    %v11483 = vadd.f32 0.0, %v11482
    %v11484 = vpop.f32.mrb[0].mxu0
    %11485 = vdwg.mxu0
    %v11486 = vadd.f32 %v11402, %v11483
    %s11487 = scalar_lea.vmem [#allocation3], 15
    %v11488 = vld [vmem:[%s11487] ss:$16 sm:$0x3]
    %v11489 = vld [vmem:[%s11487] ss:$16 sm:$0xc]
    %v11490 = vor.u32 %v11488, %v11489
    %v11491 = vld [vmem:[%s11487] ss:$16 sm:$0x30]
    %v11492 = vor.u32 %v11490, %v11491
    %v11493 = vld [vmem:[%s11487] ss:$16 sm:$0xc0]
    %v11494 = vor.u32 %v11492, %v11493
    %v11495 = vld [vmem:[%s5 + $0xf0] sm:$0xff]
    %v11496 = vld [vmem:[%s5 + $0xf8] sm:$0xff]
    %v11498 = vsel %vm1192, %v11494, 0
    %11500 = vmatprep.subr.mxu0 0.0
    %11501 = vmatpush1.msra.mxu0 %v11495
    %11502 = vmatprep.subr.mxu0 0.0
    %11503 = vmatpush1.msra.mxu0 %v11496
    %11504 = vmatprep.subr.mxu0 0.0
    %11505 = vmatpush1.msra.mxu0 0.0
    %11506 = vmatprep.subr.mxu0 0.0
    %11507 = vmatpush1.msra.mxu0 0.0
    %11508 = vmatprep.subr.mxu0 0.0
    %11509 = vmatpush1.msra.mxu0 0.0
    %11510 = vmatprep.subr.mxu0 0.0
    %11511 = vmatpush1.msra.mxu0 0.0
    %11512 = vmatprep.subr.mxu0 0.0
    %11513 = vmatpush1.msra.mxu0 0.0
    %11514 = vmatprep.subr.mxu0 0.0
    %11515 = vmatpush1.msra.mxu0 0.0
    %11516 = vmatprep.subr.mxu0 0.0
    %11517 = vmatpush1.msra.mxu0 0.0
    %11518 = vmatprep.subr.mxu0 0.0
    %11519 = vmatpush1.msra.mxu0 0.0
    %11520 = vmatprep.subr.mxu0 0.0
    %11521 = vmatpush1.msra.mxu0 0.0
    %11522 = vmatprep.subr.mxu0 0.0
    %11523 = vmatpush1.msra.mxu0 0.0
    %11524 = vmatprep.subr.mxu0 0.0
    %11525 = vmatpush1.msra.mxu0 0.0
    %11526 = vmatprep.subr.mxu0 0.0
    %11527 = vmatpush1.msra.mxu0 0.0
    %11528 = vmatprep.subr.mxu0 0.0
    %11529 = vmatpush1.msra.mxu0 0.0
    %11530 = vmatprep.subr.mxu0 0.0
    %11531 = vmatpush1.msra.mxu0 0.0
    %11532 = vmatprep.subr.mxu0 0.0
    %11533 = vmatpush1.msra.mxu0 0.0
    %11534 = vmatprep.subr.mxu0 0.0
    %11535 = vmatpush1.msra.mxu0 0.0
    %11536 = vmatprep.subr.mxu0 0.0
    %11537 = vmatpush1.msra.mxu0 0.0
    %11538 = vmatprep.subr.mxu0 0.0
    %11539 = vmatpush1.msra.mxu0 0.0
    %11540 = vmatprep.subr.mxu0 0.0
    %11541 = vmatpush1.msra.mxu0 0.0
    %11542 = vmatprep.subr.mxu0 0.0
    %11543 = vmatpush1.msra.mxu0 0.0
    %11544 = vmatprep.subr.mxu0 0.0
    %11545 = vmatpush1.msra.mxu0 0.0
    %11546 = vmatprep.subr.mxu0 0.0
    %11547 = vmatpush1.msra.mxu0 0.0
    %11548 = vmatprep.subr.mxu0 0.0
    %11549 = vmatpush1.msra.mxu0 0.0
    %11550 = vmatprep.subr.mxu0 0.0
    %11551 = vmatpush1.msra.mxu0 0.0
    %11552 = vmatprep.subr.mxu0 0.0
    %11553 = vmatpush1.msra.mxu0 0.0
    %11554 = vmatprep.subr.mxu0 0.0
    %11555 = vmatpush1.msra.mxu0 0.0
    %11556 = vmatprep.subr.mxu0 0.0
    %11557 = vmatpush1.msra.mxu0 0.0
    %11558 = vmatprep.subr.mxu0 0.0
    %11559 = vmatpush1.msra.mxu0 0.0
    %11560 = vmatprep.subr.mxu0 0.0
    %11561 = vmatpush1.msra.mxu0 0.0
    %11562 = vmatprep.subr.mxu0 0.0
    %11563 = vmatpush1.msra.mxu0 0.0
    %11564 = vmatprep.mubr.f32.mxu0 0.0
    %11565 = vmatmul.mubr.f32.gmra.mrb[0].mxu0 %v11498
    %v11566 = vpop.f32.mrb[0].mxu0
    %v11567 = vadd.f32 0.0, %v11566
    %v11568 = vpop.f32.mrb[0].mxu0
    %11569 = vdwg.mxu0
    %v11570 = vadd.f32 %v11486, %v11567
    %v11571 = vld [vmem:[%s3 + $0x9] sm:$0x1]
    %v11572 = vlaneseq
    %v11573 = vshrl.u32 %v11572, 7
    %v11574 = vsub.s32 0, %v11573
    %v11575 = vrot.slane %v11571, %v11574
    %v11576 = vadd.f32 %v11570, %v11575
    %11577 = vst [vmem:[%s6] sm:$0xff] %v11576
    // Predicated region
    $region30: #{lhvit_forward.1} parent=1 // pred_check
      _
    $region31: #{lhvit_forward.1} parent=1 // pred_check_branch
      %11579 = sbr.rel (0) target = $region33
    $region32: #{lhvit_forward.1} parent=1 // pred_region
      _
    $region33: #{lhvit_forward.1} parent=1 // pred_fallthru
      _
    // Predicated region
    $region34: #{lhvit_forward.1} parent=1 // pred_check
      _
    $region35: #{lhvit_forward.1} parent=1 // pred_check_branch
      %11581 = sbr.rel (0) target = $region37
    $region36: #{lhvit_forward.1} parent=1 // pred_region
      _
    $region37: #{lhvit_forward.1} parent=1 // pred_fallthru
      _
    %11582 = vsyncpa [#allocation5], 1

</llo_original>
